<compile_context>
chip_gen: v7x
topology: tpu7x:2x2x1
jax: 0.10.0
libtpu: 0.0.40
codegen_flags: <defaults>
</compile_context>

<pallas_src>
import jax
import jax.numpy as jnp
from jax import lax
from jax.experimental import pallas as pl
from jax.experimental.pallas import tpu as pltpu

_C_PAD = 8          # class axis padded 5 -> 8 (full sublane tile, unmasked stores)
_NEG_BIG = -1e30    # bias of padded classes: exp() underflows to 0 in the softmax


def _vecsim_kernel(w1_ref, w2_ref, noun_t_ref, wh_ref, bh_ref, wo_ref, bo_ref,
                   out_ref):
    # Shapes (per grid step):
    #   w1_ref/w2_ref : [S, BT]      int32 (word indices, batch on lanes)
    #   noun_t_ref    : [E, V]       f32   (embedding table, transposed)
    #   wh_ref        : [H, 4E]      f32   (predictor_h.weight, kept intact)
    #   bh_ref        : [H, 1]       f32
    #   wo_ref        : [C_PAD, H]   f32   (predictor_o.weight, padded rows = 0)
    #   bo_ref        : [C_PAD, 1]   f32   (padded rows = -1e30)
    #   out_ref       : [C_PAD, BT]  f32   (log-probs, batch on lanes)
    S, BT = w1_ref.shape
    E, V = noun_t_ref.shape
    hi = lax.Precision.HIGHEST     # keep full f32 fidelity through the MXU

    noun_t = noun_t_ref[...]                                       # [E, V]

    # Pack both sentences on the lane axis (both tiles are 128-lane aligned,
    # so this is pure vreg placement): one one-hot + one N=2*BT gather dot
    # per word position instead of two.
    w12 = jnp.concatenate([w1_ref[...], w2_ref[...]], axis=1)      # [S, 2*BT]
    vocab_iota = lax.broadcasted_iota(jnp.int32, (V, 2 * BT), 0)   # [V, 2*BT]

    prod = None
    for s in range(S):                                             # S is small; unrolled
        w_row = w12[s:s + 1, :]                                    # [1, 2*BT]
        onehot = (w_row == vocab_iota).astype(jnp.float32)         # [V, 2*BT]
        emb = jnp.dot(noun_t, onehot,
                      preferred_element_type=jnp.float32,
                      precision=hi)                                # [E, 2*BT]
        prod = emb if prod is None else prod * emb                 # VPU multiply chain

    s1 = prod[:, :BT]                                              # [E, BT]
    s2 = prod[:, BT:]                                              # [E, BT]
    mult_dist = s1 * s2
    abs_dist = jnp.abs(s1 - s2)

    # vec_dist stacked on the sublane (feature) axis: each chunk is E rows
    # (multiple of 8), so this is vreg-row placement, no XLU; one K=4E dot.
    vec_dist = jnp.concatenate([s1, s2, mult_dist, abs_dist], axis=0)   # [4E, BT]
    hpre = (jnp.dot(wh_ref[...], vec_dist,
                    preferred_element_type=jnp.float32, precision=hi)
            + bh_ref[...])                                         # [H, BT]
    hidden = jax.nn.sigmoid(hpre)

    logits = (jnp.dot(wo_ref[...], hidden,
                      preferred_element_type=jnp.float32, precision=hi)
              + bo_ref[...])                                       # [C_PAD, BT]

    # log_softmax over the (padded) class axis; padded rows carry -1e30 bias,
    # so exp() underflows to 0 and the real 5 classes are unaffected.
    m = jnp.max(logits, axis=0, keepdims=True)                     # [1, BT]
    shifted = logits - m
    lse = jnp.log(jnp.sum(jnp.exp(shifted), axis=0, keepdims=True))
    out_ref[...] = shifted - lse                                   # [C_PAD, BT]


def vecsim_linear_forward(noun_matrix, words1, words2, w_h, b_h, w_o, b_o,
                          *, block_b=128):
    """Batched VecSimLinear forward.

    noun_matrix : [V, E] f32   (pretrained noun embeddings)
    words1/2    : [B, S] int32 (B sentence pairs, S words each)
    w_h, b_h    : [H, 4E], [H]   (PyTorch Linear layout: weight[out, in])
    w_o, b_o    : [C, H],  [C]
    Returns [B, C] log-probabilities (row b == module output for pair b).
    """
    V, E = noun_matrix.shape
    B, S = words1.shape
    H = w_h.shape[0]
    C = w_o.shape[0]

    # Batch tiling: pad ragged batches up to a multiple of the tile (padded
    # rows are computed on index 0 and discarded).  block_b=128 keeps >=2 grid
    # blocks at B>=256 so the "parallel" axis shards across v7x's two cores;
    # the fused gather already gives N=2*block_b=256 MXU lanes per dot.
    nb = pl.cdiv(B, block_b)
    B_pad = nb * block_b
    pad_b = B_pad - B

    # nn.Embedding would raise on out-of-range indices; we clamp defensively
    # (valid inputs are unchanged).
    words1 = jnp.clip(words1.astype(jnp.int32), 0, V - 1)
    words2 = jnp.clip(words2.astype(jnp.int32), 0, V - 1)
    if pad_b:
        words1 = jnp.pad(words1, ((0, pad_b), (0, 0)))
        words2 = jnp.pad(words2, ((0, pad_b), (0, 0)))

    # Cheap XLA-side layout plumbing (all tiny arrays).
    words1_t = words1.T                          # [S, B_pad]
    words2_t = words2.T                          # [S, B_pad]
    noun_t = noun_matrix.T                       # [E, V]
    bh_col = b_h.reshape(H, 1)
    # Class padding 5 -> 8: zero weight rows, -1e30 bias rows.
    wo_pad = jnp.zeros((_C_PAD, H), jnp.float32).at[:C].set(w_o)
    bo_pad = jnp.full((_C_PAD, 1), _NEG_BIG, jnp.float32).at[:C, 0].set(b_o)

    out_t = pl.pallas_call(
        _vecsim_kernel,
        out_shape=jax.ShapeDtypeStruct((_C_PAD, B_pad), jnp.float32),
        grid=(nb,),
        in_specs=[
            pl.BlockSpec((S, block_b), lambda i: (0, i)),   # words1 (transposed)
            pl.BlockSpec((S, block_b), lambda i: (0, i)),   # words2 (transposed)
            pl.BlockSpec((E, V), lambda i: (0, 0)),         # noun_matrix.T
            pl.BlockSpec((H, 4 * E), lambda i: (0, 0)),     # W_h intact (K = 4E)
            pl.BlockSpec((H, 1), lambda i: (0, 0)),         # b_h
            pl.BlockSpec((_C_PAD, H), lambda i: (0, 0)),    # W_o (padded)
            pl.BlockSpec((_C_PAD, 1), lambda i: (0, 0)),    # b_o (padded)
        ],
        out_specs=pl.BlockSpec((_C_PAD, block_b), lambda i: (0, i)),
        compiler_params=pltpu.CompilerParams(
            dimension_semantics=("parallel",)),              # shard batch blocks across TCs
    )(words1_t, words2_t, noun_t, w_h, bh_col, wo_pad, bo_pad)

    # TODO(synk): for realistic vocabularies (V*E*4 bytes approaching VMEM,
    # especially v7x's 64 MiB) the whole-table one-hot gather must be replaced
    # by a V-tiled contraction (extra "arbitrary" grid axis, single-buffered
    # table) or a manual row-DMA gather; at these test sizes the table is 8 KB.
    return out_t[:C, :B].T                                   # [B, C]


def _reference_forward(noun_matrix, words1, words2, w_h, b_h, w_o, b_o):
    """Pure-JAX reference, per-pair (identical to the PyTorch module), vmapped."""
    def single(ws1, ws2):
        s1 = jnp.prod(noun_matrix[ws1], axis=0)
        s2 = jnp.prod(noun_matrix[ws2], axis=0)
        vec = jnp.concatenate([s1, s2, s1 * s2, jnp.abs(s1 - s2)])
        h = jax.nn.sigmoid(vec @ w_h.T + b_h)
        logits = h @ w_o.T + b_o
        return jax.nn.log_softmax(logits, axis=-1)
    return jax.vmap(single)(words1, words2)


if __name__ == "__main__":
    # Make the pure-JAX reference use exact f32 matmuls too, so the numerical
    # comparison against the HIGHEST-precision kernel is apples-to-apples.
    jax.config.update("jax_default_matmul_precision", "highest")

    key = jax.random.PRNGKey(0)
    k_nm, k_w1, k_w2, k_wh, k_bh, k_wo, k_bo = jax.random.split(key, 7)

    VOCAB, EMBED, HIDDEN, SEQ, BATCH, CLASSES = 64, 32, 32, 8, 256, 5

    # Deterministic synthetic parameters (PyTorch Linear layout: [out, in]).
    noun_matrix = jax.random.normal(k_nm, (VOCAB, EMBED), dtype=jnp.float32) * 0.5
    w_h = jax.random.normal(k_wh, (HIDDEN, 4 * EMBED), dtype=jnp.float32) * 0.1
    b_h = jax.random.normal(k_bh, (HIDDEN,), dtype=jnp.float32) * 0.1
    w_o = jax.random.normal(k_wo, (CLASSES, HIDDEN), dtype=jnp.float32) * 0.1
    b_o = jax.random.normal(k_bo, (CLASSES,), dtype=jnp.float32) * 0.1

    # Word-index sequences (the LongTensor inputs), batched as B pairs.
    words1 = jax.random.randint(k_w1, (BATCH, SEQ), 0, VOCAB, dtype=jnp.int32)
    words2 = jax.random.randint(k_w2, (BATCH, SEQ), 0, VOCAB, dtype=jnp.int32)

    forward = jax.jit(vecsim_linear_forward)
    out = forward(noun_matrix, words1, words2, w_h, b_h, w_o, b_o)
    out = jax.block_until_ready(out)

    ref = _reference_forward(noun_matrix, words1, words2, w_h, b_h, w_o, b_o)
    ref = jax.block_until_ready(ref)

    assert out.shape == (BATCH, CLASSES), out.shape
    max_err = float(jnp.max(jnp.abs(out - ref)))
    assert jnp.allclose(out, ref, atol=2e-3, rtol=2e-3), ("max|diff|", max_err)

    print("KERNEL_OK")
</pallas_src>

<mosaic_0001>
module attributes {stable_mosaic.version = 11 : i64} {
  func.func @_vecsim_kernel(%arg0: i32, %arg1: memref<8x128xi32, #tpu.memory_space<vmem>>, %arg2: memref<8x128xi32, #tpu.memory_space<vmem>>, %arg3: memref<32x64xf32, #tpu.memory_space<vmem>>, %arg4: memref<32x128xf32, #tpu.memory_space<vmem>>, %arg5: memref<32x1xf32, #tpu.memory_space<vmem>>, %arg6: memref<8x32xf32, #tpu.memory_space<vmem>>, %arg7: memref<8x1xf32, #tpu.memory_space<vmem>>, %arg8: memref<8x128xf32, #tpu.memory_space<vmem>>) attributes {dimension_semantics = [#tpu.dimension_semantics<parallel>], iteration_bounds = array<i64: 2>, scalar_prefetch = 0 : i64, scratch_operands = 0 : i64, tpu.core_type = #tpu.core_type<tc>, window_params = [{transform_indices = @transform_0, window_bounds = array<i64: 8, 128>}, {transform_indices = @transform_1, window_bounds = array<i64: 8, 128>}, {pipeline_mode = #tpu.pipeline_mode<synchronous>, transform_indices = @transform_2, window_bounds = array<i64: 32, 64>}, {pipeline_mode = #tpu.pipeline_mode<synchronous>, transform_indices = @transform_3, window_bounds = array<i64: 32, 128>}, {pipeline_mode = #tpu.pipeline_mode<synchronous>, transform_indices = @transform_4, window_bounds = array<i64: 32, 1>}, {pipeline_mode = #tpu.pipeline_mode<synchronous>, transform_indices = @transform_5, window_bounds = array<i64: 8, 32>}, {pipeline_mode = #tpu.pipeline_mode<synchronous>, transform_indices = @transform_6, window_bounds = array<i64: 8, 1>}, {transform_indices = @transform_7, window_bounds = array<i64: 8, 128>}]} {
    %c0 = arith.constant 0 : index
    %c0_0 = arith.constant 0 : index
    %0 = vector.load %arg3[%c0, %c0_0] : memref<32x64xf32, #tpu.memory_space<vmem>>, vector<32x64xf32>
    %c0_1 = arith.constant 0 : index
    %c0_2 = arith.constant 0 : index
    %1 = vector.load %arg1[%c0_1, %c0_2] : memref<8x128xi32, #tpu.memory_space<vmem>>, vector<8x128xi32>
    %c0_3 = arith.constant 0 : index
    %c0_4 = arith.constant 0 : index
    %2 = vector.load %arg2[%c0_3, %c0_4] : memref<8x128xi32, #tpu.memory_space<vmem>>, vector<8x128xi32>
    %3 = tpu.concatenate %1, %2 in 1 : vector<8x128xi32>, vector<8x128xi32> -> vector<8x256xi32>
    %4 = tpu.iota {dimensions = array<i32: 0>} : vector<64x256xi32>
    %5 = vector.extract_strided_slice %3 {offsets = [0, 0], sizes = [1, 256], strides = [1, 1]} : vector<8x256xi32> to vector<1x256xi32>
    %6 = vector.broadcast %5 : vector<1x256xi32> to vector<64x256xi32>
    %7 = arith.cmpi eq, %6, %4 : vector<64x256xi32>
    %8 = arith.extui %7 : vector<64x256xi1> to vector<64x256xi32>
    %9 = arith.sitofp %8 : vector<64x256xi32> to vector<64x256xf32>
    %cst = arith.constant dense<0.000000e+00> : vector<32x256xf32>
    %10 = tpu.matmul %0, %9, %cst {dimension_numbers = #tpu.dot_dimension_numbers<[1], [0], [0], [1], [0, 0, 1, 1], [], []>, precision = #tpu.contract_precision<fp32>} : vector<32x64xf32>, vector<64x256xf32>, vector<32x256xf32> -> vector<32x256xf32>
    %11 = vector.extract_strided_slice %3 {offsets = [1, 0], sizes = [1, 256], strides = [1, 1]} : vector<8x256xi32> to vector<1x256xi32>
    %12 = vector.broadcast %11 : vector<1x256xi32> to vector<64x256xi32>
    %13 = arith.cmpi eq, %12, %4 : vector<64x256xi32>
    %14 = arith.extui %13 : vector<64x256xi1> to vector<64x256xi32>
    %15 = arith.sitofp %14 : vector<64x256xi32> to vector<64x256xf32>
    %cst_5 = arith.constant dense<0.000000e+00> : vector<32x256xf32>
    %16 = tpu.matmul %0, %15, %cst_5 {dimension_numbers = #tpu.dot_dimension_numbers<[1], [0], [0], [1], [0, 0, 1, 1], [], []>, precision = #tpu.contract_precision<fp32>} : vector<32x64xf32>, vector<64x256xf32>, vector<32x256xf32> -> vector<32x256xf32>
    %17 = arith.mulf %10, %16 : vector<32x256xf32>
    %18 = vector.extract_strided_slice %3 {offsets = [2, 0], sizes = [1, 256], strides = [1, 1]} : vector<8x256xi32> to vector<1x256xi32>
    %19 = vector.broadcast %18 : vector<1x256xi32> to vector<64x256xi32>
    %20 = arith.cmpi eq, %19, %4 : vector<64x256xi32>
    %21 = arith.extui %20 : vector<64x256xi1> to vector<64x256xi32>
    %22 = arith.sitofp %21 : vector<64x256xi32> to vector<64x256xf32>
    %cst_6 = arith.constant dense<0.000000e+00> : vector<32x256xf32>
    %23 = tpu.matmul %0, %22, %cst_6 {dimension_numbers = #tpu.dot_dimension_numbers<[1], [0], [0], [1], [0, 0, 1, 1], [], []>, precision = #tpu.contract_precision<fp32>} : vector<32x64xf32>, vector<64x256xf32>, vector<32x256xf32> -> vector<32x256xf32>
    %24 = arith.mulf %17, %23 : vector<32x256xf32>
    %25 = vector.extract_strided_slice %3 {offsets = [3, 0], sizes = [1, 256], strides = [1, 1]} : vector<8x256xi32> to vector<1x256xi32>
    %26 = vector.broadcast %25 : vector<1x256xi32> to vector<64x256xi32>
    %27 = arith.cmpi eq, %26, %4 : vector<64x256xi32>
    %28 = arith.extui %27 : vector<64x256xi1> to vector<64x256xi32>
    %29 = arith.sitofp %28 : vector<64x256xi32> to vector<64x256xf32>
    %cst_7 = arith.constant dense<0.000000e+00> : vector<32x256xf32>
    %30 = tpu.matmul %0, %29, %cst_7 {dimension_numbers = #tpu.dot_dimension_numbers<[1], [0], [0], [1], [0, 0, 1, 1], [], []>, precision = #tpu.contract_precision<fp32>} : vector<32x64xf32>, vector<64x256xf32>, vector<32x256xf32> -> vector<32x256xf32>
    %31 = arith.mulf %24, %30 : vector<32x256xf32>
    %32 = vector.extract_strided_slice %3 {offsets = [4, 0], sizes = [1, 256], strides = [1, 1]} : vector<8x256xi32> to vector<1x256xi32>
    %33 = vector.broadcast %32 : vector<1x256xi32> to vector<64x256xi32>
    %34 = arith.cmpi eq, %33, %4 : vector<64x256xi32>
    %35 = arith.extui %34 : vector<64x256xi1> to vector<64x256xi32>
    %36 = arith.sitofp %35 : vector<64x256xi32> to vector<64x256xf32>
    %cst_8 = arith.constant dense<0.000000e+00> : vector<32x256xf32>
    %37 = tpu.matmul %0, %36, %cst_8 {dimension_numbers = #tpu.dot_dimension_numbers<[1], [0], [0], [1], [0, 0, 1, 1], [], []>, precision = #tpu.contract_precision<fp32>} : vector<32x64xf32>, vector<64x256xf32>, vector<32x256xf32> -> vector<32x256xf32>
    %38 = arith.mulf %31, %37 : vector<32x256xf32>
    %39 = vector.extract_strided_slice %3 {offsets = [5, 0], sizes = [1, 256], strides = [1, 1]} : vector<8x256xi32> to vector<1x256xi32>
    %40 = vector.broadcast %39 : vector<1x256xi32> to vector<64x256xi32>
    %41 = arith.cmpi eq, %40, %4 : vector<64x256xi32>
    %42 = arith.extui %41 : vector<64x256xi1> to vector<64x256xi32>
    %43 = arith.sitofp %42 : vector<64x256xi32> to vector<64x256xf32>
    %cst_9 = arith.constant dense<0.000000e+00> : vector<32x256xf32>
    %44 = tpu.matmul %0, %43, %cst_9 {dimension_numbers = #tpu.dot_dimension_numbers<[1], [0], [0], [1], [0, 0, 1, 1], [], []>, precision = #tpu.contract_precision<fp32>} : vector<32x64xf32>, vector<64x256xf32>, vector<32x256xf32> -> vector<32x256xf32>
    %45 = arith.mulf %38, %44 : vector<32x256xf32>
    %46 = vector.extract_strided_slice %3 {offsets = [6, 0], sizes = [1, 256], strides = [1, 1]} : vector<8x256xi32> to vector<1x256xi32>
    %47 = vector.broadcast %46 : vector<1x256xi32> to vector<64x256xi32>
    %48 = arith.cmpi eq, %47, %4 : vector<64x256xi32>
    %49 = arith.extui %48 : vector<64x256xi1> to vector<64x256xi32>
    %50 = arith.sitofp %49 : vector<64x256xi32> to vector<64x256xf32>
    %cst_10 = arith.constant dense<0.000000e+00> : vector<32x256xf32>
    %51 = tpu.matmul %0, %50, %cst_10 {dimension_numbers = #tpu.dot_dimension_numbers<[1], [0], [0], [1], [0, 0, 1, 1], [], []>, precision = #tpu.contract_precision<fp32>} : vector<32x64xf32>, vector<64x256xf32>, vector<32x256xf32> -> vector<32x256xf32>
    %52 = arith.mulf %45, %51 : vector<32x256xf32>
    %53 = vector.extract_strided_slice %3 {offsets = [7, 0], sizes = [1, 256], strides = [1, 1]} : vector<8x256xi32> to vector<1x256xi32>
    %54 = vector.broadcast %53 : vector<1x256xi32> to vector<64x256xi32>
    %55 = arith.cmpi eq, %54, %4 : vector<64x256xi32>
    %56 = arith.extui %55 : vector<64x256xi1> to vector<64x256xi32>
    %57 = arith.sitofp %56 : vector<64x256xi32> to vector<64x256xf32>
    %cst_11 = arith.constant dense<0.000000e+00> : vector<32x256xf32>
    %58 = tpu.matmul %0, %57, %cst_11 {dimension_numbers = #tpu.dot_dimension_numbers<[1], [0], [0], [1], [0, 0, 1, 1], [], []>, precision = #tpu.contract_precision<fp32>} : vector<32x64xf32>, vector<64x256xf32>, vector<32x256xf32> -> vector<32x256xf32>
    %59 = arith.mulf %52, %58 : vector<32x256xf32>
    %60 = vector.extract_strided_slice %59 {offsets = [0, 0], sizes = [32, 128], strides = [1, 1]} : vector<32x256xf32> to vector<32x128xf32>
    %61 = vector.extract_strided_slice %59 {offsets = [0, 128], sizes = [32, 128], strides = [1, 1]} : vector<32x256xf32> to vector<32x128xf32>
    %62 = arith.mulf %60, %61 : vector<32x128xf32>
    %63 = arith.subf %60, %61 : vector<32x128xf32>
    %64 = math.absf %63 : vector<32x128xf32>
    %65 = tpu.concatenate %60, %61, %62, %64 in 0 : vector<32x128xf32>, vector<32x128xf32>, vector<32x128xf32>, vector<32x128xf32> -> vector<128x128xf32>
    %c0_12 = arith.constant 0 : index
    %c0_13 = arith.constant 0 : index
    %66 = vector.load %arg4[%c0_12, %c0_13] : memref<32x128xf32, #tpu.memory_space<vmem>>, vector<32x128xf32>
    %cst_14 = arith.constant dense<0.000000e+00> : vector<32x128xf32>
    %67 = tpu.matmul %66, %65, %cst_14 {dimension_numbers = #tpu.dot_dimension_numbers<[1], [0], [0], [1], [0, 0, 1, 1], [], []>, precision = #tpu.contract_precision<fp32>} : vector<32x128xf32>, vector<128x128xf32>, vector<32x128xf32> -> vector<32x128xf32>
    %c0_15 = arith.constant 0 : index
    %c0_16 = arith.constant 0 : index
    %68 = vector.load %arg5[%c0_15, %c0_16] : memref<32x1xf32, #tpu.memory_space<vmem>>, vector<32x1xf32>
    %69 = vector.broadcast %68 : vector<32x1xf32> to vector<32x128xf32>
    %70 = arith.addf %67, %69 : vector<32x128xf32>
    %71 = arith.negf %70 : vector<32x128xf32>
    %72 = math.exp %71 : vector<32x128xf32>
    %cst_17 = arith.constant 1.000000e+00 : f32
    %73 = vector.broadcast %cst_17 : f32 to vector<32x128xf32>
    %74 = arith.addf %73, %72 : vector<32x128xf32>
    %75 = arith.divf %73, %74 : vector<32x128xf32>
    %c0_18 = arith.constant 0 : index
    %c0_19 = arith.constant 0 : index
    %76 = vector.load %arg6[%c0_18, %c0_19] : memref<8x32xf32, #tpu.memory_space<vmem>>, vector<8x32xf32>
    %cst_20 = arith.constant dense<0.000000e+00> : vector<8x128xf32>
    %77 = tpu.matmul %76, %75, %cst_20 {dimension_numbers = #tpu.dot_dimension_numbers<[1], [0], [0], [1], [0, 0, 1, 1], [], []>, precision = #tpu.contract_precision<fp32>} : vector<8x32xf32>, vector<32x128xf32>, vector<8x128xf32> -> vector<8x128xf32>
    %c0_21 = arith.constant 0 : index
    %c0_22 = arith.constant 0 : index
    %78 = vector.load %arg7[%c0_21, %c0_22] : memref<8x1xf32, #tpu.memory_space<vmem>>, vector<8x1xf32>
    %79 = vector.broadcast %78 : vector<8x1xf32> to vector<8x128xf32>
    %80 = arith.addf %77, %79 : vector<8x128xf32>
    %cst_23 = arith.constant dense<0xFF800000> : vector<128xf32>
    %81 = vector.multi_reduction <maximumf>, %80, %cst_23 [0] : vector<8x128xf32> to vector<128xf32>
    %82 = vector.shape_cast %81 : vector<128xf32> to vector<1x128xf32>
    %83 = vector.broadcast %82 : vector<1x128xf32> to vector<8x128xf32>
    %84 = arith.subf %80, %83 : vector<8x128xf32>
    %85 = math.exp %84 : vector<8x128xf32>
    %cst_24 = arith.constant dense<0.000000e+00> : vector<128xf32>
    %86 = vector.multi_reduction <add>, %85, %cst_24 [0] : vector<8x128xf32> to vector<128xf32>
    %87 = vector.shape_cast %86 : vector<128xf32> to vector<1x128xf32>
    %88 = math.log %87 : vector<1x128xf32>
    %89 = vector.broadcast %88 : vector<1x128xf32> to vector<8x128xf32>
    %90 = arith.subf %84, %89 : vector<8x128xf32>
    %c0_25 = arith.constant 0 : index
    %c0_26 = arith.constant 0 : index
    %91 = vector.load %arg8[%c0_25, %c0_26] : memref<8x128xf32, #tpu.memory_space<vmem>>, vector<8x128xf32>
    tpu.vector_store %arg8[%c0_25, %c0_26], %90 {strides = array<i32>} : memref<8x128xf32, #tpu.memory_space<vmem>>, vector<8x128xf32>,
    return
  }
  func.func @transform_0(%arg0: i32) -> (i32, i32) {
    %c0_i32 = arith.constant 0 : i32
    %c0_i32_0 = arith.constant 0 : i32
    return %c0_i32, %arg0 : i32, i32
  }
  func.func @transform_1(%arg0: i32) -> (i32, i32) {
    %c0_i32 = arith.constant 0 : i32
    %c0_i32_0 = arith.constant 0 : i32
    return %c0_i32, %arg0 : i32, i32
  }
  func.func @transform_2(%arg0: i32) -> (i32, i32) {
    %c0_i32 = arith.constant 0 : i32
    %c0_i32_0 = arith.constant 0 : i32
    %c0_i32_1 = arith.constant 0 : i32
    return %c0_i32, %c0_i32_0 : i32, i32
  }
  func.func @transform_3(%arg0: i32) -> (i32, i32) {
    %c0_i32 = arith.constant 0 : i32
    %c0_i32_0 = arith.constant 0 : i32
    %c0_i32_1 = arith.constant 0 : i32
    return %c0_i32, %c0_i32_0 : i32, i32
  }
  func.func @transform_4(%arg0: i32) -> (i32, i32) {
    %c0_i32 = arith.constant 0 : i32
    %c0_i32_0 = arith.constant 0 : i32
    %c0_i32_1 = arith.constant 0 : i32
    return %c0_i32, %c0_i32_0 : i32, i32
  }
  func.func @transform_5(%arg0: i32) -> (i32, i32) {
    %c0_i32 = arith.constant 0 : i32
    %c0_i32_0 = arith.constant 0 : i32
    %c0_i32_1 = arith.constant 0 : i32
    return %c0_i32, %c0_i32_0 : i32, i32
  }
  func.func @transform_6(%arg0: i32) -> (i32, i32) {
    %c0_i32 = arith.constant 0 : i32
    %c0_i32_0 = arith.constant 0 : i32
    %c0_i32_1 = arith.constant 0 : i32
    return %c0_i32, %c0_i32_0 : i32, i32
  }
  func.func @transform_7(%arg0: i32) -> (i32, i32) {
    %c0_i32 = arith.constant 0 : i32
    %c0_i32_0 = arith.constant 0 : i32
    return %c0_i32, %arg0 : i32, i32
  }
}

</mosaic_0001>

<llo_original>
// kernel: vecsim_linear_forward.1
$region0: #{vecsim_linear_forward.1}
  #allocation0 [shape = 'u32[]', space=smem, size = 0x4, offset = 0x4, fixed_abs, tag = 'smem constant byte address 0x4 - core index']
  #allocation1 [shape = 'u32[144,128]{1,0:T(1,128)}', space=vmem, size = 0x12000, scoped, tag = 'internal scratch']
  %s0 = inlined_call_operand.vmem [shape: s32[8,256], index: 0, kind: input, shape index: {}]
  %s1 = inlined_call_operand.vmem [shape: s32[8,256], index: 1, kind: input, shape index: {}]
  %s2 = inlined_call_operand.vmem [shape: f32[32,64], index: 2, kind: input, shape index: {}]
  %s3 = inlined_call_operand.vmem [shape: f32[32,128], index: 3, kind: input, shape index: {}]
  %s4 = inlined_call_operand.vmem [shape: f32[32,1], index: 4, kind: input, shape index: {}]
  %s5 = inlined_call_operand.vmem [shape: f32[8,32], index: 5, kind: input, shape index: {}]
  %s6 = inlined_call_operand.vmem [shape: f32[8,1], index: 6, kind: input, shape index: {}]
  %s7 = inlined_call_operand.vmem [shape: f32[8,256], index: 7, kind: output, shape index: {}]
  %s8 = sld [smem:[#allocation0]]
  $region61: #{vecsim_linear_forward.1} parent=0
    _
  %s10 = ssub.s32 1, %s8
  %s11 = scalar_select 0, %s10, %s8
  loop: start=0, step=1, limit=4
  $region2: #{vecsim_linear_forward.1} parent=0 // loop_pre_header
    _
  $region3: #{vecsim_linear_forward.1} parent=0 // loop_header
    %s13 = sphi 0, %s17
    %p14 = scmp.ge.s32.totalorder %s13, 4
    %s23 = sphi 0, %s25
    %s26 = sphi 0, %s23
    %s27 = sphi 0, %s26
    %s43 = sphi 0, %s27
    %s49 = sphi 0, %s51
    %s52 = sphi 0, %s49
    %s53 = sphi 0, %s52
    %s69 = sphi 0, %s53
    %s73 = sphi 0, %s73
    %s75 = sphi 0, %s73
    %s76 = sphi 0, %s75
    %s90 = sphi 0, %s76
    %s94 = sphi 0, %s94
    %s96 = sphi 0, %s94
    %s97 = sphi 0, %s96
    %s111 = sphi 0, %s97
    %s115 = sphi 0, %s115
    %s117 = sphi 0, %s115
    %s118 = sphi 0, %s117
    %s132 = sphi 0, %s118
    %s136 = sphi 0, %s136
    %s138 = sphi 0, %s136
    %s139 = sphi 0, %s138
    %s153 = sphi 0, %s139
    %s157 = sphi 0, %s157
    %s159 = sphi 0, %s157
    %s160 = sphi 0, %s159
    %s174 = sphi 0, %s160
    %s180 = sphi 0, %s182
    %s183 = sphi 0, %s180
    %s184 = sphi 0, %s183
    %s200 = sphi 0, %s184
  $region4: #{vecsim_linear_forward.1} parent=0 // loop_header_branch
    %16 = sbr.rel (%p14) target = $region8
  $region5: #{vecsim_linear_forward.1} parent=0 // loop_body
    %s18 = ssub.s32 %s13, 1
    %s19 = ssub.s32 %s13, 2
    %s20 = sadd.s32 %s13, 1
    %s21 = ssub.s32 %s13, %s20
    %p22 = scmp.eq.s32.totalorder %s21, 0
    %s24 = sadd.s32 %s23, 1
    %s25 = scalar_select %p22, %s23, %s24
    %p28 = pneg %p22
    %p29 = scmp.eq.s32.totalorder %s13, 1
    %p30 = por %p28, %p29
    %p31 = scmp.ne.s32.totalorder %s23, %s26
    %p32 = scmp.eq.s32.totalorder %s13, 0
    %p33 = por %p31, %p32
    %p34 = scmp.ne.s32.totalorder %s23, %s26
    %p35 = scmp.eq.s32.totalorder %s18, 1
    %p36 = por %p34, %p35
    %p37 = scmp.ne.s32.totalorder %s26, %s27
    %p38 = scmp.eq.s32.totalorder %s18, 0
    %p39 = por %p37, %p38
    %p40 = scmp.ne.s32.totalorder %s26, %s27
    %p41 = scmp.eq.s32.totalorder %s19, 1
    %p42 = por %p40, %p41
    %p44 = scmp.ne.s32.totalorder %s27, %s43
    %p45 = scmp.eq.s32.totalorder %s19, 0
    %p46 = por %p44, %p45
    %s47 = ssub.s32 %s13, %s20
    %p48 = scmp.eq.s32.totalorder %s47, 0
    %s50 = sadd.s32 %s49, 1
    %s51 = scalar_select %p48, %s49, %s50
    %p54 = pneg %p48
    %p55 = scmp.eq.s32.totalorder %s13, 1
    %p56 = por %p54, %p55
    %p57 = scmp.ne.s32.totalorder %s49, %s52
    %p58 = scmp.eq.s32.totalorder %s13, 0
    %p59 = por %p57, %p58
    %p60 = scmp.ne.s32.totalorder %s49, %s52
    %p61 = scmp.eq.s32.totalorder %s18, 1
    %p62 = por %p60, %p61
    %p63 = scmp.ne.s32.totalorder %s52, %s53
    %p64 = scmp.eq.s32.totalorder %s18, 0
    %p65 = por %p63, %p64
    %p66 = scmp.ne.s32.totalorder %s52, %s53
    %p67 = scmp.eq.s32.totalorder %s19, 1
    %p68 = por %p66, %p67
    %p70 = scmp.ne.s32.totalorder %s53, %s69
    %p71 = scmp.eq.s32.totalorder %s19, 0
    %p72 = por %p70, %p71
    %s74 = sadd.s32 %s73, 1
    %p77 = scmp.eq.s32.totalorder %s13, 1
    %p78 = scmp.ne.s32.totalorder %s73, %s75
    %p79 = scmp.eq.s32.totalorder %s13, 0
    %p80 = por %p78, %p79
    %p81 = scmp.ne.s32.totalorder %s73, %s75
    %p82 = scmp.eq.s32.totalorder %s18, 1
    %p83 = por %p81, %p82
    %p84 = scmp.ne.s32.totalorder %s75, %s76
    %p85 = scmp.eq.s32.totalorder %s18, 0
    %p86 = por %p84, %p85
    %p87 = scmp.ne.s32.totalorder %s75, %s76
    %p88 = scmp.eq.s32.totalorder %s19, 1
    %p89 = por %p87, %p88
    %p91 = scmp.ne.s32.totalorder %s76, %s90
    %p92 = scmp.eq.s32.totalorder %s19, 0
    %p93 = por %p91, %p92
    %s95 = sadd.s32 %s94, 1
    %p98 = scmp.eq.s32.totalorder %s13, 1
    %p99 = scmp.ne.s32.totalorder %s94, %s96
    %p100 = scmp.eq.s32.totalorder %s13, 0
    %p101 = por %p99, %p100
    %p102 = scmp.ne.s32.totalorder %s94, %s96
    %p103 = scmp.eq.s32.totalorder %s18, 1
    %p104 = por %p102, %p103
    %p105 = scmp.ne.s32.totalorder %s96, %s97
    %p106 = scmp.eq.s32.totalorder %s18, 0
    %p107 = por %p105, %p106
    %p108 = scmp.ne.s32.totalorder %s96, %s97
    %p109 = scmp.eq.s32.totalorder %s19, 1
    %p110 = por %p108, %p109
    %p112 = scmp.ne.s32.totalorder %s97, %s111
    %p113 = scmp.eq.s32.totalorder %s19, 0
    %p114 = por %p112, %p113
    %s116 = sadd.s32 %s115, 1
    %p119 = scmp.eq.s32.totalorder %s13, 1
    %p120 = scmp.ne.s32.totalorder %s115, %s117
    %p121 = scmp.eq.s32.totalorder %s13, 0
    %p122 = por %p120, %p121
    %p123 = scmp.ne.s32.totalorder %s115, %s117
    %p124 = scmp.eq.s32.totalorder %s18, 1
    %p125 = por %p123, %p124
    %p126 = scmp.ne.s32.totalorder %s117, %s118
    %p127 = scmp.eq.s32.totalorder %s18, 0
    %p128 = por %p126, %p127
    %p129 = scmp.ne.s32.totalorder %s117, %s118
    %p130 = scmp.eq.s32.totalorder %s19, 1
    %p131 = por %p129, %p130
    %p133 = scmp.ne.s32.totalorder %s118, %s132
    %p134 = scmp.eq.s32.totalorder %s19, 0
    %p135 = por %p133, %p134
    %s137 = sadd.s32 %s136, 1
    %p140 = scmp.eq.s32.totalorder %s13, 1
    %p141 = scmp.ne.s32.totalorder %s136, %s138
    %p142 = scmp.eq.s32.totalorder %s13, 0
    %p143 = por %p141, %p142
    %p144 = scmp.ne.s32.totalorder %s136, %s138
    %p145 = scmp.eq.s32.totalorder %s18, 1
    %p146 = por %p144, %p145
    %p147 = scmp.ne.s32.totalorder %s138, %s139
    %p148 = scmp.eq.s32.totalorder %s18, 0
    %p149 = por %p147, %p148
    %p150 = scmp.ne.s32.totalorder %s138, %s139
    %p151 = scmp.eq.s32.totalorder %s19, 1
    %p152 = por %p150, %p151
    %p154 = scmp.ne.s32.totalorder %s139, %s153
    %p155 = scmp.eq.s32.totalorder %s19, 0
    %p156 = por %p154, %p155
    %s158 = sadd.s32 %s157, 1
    %p161 = scmp.eq.s32.totalorder %s13, 1
    %p162 = scmp.ne.s32.totalorder %s157, %s159
    %p163 = scmp.eq.s32.totalorder %s13, 0
    %p164 = por %p162, %p163
    %p165 = scmp.ne.s32.totalorder %s157, %s159
    %p166 = scmp.eq.s32.totalorder %s18, 1
    %p167 = por %p165, %p166
    %p168 = scmp.ne.s32.totalorder %s159, %s160
    %p169 = scmp.eq.s32.totalorder %s18, 0
    %p170 = por %p168, %p169
    %p171 = scmp.ne.s32.totalorder %s159, %s160
    %p172 = scmp.eq.s32.totalorder %s19, 1
    %p173 = por %p171, %p172
    %p175 = scmp.ne.s32.totalorder %s160, %s174
    %p176 = scmp.eq.s32.totalorder %s19, 0
    %p177 = por %p175, %p176
    %s178 = ssub.s32 %s13, %s20
    %p179 = scmp.eq.s32.totalorder %s178, 0
    %s181 = sadd.s32 %s180, 1
    %s182 = scalar_select %p179, %s180, %s181
    %p185 = pneg %p179
    %p186 = scmp.eq.s32.totalorder %s13, 1
    %p187 = por %p185, %p186
    %p188 = scmp.ne.s32.totalorder %s180, %s183
    %p189 = scmp.eq.s32.totalorder %s13, 0
    %p190 = por %p188, %p189
    %p191 = scmp.ne.s32.totalorder %s180, %s183
    %p192 = scmp.eq.s32.totalorder %s18, 1
    %p193 = por %p191, %p192
    %p194 = scmp.ne.s32.totalorder %s183, %s184
    %p195 = scmp.eq.s32.totalorder %s18, 0
    %p196 = por %p194, %p195
    %p197 = scmp.ne.s32.totalorder %s183, %s184
    %p198 = scmp.eq.s32.totalorder %s19, 1
    %p199 = por %p197, %p198
    %p201 = scmp.ne.s32.totalorder %s184, %s200
    %p202 = scmp.eq.s32.totalorder %s19, 0
    %p203 = por %p201, %p202
    %p204 = scmp.le.s32.totalorder 1, %s13
    %p205 = scmp.lt.s32.totalorder %s13, 3
    %p206 = pnand %p204, %p205
    %p207 = pneg %p206
    // Predicated region
    $region9: #{vecsim_linear_forward.1} parent=5 // pred_check
      _
    $region10: #{vecsim_linear_forward.1} parent=5 // pred_check_branch
      %209 = sbr.rel (%p206) target = $region12
    $region11: #{vecsim_linear_forward.1} parent=5 // pred_region
      %s210 = ssub.s32 %s13, 1
      // Predicated region
      $region13: #{vecsim_linear_forward.1} parent=11 // pred_check
        %p211 = pneg %p86
      $region14: #{vecsim_linear_forward.1} parent=11 // pred_check_branch
        %213 = sbr.rel (%p211) target = $region16
      $region15: #{vecsim_linear_forward.1} parent=11 // pred_region
        _
      $region16: #{vecsim_linear_forward.1} parent=11 // pred_fallthru
        _
      // Predicated region
      $region17: #{vecsim_linear_forward.1} parent=11 // pred_check
        %p214 = pneg %p107
      $region18: #{vecsim_linear_forward.1} parent=11 // pred_check_branch
        %216 = sbr.rel (%p214) target = $region20
      $region19: #{vecsim_linear_forward.1} parent=11 // pred_region
        _
      $region20: #{vecsim_linear_forward.1} parent=11 // pred_fallthru
        _
      // Predicated region
      $region21: #{vecsim_linear_forward.1} parent=11 // pred_check
        %p217 = pneg %p128
      $region22: #{vecsim_linear_forward.1} parent=11 // pred_check_branch
        %219 = sbr.rel (%p217) target = $region24
      $region23: #{vecsim_linear_forward.1} parent=11 // pred_region
        _
      $region24: #{vecsim_linear_forward.1} parent=11 // pred_fallthru
        _
      // Predicated region
      $region25: #{vecsim_linear_forward.1} parent=11 // pred_check
        %p220 = pneg %p149
      $region26: #{vecsim_linear_forward.1} parent=11 // pred_check_branch
        %222 = sbr.rel (%p220) target = $region28
      $region27: #{vecsim_linear_forward.1} parent=11 // pred_region
        _
      $region28: #{vecsim_linear_forward.1} parent=11 // pred_fallthru
        _
      // Predicated region
      $region29: #{vecsim_linear_forward.1} parent=11 // pred_check
        %p223 = pneg %p170
      $region30: #{vecsim_linear_forward.1} parent=11 // pred_check_branch
        %225 = sbr.rel (%p223) target = $region32
      $region31: #{vecsim_linear_forward.1} parent=11 // pred_region
        _
      $region32: #{vecsim_linear_forward.1} parent=11 // pred_fallthru
        _
    $region12: #{vecsim_linear_forward.1} parent=5 // pred_fallthru
      _
    %p226 = scmp.lt.s32.totalorder %s13, 2
    // Predicated region
    $region33: #{vecsim_linear_forward.1} parent=5 // pred_check
      %p227 = pneg %p226
    $region34: #{vecsim_linear_forward.1} parent=5 // pred_check_branch
      %229 = sbr.rel (%p227) target = $region36
    $region35: #{vecsim_linear_forward.1} parent=5 // pred_region
      // Predicated region
      $region37: #{vecsim_linear_forward.1} parent=35 // pred_check
        %p230 = pneg %p33
      $region38: #{vecsim_linear_forward.1} parent=35 // pred_check_branch
        %232 = sbr.rel (%p230) target = $region40
      $region39: #{vecsim_linear_forward.1} parent=35 // pred_region
        %p233 = scmp.lt.s32.totalorder %s13, 1
        %s234 = scalar_select %p233, %s13, 1
        %s235 = smul.addr %s234, 8
        %s236 = scalar_lea.vmem %s0, %s235
      $region40: #{vecsim_linear_forward.1} parent=35 // pred_fallthru
        _
      // Predicated region
      $region41: #{vecsim_linear_forward.1} parent=35 // pred_check
        %p237 = pneg %p59
      $region42: #{vecsim_linear_forward.1} parent=35 // pred_check_branch
        %239 = sbr.rel (%p237) target = $region44
      $region43: #{vecsim_linear_forward.1} parent=35 // pred_region
        %p240 = scmp.lt.s32.totalorder %s13, 1
        %s241 = scalar_select %p240, %s13, 1
        %s242 = smul.addr %s241, 8
        %s243 = scalar_lea.vmem %s1, %s242
      $region44: #{vecsim_linear_forward.1} parent=35 // pred_fallthru
        _
    $region36: #{vecsim_linear_forward.1} parent=5 // pred_fallthru
      _
    %p244 = scmp.le.s32.totalorder 1, %s13
    %p245 = scmp.lt.s32.totalorder %s13, 3
    %p246 = pnand %p244, %p245
    %p247 = pneg %p246
    // Predicated region
    $region45: #{vecsim_linear_forward.1} parent=5 // pred_check
      _
    $region46: #{vecsim_linear_forward.1} parent=5 // pred_check_branch
      %249 = sbr.rel (%p246) target = $region48
    $region47: #{vecsim_linear_forward.1} parent=5 // pred_region
      %s250 = ssub.s32 %s13, 1
      %p251 = scmp.lt.s32.totalorder %s18, 1
      %s252 = scalar_select %p251, %s18, 1
      %s253 = smul.addr %s252, 8
      %s254 = scalar_lea.vmem %s0, %s253
      %p255 = pneg %p39
      %p256 = pneg %p36
      %p257 = scmp.lt.s32.totalorder %s18, 1
      %s258 = scalar_select %p257, %s18, 1
      %s259 = smul.addr %s258, 8
      %s260 = scalar_lea.vmem %s1, %s259
      %p261 = pneg %p65
      %p262 = pneg %p62
      %p263 = pneg %p86
      %p264 = pneg %p83
      %p265 = pneg %p107
      %p266 = pneg %p104
      %p267 = pneg %p128
      %p268 = pneg %p125
      %p269 = pneg %p149
      %p270 = pneg %p146
      %p271 = pneg %p170
      %p272 = pneg %p167
      %p273 = pneg %p196
      %p274 = pneg %p193
      %p275 = scmp.lt.s32.totalorder %s18, 1
      %s276 = scalar_select %p275, %s18, 1
      %s277 = smul.addr %s276, 8
      %s278 = scalar_lea.vmem %s7, %s277
      %p279 = scmp.lt.s32.totalorder %s18, 1
      %s280 = scalar_select %p279, %s18, 1
      %s281 = smul.addr %s280, 8
      %s282 = scalar_lea.vmem %s0, %s281
      %p283 = scmp.lt.s32.totalorder %s18, 1
      %s284 = scalar_select %p283, %s18, 1
      %s285 = smul.addr %s284, 8
      %s286 = scalar_lea.vmem %s1, %s285
      %p287 = scmp.lt.s32.totalorder %s18, 1
      %s288 = scalar_select %p287, %s18, 1
      %s289 = smul.addr %s288, 8
      %s290 = scalar_lea.vmem %s7, %s289
      %v291 = vld [vmem:[%s2] sm:$0xff]
      %v292 = vld [vmem:[%s2 + $0x8] sm:$0xff]
      %v293 = vld [vmem:[%s2 + $0x10] sm:$0xff]
      %v294 = vld [vmem:[%s2 + $0x18] sm:$0xff]
      %v295 = vld [vmem:[%s282] sm:$0xff]
      %v296 = vld [vmem:[%s286] sm:$0xff]
      %v297 = vlaneseq
      %v298 = vshrl.u32 %v297, 7
      %v299 = vadd.s32 %v298, 8
      %v300 = vadd.s32 %v298, 16
      %v301 = vadd.s32 %v298, 24
      %v302 = vadd.s32 %v298, 32
      %v303 = vadd.s32 %v298, 40
      %v304 = vadd.s32 %v298, 48
      %v305 = vadd.s32 %v298, 56
      %v306 = vlaneseq
      %v307 = vshrl.u32 %v306, 7
      %v308 = vsub.s32 0, %v307
      %v309 = vrot.slane %v295, %v308
      %v310 = vlaneseq
      %v311 = vshrl.u32 %v310, 7
      %v312 = vsub.s32 0, %v311
      %v313 = vrot.slane %v296, %v312
      %vm314 = vcmp.eq.s32.totalorder %v309, %v298
      %vm315 = vcmp.eq.s32.totalorder %v313, %v298
      %vm316 = vcmp.eq.s32.totalorder %v309, %v299
      %vm317 = vcmp.eq.s32.totalorder %v313, %v299
      %vm318 = vcmp.eq.s32.totalorder %v309, %v300
      %vm319 = vcmp.eq.s32.totalorder %v313, %v300
      %vm320 = vcmp.eq.s32.totalorder %v309, %v301
      %vm321 = vcmp.eq.s32.totalorder %v313, %v301
      %vm322 = vcmp.eq.s32.totalorder %v309, %v302
      %vm323 = vcmp.eq.s32.totalorder %v313, %v302
      %vm324 = vcmp.eq.s32.totalorder %v309, %v303
      %vm325 = vcmp.eq.s32.totalorder %v313, %v303
      %vm326 = vcmp.eq.s32.totalorder %v309, %v304
      %vm327 = vcmp.eq.s32.totalorder %v313, %v304
      %vm328 = vcmp.eq.s32.totalorder %v309, %v305
      %vm329 = vcmp.eq.s32.totalorder %v313, %v305
      %v330 = vsel %vm314, 1, 0
      %v331 = vsel %vm315, 1, 0
      %v332 = vsel %vm316, 1, 0
      %v333 = vsel %vm317, 1, 0
      %v334 = vsel %vm318, 1, 0
      %v335 = vsel %vm319, 1, 0
      %v336 = vsel %vm320, 1, 0
      %v337 = vsel %vm321, 1, 0
      %v338 = vsel %vm322, 1, 0
      %v339 = vsel %vm323, 1, 0
      %v340 = vsel %vm324, 1, 0
      %v341 = vsel %vm325, 1, 0
      %v342 = vsel %vm326, 1, 0
      %v343 = vsel %vm327, 1, 0
      %v344 = vsel %vm328, 1, 0
      %v345 = vsel %vm329, 1, 0
      %v346 = vcvt.s32.f32 %v330
      %v347 = vcvt.s32.f32 %v331
      %v348 = vcvt.s32.f32 %v332
      %v349 = vcvt.s32.f32 %v333
      %v350 = vcvt.s32.f32 %v334
      %v351 = vcvt.s32.f32 %v335
      %v352 = vcvt.s32.f32 %v336
      %v353 = vcvt.s32.f32 %v337
      %v354 = vcvt.s32.f32 %v338
      %v355 = vcvt.s32.f32 %v339
      %v356 = vcvt.s32.f32 %v340
      %v357 = vcvt.s32.f32 %v341
      %v358 = vcvt.s32.f32 %v342
      %v359 = vcvt.s32.f32 %v343
      %v360 = vcvt.s32.f32 %v344
      %v361 = vcvt.s32.f32 %v345
      %vm362 = vcmask 523264
      %v364 = vsel %vm362, %v291, 0
      %v367 = vsel %vm362, %v292, 0
      %v370 = vsel %vm362, %v293, 0
      %v373 = vsel %vm362, %v294, 0
      %v375 = vand.u32 %v347, 4294901760
      %376 = vmatprep.subr.mxu0 %v375
      %v377 = vand.u32 %v346, 4294901760
      %378 = vmatpush1.msra.mxu0 %v377
      %v379 = vand.u32 %v349, 4294901760
      %380 = vmatprep.subr.mxu0 %v379
      %v381 = vand.u32 %v348, 4294901760
      %382 = vmatpush1.msra.mxu0 %v381
      %v383 = vand.u32 %v351, 4294901760
      %384 = vmatprep.subr.mxu0 %v383
      %v385 = vand.u32 %v350, 4294901760
      %386 = vmatpush1.msra.mxu0 %v385
      %v387 = vand.u32 %v353, 4294901760
      %388 = vmatprep.subr.mxu0 %v387
      %v389 = vand.u32 %v352, 4294901760
      %390 = vmatpush1.msra.mxu0 %v389
      %v391 = vand.u32 %v355, 4294901760
      %392 = vmatprep.subr.mxu0 %v391
      %v393 = vand.u32 %v354, 4294901760
      %394 = vmatpush1.msra.mxu0 %v393
      %v395 = vand.u32 %v357, 4294901760
      %396 = vmatprep.subr.mxu0 %v395
      %v397 = vand.u32 %v356, 4294901760
      %398 = vmatpush1.msra.mxu0 %v397
      %v399 = vand.u32 %v359, 4294901760
      %400 = vmatprep.subr.mxu0 %v399
      %v401 = vand.u32 %v358, 4294901760
      %402 = vmatpush1.msra.mxu0 %v401
      %v403 = vand.u32 %v361, 4294901760
      %404 = vmatprep.subr.mxu0 %v403
      %v405 = vand.u32 %v360, 4294901760
      %406 = vmatpush1.msra.mxu0 %v405
      %407 = vmatprep.subr.mxu0 0.0
      %408 = vmatpush1.msra.mxu0 0.0
      %409 = vmatprep.subr.mxu0 0.0
      %410 = vmatpush1.msra.mxu0 0.0
      %411 = vmatprep.subr.mxu0 0.0
      %412 = vmatpush1.msra.mxu0 0.0
      %413 = vmatprep.subr.mxu0 0.0
      %414 = vmatpush1.msra.mxu0 0.0
      %415 = vmatprep.subr.mxu0 0.0
      %416 = vmatpush1.msra.mxu0 0.0
      %417 = vmatprep.subr.mxu0 0.0
      %418 = vmatpush1.msra.mxu0 0.0
      %419 = vmatprep.subr.mxu0 0.0
      %420 = vmatpush1.msra.mxu0 0.0
      %421 = vmatprep.subr.mxu0 0.0
      %422 = vmatpush1.msra.mxu0 0.0
      %423 = vmatprep.subr.mxu0 0.0
      %424 = vmatpush1.msra.mxu0 0.0
      %425 = vmatprep.subr.mxu0 0.0
      %426 = vmatpush1.msra.mxu0 0.0
      %427 = vmatprep.subr.mxu0 0.0
      %428 = vmatpush1.msra.mxu0 0.0
      %429 = vmatprep.subr.mxu0 0.0
      %430 = vmatpush1.msra.mxu0 0.0
      %431 = vmatprep.subr.mxu0 0.0
      %432 = vmatpush1.msra.mxu0 0.0
      %433 = vmatprep.subr.mxu0 0.0
      %434 = vmatpush1.msra.mxu0 0.0
      %435 = vmatprep.subr.mxu0 0.0
      %436 = vmatpush1.msra.mxu0 0.0
      %437 = vmatprep.subr.mxu0 0.0
      %438 = vmatpush1.msra.mxu0 0.0
      %439 = vmatprep.subr.mxu0 0.0
      %440 = vmatpush1.msra.mxu0 0.0
      %441 = vmatprep.subr.mxu0 0.0
      %442 = vmatpush1.msra.mxu0 0.0
      %443 = vmatprep.subr.mxu0 0.0
      %444 = vmatpush1.msra.mxu0 0.0
      %445 = vmatprep.subr.mxu0 0.0
      %446 = vmatpush1.msra.mxu0 0.0
      %447 = vmatprep.subr.mxu0 0.0
      %448 = vmatpush1.msra.mxu0 0.0
      %449 = vmatprep.subr.mxu0 0.0
      %450 = vmatpush1.msra.mxu0 0.0
      %451 = vmatprep.subr.mxu0 0.0
      %452 = vmatpush1.msra.mxu0 0.0
      %453 = vmatprep.subr.mxu0 0.0
      %454 = vmatpush1.msra.mxu0 0.0
      %455 = vmatprep.mubr.f32.mxu0 0.0
      %v456 = vand.u32 %v364, 4294901760
      %v457 = vsub.f32 %v364, %v456
      %v458 = vand.u32 %v457, 4294901760
      %v459 = vsub.f32 %v457, %v458
      %v460 = vand.u32 %v459, 4294901760
      %461 = vmatmul.mubr.f32.gmra.mrb[0].mxu0 %v460
      %v462 = vpop.f32.mrb[0].mxu0
      %v463 = vadd.f32 0.0, %v462
      %v464 = vpop.f32.mrb[0].mxu0
      %v465 = vadd.f32 0.0, %v464
      %466 = vmatprep.mubr.f32.mxu0 0.0
      %v467 = vand.u32 %v367, 4294901760
      %v468 = vsub.f32 %v367, %v467
      %v469 = vand.u32 %v468, 4294901760
      %v470 = vsub.f32 %v468, %v469
      %v471 = vand.u32 %v470, 4294901760
      %472 = vmatmul.mubr.f32.gmra.mrb[0].mxu0 %v471
      %v473 = vpop.f32.mrb[0].mxu0
      %v474 = vadd.f32 0.0, %v473
      %v475 = vpop.f32.mrb[0].mxu0
      %v476 = vadd.f32 0.0, %v475
      %477 = vmatprep.mubr.f32.mxu0 0.0
      %v478 = vand.u32 %v370, 4294901760
      %v479 = vsub.f32 %v370, %v478
      %v480 = vand.u32 %v479, 4294901760
      %v481 = vsub.f32 %v479, %v480
      %v482 = vand.u32 %v481, 4294901760
      %483 = vmatmul.mubr.f32.gmra.mrb[0].mxu0 %v482
      %v484 = vpop.f32.mrb[0].mxu0
      %v485 = vadd.f32 0.0, %v484
      %v486 = vpop.f32.mrb[0].mxu0
      %v487 = vadd.f32 0.0, %v486
      %488 = vmatprep.mubr.f32.mxu0 0.0
      %v489 = vand.u32 %v373, 4294901760
      %v490 = vsub.f32 %v373, %v489
      %v491 = vand.u32 %v490, 4294901760
      %v492 = vsub.f32 %v490, %v491
      %v493 = vand.u32 %v492, 4294901760
      %494 = vmatmul.mubr.f32.gmra.mrb[0].mxu0 %v493
      %v495 = vpop.f32.mrb[0].mxu0
      %v496 = vadd.f32 0.0, %v495
      %v497 = vpop.f32.mrb[0].mxu0
      %v498 = vadd.f32 0.0, %v497
      %499 = vdwg.mxu0
      %v500 = vand.u32 %v347, 4294901760
      %v501 = vsub.f32 %v347, %v500
      %v502 = vand.u32 %v501, 4294901760
      %v503 = vsub.f32 %v501, %v502
      %v504 = vand.u32 %v503, 4294901760
      %505 = vmatprep.subr.mxu0 %v504
      %v506 = vand.u32 %v346, 4294901760
      %v507 = vsub.f32 %v346, %v506
      %v508 = vand.u32 %v507, 4294901760
      %v509 = vsub.f32 %v507, %v508
      %v510 = vand.u32 %v509, 4294901760
      %511 = vmatpush1.msra.mxu0 %v510
      %v512 = vand.u32 %v349, 4294901760
      %v513 = vsub.f32 %v349, %v512
      %v514 = vand.u32 %v513, 4294901760
      %v515 = vsub.f32 %v513, %v514
      %v516 = vand.u32 %v515, 4294901760
      %517 = vmatprep.subr.mxu0 %v516
      %v518 = vand.u32 %v348, 4294901760
      %v519 = vsub.f32 %v348, %v518
      %v520 = vand.u32 %v519, 4294901760
      %v521 = vsub.f32 %v519, %v520
      %v522 = vand.u32 %v521, 4294901760
      %523 = vmatpush1.msra.mxu0 %v522
      %v524 = vand.u32 %v351, 4294901760
      %v525 = vsub.f32 %v351, %v524
      %v526 = vand.u32 %v525, 4294901760
      %v527 = vsub.f32 %v525, %v526
      %v528 = vand.u32 %v527, 4294901760
      %529 = vmatprep.subr.mxu0 %v528
      %v530 = vand.u32 %v350, 4294901760
      %v531 = vsub.f32 %v350, %v530
      %v532 = vand.u32 %v531, 4294901760
      %v533 = vsub.f32 %v531, %v532
      %v534 = vand.u32 %v533, 4294901760
      %535 = vmatpush1.msra.mxu0 %v534
      %v536 = vand.u32 %v353, 4294901760
      %v537 = vsub.f32 %v353, %v536
      %v538 = vand.u32 %v537, 4294901760
      %v539 = vsub.f32 %v537, %v538
      %v540 = vand.u32 %v539, 4294901760
      %541 = vmatprep.subr.mxu0 %v540
      %v542 = vand.u32 %v352, 4294901760
      %v543 = vsub.f32 %v352, %v542
      %v544 = vand.u32 %v543, 4294901760
      %v545 = vsub.f32 %v543, %v544
      %v546 = vand.u32 %v545, 4294901760
      %547 = vmatpush1.msra.mxu0 %v546
      %v548 = vand.u32 %v355, 4294901760
      %v549 = vsub.f32 %v355, %v548
      %v550 = vand.u32 %v549, 4294901760
      %v551 = vsub.f32 %v549, %v550
      %v552 = vand.u32 %v551, 4294901760
      %553 = vmatprep.subr.mxu0 %v552
      %v554 = vand.u32 %v354, 4294901760
      %v555 = vsub.f32 %v354, %v554
      %v556 = vand.u32 %v555, 4294901760
      %v557 = vsub.f32 %v555, %v556
      %v558 = vand.u32 %v557, 4294901760
      %559 = vmatpush1.msra.mxu0 %v558
      %v560 = vand.u32 %v357, 4294901760
      %v561 = vsub.f32 %v357, %v560
      %v562 = vand.u32 %v561, 4294901760
      %v563 = vsub.f32 %v561, %v562
      %v564 = vand.u32 %v563, 4294901760
      %565 = vmatprep.subr.mxu0 %v564
      %v566 = vand.u32 %v356, 4294901760
      %v567 = vsub.f32 %v356, %v566
      %v568 = vand.u32 %v567, 4294901760
      %v569 = vsub.f32 %v567, %v568
      %v570 = vand.u32 %v569, 4294901760
      %571 = vmatpush1.msra.mxu0 %v570
      %v572 = vand.u32 %v359, 4294901760
      %v573 = vsub.f32 %v359, %v572
      %v574 = vand.u32 %v573, 4294901760
      %v575 = vsub.f32 %v573, %v574
      %v576 = vand.u32 %v575, 4294901760
      %577 = vmatprep.subr.mxu0 %v576
      %v578 = vand.u32 %v358, 4294901760
      %v579 = vsub.f32 %v358, %v578
      %v580 = vand.u32 %v579, 4294901760
      %v581 = vsub.f32 %v579, %v580
      %v582 = vand.u32 %v581, 4294901760
      %583 = vmatpush1.msra.mxu0 %v582
      %v584 = vand.u32 %v361, 4294901760
      %v585 = vsub.f32 %v361, %v584
      %v586 = vand.u32 %v585, 4294901760
      %v587 = vsub.f32 %v585, %v586
      %v588 = vand.u32 %v587, 4294901760
      %589 = vmatprep.subr.mxu0 %v588
      %v590 = vand.u32 %v360, 4294901760
      %v591 = vsub.f32 %v360, %v590
      %v592 = vand.u32 %v591, 4294901760
      %v593 = vsub.f32 %v591, %v592
      %v594 = vand.u32 %v593, 4294901760
      %595 = vmatpush1.msra.mxu0 %v594
      %596 = vmatprep.subr.mxu0 0.0
      %597 = vmatpush1.msra.mxu0 0.0
      %598 = vmatprep.subr.mxu0 0.0
      %599 = vmatpush1.msra.mxu0 0.0
      %600 = vmatprep.subr.mxu0 0.0
      %601 = vmatpush1.msra.mxu0 0.0
      %602 = vmatprep.subr.mxu0 0.0
      %603 = vmatpush1.msra.mxu0 0.0
      %604 = vmatprep.subr.mxu0 0.0
      %605 = vmatpush1.msra.mxu0 0.0
      %606 = vmatprep.subr.mxu0 0.0
      %607 = vmatpush1.msra.mxu0 0.0
      %608 = vmatprep.subr.mxu0 0.0
      %609 = vmatpush1.msra.mxu0 0.0
      %610 = vmatprep.subr.mxu0 0.0
      %611 = vmatpush1.msra.mxu0 0.0
      %612 = vmatprep.subr.mxu0 0.0
      %613 = vmatpush1.msra.mxu0 0.0
      %614 = vmatprep.subr.mxu0 0.0
      %615 = vmatpush1.msra.mxu0 0.0
      %616 = vmatprep.subr.mxu0 0.0
      %617 = vmatpush1.msra.mxu0 0.0
      %618 = vmatprep.subr.mxu0 0.0
      %619 = vmatpush1.msra.mxu0 0.0
      %620 = vmatprep.subr.mxu0 0.0
      %621 = vmatpush1.msra.mxu0 0.0
      %622 = vmatprep.subr.mxu0 0.0
      %623 = vmatpush1.msra.mxu0 0.0
      %624 = vmatprep.subr.mxu0 0.0
      %625 = vmatpush1.msra.mxu0 0.0
      %626 = vmatprep.subr.mxu0 0.0
      %627 = vmatpush1.msra.mxu0 0.0
      %628 = vmatprep.subr.mxu0 0.0
      %629 = vmatpush1.msra.mxu0 0.0
      %630 = vmatprep.subr.mxu0 0.0
      %631 = vmatpush1.msra.mxu0 0.0
      %632 = vmatprep.subr.mxu0 0.0
      %633 = vmatpush1.msra.mxu0 0.0
      %634 = vmatprep.subr.mxu0 0.0
      %635 = vmatpush1.msra.mxu0 0.0
      %636 = vmatprep.subr.mxu0 0.0
      %637 = vmatpush1.msra.mxu0 0.0
      %638 = vmatprep.subr.mxu0 0.0
      %639 = vmatpush1.msra.mxu0 0.0
      %640 = vmatprep.subr.mxu0 0.0
      %641 = vmatpush1.msra.mxu0 0.0
      %642 = vmatprep.subr.mxu0 0.0
      %643 = vmatpush1.msra.mxu0 0.0
      %644 = vmatprep.mubr.f32.mxu0 0.0
      %v645 = vand.u32 %v364, 4294901760
      %646 = vmatmul.mubr.f32.gmra.mrb[0].mxu0 %v645
      %v647 = vpop.f32.mrb[0].mxu0
      %v648 = vadd.f32 %v463, %v647
      %v649 = vpop.f32.mrb[0].mxu0
      %v650 = vadd.f32 %v465, %v649
      %651 = vmatprep.mubr.f32.mxu0 0.0
      %v652 = vand.u32 %v367, 4294901760
      %653 = vmatmul.mubr.f32.gmra.mrb[0].mxu0 %v652
      %v654 = vpop.f32.mrb[0].mxu0
      %v655 = vadd.f32 %v474, %v654
      %v656 = vpop.f32.mrb[0].mxu0
      %v657 = vadd.f32 %v476, %v656
      %658 = vmatprep.mubr.f32.mxu0 0.0
      %v659 = vand.u32 %v370, 4294901760
      %660 = vmatmul.mubr.f32.gmra.mrb[0].mxu0 %v659
      %v661 = vpop.f32.mrb[0].mxu0
      %v662 = vadd.f32 %v485, %v661
      %v663 = vpop.f32.mrb[0].mxu0
      %v664 = vadd.f32 %v487, %v663
      %665 = vmatprep.mubr.f32.mxu0 0.0
      %v666 = vand.u32 %v373, 4294901760
      %667 = vmatmul.mubr.f32.gmra.mrb[0].mxu0 %v666
      %v668 = vpop.f32.mrb[0].mxu0
      %v669 = vadd.f32 %v496, %v668
      %v670 = vpop.f32.mrb[0].mxu0
      %v671 = vadd.f32 %v498, %v670
      %672 = vdwg.mxu0
      %v673 = vand.u32 %v347, 4294901760
      %v674 = vsub.f32 %v347, %v673
      %675 = vmatprep.subr.mxu0 %v674
      %v676 = vand.u32 %v346, 4294901760
      %v677 = vsub.f32 %v346, %v676
      %678 = vmatpush1.msra.mxu0 %v677
      %v679 = vand.u32 %v349, 4294901760
      %v680 = vsub.f32 %v349, %v679
      %681 = vmatprep.subr.mxu0 %v680
      %v682 = vand.u32 %v348, 4294901760
      %v683 = vsub.f32 %v348, %v682
      %684 = vmatpush1.msra.mxu0 %v683
      %v685 = vand.u32 %v351, 4294901760
      %v686 = vsub.f32 %v351, %v685
      %687 = vmatprep.subr.mxu0 %v686
      %v688 = vand.u32 %v350, 4294901760
      %v689 = vsub.f32 %v350, %v688
      %690 = vmatpush1.msra.mxu0 %v689
      %v691 = vand.u32 %v353, 4294901760
      %v692 = vsub.f32 %v353, %v691
      %693 = vmatprep.subr.mxu0 %v692
      %v694 = vand.u32 %v352, 4294901760
      %v695 = vsub.f32 %v352, %v694
      %696 = vmatpush1.msra.mxu0 %v695
      %v697 = vand.u32 %v355, 4294901760
      %v698 = vsub.f32 %v355, %v697
      %699 = vmatprep.subr.mxu0 %v698
      %v700 = vand.u32 %v354, 4294901760
      %v701 = vsub.f32 %v354, %v700
      %702 = vmatpush1.msra.mxu0 %v701
      %v703 = vand.u32 %v357, 4294901760
      %v704 = vsub.f32 %v357, %v703
      %705 = vmatprep.subr.mxu0 %v704
      %v706 = vand.u32 %v356, 4294901760
      %v707 = vsub.f32 %v356, %v706
      %708 = vmatpush1.msra.mxu0 %v707
      %v709 = vand.u32 %v359, 4294901760
      %v710 = vsub.f32 %v359, %v709
      %711 = vmatprep.subr.mxu0 %v710
      %v712 = vand.u32 %v358, 4294901760
      %v713 = vsub.f32 %v358, %v712
      %714 = vmatpush1.msra.mxu0 %v713
      %v715 = vand.u32 %v361, 4294901760
      %v716 = vsub.f32 %v361, %v715
      %717 = vmatprep.subr.mxu0 %v716
      %v718 = vand.u32 %v360, 4294901760
      %v719 = vsub.f32 %v360, %v718
      %720 = vmatpush1.msra.mxu0 %v719
      %721 = vmatprep.subr.mxu0 0.0
      %722 = vmatpush1.msra.mxu0 0.0
      %723 = vmatprep.subr.mxu0 0.0
      %724 = vmatpush1.msra.mxu0 0.0
      %725 = vmatprep.subr.mxu0 0.0
      %726 = vmatpush1.msra.mxu0 0.0
      %727 = vmatprep.subr.mxu0 0.0
      %728 = vmatpush1.msra.mxu0 0.0
      %729 = vmatprep.subr.mxu0 0.0
      %730 = vmatpush1.msra.mxu0 0.0
      %731 = vmatprep.subr.mxu0 0.0
      %732 = vmatpush1.msra.mxu0 0.0
      %733 = vmatprep.subr.mxu0 0.0
      %734 = vmatpush1.msra.mxu0 0.0
      %735 = vmatprep.subr.mxu0 0.0
      %736 = vmatpush1.msra.mxu0 0.0
      %737 = vmatprep.subr.mxu0 0.0
      %738 = vmatpush1.msra.mxu0 0.0
      %739 = vmatprep.subr.mxu0 0.0
      %740 = vmatpush1.msra.mxu0 0.0
      %741 = vmatprep.subr.mxu0 0.0
      %742 = vmatpush1.msra.mxu0 0.0
      %743 = vmatprep.subr.mxu0 0.0
      %744 = vmatpush1.msra.mxu0 0.0
      %745 = vmatprep.subr.mxu0 0.0
      %746 = vmatpush1.msra.mxu0 0.0
      %747 = vmatprep.subr.mxu0 0.0
      %748 = vmatpush1.msra.mxu0 0.0
      %749 = vmatprep.subr.mxu0 0.0
      %750 = vmatpush1.msra.mxu0 0.0
      %751 = vmatprep.subr.mxu0 0.0
      %752 = vmatpush1.msra.mxu0 0.0
      %753 = vmatprep.subr.mxu0 0.0
      %754 = vmatpush1.msra.mxu0 0.0
      %755 = vmatprep.subr.mxu0 0.0
      %756 = vmatpush1.msra.mxu0 0.0
      %757 = vmatprep.subr.mxu0 0.0
      %758 = vmatpush1.msra.mxu0 0.0
      %759 = vmatprep.subr.mxu0 0.0
      %760 = vmatpush1.msra.mxu0 0.0
      %761 = vmatprep.subr.mxu0 0.0
      %762 = vmatpush1.msra.mxu0 0.0
      %763 = vmatprep.subr.mxu0 0.0
      %764 = vmatpush1.msra.mxu0 0.0
      %765 = vmatprep.subr.mxu0 0.0
      %766 = vmatpush1.msra.mxu0 0.0
      %767 = vmatprep.subr.mxu0 0.0
      %768 = vmatpush1.msra.mxu0 0.0
      %769 = vmatprep.mubr.f32.mxu0 0.0
      %v770 = vand.u32 %v364, 4294901760
      %v771 = vsub.f32 %v364, %v770
      %772 = vmatmul.mubr.f32.gmra.mrb[0].mxu0 %v771
      %v773 = vpop.f32.mrb[0].mxu0
      %v774 = vadd.f32 %v648, %v773
      %v775 = vpop.f32.mrb[0].mxu0
      %v776 = vadd.f32 %v650, %v775
      %777 = vmatprep.mubr.f32.mxu0 0.0
      %v778 = vand.u32 %v367, 4294901760
      %v779 = vsub.f32 %v367, %v778
      %780 = vmatmul.mubr.f32.gmra.mrb[0].mxu0 %v779
      %v781 = vpop.f32.mrb[0].mxu0
      %v782 = vadd.f32 %v655, %v781
      %v783 = vpop.f32.mrb[0].mxu0
      %v784 = vadd.f32 %v657, %v783
      %785 = vmatprep.mubr.f32.mxu0 0.0
      %v786 = vand.u32 %v370, 4294901760
      %v787 = vsub.f32 %v370, %v786
      %788 = vmatmul.mubr.f32.gmra.mrb[0].mxu0 %v787
      %v789 = vpop.f32.mrb[0].mxu0
      %v790 = vadd.f32 %v662, %v789
      %v791 = vpop.f32.mrb[0].mxu0
      %v792 = vadd.f32 %v664, %v791
      %793 = vmatprep.mubr.f32.mxu0 0.0
      %v794 = vand.u32 %v373, 4294901760
      %v795 = vsub.f32 %v373, %v794
      %796 = vmatmul.mubr.f32.gmra.mrb[0].mxu0 %v795
      %v797 = vpop.f32.mrb[0].mxu0
      %v798 = vadd.f32 %v669, %v797
      %v799 = vpop.f32.mrb[0].mxu0
      %v800 = vadd.f32 %v671, %v799
      %801 = vdwg.mxu0
      %v802 = vand.u32 %v347, 4294901760
      %803 = vmatprep.subr.mxu0 %v802
      %v804 = vand.u32 %v346, 4294901760
      %805 = vmatpush1.msra.mxu0 %v804
      %v806 = vand.u32 %v349, 4294901760
      %807 = vmatprep.subr.mxu0 %v806
      %v808 = vand.u32 %v348, 4294901760
      %809 = vmatpush1.msra.mxu0 %v808
      %v810 = vand.u32 %v351, 4294901760
      %811 = vmatprep.subr.mxu0 %v810
      %v812 = vand.u32 %v350, 4294901760
      %813 = vmatpush1.msra.mxu0 %v812
      %v814 = vand.u32 %v353, 4294901760
      %815 = vmatprep.subr.mxu0 %v814
      %v816 = vand.u32 %v352, 4294901760
      %817 = vmatpush1.msra.mxu0 %v816
      %v818 = vand.u32 %v355, 4294901760
      %819 = vmatprep.subr.mxu0 %v818
      %v820 = vand.u32 %v354, 4294901760
      %821 = vmatpush1.msra.mxu0 %v820
      %v822 = vand.u32 %v357, 4294901760
      %823 = vmatprep.subr.mxu0 %v822
      %v824 = vand.u32 %v356, 4294901760
      %825 = vmatpush1.msra.mxu0 %v824
      %v826 = vand.u32 %v359, 4294901760
      %827 = vmatprep.subr.mxu0 %v826
      %v828 = vand.u32 %v358, 4294901760
      %829 = vmatpush1.msra.mxu0 %v828
      %v830 = vand.u32 %v361, 4294901760
      %831 = vmatprep.subr.mxu0 %v830
      %v832 = vand.u32 %v360, 4294901760
      %833 = vmatpush1.msra.mxu0 %v832
      %834 = vmatprep.subr.mxu0 0.0
      %835 = vmatpush1.msra.mxu0 0.0
      %836 = vmatprep.subr.mxu0 0.0
      %837 = vmatpush1.msra.mxu0 0.0
      %838 = vmatprep.subr.mxu0 0.0
      %839 = vmatpush1.msra.mxu0 0.0
      %840 = vmatprep.subr.mxu0 0.0
      %841 = vmatpush1.msra.mxu0 0.0
      %842 = vmatprep.subr.mxu0 0.0
      %843 = vmatpush1.msra.mxu0 0.0
      %844 = vmatprep.subr.mxu0 0.0
      %845 = vmatpush1.msra.mxu0 0.0
      %846 = vmatprep.subr.mxu0 0.0
      %847 = vmatpush1.msra.mxu0 0.0
      %848 = vmatprep.subr.mxu0 0.0
      %849 = vmatpush1.msra.mxu0 0.0
      %850 = vmatprep.subr.mxu0 0.0
      %851 = vmatpush1.msra.mxu0 0.0
      %852 = vmatprep.subr.mxu0 0.0
      %853 = vmatpush1.msra.mxu0 0.0
      %854 = vmatprep.subr.mxu0 0.0
      %855 = vmatpush1.msra.mxu0 0.0
      %856 = vmatprep.subr.mxu0 0.0
      %857 = vmatpush1.msra.mxu0 0.0
      %858 = vmatprep.subr.mxu0 0.0
      %859 = vmatpush1.msra.mxu0 0.0
      %860 = vmatprep.subr.mxu0 0.0
      %861 = vmatpush1.msra.mxu0 0.0
      %862 = vmatprep.subr.mxu0 0.0
      %863 = vmatpush1.msra.mxu0 0.0
      %864 = vmatprep.subr.mxu0 0.0
      %865 = vmatpush1.msra.mxu0 0.0
      %866 = vmatprep.subr.mxu0 0.0
      %867 = vmatpush1.msra.mxu0 0.0
      %868 = vmatprep.subr.mxu0 0.0
      %869 = vmatpush1.msra.mxu0 0.0
      %870 = vmatprep.subr.mxu0 0.0
      %871 = vmatpush1.msra.mxu0 0.0
      %872 = vmatprep.subr.mxu0 0.0
      %873 = vmatpush1.msra.mxu0 0.0
      %874 = vmatprep.subr.mxu0 0.0
      %875 = vmatpush1.msra.mxu0 0.0
      %876 = vmatprep.subr.mxu0 0.0
      %877 = vmatpush1.msra.mxu0 0.0
      %878 = vmatprep.subr.mxu0 0.0
      %879 = vmatpush1.msra.mxu0 0.0
      %880 = vmatprep.subr.mxu0 0.0
      %881 = vmatpush1.msra.mxu0 0.0
      %882 = vmatprep.mubr.f32.mxu0 0.0
      %v883 = vand.u32 %v364, 4294901760
      %v884 = vsub.f32 %v364, %v883
      %v885 = vand.u32 %v884, 4294901760
      %886 = vmatmul.mubr.f32.gmra.mrb[0].mxu0 %v885
      %v887 = vpop.f32.mrb[0].mxu0
      %v888 = vadd.f32 %v774, %v887
      %v889 = vpop.f32.mrb[0].mxu0
      %v890 = vadd.f32 %v776, %v889
      %891 = vmatprep.mubr.f32.mxu0 0.0
      %v892 = vand.u32 %v367, 4294901760
      %v893 = vsub.f32 %v367, %v892
      %v894 = vand.u32 %v893, 4294901760
      %895 = vmatmul.mubr.f32.gmra.mrb[0].mxu0 %v894
      %v896 = vpop.f32.mrb[0].mxu0
      %v897 = vadd.f32 %v782, %v896
      %v898 = vpop.f32.mrb[0].mxu0
      %v899 = vadd.f32 %v784, %v898
      %900 = vmatprep.mubr.f32.mxu0 0.0
      %v901 = vand.u32 %v370, 4294901760
      %v902 = vsub.f32 %v370, %v901
      %v903 = vand.u32 %v902, 4294901760
      %904 = vmatmul.mubr.f32.gmra.mrb[0].mxu0 %v903
      %v905 = vpop.f32.mrb[0].mxu0
      %v906 = vadd.f32 %v790, %v905
      %v907 = vpop.f32.mrb[0].mxu0
      %v908 = vadd.f32 %v792, %v907
      %909 = vmatprep.mubr.f32.mxu0 0.0
      %v910 = vand.u32 %v373, 4294901760
      %v911 = vsub.f32 %v373, %v910
      %v912 = vand.u32 %v911, 4294901760
      %913 = vmatmul.mubr.f32.gmra.mrb[0].mxu0 %v912
      %v914 = vpop.f32.mrb[0].mxu0
      %v915 = vadd.f32 %v798, %v914
      %v916 = vpop.f32.mrb[0].mxu0
      %v917 = vadd.f32 %v800, %v916
      %918 = vdwg.mxu0
      %v919 = vand.u32 %v347, 4294901760
      %v920 = vsub.f32 %v347, %v919
      %v921 = vand.u32 %v920, 4294901760
      %922 = vmatprep.subr.mxu0 %v921
      %v923 = vand.u32 %v346, 4294901760
      %v924 = vsub.f32 %v346, %v923
      %v925 = vand.u32 %v924, 4294901760
      %926 = vmatpush1.msra.mxu0 %v925
      %v927 = vand.u32 %v349, 4294901760
      %v928 = vsub.f32 %v349, %v927
      %v929 = vand.u32 %v928, 4294901760
      %930 = vmatprep.subr.mxu0 %v929
      %v931 = vand.u32 %v348, 4294901760
      %v932 = vsub.f32 %v348, %v931
      %v933 = vand.u32 %v932, 4294901760
      %934 = vmatpush1.msra.mxu0 %v933
      %v935 = vand.u32 %v351, 4294901760
      %v936 = vsub.f32 %v351, %v935
      %v937 = vand.u32 %v936, 4294901760
      %938 = vmatprep.subr.mxu0 %v937
      %v939 = vand.u32 %v350, 4294901760
      %v940 = vsub.f32 %v350, %v939
      %v941 = vand.u32 %v940, 4294901760
      %942 = vmatpush1.msra.mxu0 %v941
      %v943 = vand.u32 %v353, 4294901760
      %v944 = vsub.f32 %v353, %v943
      %v945 = vand.u32 %v944, 4294901760
      %946 = vmatprep.subr.mxu0 %v945
      %v947 = vand.u32 %v352, 4294901760
      %v948 = vsub.f32 %v352, %v947
      %v949 = vand.u32 %v948, 4294901760
      %950 = vmatpush1.msra.mxu0 %v949
      %v951 = vand.u32 %v355, 4294901760
      %v952 = vsub.f32 %v355, %v951
      %v953 = vand.u32 %v952, 4294901760
      %954 = vmatprep.subr.mxu0 %v953
      %v955 = vand.u32 %v354, 4294901760
      %v956 = vsub.f32 %v354, %v955
      %v957 = vand.u32 %v956, 4294901760
      %958 = vmatpush1.msra.mxu0 %v957
      %v959 = vand.u32 %v357, 4294901760
      %v960 = vsub.f32 %v357, %v959
      %v961 = vand.u32 %v960, 4294901760
      %962 = vmatprep.subr.mxu0 %v961
      %v963 = vand.u32 %v356, 4294901760
      %v964 = vsub.f32 %v356, %v963
      %v965 = vand.u32 %v964, 4294901760
      %966 = vmatpush1.msra.mxu0 %v965
      %v967 = vand.u32 %v359, 4294901760
      %v968 = vsub.f32 %v359, %v967
      %v969 = vand.u32 %v968, 4294901760
      %970 = vmatprep.subr.mxu0 %v969
      %v971 = vand.u32 %v358, 4294901760
      %v972 = vsub.f32 %v358, %v971
      %v973 = vand.u32 %v972, 4294901760
      %974 = vmatpush1.msra.mxu0 %v973
      %v975 = vand.u32 %v361, 4294901760
      %v976 = vsub.f32 %v361, %v975
      %v977 = vand.u32 %v976, 4294901760
      %978 = vmatprep.subr.mxu0 %v977
      %v979 = vand.u32 %v360, 4294901760
      %v980 = vsub.f32 %v360, %v979
      %v981 = vand.u32 %v980, 4294901760
      %982 = vmatpush1.msra.mxu0 %v981
      %983 = vmatprep.subr.mxu0 0.0
      %984 = vmatpush1.msra.mxu0 0.0
      %985 = vmatprep.subr.mxu0 0.0
      %986 = vmatpush1.msra.mxu0 0.0
      %987 = vmatprep.subr.mxu0 0.0
      %988 = vmatpush1.msra.mxu0 0.0
      %989 = vmatprep.subr.mxu0 0.0
      %990 = vmatpush1.msra.mxu0 0.0
      %991 = vmatprep.subr.mxu0 0.0
      %992 = vmatpush1.msra.mxu0 0.0
      %993 = vmatprep.subr.mxu0 0.0
      %994 = vmatpush1.msra.mxu0 0.0
      %995 = vmatprep.subr.mxu0 0.0
      %996 = vmatpush1.msra.mxu0 0.0
      %997 = vmatprep.subr.mxu0 0.0
      %998 = vmatpush1.msra.mxu0 0.0
      %999 = vmatprep.subr.mxu0 0.0
      %1000 = vmatpush1.msra.mxu0 0.0
      %1001 = vmatprep.subr.mxu0 0.0
      %1002 = vmatpush1.msra.mxu0 0.0
      %1003 = vmatprep.subr.mxu0 0.0
      %1004 = vmatpush1.msra.mxu0 0.0
      %1005 = vmatprep.subr.mxu0 0.0
      %1006 = vmatpush1.msra.mxu0 0.0
      %1007 = vmatprep.subr.mxu0 0.0
      %1008 = vmatpush1.msra.mxu0 0.0
      %1009 = vmatprep.subr.mxu0 0.0
      %1010 = vmatpush1.msra.mxu0 0.0
      %1011 = vmatprep.subr.mxu0 0.0
      %1012 = vmatpush1.msra.mxu0 0.0
      %1013 = vmatprep.subr.mxu0 0.0
      %1014 = vmatpush1.msra.mxu0 0.0
      %1015 = vmatprep.subr.mxu0 0.0
      %1016 = vmatpush1.msra.mxu0 0.0
      %1017 = vmatprep.subr.mxu0 0.0
      %1018 = vmatpush1.msra.mxu0 0.0
      %1019 = vmatprep.subr.mxu0 0.0
      %1020 = vmatpush1.msra.mxu0 0.0
      %1021 = vmatprep.subr.mxu0 0.0
      %1022 = vmatpush1.msra.mxu0 0.0
      %1023 = vmatprep.subr.mxu0 0.0
      %1024 = vmatpush1.msra.mxu0 0.0
      %1025 = vmatprep.subr.mxu0 0.0
      %1026 = vmatpush1.msra.mxu0 0.0
      %1027 = vmatprep.subr.mxu0 0.0
      %1028 = vmatpush1.msra.mxu0 0.0
      %1029 = vmatprep.subr.mxu0 0.0
      %1030 = vmatpush1.msra.mxu0 0.0
      %1031 = vmatprep.mubr.f32.mxu0 0.0
      %v1032 = vand.u32 %v364, 4294901760
      %1033 = vmatmul.mubr.f32.gmra.mrb[0].mxu0 %v1032
      %v1034 = vpop.f32.mrb[0].mxu0
      %v1035 = vadd.f32 %v888, %v1034
      %v1036 = vpop.f32.mrb[0].mxu0
      %v1037 = vadd.f32 %v890, %v1036
      %1038 = vmatprep.mubr.f32.mxu0 0.0
      %v1039 = vand.u32 %v367, 4294901760
      %1040 = vmatmul.mubr.f32.gmra.mrb[0].mxu0 %v1039
      %v1041 = vpop.f32.mrb[0].mxu0
      %v1042 = vadd.f32 %v897, %v1041
      %v1043 = vpop.f32.mrb[0].mxu0
      %v1044 = vadd.f32 %v899, %v1043
      %1045 = vmatprep.mubr.f32.mxu0 0.0
      %v1046 = vand.u32 %v370, 4294901760
      %1047 = vmatmul.mubr.f32.gmra.mrb[0].mxu0 %v1046
      %v1048 = vpop.f32.mrb[0].mxu0
      %v1049 = vadd.f32 %v906, %v1048
      %v1050 = vpop.f32.mrb[0].mxu0
      %v1051 = vadd.f32 %v908, %v1050
      %1052 = vmatprep.mubr.f32.mxu0 0.0
      %v1053 = vand.u32 %v373, 4294901760
      %1054 = vmatmul.mubr.f32.gmra.mrb[0].mxu0 %v1053
      %v1055 = vpop.f32.mrb[0].mxu0
      %v1056 = vadd.f32 %v915, %v1055
      %v1057 = vpop.f32.mrb[0].mxu0
      %v1058 = vadd.f32 %v917, %v1057
      %1059 = vdwg.mxu0
      %v1060 = vand.u32 %v347, 4294901760
      %1061 = vmatprep.subr.mxu0 %v1060
      %v1062 = vand.u32 %v346, 4294901760
      %1063 = vmatpush1.msra.mxu0 %v1062
      %v1064 = vand.u32 %v349, 4294901760
      %1065 = vmatprep.subr.mxu0 %v1064
      %v1066 = vand.u32 %v348, 4294901760
      %1067 = vmatpush1.msra.mxu0 %v1066
      %v1068 = vand.u32 %v351, 4294901760
      %1069 = vmatprep.subr.mxu0 %v1068
      %v1070 = vand.u32 %v350, 4294901760
      %1071 = vmatpush1.msra.mxu0 %v1070
      %v1072 = vand.u32 %v353, 4294901760
      %1073 = vmatprep.subr.mxu0 %v1072
      %v1074 = vand.u32 %v352, 4294901760
      %1075 = vmatpush1.msra.mxu0 %v1074
      %v1076 = vand.u32 %v355, 4294901760
      %1077 = vmatprep.subr.mxu0 %v1076
      %v1078 = vand.u32 %v354, 4294901760
      %1079 = vmatpush1.msra.mxu0 %v1078
      %v1080 = vand.u32 %v357, 4294901760
      %1081 = vmatprep.subr.mxu0 %v1080
      %v1082 = vand.u32 %v356, 4294901760
      %1083 = vmatpush1.msra.mxu0 %v1082
      %v1084 = vand.u32 %v359, 4294901760
      %1085 = vmatprep.subr.mxu0 %v1084
      %v1086 = vand.u32 %v358, 4294901760
      %1087 = vmatpush1.msra.mxu0 %v1086
      %v1088 = vand.u32 %v361, 4294901760
      %1089 = vmatprep.subr.mxu0 %v1088
      %v1090 = vand.u32 %v360, 4294901760
      %1091 = vmatpush1.msra.mxu0 %v1090
      %1092 = vmatprep.subr.mxu0 0.0
      %1093 = vmatpush1.msra.mxu0 0.0
      %1094 = vmatprep.subr.mxu0 0.0
      %1095 = vmatpush1.msra.mxu0 0.0
      %1096 = vmatprep.subr.mxu0 0.0
      %1097 = vmatpush1.msra.mxu0 0.0
      %1098 = vmatprep.subr.mxu0 0.0
      %1099 = vmatpush1.msra.mxu0 0.0
      %1100 = vmatprep.subr.mxu0 0.0
      %1101 = vmatpush1.msra.mxu0 0.0
      %1102 = vmatprep.subr.mxu0 0.0
      %1103 = vmatpush1.msra.mxu0 0.0
      %1104 = vmatprep.subr.mxu0 0.0
      %1105 = vmatpush1.msra.mxu0 0.0
      %1106 = vmatprep.subr.mxu0 0.0
      %1107 = vmatpush1.msra.mxu0 0.0
      %1108 = vmatprep.subr.mxu0 0.0
      %1109 = vmatpush1.msra.mxu0 0.0
      %1110 = vmatprep.subr.mxu0 0.0
      %1111 = vmatpush1.msra.mxu0 0.0
      %1112 = vmatprep.subr.mxu0 0.0
      %1113 = vmatpush1.msra.mxu0 0.0
      %1114 = vmatprep.subr.mxu0 0.0
      %1115 = vmatpush1.msra.mxu0 0.0
      %1116 = vmatprep.subr.mxu0 0.0
      %1117 = vmatpush1.msra.mxu0 0.0
      %1118 = vmatprep.subr.mxu0 0.0
      %1119 = vmatpush1.msra.mxu0 0.0
      %1120 = vmatprep.subr.mxu0 0.0
      %1121 = vmatpush1.msra.mxu0 0.0
      %1122 = vmatprep.subr.mxu0 0.0
      %1123 = vmatpush1.msra.mxu0 0.0
      %1124 = vmatprep.subr.mxu0 0.0
      %1125 = vmatpush1.msra.mxu0 0.0
      %1126 = vmatprep.subr.mxu0 0.0
      %1127 = vmatpush1.msra.mxu0 0.0
      %1128 = vmatprep.subr.mxu0 0.0
      %1129 = vmatpush1.msra.mxu0 0.0
      %1130 = vmatprep.subr.mxu0 0.0
      %1131 = vmatpush1.msra.mxu0 0.0
      %1132 = vmatprep.subr.mxu0 0.0
      %1133 = vmatpush1.msra.mxu0 0.0
      %1134 = vmatprep.subr.mxu0 0.0
      %1135 = vmatpush1.msra.mxu0 0.0
      %1136 = vmatprep.subr.mxu0 0.0
      %1137 = vmatpush1.msra.mxu0 0.0
      %1138 = vmatprep.subr.mxu0 0.0
      %1139 = vmatpush1.msra.mxu0 0.0
      %1140 = vmatprep.mubr.f32.mxu0 0.0
      %v1141 = vand.u32 %v364, 4294901760
      %1142 = vmatmul.mubr.f32.gmra.mrb[0].mxu0 %v1141
      %v1143 = vpop.f32.mrb[0].mxu0
      %v1144 = vadd.f32 %v1035, %v1143
      %v1145 = vpop.f32.mrb[0].mxu0
      %v1146 = vadd.f32 %v1037, %v1145
      %1147 = vmatprep.mubr.f32.mxu0 0.0
      %v1148 = vand.u32 %v367, 4294901760
      %1149 = vmatmul.mubr.f32.gmra.mrb[0].mxu0 %v1148
      %v1150 = vpop.f32.mrb[0].mxu0
      %v1151 = vadd.f32 %v1042, %v1150
      %v1152 = vpop.f32.mrb[0].mxu0
      %v1153 = vadd.f32 %v1044, %v1152
      %1154 = vmatprep.mubr.f32.mxu0 0.0
      %v1155 = vand.u32 %v370, 4294901760
      %1156 = vmatmul.mubr.f32.gmra.mrb[0].mxu0 %v1155
      %v1157 = vpop.f32.mrb[0].mxu0
      %v1158 = vadd.f32 %v1049, %v1157
      %v1159 = vpop.f32.mrb[0].mxu0
      %v1160 = vadd.f32 %v1051, %v1159
      %1161 = vmatprep.mubr.f32.mxu0 0.0
      %v1162 = vand.u32 %v373, 4294901760
      %1163 = vmatmul.mubr.f32.gmra.mrb[0].mxu0 %v1162
      %v1164 = vpop.f32.mrb[0].mxu0
      %v1165 = vadd.f32 %v1056, %v1164
      %v1166 = vpop.f32.mrb[0].mxu0
      %v1167 = vadd.f32 %v1058, %v1166
      %1168 = vdwg.mxu0
      %v1169 = vlaneseq
      %v1170 = vshrl.u32 %v1169, 7
      %v1171 = vsub.s32 1, %v1170
      %v1172 = vrot.slane %v295, %v1171
      %v1173 = vlaneseq
      %v1174 = vshrl.u32 %v1173, 7
      %v1175 = vsub.s32 1, %v1174
      %v1176 = vrot.slane %v296, %v1175
      %vm1177 = vcmp.eq.s32.totalorder %v1172, %v298
      %vm1178 = vcmp.eq.s32.totalorder %v1176, %v298
      %vm1179 = vcmp.eq.s32.totalorder %v1172, %v299
      %vm1180 = vcmp.eq.s32.totalorder %v1176, %v299
      %vm1181 = vcmp.eq.s32.totalorder %v1172, %v300
      %vm1182 = vcmp.eq.s32.totalorder %v1176, %v300
      %vm1183 = vcmp.eq.s32.totalorder %v1172, %v301
      %vm1184 = vcmp.eq.s32.totalorder %v1176, %v301
      %vm1185 = vcmp.eq.s32.totalorder %v1172, %v302
      %vm1186 = vcmp.eq.s32.totalorder %v1176, %v302
      %vm1187 = vcmp.eq.s32.totalorder %v1172, %v303
      %vm1188 = vcmp.eq.s32.totalorder %v1176, %v303
      %vm1189 = vcmp.eq.s32.totalorder %v1172, %v304
      %vm1190 = vcmp.eq.s32.totalorder %v1176, %v304
      %vm1191 = vcmp.eq.s32.totalorder %v1172, %v305
      %vm1192 = vcmp.eq.s32.totalorder %v1176, %v305
      %v1193 = vsel %vm1177, 1, 0
      %v1194 = vsel %vm1178, 1, 0
      %v1195 = vsel %vm1179, 1, 0
      %v1196 = vsel %vm1180, 1, 0
      %v1197 = vsel %vm1181, 1, 0
      %v1198 = vsel %vm1182, 1, 0
      %v1199 = vsel %vm1183, 1, 0
      %v1200 = vsel %vm1184, 1, 0
      %v1201 = vsel %vm1185, 1, 0
      %v1202 = vsel %vm1186, 1, 0
      %v1203 = vsel %vm1187, 1, 0
      %v1204 = vsel %vm1188, 1, 0
      %v1205 = vsel %vm1189, 1, 0
      %v1206 = vsel %vm1190, 1, 0
      %v1207 = vsel %vm1191, 1, 0
      %v1208 = vsel %vm1192, 1, 0
      %v1209 = vcvt.s32.f32 %v1193
      %v1210 = vcvt.s32.f32 %v1194
      %v1211 = vcvt.s32.f32 %v1195
      %v1212 = vcvt.s32.f32 %v1196
      %v1213 = vcvt.s32.f32 %v1197
      %v1214 = vcvt.s32.f32 %v1198
      %v1215 = vcvt.s32.f32 %v1199
      %v1216 = vcvt.s32.f32 %v1200
      %v1217 = vcvt.s32.f32 %v1201
      %v1218 = vcvt.s32.f32 %v1202
      %v1219 = vcvt.s32.f32 %v1203
      %v1220 = vcvt.s32.f32 %v1204
      %v1221 = vcvt.s32.f32 %v1205
      %v1222 = vcvt.s32.f32 %v1206
      %v1223 = vcvt.s32.f32 %v1207
      %v1224 = vcvt.s32.f32 %v1208
      %v1225 = vand.u32 %v1210, 4294901760
      %1226 = vmatprep.subr.mxu0 %v1225
      %v1227 = vand.u32 %v1209, 4294901760
      %1228 = vmatpush1.msra.mxu0 %v1227
      %v1229 = vand.u32 %v1212, 4294901760
      %1230 = vmatprep.subr.mxu0 %v1229
      %v1231 = vand.u32 %v1211, 4294901760
      %1232 = vmatpush1.msra.mxu0 %v1231
      %v1233 = vand.u32 %v1214, 4294901760
      %1234 = vmatprep.subr.mxu0 %v1233
      %v1235 = vand.u32 %v1213, 4294901760
      %1236 = vmatpush1.msra.mxu0 %v1235
      %v1237 = vand.u32 %v1216, 4294901760
      %1238 = vmatprep.subr.mxu0 %v1237
      %v1239 = vand.u32 %v1215, 4294901760
      %1240 = vmatpush1.msra.mxu0 %v1239
      %v1241 = vand.u32 %v1218, 4294901760
      %1242 = vmatprep.subr.mxu0 %v1241
      %v1243 = vand.u32 %v1217, 4294901760
      %1244 = vmatpush1.msra.mxu0 %v1243
      %v1245 = vand.u32 %v1220, 4294901760
      %1246 = vmatprep.subr.mxu0 %v1245
      %v1247 = vand.u32 %v1219, 4294901760
      %1248 = vmatpush1.msra.mxu0 %v1247
      %v1249 = vand.u32 %v1222, 4294901760
      %1250 = vmatprep.subr.mxu0 %v1249
      %v1251 = vand.u32 %v1221, 4294901760
      %1252 = vmatpush1.msra.mxu0 %v1251
      %v1253 = vand.u32 %v1224, 4294901760
      %1254 = vmatprep.subr.mxu0 %v1253
      %v1255 = vand.u32 %v1223, 4294901760
      %1256 = vmatpush1.msra.mxu0 %v1255
      %1257 = vmatprep.subr.mxu0 0.0
      %1258 = vmatpush1.msra.mxu0 0.0
      %1259 = vmatprep.subr.mxu0 0.0
      %1260 = vmatpush1.msra.mxu0 0.0
      %1261 = vmatprep.subr.mxu0 0.0
      %1262 = vmatpush1.msra.mxu0 0.0
      %1263 = vmatprep.subr.mxu0 0.0
      %1264 = vmatpush1.msra.mxu0 0.0
      %1265 = vmatprep.subr.mxu0 0.0
      %1266 = vmatpush1.msra.mxu0 0.0
      %1267 = vmatprep.subr.mxu0 0.0
      %1268 = vmatpush1.msra.mxu0 0.0
      %1269 = vmatprep.subr.mxu0 0.0
      %1270 = vmatpush1.msra.mxu0 0.0
      %1271 = vmatprep.subr.mxu0 0.0
      %1272 = vmatpush1.msra.mxu0 0.0
      %1273 = vmatprep.subr.mxu0 0.0
      %1274 = vmatpush1.msra.mxu0 0.0
      %1275 = vmatprep.subr.mxu0 0.0
      %1276 = vmatpush1.msra.mxu0 0.0
      %1277 = vmatprep.subr.mxu0 0.0
      %1278 = vmatpush1.msra.mxu0 0.0
      %1279 = vmatprep.subr.mxu0 0.0
      %1280 = vmatpush1.msra.mxu0 0.0
      %1281 = vmatprep.subr.mxu0 0.0
      %1282 = vmatpush1.msra.mxu0 0.0
      %1283 = vmatprep.subr.mxu0 0.0
      %1284 = vmatpush1.msra.mxu0 0.0
      %1285 = vmatprep.subr.mxu0 0.0
      %1286 = vmatpush1.msra.mxu0 0.0
      %1287 = vmatprep.subr.mxu0 0.0
      %1288 = vmatpush1.msra.mxu0 0.0
      %1289 = vmatprep.subr.mxu0 0.0
      %1290 = vmatpush1.msra.mxu0 0.0
      %1291 = vmatprep.subr.mxu0 0.0
      %1292 = vmatpush1.msra.mxu0 0.0
      %1293 = vmatprep.subr.mxu0 0.0
      %1294 = vmatpush1.msra.mxu0 0.0
      %1295 = vmatprep.subr.mxu0 0.0
      %1296 = vmatpush1.msra.mxu0 0.0
      %1297 = vmatprep.subr.mxu0 0.0
      %1298 = vmatpush1.msra.mxu0 0.0
      %1299 = vmatprep.subr.mxu0 0.0
      %1300 = vmatpush1.msra.mxu0 0.0
      %1301 = vmatprep.subr.mxu0 0.0
      %1302 = vmatpush1.msra.mxu0 0.0
      %1303 = vmatprep.subr.mxu0 0.0
      %1304 = vmatpush1.msra.mxu0 0.0
      %1305 = vmatprep.mubr.f32.mxu0 0.0
      %v1306 = vand.u32 %v364, 4294901760
      %v1307 = vsub.f32 %v364, %v1306
      %v1308 = vand.u32 %v1307, 4294901760
      %v1309 = vsub.f32 %v1307, %v1308
      %v1310 = vand.u32 %v1309, 4294901760
      %1311 = vmatmul.mubr.f32.gmra.mrb[0].mxu0 %v1310
      %v1312 = vpop.f32.mrb[0].mxu0
      %v1313 = vadd.f32 0.0, %v1312
      %v1314 = vpop.f32.mrb[0].mxu0
      %v1315 = vadd.f32 0.0, %v1314
      %1316 = vmatprep.mubr.f32.mxu0 0.0
      %v1317 = vand.u32 %v367, 4294901760
      %v1318 = vsub.f32 %v367, %v1317
      %v1319 = vand.u32 %v1318, 4294901760
      %v1320 = vsub.f32 %v1318, %v1319
      %v1321 = vand.u32 %v1320, 4294901760
      %1322 = vmatmul.mubr.f32.gmra.mrb[0].mxu0 %v1321
      %v1323 = vpop.f32.mrb[0].mxu0
      %v1324 = vadd.f32 0.0, %v1323
      %v1325 = vpop.f32.mrb[0].mxu0
      %v1326 = vadd.f32 0.0, %v1325
      %1327 = vmatprep.mubr.f32.mxu0 0.0
      %v1328 = vand.u32 %v370, 4294901760
      %v1329 = vsub.f32 %v370, %v1328
      %v1330 = vand.u32 %v1329, 4294901760
      %v1331 = vsub.f32 %v1329, %v1330
      %v1332 = vand.u32 %v1331, 4294901760
      %1333 = vmatmul.mubr.f32.gmra.mrb[0].mxu0 %v1332
      %v1334 = vpop.f32.mrb[0].mxu0
      %v1335 = vadd.f32 0.0, %v1334
      %v1336 = vpop.f32.mrb[0].mxu0
      %v1337 = vadd.f32 0.0, %v1336
      %1338 = vmatprep.mubr.f32.mxu0 0.0
      %v1339 = vand.u32 %v373, 4294901760
      %v1340 = vsub.f32 %v373, %v1339
      %v1341 = vand.u32 %v1340, 4294901760
      %v1342 = vsub.f32 %v1340, %v1341
      %v1343 = vand.u32 %v1342, 4294901760
      %1344 = vmatmul.mubr.f32.gmra.mrb[0].mxu0 %v1343
      %v1345 = vpop.f32.mrb[0].mxu0
      %v1346 = vadd.f32 0.0, %v1345
      %v1347 = vpop.f32.mrb[0].mxu0
      %v1348 = vadd.f32 0.0, %v1347
      %1349 = vdwg.mxu0
      %v1350 = vand.u32 %v1210, 4294901760
      %v1351 = vsub.f32 %v1210, %v1350
      %v1352 = vand.u32 %v1351, 4294901760
      %v1353 = vsub.f32 %v1351, %v1352
      %v1354 = vand.u32 %v1353, 4294901760
      %1355 = vmatprep.subr.mxu0 %v1354
      %v1356 = vand.u32 %v1209, 4294901760
      %v1357 = vsub.f32 %v1209, %v1356
      %v1358 = vand.u32 %v1357, 4294901760
      %v1359 = vsub.f32 %v1357, %v1358
      %v1360 = vand.u32 %v1359, 4294901760
      %1361 = vmatpush1.msra.mxu0 %v1360
      %v1362 = vand.u32 %v1212, 4294901760
      %v1363 = vsub.f32 %v1212, %v1362
      %v1364 = vand.u32 %v1363, 4294901760
      %v1365 = vsub.f32 %v1363, %v1364
      %v1366 = vand.u32 %v1365, 4294901760
      %1367 = vmatprep.subr.mxu0 %v1366
      %v1368 = vand.u32 %v1211, 4294901760
      %v1369 = vsub.f32 %v1211, %v1368
      %v1370 = vand.u32 %v1369, 4294901760
      %v1371 = vsub.f32 %v1369, %v1370
      %v1372 = vand.u32 %v1371, 4294901760
      %1373 = vmatpush1.msra.mxu0 %v1372
      %v1374 = vand.u32 %v1214, 4294901760
      %v1375 = vsub.f32 %v1214, %v1374
      %v1376 = vand.u32 %v1375, 4294901760
      %v1377 = vsub.f32 %v1375, %v1376
      %v1378 = vand.u32 %v1377, 4294901760
      %1379 = vmatprep.subr.mxu0 %v1378
      %v1380 = vand.u32 %v1213, 4294901760
      %v1381 = vsub.f32 %v1213, %v1380
      %v1382 = vand.u32 %v1381, 4294901760
      %v1383 = vsub.f32 %v1381, %v1382
      %v1384 = vand.u32 %v1383, 4294901760
      %1385 = vmatpush1.msra.mxu0 %v1384
      %v1386 = vand.u32 %v1216, 4294901760
      %v1387 = vsub.f32 %v1216, %v1386
      %v1388 = vand.u32 %v1387, 4294901760
      %v1389 = vsub.f32 %v1387, %v1388
      %v1390 = vand.u32 %v1389, 4294901760
      %1391 = vmatprep.subr.mxu0 %v1390
      %v1392 = vand.u32 %v1215, 4294901760
      %v1393 = vsub.f32 %v1215, %v1392
      %v1394 = vand.u32 %v1393, 4294901760
      %v1395 = vsub.f32 %v1393, %v1394
      %v1396 = vand.u32 %v1395, 4294901760
      %1397 = vmatpush1.msra.mxu0 %v1396
      %v1398 = vand.u32 %v1218, 4294901760
      %v1399 = vsub.f32 %v1218, %v1398
      %v1400 = vand.u32 %v1399, 4294901760
      %v1401 = vsub.f32 %v1399, %v1400
      %v1402 = vand.u32 %v1401, 4294901760
      %1403 = vmatprep.subr.mxu0 %v1402
      %v1404 = vand.u32 %v1217, 4294901760
      %v1405 = vsub.f32 %v1217, %v1404
      %v1406 = vand.u32 %v1405, 4294901760
      %v1407 = vsub.f32 %v1405, %v1406
      %v1408 = vand.u32 %v1407, 4294901760
      %1409 = vmatpush1.msra.mxu0 %v1408
      %v1410 = vand.u32 %v1220, 4294901760
      %v1411 = vsub.f32 %v1220, %v1410
      %v1412 = vand.u32 %v1411, 4294901760
      %v1413 = vsub.f32 %v1411, %v1412
      %v1414 = vand.u32 %v1413, 4294901760
      %1415 = vmatprep.subr.mxu0 %v1414
      %v1416 = vand.u32 %v1219, 4294901760
      %v1417 = vsub.f32 %v1219, %v1416
      %v1418 = vand.u32 %v1417, 4294901760
      %v1419 = vsub.f32 %v1417, %v1418
      %v1420 = vand.u32 %v1419, 4294901760
      %1421 = vmatpush1.msra.mxu0 %v1420
      %v1422 = vand.u32 %v1222, 4294901760
      %v1423 = vsub.f32 %v1222, %v1422
      %v1424 = vand.u32 %v1423, 4294901760
      %v1425 = vsub.f32 %v1423, %v1424
      %v1426 = vand.u32 %v1425, 4294901760
      %1427 = vmatprep.subr.mxu0 %v1426
      %v1428 = vand.u32 %v1221, 4294901760
      %v1429 = vsub.f32 %v1221, %v1428
      %v1430 = vand.u32 %v1429, 4294901760
      %v1431 = vsub.f32 %v1429, %v1430
      %v1432 = vand.u32 %v1431, 4294901760
      %1433 = vmatpush1.msra.mxu0 %v1432
      %v1434 = vand.u32 %v1224, 4294901760
      %v1435 = vsub.f32 %v1224, %v1434
      %v1436 = vand.u32 %v1435, 4294901760
      %v1437 = vsub.f32 %v1435, %v1436
      %v1438 = vand.u32 %v1437, 4294901760
      %1439 = vmatprep.subr.mxu0 %v1438
      %v1440 = vand.u32 %v1223, 4294901760
      %v1441 = vsub.f32 %v1223, %v1440
      %v1442 = vand.u32 %v1441, 4294901760
      %v1443 = vsub.f32 %v1441, %v1442
      %v1444 = vand.u32 %v1443, 4294901760
      %1445 = vmatpush1.msra.mxu0 %v1444
      %1446 = vmatprep.subr.mxu0 0.0
      %1447 = vmatpush1.msra.mxu0 0.0
      %1448 = vmatprep.subr.mxu0 0.0
      %1449 = vmatpush1.msra.mxu0 0.0
      %1450 = vmatprep.subr.mxu0 0.0
      %1451 = vmatpush1.msra.mxu0 0.0
      %1452 = vmatprep.subr.mxu0 0.0
      %1453 = vmatpush1.msra.mxu0 0.0
      %1454 = vmatprep.subr.mxu0 0.0
      %1455 = vmatpush1.msra.mxu0 0.0
      %1456 = vmatprep.subr.mxu0 0.0
      %1457 = vmatpush1.msra.mxu0 0.0
      %1458 = vmatprep.subr.mxu0 0.0
      %1459 = vmatpush1.msra.mxu0 0.0
      %1460 = vmatprep.subr.mxu0 0.0
      %1461 = vmatpush1.msra.mxu0 0.0
      %1462 = vmatprep.subr.mxu0 0.0
      %1463 = vmatpush1.msra.mxu0 0.0
      %1464 = vmatprep.subr.mxu0 0.0
      %1465 = vmatpush1.msra.mxu0 0.0
      %1466 = vmatprep.subr.mxu0 0.0
      %1467 = vmatpush1.msra.mxu0 0.0
      %1468 = vmatprep.subr.mxu0 0.0
      %1469 = vmatpush1.msra.mxu0 0.0
      %1470 = vmatprep.subr.mxu0 0.0
      %1471 = vmatpush1.msra.mxu0 0.0
      %1472 = vmatprep.subr.mxu0 0.0
      %1473 = vmatpush1.msra.mxu0 0.0
      %1474 = vmatprep.subr.mxu0 0.0
      %1475 = vmatpush1.msra.mxu0 0.0
      %1476 = vmatprep.subr.mxu0 0.0
      %1477 = vmatpush1.msra.mxu0 0.0
      %1478 = vmatprep.subr.mxu0 0.0
      %1479 = vmatpush1.msra.mxu0 0.0
      %1480 = vmatprep.subr.mxu0 0.0
      %1481 = vmatpush1.msra.mxu0 0.0
      %1482 = vmatprep.subr.mxu0 0.0
      %1483 = vmatpush1.msra.mxu0 0.0
      %1484 = vmatprep.subr.mxu0 0.0
      %1485 = vmatpush1.msra.mxu0 0.0
      %1486 = vmatprep.subr.mxu0 0.0
      %1487 = vmatpush1.msra.mxu0 0.0
      %1488 = vmatprep.subr.mxu0 0.0
      %1489 = vmatpush1.msra.mxu0 0.0
      %1490 = vmatprep.subr.mxu0 0.0
      %1491 = vmatpush1.msra.mxu0 0.0
      %1492 = vmatprep.subr.mxu0 0.0
      %1493 = vmatpush1.msra.mxu0 0.0
      %1494 = vmatprep.mubr.f32.mxu0 0.0
      %v1495 = vand.u32 %v364, 4294901760
      %1496 = vmatmul.mubr.f32.gmra.mrb[0].mxu0 %v1495
      %v1497 = vpop.f32.mrb[0].mxu0
      %v1498 = vadd.f32 %v1313, %v1497
      %v1499 = vpop.f32.mrb[0].mxu0
      %v1500 = vadd.f32 %v1315, %v1499
      %1501 = vmatprep.mubr.f32.mxu0 0.0
      %v1502 = vand.u32 %v367, 4294901760
      %1503 = vmatmul.mubr.f32.gmra.mrb[0].mxu0 %v1502
      %v1504 = vpop.f32.mrb[0].mxu0
      %v1505 = vadd.f32 %v1324, %v1504
      %v1506 = vpop.f32.mrb[0].mxu0
      %v1507 = vadd.f32 %v1326, %v1506
      %1508 = vmatprep.mubr.f32.mxu0 0.0
      %v1509 = vand.u32 %v370, 4294901760
      %1510 = vmatmul.mubr.f32.gmra.mrb[0].mxu0 %v1509
      %v1511 = vpop.f32.mrb[0].mxu0
      %v1512 = vadd.f32 %v1335, %v1511
      %v1513 = vpop.f32.mrb[0].mxu0
      %v1514 = vadd.f32 %v1337, %v1513
      %1515 = vmatprep.mubr.f32.mxu0 0.0
      %v1516 = vand.u32 %v373, 4294901760
      %1517 = vmatmul.mubr.f32.gmra.mrb[0].mxu0 %v1516
      %v1518 = vpop.f32.mrb[0].mxu0
      %v1519 = vadd.f32 %v1346, %v1518
      %v1520 = vpop.f32.mrb[0].mxu0
      %v1521 = vadd.f32 %v1348, %v1520
      %1522 = vdwg.mxu0
      %v1523 = vand.u32 %v1210, 4294901760
      %v1524 = vsub.f32 %v1210, %v1523
      %1525 = vmatprep.subr.mxu0 %v1524
      %v1526 = vand.u32 %v1209, 4294901760
      %v1527 = vsub.f32 %v1209, %v1526
      %1528 = vmatpush1.msra.mxu0 %v1527
      %v1529 = vand.u32 %v1212, 4294901760
      %v1530 = vsub.f32 %v1212, %v1529
      %1531 = vmatprep.subr.mxu0 %v1530
      %v1532 = vand.u32 %v1211, 4294901760
      %v1533 = vsub.f32 %v1211, %v1532
      %1534 = vmatpush1.msra.mxu0 %v1533
      %v1535 = vand.u32 %v1214, 4294901760
      %v1536 = vsub.f32 %v1214, %v1535
      %1537 = vmatprep.subr.mxu0 %v1536
      %v1538 = vand.u32 %v1213, 4294901760
      %v1539 = vsub.f32 %v1213, %v1538
      %1540 = vmatpush1.msra.mxu0 %v1539
      %v1541 = vand.u32 %v1216, 4294901760
      %v1542 = vsub.f32 %v1216, %v1541
      %1543 = vmatprep.subr.mxu0 %v1542
      %v1544 = vand.u32 %v1215, 4294901760
      %v1545 = vsub.f32 %v1215, %v1544
      %1546 = vmatpush1.msra.mxu0 %v1545
      %v1547 = vand.u32 %v1218, 4294901760
      %v1548 = vsub.f32 %v1218, %v1547
      %1549 = vmatprep.subr.mxu0 %v1548
      %v1550 = vand.u32 %v1217, 4294901760
      %v1551 = vsub.f32 %v1217, %v1550
      %1552 = vmatpush1.msra.mxu0 %v1551
      %v1553 = vand.u32 %v1220, 4294901760
      %v1554 = vsub.f32 %v1220, %v1553
      %1555 = vmatprep.subr.mxu0 %v1554
      %v1556 = vand.u32 %v1219, 4294901760
      %v1557 = vsub.f32 %v1219, %v1556
      %1558 = vmatpush1.msra.mxu0 %v1557
      %v1559 = vand.u32 %v1222, 4294901760
      %v1560 = vsub.f32 %v1222, %v1559
      %1561 = vmatprep.subr.mxu0 %v1560
      %v1562 = vand.u32 %v1221, 4294901760
      %v1563 = vsub.f32 %v1221, %v1562
      %1564 = vmatpush1.msra.mxu0 %v1563
      %v1565 = vand.u32 %v1224, 4294901760
      %v1566 = vsub.f32 %v1224, %v1565
      %1567 = vmatprep.subr.mxu0 %v1566
      %v1568 = vand.u32 %v1223, 4294901760
      %v1569 = vsub.f32 %v1223, %v1568
      %1570 = vmatpush1.msra.mxu0 %v1569
      %1571 = vmatprep.subr.mxu0 0.0
      %1572 = vmatpush1.msra.mxu0 0.0
      %1573 = vmatprep.subr.mxu0 0.0
      %1574 = vmatpush1.msra.mxu0 0.0
      %1575 = vmatprep.subr.mxu0 0.0
      %1576 = vmatpush1.msra.mxu0 0.0
      %1577 = vmatprep.subr.mxu0 0.0
      %1578 = vmatpush1.msra.mxu0 0.0
      %1579 = vmatprep.subr.mxu0 0.0
      %1580 = vmatpush1.msra.mxu0 0.0
      %1581 = vmatprep.subr.mxu0 0.0
      %1582 = vmatpush1.msra.mxu0 0.0
      %1583 = vmatprep.subr.mxu0 0.0
      %1584 = vmatpush1.msra.mxu0 0.0
      %1585 = vmatprep.subr.mxu0 0.0
      %1586 = vmatpush1.msra.mxu0 0.0
      %1587 = vmatprep.subr.mxu0 0.0
      %1588 = vmatpush1.msra.mxu0 0.0
      %1589 = vmatprep.subr.mxu0 0.0
      %1590 = vmatpush1.msra.mxu0 0.0
      %1591 = vmatprep.subr.mxu0 0.0
      %1592 = vmatpush1.msra.mxu0 0.0
      %1593 = vmatprep.subr.mxu0 0.0
      %1594 = vmatpush1.msra.mxu0 0.0
      %1595 = vmatprep.subr.mxu0 0.0
      %1596 = vmatpush1.msra.mxu0 0.0
      %1597 = vmatprep.subr.mxu0 0.0
      %1598 = vmatpush1.msra.mxu0 0.0
      %1599 = vmatprep.subr.mxu0 0.0
      %1600 = vmatpush1.msra.mxu0 0.0
      %1601 = vmatprep.subr.mxu0 0.0
      %1602 = vmatpush1.msra.mxu0 0.0
      %1603 = vmatprep.subr.mxu0 0.0
      %1604 = vmatpush1.msra.mxu0 0.0
      %1605 = vmatprep.subr.mxu0 0.0
      %1606 = vmatpush1.msra.mxu0 0.0
      %1607 = vmatprep.subr.mxu0 0.0
      %1608 = vmatpush1.msra.mxu0 0.0
      %1609 = vmatprep.subr.mxu0 0.0
      %1610 = vmatpush1.msra.mxu0 0.0
      %1611 = vmatprep.subr.mxu0 0.0
      %1612 = vmatpush1.msra.mxu0 0.0
      %1613 = vmatprep.subr.mxu0 0.0
      %1614 = vmatpush1.msra.mxu0 0.0
      %1615 = vmatprep.subr.mxu0 0.0
      %1616 = vmatpush1.msra.mxu0 0.0
      %1617 = vmatprep.subr.mxu0 0.0
      %1618 = vmatpush1.msra.mxu0 0.0
      %1619 = vmatprep.mubr.f32.mxu0 0.0
      %v1620 = vand.u32 %v364, 4294901760
      %v1621 = vsub.f32 %v364, %v1620
      %1622 = vmatmul.mubr.f32.gmra.mrb[0].mxu0 %v1621
      %v1623 = vpop.f32.mrb[0].mxu0
      %v1624 = vadd.f32 %v1498, %v1623
      %v1625 = vpop.f32.mrb[0].mxu0
      %v1626 = vadd.f32 %v1500, %v1625
      %1627 = vmatprep.mubr.f32.mxu0 0.0
      %v1628 = vand.u32 %v367, 4294901760
      %v1629 = vsub.f32 %v367, %v1628
      %1630 = vmatmul.mubr.f32.gmra.mrb[0].mxu0 %v1629
      %v1631 = vpop.f32.mrb[0].mxu0
      %v1632 = vadd.f32 %v1505, %v1631
      %v1633 = vpop.f32.mrb[0].mxu0
      %v1634 = vadd.f32 %v1507, %v1633
      %1635 = vmatprep.mubr.f32.mxu0 0.0
      %v1636 = vand.u32 %v370, 4294901760
      %v1637 = vsub.f32 %v370, %v1636
      %1638 = vmatmul.mubr.f32.gmra.mrb[0].mxu0 %v1637
      %v1639 = vpop.f32.mrb[0].mxu0
      %v1640 = vadd.f32 %v1512, %v1639
      %v1641 = vpop.f32.mrb[0].mxu0
      %v1642 = vadd.f32 %v1514, %v1641
      %1643 = vmatprep.mubr.f32.mxu0 0.0
      %v1644 = vand.u32 %v373, 4294901760
      %v1645 = vsub.f32 %v373, %v1644
      %1646 = vmatmul.mubr.f32.gmra.mrb[0].mxu0 %v1645
      %v1647 = vpop.f32.mrb[0].mxu0
      %v1648 = vadd.f32 %v1519, %v1647
      %v1649 = vpop.f32.mrb[0].mxu0
      %v1650 = vadd.f32 %v1521, %v1649
      %1651 = vdwg.mxu0
      %v1652 = vand.u32 %v1210, 4294901760
      %1653 = vmatprep.subr.mxu0 %v1652
      %v1654 = vand.u32 %v1209, 4294901760
      %1655 = vmatpush1.msra.mxu0 %v1654
      %v1656 = vand.u32 %v1212, 4294901760
      %1657 = vmatprep.subr.mxu0 %v1656
      %v1658 = vand.u32 %v1211, 4294901760
      %1659 = vmatpush1.msra.mxu0 %v1658
      %v1660 = vand.u32 %v1214, 4294901760
      %1661 = vmatprep.subr.mxu0 %v1660
      %v1662 = vand.u32 %v1213, 4294901760
      %1663 = vmatpush1.msra.mxu0 %v1662
      %v1664 = vand.u32 %v1216, 4294901760
      %1665 = vmatprep.subr.mxu0 %v1664
      %v1666 = vand.u32 %v1215, 4294901760
      %1667 = vmatpush1.msra.mxu0 %v1666
      %v1668 = vand.u32 %v1218, 4294901760
      %1669 = vmatprep.subr.mxu0 %v1668
      %v1670 = vand.u32 %v1217, 4294901760
      %1671 = vmatpush1.msra.mxu0 %v1670
      %v1672 = vand.u32 %v1220, 4294901760
      %1673 = vmatprep.subr.mxu0 %v1672
      %v1674 = vand.u32 %v1219, 4294901760
      %1675 = vmatpush1.msra.mxu0 %v1674
      %v1676 = vand.u32 %v1222, 4294901760
      %1677 = vmatprep.subr.mxu0 %v1676
      %v1678 = vand.u32 %v1221, 4294901760
      %1679 = vmatpush1.msra.mxu0 %v1678
      %v1680 = vand.u32 %v1224, 4294901760
      %1681 = vmatprep.subr.mxu0 %v1680
      %v1682 = vand.u32 %v1223, 4294901760
      %1683 = vmatpush1.msra.mxu0 %v1682
      %1684 = vmatprep.subr.mxu0 0.0
      %1685 = vmatpush1.msra.mxu0 0.0
      %1686 = vmatprep.subr.mxu0 0.0
      %1687 = vmatpush1.msra.mxu0 0.0
      %1688 = vmatprep.subr.mxu0 0.0
      %1689 = vmatpush1.msra.mxu0 0.0
      %1690 = vmatprep.subr.mxu0 0.0
      %1691 = vmatpush1.msra.mxu0 0.0
      %1692 = vmatprep.subr.mxu0 0.0
      %1693 = vmatpush1.msra.mxu0 0.0
      %1694 = vmatprep.subr.mxu0 0.0
      %1695 = vmatpush1.msra.mxu0 0.0
      %1696 = vmatprep.subr.mxu0 0.0
      %1697 = vmatpush1.msra.mxu0 0.0
      %1698 = vmatprep.subr.mxu0 0.0
      %1699 = vmatpush1.msra.mxu0 0.0
      %1700 = vmatprep.subr.mxu0 0.0
      %1701 = vmatpush1.msra.mxu0 0.0
      %1702 = vmatprep.subr.mxu0 0.0
      %1703 = vmatpush1.msra.mxu0 0.0
      %1704 = vmatprep.subr.mxu0 0.0
      %1705 = vmatpush1.msra.mxu0 0.0
      %1706 = vmatprep.subr.mxu0 0.0
      %1707 = vmatpush1.msra.mxu0 0.0
      %1708 = vmatprep.subr.mxu0 0.0
      %1709 = vmatpush1.msra.mxu0 0.0
      %1710 = vmatprep.subr.mxu0 0.0
      %1711 = vmatpush1.msra.mxu0 0.0
      %1712 = vmatprep.subr.mxu0 0.0
      %1713 = vmatpush1.msra.mxu0 0.0
      %1714 = vmatprep.subr.mxu0 0.0
      %1715 = vmatpush1.msra.mxu0 0.0
      %1716 = vmatprep.subr.mxu0 0.0
      %1717 = vmatpush1.msra.mxu0 0.0
      %1718 = vmatprep.subr.mxu0 0.0
      %1719 = vmatpush1.msra.mxu0 0.0
      %1720 = vmatprep.subr.mxu0 0.0
      %1721 = vmatpush1.msra.mxu0 0.0
      %1722 = vmatprep.subr.mxu0 0.0
      %1723 = vmatpush1.msra.mxu0 0.0
      %1724 = vmatprep.subr.mxu0 0.0
      %1725 = vmatpush1.msra.mxu0 0.0
      %1726 = vmatprep.subr.mxu0 0.0
      %1727 = vmatpush1.msra.mxu0 0.0
      %1728 = vmatprep.subr.mxu0 0.0
      %1729 = vmatpush1.msra.mxu0 0.0
      %1730 = vmatprep.subr.mxu0 0.0
      %1731 = vmatpush1.msra.mxu0 0.0
      %1732 = vmatprep.mubr.f32.mxu0 0.0
      %v1733 = vand.u32 %v364, 4294901760
      %v1734 = vsub.f32 %v364, %v1733
      %v1735 = vand.u32 %v1734, 4294901760
      %1736 = vmatmul.mubr.f32.gmra.mrb[0].mxu0 %v1735
      %v1737 = vpop.f32.mrb[0].mxu0
      %v1738 = vadd.f32 %v1624, %v1737
      %v1739 = vpop.f32.mrb[0].mxu0
      %v1740 = vadd.f32 %v1626, %v1739
      %1741 = vmatprep.mubr.f32.mxu0 0.0
      %v1742 = vand.u32 %v367, 4294901760
      %v1743 = vsub.f32 %v367, %v1742
      %v1744 = vand.u32 %v1743, 4294901760
      %1745 = vmatmul.mubr.f32.gmra.mrb[0].mxu0 %v1744
      %v1746 = vpop.f32.mrb[0].mxu0
      %v1747 = vadd.f32 %v1632, %v1746
      %v1748 = vpop.f32.mrb[0].mxu0
      %v1749 = vadd.f32 %v1634, %v1748
      %1750 = vmatprep.mubr.f32.mxu0 0.0
      %v1751 = vand.u32 %v370, 4294901760
      %v1752 = vsub.f32 %v370, %v1751
      %v1753 = vand.u32 %v1752, 4294901760
      %1754 = vmatmul.mubr.f32.gmra.mrb[0].mxu0 %v1753
      %v1755 = vpop.f32.mrb[0].mxu0
      %v1756 = vadd.f32 %v1640, %v1755
      %v1757 = vpop.f32.mrb[0].mxu0
      %v1758 = vadd.f32 %v1642, %v1757
      %1759 = vmatprep.mubr.f32.mxu0 0.0
      %v1760 = vand.u32 %v373, 4294901760
      %v1761 = vsub.f32 %v373, %v1760
      %v1762 = vand.u32 %v1761, 4294901760
      %1763 = vmatmul.mubr.f32.gmra.mrb[0].mxu0 %v1762
      %v1764 = vpop.f32.mrb[0].mxu0
      %v1765 = vadd.f32 %v1648, %v1764
      %v1766 = vpop.f32.mrb[0].mxu0
      %v1767 = vadd.f32 %v1650, %v1766
      %1768 = vdwg.mxu0
      %v1769 = vand.u32 %v1210, 4294901760
      %v1770 = vsub.f32 %v1210, %v1769
      %v1771 = vand.u32 %v1770, 4294901760
      %1772 = vmatprep.subr.mxu0 %v1771
      %v1773 = vand.u32 %v1209, 4294901760
      %v1774 = vsub.f32 %v1209, %v1773
      %v1775 = vand.u32 %v1774, 4294901760
      %1776 = vmatpush1.msra.mxu0 %v1775
      %v1777 = vand.u32 %v1212, 4294901760
      %v1778 = vsub.f32 %v1212, %v1777
      %v1779 = vand.u32 %v1778, 4294901760
      %1780 = vmatprep.subr.mxu0 %v1779
      %v1781 = vand.u32 %v1211, 4294901760
      %v1782 = vsub.f32 %v1211, %v1781
      %v1783 = vand.u32 %v1782, 4294901760
      %1784 = vmatpush1.msra.mxu0 %v1783
      %v1785 = vand.u32 %v1214, 4294901760
      %v1786 = vsub.f32 %v1214, %v1785
      %v1787 = vand.u32 %v1786, 4294901760
      %1788 = vmatprep.subr.mxu0 %v1787
      %v1789 = vand.u32 %v1213, 4294901760
      %v1790 = vsub.f32 %v1213, %v1789
      %v1791 = vand.u32 %v1790, 4294901760
      %1792 = vmatpush1.msra.mxu0 %v1791
      %v1793 = vand.u32 %v1216, 4294901760
      %v1794 = vsub.f32 %v1216, %v1793
      %v1795 = vand.u32 %v1794, 4294901760
      %1796 = vmatprep.subr.mxu0 %v1795
      %v1797 = vand.u32 %v1215, 4294901760
      %v1798 = vsub.f32 %v1215, %v1797
      %v1799 = vand.u32 %v1798, 4294901760
      %1800 = vmatpush1.msra.mxu0 %v1799
      %v1801 = vand.u32 %v1218, 4294901760
      %v1802 = vsub.f32 %v1218, %v1801
      %v1803 = vand.u32 %v1802, 4294901760
      %1804 = vmatprep.subr.mxu0 %v1803
      %v1805 = vand.u32 %v1217, 4294901760
      %v1806 = vsub.f32 %v1217, %v1805
      %v1807 = vand.u32 %v1806, 4294901760
      %1808 = vmatpush1.msra.mxu0 %v1807
      %v1809 = vand.u32 %v1220, 4294901760
      %v1810 = vsub.f32 %v1220, %v1809
      %v1811 = vand.u32 %v1810, 4294901760
      %1812 = vmatprep.subr.mxu0 %v1811
      %v1813 = vand.u32 %v1219, 4294901760
      %v1814 = vsub.f32 %v1219, %v1813
      %v1815 = vand.u32 %v1814, 4294901760
      %1816 = vmatpush1.msra.mxu0 %v1815
      %v1817 = vand.u32 %v1222, 4294901760
      %v1818 = vsub.f32 %v1222, %v1817
      %v1819 = vand.u32 %v1818, 4294901760
      %1820 = vmatprep.subr.mxu0 %v1819
      %v1821 = vand.u32 %v1221, 4294901760
      %v1822 = vsub.f32 %v1221, %v1821
      %v1823 = vand.u32 %v1822, 4294901760
      %1824 = vmatpush1.msra.mxu0 %v1823
      %v1825 = vand.u32 %v1224, 4294901760
      %v1826 = vsub.f32 %v1224, %v1825
      %v1827 = vand.u32 %v1826, 4294901760
      %1828 = vmatprep.subr.mxu0 %v1827
      %v1829 = vand.u32 %v1223, 4294901760
      %v1830 = vsub.f32 %v1223, %v1829
      %v1831 = vand.u32 %v1830, 4294901760
      %1832 = vmatpush1.msra.mxu0 %v1831
      %1833 = vmatprep.subr.mxu0 0.0
      %1834 = vmatpush1.msra.mxu0 0.0
      %1835 = vmatprep.subr.mxu0 0.0
      %1836 = vmatpush1.msra.mxu0 0.0
      %1837 = vmatprep.subr.mxu0 0.0
      %1838 = vmatpush1.msra.mxu0 0.0
      %1839 = vmatprep.subr.mxu0 0.0
      %1840 = vmatpush1.msra.mxu0 0.0
      %1841 = vmatprep.subr.mxu0 0.0
      %1842 = vmatpush1.msra.mxu0 0.0
      %1843 = vmatprep.subr.mxu0 0.0
      %1844 = vmatpush1.msra.mxu0 0.0
      %1845 = vmatprep.subr.mxu0 0.0
      %1846 = vmatpush1.msra.mxu0 0.0
      %1847 = vmatprep.subr.mxu0 0.0
      %1848 = vmatpush1.msra.mxu0 0.0
      %1849 = vmatprep.subr.mxu0 0.0
      %1850 = vmatpush1.msra.mxu0 0.0
      %1851 = vmatprep.subr.mxu0 0.0
      %1852 = vmatpush1.msra.mxu0 0.0
      %1853 = vmatprep.subr.mxu0 0.0
      %1854 = vmatpush1.msra.mxu0 0.0
      %1855 = vmatprep.subr.mxu0 0.0
      %1856 = vmatpush1.msra.mxu0 0.0
      %1857 = vmatprep.subr.mxu0 0.0
      %1858 = vmatpush1.msra.mxu0 0.0
      %1859 = vmatprep.subr.mxu0 0.0
      %1860 = vmatpush1.msra.mxu0 0.0
      %1861 = vmatprep.subr.mxu0 0.0
      %1862 = vmatpush1.msra.mxu0 0.0
      %1863 = vmatprep.subr.mxu0 0.0
      %1864 = vmatpush1.msra.mxu0 0.0
      %1865 = vmatprep.subr.mxu0 0.0
      %1866 = vmatpush1.msra.mxu0 0.0
      %1867 = vmatprep.subr.mxu0 0.0
      %1868 = vmatpush1.msra.mxu0 0.0
      %1869 = vmatprep.subr.mxu0 0.0
      %1870 = vmatpush1.msra.mxu0 0.0
      %1871 = vmatprep.subr.mxu0 0.0
      %1872 = vmatpush1.msra.mxu0 0.0
      %1873 = vmatprep.subr.mxu0 0.0
      %1874 = vmatpush1.msra.mxu0 0.0
      %1875 = vmatprep.subr.mxu0 0.0
      %1876 = vmatpush1.msra.mxu0 0.0
      %1877 = vmatprep.subr.mxu0 0.0
      %1878 = vmatpush1.msra.mxu0 0.0
      %1879 = vmatprep.subr.mxu0 0.0
      %1880 = vmatpush1.msra.mxu0 0.0
      %1881 = vmatprep.mubr.f32.mxu0 0.0
      %v1882 = vand.u32 %v364, 4294901760
      %1883 = vmatmul.mubr.f32.gmra.mrb[0].mxu0 %v1882
      %v1884 = vpop.f32.mrb[0].mxu0
      %v1885 = vadd.f32 %v1738, %v1884
      %v1886 = vpop.f32.mrb[0].mxu0
      %v1887 = vadd.f32 %v1740, %v1886
      %1888 = vmatprep.mubr.f32.mxu0 0.0
      %v1889 = vand.u32 %v367, 4294901760
      %1890 = vmatmul.mubr.f32.gmra.mrb[0].mxu0 %v1889
      %v1891 = vpop.f32.mrb[0].mxu0
      %v1892 = vadd.f32 %v1747, %v1891
      %v1893 = vpop.f32.mrb[0].mxu0
      %v1894 = vadd.f32 %v1749, %v1893
      %1895 = vmatprep.mubr.f32.mxu0 0.0
      %v1896 = vand.u32 %v370, 4294901760
      %1897 = vmatmul.mubr.f32.gmra.mrb[0].mxu0 %v1896
      %v1898 = vpop.f32.mrb[0].mxu0
      %v1899 = vadd.f32 %v1756, %v1898
      %v1900 = vpop.f32.mrb[0].mxu0
      %v1901 = vadd.f32 %v1758, %v1900
      %1902 = vmatprep.mubr.f32.mxu0 0.0
      %v1903 = vand.u32 %v373, 4294901760
      %1904 = vmatmul.mubr.f32.gmra.mrb[0].mxu0 %v1903
      %v1905 = vpop.f32.mrb[0].mxu0
      %v1906 = vadd.f32 %v1765, %v1905
      %v1907 = vpop.f32.mrb[0].mxu0
      %v1908 = vadd.f32 %v1767, %v1907
      %1909 = vdwg.mxu0
      %v1910 = vand.u32 %v1210, 4294901760
      %1911 = vmatprep.subr.mxu0 %v1910
      %v1912 = vand.u32 %v1209, 4294901760
      %1913 = vmatpush1.msra.mxu0 %v1912
      %v1914 = vand.u32 %v1212, 4294901760
      %1915 = vmatprep.subr.mxu0 %v1914
      %v1916 = vand.u32 %v1211, 4294901760
      %1917 = vmatpush1.msra.mxu0 %v1916
      %v1918 = vand.u32 %v1214, 4294901760
      %1919 = vmatprep.subr.mxu0 %v1918
      %v1920 = vand.u32 %v1213, 4294901760
      %1921 = vmatpush1.msra.mxu0 %v1920
      %v1922 = vand.u32 %v1216, 4294901760
      %1923 = vmatprep.subr.mxu0 %v1922
      %v1924 = vand.u32 %v1215, 4294901760
      %1925 = vmatpush1.msra.mxu0 %v1924
      %v1926 = vand.u32 %v1218, 4294901760
      %1927 = vmatprep.subr.mxu0 %v1926
      %v1928 = vand.u32 %v1217, 4294901760
      %1929 = vmatpush1.msra.mxu0 %v1928
      %v1930 = vand.u32 %v1220, 4294901760
      %1931 = vmatprep.subr.mxu0 %v1930
      %v1932 = vand.u32 %v1219, 4294901760
      %1933 = vmatpush1.msra.mxu0 %v1932
      %v1934 = vand.u32 %v1222, 4294901760
      %1935 = vmatprep.subr.mxu0 %v1934
      %v1936 = vand.u32 %v1221, 4294901760
      %1937 = vmatpush1.msra.mxu0 %v1936
      %v1938 = vand.u32 %v1224, 4294901760
      %1939 = vmatprep.subr.mxu0 %v1938
      %v1940 = vand.u32 %v1223, 4294901760
      %1941 = vmatpush1.msra.mxu0 %v1940
      %1942 = vmatprep.subr.mxu0 0.0
      %1943 = vmatpush1.msra.mxu0 0.0
      %1944 = vmatprep.subr.mxu0 0.0
      %1945 = vmatpush1.msra.mxu0 0.0
      %1946 = vmatprep.subr.mxu0 0.0
      %1947 = vmatpush1.msra.mxu0 0.0
      %1948 = vmatprep.subr.mxu0 0.0
      %1949 = vmatpush1.msra.mxu0 0.0
      %1950 = vmatprep.subr.mxu0 0.0
      %1951 = vmatpush1.msra.mxu0 0.0
      %1952 = vmatprep.subr.mxu0 0.0
      %1953 = vmatpush1.msra.mxu0 0.0
      %1954 = vmatprep.subr.mxu0 0.0
      %1955 = vmatpush1.msra.mxu0 0.0
      %1956 = vmatprep.subr.mxu0 0.0
      %1957 = vmatpush1.msra.mxu0 0.0
      %1958 = vmatprep.subr.mxu0 0.0
      %1959 = vmatpush1.msra.mxu0 0.0
      %1960 = vmatprep.subr.mxu0 0.0
      %1961 = vmatpush1.msra.mxu0 0.0
      %1962 = vmatprep.subr.mxu0 0.0
      %1963 = vmatpush1.msra.mxu0 0.0
      %1964 = vmatprep.subr.mxu0 0.0
      %1965 = vmatpush1.msra.mxu0 0.0
      %1966 = vmatprep.subr.mxu0 0.0
      %1967 = vmatpush1.msra.mxu0 0.0
      %1968 = vmatprep.subr.mxu0 0.0
      %1969 = vmatpush1.msra.mxu0 0.0
      %1970 = vmatprep.subr.mxu0 0.0
      %1971 = vmatpush1.msra.mxu0 0.0
      %1972 = vmatprep.subr.mxu0 0.0
      %1973 = vmatpush1.msra.mxu0 0.0
      %1974 = vmatprep.subr.mxu0 0.0
      %1975 = vmatpush1.msra.mxu0 0.0
      %1976 = vmatprep.subr.mxu0 0.0
      %1977 = vmatpush1.msra.mxu0 0.0
      %1978 = vmatprep.subr.mxu0 0.0
      %1979 = vmatpush1.msra.mxu0 0.0
      %1980 = vmatprep.subr.mxu0 0.0
      %1981 = vmatpush1.msra.mxu0 0.0
      %1982 = vmatprep.subr.mxu0 0.0
      %1983 = vmatpush1.msra.mxu0 0.0
      %1984 = vmatprep.subr.mxu0 0.0
      %1985 = vmatpush1.msra.mxu0 0.0
      %1986 = vmatprep.subr.mxu0 0.0
      %1987 = vmatpush1.msra.mxu0 0.0
      %1988 = vmatprep.subr.mxu0 0.0
      %1989 = vmatpush1.msra.mxu0 0.0
      %1990 = vmatprep.mubr.f32.mxu0 0.0
      %v1991 = vand.u32 %v364, 4294901760
      %1992 = vmatmul.mubr.f32.gmra.mrb[0].mxu0 %v1991
      %v1993 = vpop.f32.mrb[0].mxu0
      %v1994 = vadd.f32 %v1885, %v1993
      %v1995 = vpop.f32.mrb[0].mxu0
      %v1996 = vadd.f32 %v1887, %v1995
      %1997 = vmatprep.mubr.f32.mxu0 0.0
      %v1998 = vand.u32 %v367, 4294901760
      %1999 = vmatmul.mubr.f32.gmra.mrb[0].mxu0 %v1998
      %v2000 = vpop.f32.mrb[0].mxu0
      %v2001 = vadd.f32 %v1892, %v2000
      %v2002 = vpop.f32.mrb[0].mxu0
      %v2003 = vadd.f32 %v1894, %v2002
      %2004 = vmatprep.mubr.f32.mxu0 0.0
      %v2005 = vand.u32 %v370, 4294901760
      %2006 = vmatmul.mubr.f32.gmra.mrb[0].mxu0 %v2005
      %v2007 = vpop.f32.mrb[0].mxu0
      %v2008 = vadd.f32 %v1899, %v2007
      %v2009 = vpop.f32.mrb[0].mxu0
      %v2010 = vadd.f32 %v1901, %v2009
      %2011 = vmatprep.mubr.f32.mxu0 0.0
      %v2012 = vand.u32 %v373, 4294901760
      %2013 = vmatmul.mubr.f32.gmra.mrb[0].mxu0 %v2012
      %v2014 = vpop.f32.mrb[0].mxu0
      %v2015 = vadd.f32 %v1906, %v2014
      %v2016 = vpop.f32.mrb[0].mxu0
      %v2017 = vadd.f32 %v1908, %v2016
      %2018 = vdwg.mxu0
      %v2019 = vmul.f32 %v1144, %v1994
      %v2020 = vmul.f32 %v1146, %v1996
      %v2021 = vmul.f32 %v1151, %v2001
      %v2022 = vmul.f32 %v1153, %v2003
      %v2023 = vmul.f32 %v1158, %v2008
      %v2024 = vmul.f32 %v1160, %v2010
      %v2025 = vmul.f32 %v1165, %v2015
      %v2026 = vmul.f32 %v1167, %v2017
      %v2027 = vlaneseq
      %v2028 = vshrl.u32 %v2027, 7
      %v2029 = vsub.s32 2, %v2028
      %v2030 = vrot.slane %v295, %v2029
      %v2031 = vlaneseq
      %v2032 = vshrl.u32 %v2031, 7
      %v2033 = vsub.s32 2, %v2032
      %v2034 = vrot.slane %v296, %v2033
      %vm2035 = vcmp.eq.s32.totalorder %v2030, %v298
      %vm2036 = vcmp.eq.s32.totalorder %v2034, %v298
      %vm2037 = vcmp.eq.s32.totalorder %v2030, %v299
      %vm2038 = vcmp.eq.s32.totalorder %v2034, %v299
      %vm2039 = vcmp.eq.s32.totalorder %v2030, %v300
      %vm2040 = vcmp.eq.s32.totalorder %v2034, %v300
      %vm2041 = vcmp.eq.s32.totalorder %v2030, %v301
      %vm2042 = vcmp.eq.s32.totalorder %v2034, %v301
      %vm2043 = vcmp.eq.s32.totalorder %v2030, %v302
      %vm2044 = vcmp.eq.s32.totalorder %v2034, %v302
      %vm2045 = vcmp.eq.s32.totalorder %v2030, %v303
      %vm2046 = vcmp.eq.s32.totalorder %v2034, %v303
      %vm2047 = vcmp.eq.s32.totalorder %v2030, %v304
      %vm2048 = vcmp.eq.s32.totalorder %v2034, %v304
      %vm2049 = vcmp.eq.s32.totalorder %v2030, %v305
      %vm2050 = vcmp.eq.s32.totalorder %v2034, %v305
      %v2051 = vsel %vm2035, 1, 0
      %v2052 = vsel %vm2036, 1, 0
      %v2053 = vsel %vm2037, 1, 0
      %v2054 = vsel %vm2038, 1, 0
      %v2055 = vsel %vm2039, 1, 0
      %v2056 = vsel %vm2040, 1, 0
      %v2057 = vsel %vm2041, 1, 0
      %v2058 = vsel %vm2042, 1, 0
      %v2059 = vsel %vm2043, 1, 0
      %v2060 = vsel %vm2044, 1, 0
      %v2061 = vsel %vm2045, 1, 0
      %v2062 = vsel %vm2046, 1, 0
      %v2063 = vsel %vm2047, 1, 0
      %v2064 = vsel %vm2048, 1, 0
      %v2065 = vsel %vm2049, 1, 0
      %v2066 = vsel %vm2050, 1, 0
      %v2067 = vcvt.s32.f32 %v2051
      %v2068 = vcvt.s32.f32 %v2052
      %v2069 = vcvt.s32.f32 %v2053
      %v2070 = vcvt.s32.f32 %v2054
      %v2071 = vcvt.s32.f32 %v2055
      %v2072 = vcvt.s32.f32 %v2056
      %v2073 = vcvt.s32.f32 %v2057
      %v2074 = vcvt.s32.f32 %v2058
      %v2075 = vcvt.s32.f32 %v2059
      %v2076 = vcvt.s32.f32 %v2060
      %v2077 = vcvt.s32.f32 %v2061
      %v2078 = vcvt.s32.f32 %v2062
      %v2079 = vcvt.s32.f32 %v2063
      %v2080 = vcvt.s32.f32 %v2064
      %v2081 = vcvt.s32.f32 %v2065
      %v2082 = vcvt.s32.f32 %v2066
      %v2083 = vand.u32 %v2068, 4294901760
      %2084 = vmatprep.subr.mxu0 %v2083
      %v2085 = vand.u32 %v2067, 4294901760
      %2086 = vmatpush1.msra.mxu0 %v2085
      %v2087 = vand.u32 %v2070, 4294901760
      %2088 = vmatprep.subr.mxu0 %v2087
      %v2089 = vand.u32 %v2069, 4294901760
      %2090 = vmatpush1.msra.mxu0 %v2089
      %v2091 = vand.u32 %v2072, 4294901760
      %2092 = vmatprep.subr.mxu0 %v2091
      %v2093 = vand.u32 %v2071, 4294901760
      %2094 = vmatpush1.msra.mxu0 %v2093
      %v2095 = vand.u32 %v2074, 4294901760
      %2096 = vmatprep.subr.mxu0 %v2095
      %v2097 = vand.u32 %v2073, 4294901760
      %2098 = vmatpush1.msra.mxu0 %v2097
      %v2099 = vand.u32 %v2076, 4294901760
      %2100 = vmatprep.subr.mxu0 %v2099
      %v2101 = vand.u32 %v2075, 4294901760
      %2102 = vmatpush1.msra.mxu0 %v2101
      %v2103 = vand.u32 %v2078, 4294901760
      %2104 = vmatprep.subr.mxu0 %v2103
      %v2105 = vand.u32 %v2077, 4294901760
      %2106 = vmatpush1.msra.mxu0 %v2105
      %v2107 = vand.u32 %v2080, 4294901760
      %2108 = vmatprep.subr.mxu0 %v2107
      %v2109 = vand.u32 %v2079, 4294901760
      %2110 = vmatpush1.msra.mxu0 %v2109
      %v2111 = vand.u32 %v2082, 4294901760
      %2112 = vmatprep.subr.mxu0 %v2111
      %v2113 = vand.u32 %v2081, 4294901760
      %2114 = vmatpush1.msra.mxu0 %v2113
      %2115 = vmatprep.subr.mxu0 0.0
      %2116 = vmatpush1.msra.mxu0 0.0
      %2117 = vmatprep.subr.mxu0 0.0
      %2118 = vmatpush1.msra.mxu0 0.0
      %2119 = vmatprep.subr.mxu0 0.0
      %2120 = vmatpush1.msra.mxu0 0.0
      %2121 = vmatprep.subr.mxu0 0.0
      %2122 = vmatpush1.msra.mxu0 0.0
      %2123 = vmatprep.subr.mxu0 0.0
      %2124 = vmatpush1.msra.mxu0 0.0
      %2125 = vmatprep.subr.mxu0 0.0
      %2126 = vmatpush1.msra.mxu0 0.0
      %2127 = vmatprep.subr.mxu0 0.0
      %2128 = vmatpush1.msra.mxu0 0.0
      %2129 = vmatprep.subr.mxu0 0.0
      %2130 = vmatpush1.msra.mxu0 0.0
      %2131 = vmatprep.subr.mxu0 0.0
      %2132 = vmatpush1.msra.mxu0 0.0
      %2133 = vmatprep.subr.mxu0 0.0
      %2134 = vmatpush1.msra.mxu0 0.0
      %2135 = vmatprep.subr.mxu0 0.0
      %2136 = vmatpush1.msra.mxu0 0.0
      %2137 = vmatprep.subr.mxu0 0.0
      %2138 = vmatpush1.msra.mxu0 0.0
      %2139 = vmatprep.subr.mxu0 0.0
      %2140 = vmatpush1.msra.mxu0 0.0
      %2141 = vmatprep.subr.mxu0 0.0
      %2142 = vmatpush1.msra.mxu0 0.0
      %2143 = vmatprep.subr.mxu0 0.0
      %2144 = vmatpush1.msra.mxu0 0.0
      %2145 = vmatprep.subr.mxu0 0.0
      %2146 = vmatpush1.msra.mxu0 0.0
      %2147 = vmatprep.subr.mxu0 0.0
      %2148 = vmatpush1.msra.mxu0 0.0
      %2149 = vmatprep.subr.mxu0 0.0
      %2150 = vmatpush1.msra.mxu0 0.0
      %2151 = vmatprep.subr.mxu0 0.0
      %2152 = vmatpush1.msra.mxu0 0.0
      %2153 = vmatprep.subr.mxu0 0.0
      %2154 = vmatpush1.msra.mxu0 0.0
      %2155 = vmatprep.subr.mxu0 0.0
      %2156 = vmatpush1.msra.mxu0 0.0
      %2157 = vmatprep.subr.mxu0 0.0
      %2158 = vmatpush1.msra.mxu0 0.0
      %2159 = vmatprep.subr.mxu0 0.0
      %2160 = vmatpush1.msra.mxu0 0.0
      %2161 = vmatprep.subr.mxu0 0.0
      %2162 = vmatpush1.msra.mxu0 0.0
      %2163 = vmatprep.mubr.f32.mxu0 0.0
      %v2164 = vand.u32 %v364, 4294901760
      %v2165 = vsub.f32 %v364, %v2164
      %v2166 = vand.u32 %v2165, 4294901760
      %v2167 = vsub.f32 %v2165, %v2166
      %v2168 = vand.u32 %v2167, 4294901760
      %2169 = vmatmul.mubr.f32.gmra.mrb[0].mxu0 %v2168
      %v2170 = vpop.f32.mrb[0].mxu0
      %v2171 = vadd.f32 0.0, %v2170
      %v2172 = vpop.f32.mrb[0].mxu0
      %v2173 = vadd.f32 0.0, %v2172
      %2174 = vmatprep.mubr.f32.mxu0 0.0
      %v2175 = vand.u32 %v367, 4294901760
      %v2176 = vsub.f32 %v367, %v2175
      %v2177 = vand.u32 %v2176, 4294901760
      %v2178 = vsub.f32 %v2176, %v2177
      %v2179 = vand.u32 %v2178, 4294901760
      %2180 = vmatmul.mubr.f32.gmra.mrb[0].mxu0 %v2179
      %v2181 = vpop.f32.mrb[0].mxu0
      %v2182 = vadd.f32 0.0, %v2181
      %v2183 = vpop.f32.mrb[0].mxu0
      %v2184 = vadd.f32 0.0, %v2183
      %2185 = vmatprep.mubr.f32.mxu0 0.0
      %v2186 = vand.u32 %v370, 4294901760
      %v2187 = vsub.f32 %v370, %v2186
      %v2188 = vand.u32 %v2187, 4294901760
      %v2189 = vsub.f32 %v2187, %v2188
      %v2190 = vand.u32 %v2189, 4294901760
      %2191 = vmatmul.mubr.f32.gmra.mrb[0].mxu0 %v2190
      %v2192 = vpop.f32.mrb[0].mxu0
      %v2193 = vadd.f32 0.0, %v2192
      %v2194 = vpop.f32.mrb[0].mxu0
      %v2195 = vadd.f32 0.0, %v2194
      %2196 = vmatprep.mubr.f32.mxu0 0.0
      %v2197 = vand.u32 %v373, 4294901760
      %v2198 = vsub.f32 %v373, %v2197
      %v2199 = vand.u32 %v2198, 4294901760
      %v2200 = vsub.f32 %v2198, %v2199
      %v2201 = vand.u32 %v2200, 4294901760
      %2202 = vmatmul.mubr.f32.gmra.mrb[0].mxu0 %v2201
      %v2203 = vpop.f32.mrb[0].mxu0
      %v2204 = vadd.f32 0.0, %v2203
      %v2205 = vpop.f32.mrb[0].mxu0
      %v2206 = vadd.f32 0.0, %v2205
      %2207 = vdwg.mxu0
      %v2208 = vand.u32 %v2068, 4294901760
      %v2209 = vsub.f32 %v2068, %v2208
      %v2210 = vand.u32 %v2209, 4294901760
      %v2211 = vsub.f32 %v2209, %v2210
      %v2212 = vand.u32 %v2211, 4294901760
      %2213 = vmatprep.subr.mxu0 %v2212
      %v2214 = vand.u32 %v2067, 4294901760
      %v2215 = vsub.f32 %v2067, %v2214
      %v2216 = vand.u32 %v2215, 4294901760
      %v2217 = vsub.f32 %v2215, %v2216
      %v2218 = vand.u32 %v2217, 4294901760
      %2219 = vmatpush1.msra.mxu0 %v2218
      %v2220 = vand.u32 %v2070, 4294901760
      %v2221 = vsub.f32 %v2070, %v2220
      %v2222 = vand.u32 %v2221, 4294901760
      %v2223 = vsub.f32 %v2221, %v2222
      %v2224 = vand.u32 %v2223, 4294901760
      %2225 = vmatprep.subr.mxu0 %v2224
      %v2226 = vand.u32 %v2069, 4294901760
      %v2227 = vsub.f32 %v2069, %v2226
      %v2228 = vand.u32 %v2227, 4294901760
      %v2229 = vsub.f32 %v2227, %v2228
      %v2230 = vand.u32 %v2229, 4294901760
      %2231 = vmatpush1.msra.mxu0 %v2230
      %v2232 = vand.u32 %v2072, 4294901760
      %v2233 = vsub.f32 %v2072, %v2232
      %v2234 = vand.u32 %v2233, 4294901760
      %v2235 = vsub.f32 %v2233, %v2234
      %v2236 = vand.u32 %v2235, 4294901760
      %2237 = vmatprep.subr.mxu0 %v2236
      %v2238 = vand.u32 %v2071, 4294901760
      %v2239 = vsub.f32 %v2071, %v2238
      %v2240 = vand.u32 %v2239, 4294901760
      %v2241 = vsub.f32 %v2239, %v2240
      %v2242 = vand.u32 %v2241, 4294901760
      %2243 = vmatpush1.msra.mxu0 %v2242
      %v2244 = vand.u32 %v2074, 4294901760
      %v2245 = vsub.f32 %v2074, %v2244
      %v2246 = vand.u32 %v2245, 4294901760
      %v2247 = vsub.f32 %v2245, %v2246
      %v2248 = vand.u32 %v2247, 4294901760
      %2249 = vmatprep.subr.mxu0 %v2248
      %v2250 = vand.u32 %v2073, 4294901760
      %v2251 = vsub.f32 %v2073, %v2250
      %v2252 = vand.u32 %v2251, 4294901760
      %v2253 = vsub.f32 %v2251, %v2252
      %v2254 = vand.u32 %v2253, 4294901760
      %2255 = vmatpush1.msra.mxu0 %v2254
      %v2256 = vand.u32 %v2076, 4294901760
      %v2257 = vsub.f32 %v2076, %v2256
      %v2258 = vand.u32 %v2257, 4294901760
      %v2259 = vsub.f32 %v2257, %v2258
      %v2260 = vand.u32 %v2259, 4294901760
      %2261 = vmatprep.subr.mxu0 %v2260
      %v2262 = vand.u32 %v2075, 4294901760
      %v2263 = vsub.f32 %v2075, %v2262
      %v2264 = vand.u32 %v2263, 4294901760
      %v2265 = vsub.f32 %v2263, %v2264
      %v2266 = vand.u32 %v2265, 4294901760
      %2267 = vmatpush1.msra.mxu0 %v2266
      %v2268 = vand.u32 %v2078, 4294901760
      %v2269 = vsub.f32 %v2078, %v2268
      %v2270 = vand.u32 %v2269, 4294901760
      %v2271 = vsub.f32 %v2269, %v2270
      %v2272 = vand.u32 %v2271, 4294901760
      %2273 = vmatprep.subr.mxu0 %v2272
      %v2274 = vand.u32 %v2077, 4294901760
      %v2275 = vsub.f32 %v2077, %v2274
      %v2276 = vand.u32 %v2275, 4294901760
      %v2277 = vsub.f32 %v2275, %v2276
      %v2278 = vand.u32 %v2277, 4294901760
      %2279 = vmatpush1.msra.mxu0 %v2278
      %v2280 = vand.u32 %v2080, 4294901760
      %v2281 = vsub.f32 %v2080, %v2280
      %v2282 = vand.u32 %v2281, 4294901760
      %v2283 = vsub.f32 %v2281, %v2282
      %v2284 = vand.u32 %v2283, 4294901760
      %2285 = vmatprep.subr.mxu0 %v2284
      %v2286 = vand.u32 %v2079, 4294901760
      %v2287 = vsub.f32 %v2079, %v2286
      %v2288 = vand.u32 %v2287, 4294901760
      %v2289 = vsub.f32 %v2287, %v2288
      %v2290 = vand.u32 %v2289, 4294901760
      %2291 = vmatpush1.msra.mxu0 %v2290
      %v2292 = vand.u32 %v2082, 4294901760
      %v2293 = vsub.f32 %v2082, %v2292
      %v2294 = vand.u32 %v2293, 4294901760
      %v2295 = vsub.f32 %v2293, %v2294
      %v2296 = vand.u32 %v2295, 4294901760
      %2297 = vmatprep.subr.mxu0 %v2296
      %v2298 = vand.u32 %v2081, 4294901760
      %v2299 = vsub.f32 %v2081, %v2298
      %v2300 = vand.u32 %v2299, 4294901760
      %v2301 = vsub.f32 %v2299, %v2300
      %v2302 = vand.u32 %v2301, 4294901760
      %2303 = vmatpush1.msra.mxu0 %v2302
      %2304 = vmatprep.subr.mxu0 0.0
      %2305 = vmatpush1.msra.mxu0 0.0
      %2306 = vmatprep.subr.mxu0 0.0
      %2307 = vmatpush1.msra.mxu0 0.0
      %2308 = vmatprep.subr.mxu0 0.0
      %2309 = vmatpush1.msra.mxu0 0.0
      %2310 = vmatprep.subr.mxu0 0.0
      %2311 = vmatpush1.msra.mxu0 0.0
      %2312 = vmatprep.subr.mxu0 0.0
      %2313 = vmatpush1.msra.mxu0 0.0
      %2314 = vmatprep.subr.mxu0 0.0
      %2315 = vmatpush1.msra.mxu0 0.0
      %2316 = vmatprep.subr.mxu0 0.0
      %2317 = vmatpush1.msra.mxu0 0.0
      %2318 = vmatprep.subr.mxu0 0.0
      %2319 = vmatpush1.msra.mxu0 0.0
      %2320 = vmatprep.subr.mxu0 0.0
      %2321 = vmatpush1.msra.mxu0 0.0
      %2322 = vmatprep.subr.mxu0 0.0
      %2323 = vmatpush1.msra.mxu0 0.0
      %2324 = vmatprep.subr.mxu0 0.0
      %2325 = vmatpush1.msra.mxu0 0.0
      %2326 = vmatprep.subr.mxu0 0.0
      %2327 = vmatpush1.msra.mxu0 0.0
      %2328 = vmatprep.subr.mxu0 0.0
      %2329 = vmatpush1.msra.mxu0 0.0
      %2330 = vmatprep.subr.mxu0 0.0
      %2331 = vmatpush1.msra.mxu0 0.0
      %2332 = vmatprep.subr.mxu0 0.0
      %2333 = vmatpush1.msra.mxu0 0.0
      %2334 = vmatprep.subr.mxu0 0.0
      %2335 = vmatpush1.msra.mxu0 0.0
      %2336 = vmatprep.subr.mxu0 0.0
      %2337 = vmatpush1.msra.mxu0 0.0
      %2338 = vmatprep.subr.mxu0 0.0
      %2339 = vmatpush1.msra.mxu0 0.0
      %2340 = vmatprep.subr.mxu0 0.0
      %2341 = vmatpush1.msra.mxu0 0.0
      %2342 = vmatprep.subr.mxu0 0.0
      %2343 = vmatpush1.msra.mxu0 0.0
      %2344 = vmatprep.subr.mxu0 0.0
      %2345 = vmatpush1.msra.mxu0 0.0
      %2346 = vmatprep.subr.mxu0 0.0
      %2347 = vmatpush1.msra.mxu0 0.0
      %2348 = vmatprep.subr.mxu0 0.0
      %2349 = vmatpush1.msra.mxu0 0.0
      %2350 = vmatprep.subr.mxu0 0.0
      %2351 = vmatpush1.msra.mxu0 0.0
      %2352 = vmatprep.mubr.f32.mxu0 0.0
      %v2353 = vand.u32 %v364, 4294901760
      %2354 = vmatmul.mubr.f32.gmra.mrb[0].mxu0 %v2353
      %v2355 = vpop.f32.mrb[0].mxu0
      %v2356 = vadd.f32 %v2171, %v2355
      %v2357 = vpop.f32.mrb[0].mxu0
      %v2358 = vadd.f32 %v2173, %v2357
      %2359 = vmatprep.mubr.f32.mxu0 0.0
      %v2360 = vand.u32 %v367, 4294901760
      %2361 = vmatmul.mubr.f32.gmra.mrb[0].mxu0 %v2360
      %v2362 = vpop.f32.mrb[0].mxu0
      %v2363 = vadd.f32 %v2182, %v2362
      %v2364 = vpop.f32.mrb[0].mxu0
      %v2365 = vadd.f32 %v2184, %v2364
      %2366 = vmatprep.mubr.f32.mxu0 0.0
      %v2367 = vand.u32 %v370, 4294901760
      %2368 = vmatmul.mubr.f32.gmra.mrb[0].mxu0 %v2367
      %v2369 = vpop.f32.mrb[0].mxu0
      %v2370 = vadd.f32 %v2193, %v2369
      %v2371 = vpop.f32.mrb[0].mxu0
      %v2372 = vadd.f32 %v2195, %v2371
      %2373 = vmatprep.mubr.f32.mxu0 0.0
      %v2374 = vand.u32 %v373, 4294901760
      %2375 = vmatmul.mubr.f32.gmra.mrb[0].mxu0 %v2374
      %v2376 = vpop.f32.mrb[0].mxu0
      %v2377 = vadd.f32 %v2204, %v2376
      %v2378 = vpop.f32.mrb[0].mxu0
      %v2379 = vadd.f32 %v2206, %v2378
      %2380 = vdwg.mxu0
      %v2381 = vand.u32 %v2068, 4294901760
      %v2382 = vsub.f32 %v2068, %v2381
      %2383 = vmatprep.subr.mxu0 %v2382
      %v2384 = vand.u32 %v2067, 4294901760
      %v2385 = vsub.f32 %v2067, %v2384
      %2386 = vmatpush1.msra.mxu0 %v2385
      %v2387 = vand.u32 %v2070, 4294901760
      %v2388 = vsub.f32 %v2070, %v2387
      %2389 = vmatprep.subr.mxu0 %v2388
      %v2390 = vand.u32 %v2069, 4294901760
      %v2391 = vsub.f32 %v2069, %v2390
      %2392 = vmatpush1.msra.mxu0 %v2391
      %v2393 = vand.u32 %v2072, 4294901760
      %v2394 = vsub.f32 %v2072, %v2393
      %2395 = vmatprep.subr.mxu0 %v2394
      %v2396 = vand.u32 %v2071, 4294901760
      %v2397 = vsub.f32 %v2071, %v2396
      %2398 = vmatpush1.msra.mxu0 %v2397
      %v2399 = vand.u32 %v2074, 4294901760
      %v2400 = vsub.f32 %v2074, %v2399
      %2401 = vmatprep.subr.mxu0 %v2400
      %v2402 = vand.u32 %v2073, 4294901760
      %v2403 = vsub.f32 %v2073, %v2402
      %2404 = vmatpush1.msra.mxu0 %v2403
      %v2405 = vand.u32 %v2076, 4294901760
      %v2406 = vsub.f32 %v2076, %v2405
      %2407 = vmatprep.subr.mxu0 %v2406
      %v2408 = vand.u32 %v2075, 4294901760
      %v2409 = vsub.f32 %v2075, %v2408
      %2410 = vmatpush1.msra.mxu0 %v2409
      %v2411 = vand.u32 %v2078, 4294901760
      %v2412 = vsub.f32 %v2078, %v2411
      %2413 = vmatprep.subr.mxu0 %v2412
      %v2414 = vand.u32 %v2077, 4294901760
      %v2415 = vsub.f32 %v2077, %v2414
      %2416 = vmatpush1.msra.mxu0 %v2415
      %v2417 = vand.u32 %v2080, 4294901760
      %v2418 = vsub.f32 %v2080, %v2417
      %2419 = vmatprep.subr.mxu0 %v2418
      %v2420 = vand.u32 %v2079, 4294901760
      %v2421 = vsub.f32 %v2079, %v2420
      %2422 = vmatpush1.msra.mxu0 %v2421
      %v2423 = vand.u32 %v2082, 4294901760
      %v2424 = vsub.f32 %v2082, %v2423
      %2425 = vmatprep.subr.mxu0 %v2424
      %v2426 = vand.u32 %v2081, 4294901760
      %v2427 = vsub.f32 %v2081, %v2426
      %2428 = vmatpush1.msra.mxu0 %v2427
      %2429 = vmatprep.subr.mxu0 0.0
      %2430 = vmatpush1.msra.mxu0 0.0
      %2431 = vmatprep.subr.mxu0 0.0
      %2432 = vmatpush1.msra.mxu0 0.0
      %2433 = vmatprep.subr.mxu0 0.0
      %2434 = vmatpush1.msra.mxu0 0.0
      %2435 = vmatprep.subr.mxu0 0.0
      %2436 = vmatpush1.msra.mxu0 0.0
      %2437 = vmatprep.subr.mxu0 0.0
      %2438 = vmatpush1.msra.mxu0 0.0
      %2439 = vmatprep.subr.mxu0 0.0
      %2440 = vmatpush1.msra.mxu0 0.0
      %2441 = vmatprep.subr.mxu0 0.0
      %2442 = vmatpush1.msra.mxu0 0.0
      %2443 = vmatprep.subr.mxu0 0.0
      %2444 = vmatpush1.msra.mxu0 0.0
      %2445 = vmatprep.subr.mxu0 0.0
      %2446 = vmatpush1.msra.mxu0 0.0
      %2447 = vmatprep.subr.mxu0 0.0
      %2448 = vmatpush1.msra.mxu0 0.0
      %2449 = vmatprep.subr.mxu0 0.0
      %2450 = vmatpush1.msra.mxu0 0.0
      %2451 = vmatprep.subr.mxu0 0.0
      %2452 = vmatpush1.msra.mxu0 0.0
      %2453 = vmatprep.subr.mxu0 0.0
      %2454 = vmatpush1.msra.mxu0 0.0
      %2455 = vmatprep.subr.mxu0 0.0
      %2456 = vmatpush1.msra.mxu0 0.0
      %2457 = vmatprep.subr.mxu0 0.0
      %2458 = vmatpush1.msra.mxu0 0.0
      %2459 = vmatprep.subr.mxu0 0.0
      %2460 = vmatpush1.msra.mxu0 0.0
      %2461 = vmatprep.subr.mxu0 0.0
      %2462 = vmatpush1.msra.mxu0 0.0
      %2463 = vmatprep.subr.mxu0 0.0
      %2464 = vmatpush1.msra.mxu0 0.0
      %2465 = vmatprep.subr.mxu0 0.0
      %2466 = vmatpush1.msra.mxu0 0.0
      %2467 = vmatprep.subr.mxu0 0.0
      %2468 = vmatpush1.msra.mxu0 0.0
      %2469 = vmatprep.subr.mxu0 0.0
      %2470 = vmatpush1.msra.mxu0 0.0
      %2471 = vmatprep.subr.mxu0 0.0
      %2472 = vmatpush1.msra.mxu0 0.0
      %2473 = vmatprep.subr.mxu0 0.0
      %2474 = vmatpush1.msra.mxu0 0.0
      %2475 = vmatprep.subr.mxu0 0.0
      %2476 = vmatpush1.msra.mxu0 0.0
      %2477 = vmatprep.mubr.f32.mxu0 0.0
      %v2478 = vand.u32 %v364, 4294901760
      %v2479 = vsub.f32 %v364, %v2478
      %2480 = vmatmul.mubr.f32.gmra.mrb[0].mxu0 %v2479
      %v2481 = vpop.f32.mrb[0].mxu0
      %v2482 = vadd.f32 %v2356, %v2481
      %v2483 = vpop.f32.mrb[0].mxu0
      %v2484 = vadd.f32 %v2358, %v2483
      %2485 = vmatprep.mubr.f32.mxu0 0.0
      %v2486 = vand.u32 %v367, 4294901760
      %v2487 = vsub.f32 %v367, %v2486
      %2488 = vmatmul.mubr.f32.gmra.mrb[0].mxu0 %v2487
      %v2489 = vpop.f32.mrb[0].mxu0
      %v2490 = vadd.f32 %v2363, %v2489
      %v2491 = vpop.f32.mrb[0].mxu0
      %v2492 = vadd.f32 %v2365, %v2491
      %2493 = vmatprep.mubr.f32.mxu0 0.0
      %v2494 = vand.u32 %v370, 4294901760
      %v2495 = vsub.f32 %v370, %v2494
      %2496 = vmatmul.mubr.f32.gmra.mrb[0].mxu0 %v2495
      %v2497 = vpop.f32.mrb[0].mxu0
      %v2498 = vadd.f32 %v2370, %v2497
      %v2499 = vpop.f32.mrb[0].mxu0
      %v2500 = vadd.f32 %v2372, %v2499
      %2501 = vmatprep.mubr.f32.mxu0 0.0
      %v2502 = vand.u32 %v373, 4294901760
      %v2503 = vsub.f32 %v373, %v2502
      %2504 = vmatmul.mubr.f32.gmra.mrb[0].mxu0 %v2503
      %v2505 = vpop.f32.mrb[0].mxu0
      %v2506 = vadd.f32 %v2377, %v2505
      %v2507 = vpop.f32.mrb[0].mxu0
      %v2508 = vadd.f32 %v2379, %v2507
      %2509 = vdwg.mxu0
      %v2510 = vand.u32 %v2068, 4294901760
      %2511 = vmatprep.subr.mxu0 %v2510
      %v2512 = vand.u32 %v2067, 4294901760
      %2513 = vmatpush1.msra.mxu0 %v2512
      %v2514 = vand.u32 %v2070, 4294901760
      %2515 = vmatprep.subr.mxu0 %v2514
      %v2516 = vand.u32 %v2069, 4294901760
      %2517 = vmatpush1.msra.mxu0 %v2516
      %v2518 = vand.u32 %v2072, 4294901760
      %2519 = vmatprep.subr.mxu0 %v2518
      %v2520 = vand.u32 %v2071, 4294901760
      %2521 = vmatpush1.msra.mxu0 %v2520
      %v2522 = vand.u32 %v2074, 4294901760
      %2523 = vmatprep.subr.mxu0 %v2522
      %v2524 = vand.u32 %v2073, 4294901760
      %2525 = vmatpush1.msra.mxu0 %v2524
      %v2526 = vand.u32 %v2076, 4294901760
      %2527 = vmatprep.subr.mxu0 %v2526
      %v2528 = vand.u32 %v2075, 4294901760
      %2529 = vmatpush1.msra.mxu0 %v2528
      %v2530 = vand.u32 %v2078, 4294901760
      %2531 = vmatprep.subr.mxu0 %v2530
      %v2532 = vand.u32 %v2077, 4294901760
      %2533 = vmatpush1.msra.mxu0 %v2532
      %v2534 = vand.u32 %v2080, 4294901760
      %2535 = vmatprep.subr.mxu0 %v2534
      %v2536 = vand.u32 %v2079, 4294901760
      %2537 = vmatpush1.msra.mxu0 %v2536
      %v2538 = vand.u32 %v2082, 4294901760
      %2539 = vmatprep.subr.mxu0 %v2538
      %v2540 = vand.u32 %v2081, 4294901760
      %2541 = vmatpush1.msra.mxu0 %v2540
      %2542 = vmatprep.subr.mxu0 0.0
      %2543 = vmatpush1.msra.mxu0 0.0
      %2544 = vmatprep.subr.mxu0 0.0
      %2545 = vmatpush1.msra.mxu0 0.0
      %2546 = vmatprep.subr.mxu0 0.0
      %2547 = vmatpush1.msra.mxu0 0.0
      %2548 = vmatprep.subr.mxu0 0.0
      %2549 = vmatpush1.msra.mxu0 0.0
      %2550 = vmatprep.subr.mxu0 0.0
      %2551 = vmatpush1.msra.mxu0 0.0
      %2552 = vmatprep.subr.mxu0 0.0
      %2553 = vmatpush1.msra.mxu0 0.0
      %2554 = vmatprep.subr.mxu0 0.0
      %2555 = vmatpush1.msra.mxu0 0.0
      %2556 = vmatprep.subr.mxu0 0.0
      %2557 = vmatpush1.msra.mxu0 0.0
      %2558 = vmatprep.subr.mxu0 0.0
      %2559 = vmatpush1.msra.mxu0 0.0
      %2560 = vmatprep.subr.mxu0 0.0
      %2561 = vmatpush1.msra.mxu0 0.0
      %2562 = vmatprep.subr.mxu0 0.0
      %2563 = vmatpush1.msra.mxu0 0.0
      %2564 = vmatprep.subr.mxu0 0.0
      %2565 = vmatpush1.msra.mxu0 0.0
      %2566 = vmatprep.subr.mxu0 0.0
      %2567 = vmatpush1.msra.mxu0 0.0
      %2568 = vmatprep.subr.mxu0 0.0
      %2569 = vmatpush1.msra.mxu0 0.0
      %2570 = vmatprep.subr.mxu0 0.0
      %2571 = vmatpush1.msra.mxu0 0.0
      %2572 = vmatprep.subr.mxu0 0.0
      %2573 = vmatpush1.msra.mxu0 0.0
      %2574 = vmatprep.subr.mxu0 0.0
      %2575 = vmatpush1.msra.mxu0 0.0
      %2576 = vmatprep.subr.mxu0 0.0
      %2577 = vmatpush1.msra.mxu0 0.0
      %2578 = vmatprep.subr.mxu0 0.0
      %2579 = vmatpush1.msra.mxu0 0.0
      %2580 = vmatprep.subr.mxu0 0.0
      %2581 = vmatpush1.msra.mxu0 0.0
      %2582 = vmatprep.subr.mxu0 0.0
      %2583 = vmatpush1.msra.mxu0 0.0
      %2584 = vmatprep.subr.mxu0 0.0
      %2585 = vmatpush1.msra.mxu0 0.0
      %2586 = vmatprep.subr.mxu0 0.0
      %2587 = vmatpush1.msra.mxu0 0.0
      %2588 = vmatprep.subr.mxu0 0.0
      %2589 = vmatpush1.msra.mxu0 0.0
      %2590 = vmatprep.mubr.f32.mxu0 0.0
      %v2591 = vand.u32 %v364, 4294901760
      %v2592 = vsub.f32 %v364, %v2591
      %v2593 = vand.u32 %v2592, 4294901760
      %2594 = vmatmul.mubr.f32.gmra.mrb[0].mxu0 %v2593
      %v2595 = vpop.f32.mrb[0].mxu0
      %v2596 = vadd.f32 %v2482, %v2595
      %v2597 = vpop.f32.mrb[0].mxu0
      %v2598 = vadd.f32 %v2484, %v2597
      %2599 = vmatprep.mubr.f32.mxu0 0.0
      %v2600 = vand.u32 %v367, 4294901760
      %v2601 = vsub.f32 %v367, %v2600
      %v2602 = vand.u32 %v2601, 4294901760
      %2603 = vmatmul.mubr.f32.gmra.mrb[0].mxu0 %v2602
      %v2604 = vpop.f32.mrb[0].mxu0
      %v2605 = vadd.f32 %v2490, %v2604
      %v2606 = vpop.f32.mrb[0].mxu0
      %v2607 = vadd.f32 %v2492, %v2606
      %2608 = vmatprep.mubr.f32.mxu0 0.0
      %v2609 = vand.u32 %v370, 4294901760
      %v2610 = vsub.f32 %v370, %v2609
      %v2611 = vand.u32 %v2610, 4294901760
      %2612 = vmatmul.mubr.f32.gmra.mrb[0].mxu0 %v2611
      %v2613 = vpop.f32.mrb[0].mxu0
      %v2614 = vadd.f32 %v2498, %v2613
      %v2615 = vpop.f32.mrb[0].mxu0
      %v2616 = vadd.f32 %v2500, %v2615
      %2617 = vmatprep.mubr.f32.mxu0 0.0
      %v2618 = vand.u32 %v373, 4294901760
      %v2619 = vsub.f32 %v373, %v2618
      %v2620 = vand.u32 %v2619, 4294901760
      %2621 = vmatmul.mubr.f32.gmra.mrb[0].mxu0 %v2620
      %v2622 = vpop.f32.mrb[0].mxu0
      %v2623 = vadd.f32 %v2506, %v2622
      %v2624 = vpop.f32.mrb[0].mxu0
      %v2625 = vadd.f32 %v2508, %v2624
      %2626 = vdwg.mxu0
      %v2627 = vand.u32 %v2068, 4294901760
      %v2628 = vsub.f32 %v2068, %v2627
      %v2629 = vand.u32 %v2628, 4294901760
      %2630 = vmatprep.subr.mxu0 %v2629
      %v2631 = vand.u32 %v2067, 4294901760
      %v2632 = vsub.f32 %v2067, %v2631
      %v2633 = vand.u32 %v2632, 4294901760
      %2634 = vmatpush1.msra.mxu0 %v2633
      %v2635 = vand.u32 %v2070, 4294901760
      %v2636 = vsub.f32 %v2070, %v2635
      %v2637 = vand.u32 %v2636, 4294901760
      %2638 = vmatprep.subr.mxu0 %v2637
      %v2639 = vand.u32 %v2069, 4294901760
      %v2640 = vsub.f32 %v2069, %v2639
      %v2641 = vand.u32 %v2640, 4294901760
      %2642 = vmatpush1.msra.mxu0 %v2641
      %v2643 = vand.u32 %v2072, 4294901760
      %v2644 = vsub.f32 %v2072, %v2643
      %v2645 = vand.u32 %v2644, 4294901760
      %2646 = vmatprep.subr.mxu0 %v2645
      %v2647 = vand.u32 %v2071, 4294901760
      %v2648 = vsub.f32 %v2071, %v2647
      %v2649 = vand.u32 %v2648, 4294901760
      %2650 = vmatpush1.msra.mxu0 %v2649
      %v2651 = vand.u32 %v2074, 4294901760
      %v2652 = vsub.f32 %v2074, %v2651
      %v2653 = vand.u32 %v2652, 4294901760
      %2654 = vmatprep.subr.mxu0 %v2653
      %v2655 = vand.u32 %v2073, 4294901760
      %v2656 = vsub.f32 %v2073, %v2655
      %v2657 = vand.u32 %v2656, 4294901760
      %2658 = vmatpush1.msra.mxu0 %v2657
      %v2659 = vand.u32 %v2076, 4294901760
      %v2660 = vsub.f32 %v2076, %v2659
      %v2661 = vand.u32 %v2660, 4294901760
      %2662 = vmatprep.subr.mxu0 %v2661
      %v2663 = vand.u32 %v2075, 4294901760
      %v2664 = vsub.f32 %v2075, %v2663
      %v2665 = vand.u32 %v2664, 4294901760
      %2666 = vmatpush1.msra.mxu0 %v2665
      %v2667 = vand.u32 %v2078, 4294901760
      %v2668 = vsub.f32 %v2078, %v2667
      %v2669 = vand.u32 %v2668, 4294901760
      %2670 = vmatprep.subr.mxu0 %v2669
      %v2671 = vand.u32 %v2077, 4294901760
      %v2672 = vsub.f32 %v2077, %v2671
      %v2673 = vand.u32 %v2672, 4294901760
      %2674 = vmatpush1.msra.mxu0 %v2673
      %v2675 = vand.u32 %v2080, 4294901760
      %v2676 = vsub.f32 %v2080, %v2675
      %v2677 = vand.u32 %v2676, 4294901760
      %2678 = vmatprep.subr.mxu0 %v2677
      %v2679 = vand.u32 %v2079, 4294901760
      %v2680 = vsub.f32 %v2079, %v2679
      %v2681 = vand.u32 %v2680, 4294901760
      %2682 = vmatpush1.msra.mxu0 %v2681
      %v2683 = vand.u32 %v2082, 4294901760
      %v2684 = vsub.f32 %v2082, %v2683
      %v2685 = vand.u32 %v2684, 4294901760
      %2686 = vmatprep.subr.mxu0 %v2685
      %v2687 = vand.u32 %v2081, 4294901760
      %v2688 = vsub.f32 %v2081, %v2687
      %v2689 = vand.u32 %v2688, 4294901760
      %2690 = vmatpush1.msra.mxu0 %v2689
      %2691 = vmatprep.subr.mxu0 0.0
      %2692 = vmatpush1.msra.mxu0 0.0
      %2693 = vmatprep.subr.mxu0 0.0
      %2694 = vmatpush1.msra.mxu0 0.0
      %2695 = vmatprep.subr.mxu0 0.0
      %2696 = vmatpush1.msra.mxu0 0.0
      %2697 = vmatprep.subr.mxu0 0.0
      %2698 = vmatpush1.msra.mxu0 0.0
      %2699 = vmatprep.subr.mxu0 0.0
      %2700 = vmatpush1.msra.mxu0 0.0
      %2701 = vmatprep.subr.mxu0 0.0
      %2702 = vmatpush1.msra.mxu0 0.0
      %2703 = vmatprep.subr.mxu0 0.0
      %2704 = vmatpush1.msra.mxu0 0.0
      %2705 = vmatprep.subr.mxu0 0.0
      %2706 = vmatpush1.msra.mxu0 0.0
      %2707 = vmatprep.subr.mxu0 0.0
      %2708 = vmatpush1.msra.mxu0 0.0
      %2709 = vmatprep.subr.mxu0 0.0
      %2710 = vmatpush1.msra.mxu0 0.0
      %2711 = vmatprep.subr.mxu0 0.0
      %2712 = vmatpush1.msra.mxu0 0.0
      %2713 = vmatprep.subr.mxu0 0.0
      %2714 = vmatpush1.msra.mxu0 0.0
      %2715 = vmatprep.subr.mxu0 0.0
      %2716 = vmatpush1.msra.mxu0 0.0
      %2717 = vmatprep.subr.mxu0 0.0
      %2718 = vmatpush1.msra.mxu0 0.0
      %2719 = vmatprep.subr.mxu0 0.0
      %2720 = vmatpush1.msra.mxu0 0.0
      %2721 = vmatprep.subr.mxu0 0.0
      %2722 = vmatpush1.msra.mxu0 0.0
      %2723 = vmatprep.subr.mxu0 0.0
      %2724 = vmatpush1.msra.mxu0 0.0
      %2725 = vmatprep.subr.mxu0 0.0
      %2726 = vmatpush1.msra.mxu0 0.0
      %2727 = vmatprep.subr.mxu0 0.0
      %2728 = vmatpush1.msra.mxu0 0.0
      %2729 = vmatprep.subr.mxu0 0.0
      %2730 = vmatpush1.msra.mxu0 0.0
      %2731 = vmatprep.subr.mxu0 0.0
      %2732 = vmatpush1.msra.mxu0 0.0
      %2733 = vmatprep.subr.mxu0 0.0
      %2734 = vmatpush1.msra.mxu0 0.0
      %2735 = vmatprep.subr.mxu0 0.0
      %2736 = vmatpush1.msra.mxu0 0.0
      %2737 = vmatprep.subr.mxu0 0.0
      %2738 = vmatpush1.msra.mxu0 0.0
      %2739 = vmatprep.mubr.f32.mxu0 0.0
      %v2740 = vand.u32 %v364, 4294901760
      %2741 = vmatmul.mubr.f32.gmra.mrb[0].mxu0 %v2740
      %v2742 = vpop.f32.mrb[0].mxu0
      %v2743 = vadd.f32 %v2596, %v2742
      %v2744 = vpop.f32.mrb[0].mxu0
      %v2745 = vadd.f32 %v2598, %v2744
      %2746 = vmatprep.mubr.f32.mxu0 0.0
      %v2747 = vand.u32 %v367, 4294901760
      %2748 = vmatmul.mubr.f32.gmra.mrb[0].mxu0 %v2747
      %v2749 = vpop.f32.mrb[0].mxu0
      %v2750 = vadd.f32 %v2605, %v2749
      %v2751 = vpop.f32.mrb[0].mxu0
      %v2752 = vadd.f32 %v2607, %v2751
      %2753 = vmatprep.mubr.f32.mxu0 0.0
      %v2754 = vand.u32 %v370, 4294901760
      %2755 = vmatmul.mubr.f32.gmra.mrb[0].mxu0 %v2754
      %v2756 = vpop.f32.mrb[0].mxu0
      %v2757 = vadd.f32 %v2614, %v2756
      %v2758 = vpop.f32.mrb[0].mxu0
      %v2759 = vadd.f32 %v2616, %v2758
      %2760 = vmatprep.mubr.f32.mxu0 0.0
      %v2761 = vand.u32 %v373, 4294901760
      %2762 = vmatmul.mubr.f32.gmra.mrb[0].mxu0 %v2761
      %v2763 = vpop.f32.mrb[0].mxu0
      %v2764 = vadd.f32 %v2623, %v2763
      %v2765 = vpop.f32.mrb[0].mxu0
      %v2766 = vadd.f32 %v2625, %v2765
      %2767 = vdwg.mxu0
      %v2768 = vand.u32 %v2068, 4294901760
      %2769 = vmatprep.subr.mxu0 %v2768
      %v2770 = vand.u32 %v2067, 4294901760
      %2771 = vmatpush1.msra.mxu0 %v2770
      %v2772 = vand.u32 %v2070, 4294901760
      %2773 = vmatprep.subr.mxu0 %v2772
      %v2774 = vand.u32 %v2069, 4294901760
      %2775 = vmatpush1.msra.mxu0 %v2774
      %v2776 = vand.u32 %v2072, 4294901760
      %2777 = vmatprep.subr.mxu0 %v2776
      %v2778 = vand.u32 %v2071, 4294901760
      %2779 = vmatpush1.msra.mxu0 %v2778
      %v2780 = vand.u32 %v2074, 4294901760
      %2781 = vmatprep.subr.mxu0 %v2780
      %v2782 = vand.u32 %v2073, 4294901760
      %2783 = vmatpush1.msra.mxu0 %v2782
      %v2784 = vand.u32 %v2076, 4294901760
      %2785 = vmatprep.subr.mxu0 %v2784
      %v2786 = vand.u32 %v2075, 4294901760
      %2787 = vmatpush1.msra.mxu0 %v2786
      %v2788 = vand.u32 %v2078, 4294901760
      %2789 = vmatprep.subr.mxu0 %v2788
      %v2790 = vand.u32 %v2077, 4294901760
      %2791 = vmatpush1.msra.mxu0 %v2790
      %v2792 = vand.u32 %v2080, 4294901760
      %2793 = vmatprep.subr.mxu0 %v2792
      %v2794 = vand.u32 %v2079, 4294901760
      %2795 = vmatpush1.msra.mxu0 %v2794
      %v2796 = vand.u32 %v2082, 4294901760
      %2797 = vmatprep.subr.mxu0 %v2796
      %v2798 = vand.u32 %v2081, 4294901760
      %2799 = vmatpush1.msra.mxu0 %v2798
      %2800 = vmatprep.subr.mxu0 0.0
      %2801 = vmatpush1.msra.mxu0 0.0
      %2802 = vmatprep.subr.mxu0 0.0
      %2803 = vmatpush1.msra.mxu0 0.0
      %2804 = vmatprep.subr.mxu0 0.0
      %2805 = vmatpush1.msra.mxu0 0.0
      %2806 = vmatprep.subr.mxu0 0.0
      %2807 = vmatpush1.msra.mxu0 0.0
      %2808 = vmatprep.subr.mxu0 0.0
      %2809 = vmatpush1.msra.mxu0 0.0
      %2810 = vmatprep.subr.mxu0 0.0
      %2811 = vmatpush1.msra.mxu0 0.0
      %2812 = vmatprep.subr.mxu0 0.0
      %2813 = vmatpush1.msra.mxu0 0.0
      %2814 = vmatprep.subr.mxu0 0.0
      %2815 = vmatpush1.msra.mxu0 0.0
      %2816 = vmatprep.subr.mxu0 0.0
      %2817 = vmatpush1.msra.mxu0 0.0
      %2818 = vmatprep.subr.mxu0 0.0
      %2819 = vmatpush1.msra.mxu0 0.0
      %2820 = vmatprep.subr.mxu0 0.0
      %2821 = vmatpush1.msra.mxu0 0.0
      %2822 = vmatprep.subr.mxu0 0.0
      %2823 = vmatpush1.msra.mxu0 0.0
      %2824 = vmatprep.subr.mxu0 0.0
      %2825 = vmatpush1.msra.mxu0 0.0
      %2826 = vmatprep.subr.mxu0 0.0
      %2827 = vmatpush1.msra.mxu0 0.0
      %2828 = vmatprep.subr.mxu0 0.0
      %2829 = vmatpush1.msra.mxu0 0.0
      %2830 = vmatprep.subr.mxu0 0.0
      %2831 = vmatpush1.msra.mxu0 0.0
      %2832 = vmatprep.subr.mxu0 0.0
      %2833 = vmatpush1.msra.mxu0 0.0
      %2834 = vmatprep.subr.mxu0 0.0
      %2835 = vmatpush1.msra.mxu0 0.0
      %2836 = vmatprep.subr.mxu0 0.0
      %2837 = vmatpush1.msra.mxu0 0.0
      %2838 = vmatprep.subr.mxu0 0.0
      %2839 = vmatpush1.msra.mxu0 0.0
      %2840 = vmatprep.subr.mxu0 0.0
      %2841 = vmatpush1.msra.mxu0 0.0
      %2842 = vmatprep.subr.mxu0 0.0
      %2843 = vmatpush1.msra.mxu0 0.0
      %2844 = vmatprep.subr.mxu0 0.0
      %2845 = vmatpush1.msra.mxu0 0.0
      %2846 = vmatprep.subr.mxu0 0.0
      %2847 = vmatpush1.msra.mxu0 0.0
      %2848 = vmatprep.mubr.f32.mxu0 0.0
      %v2849 = vand.u32 %v364, 4294901760
      %2850 = vmatmul.mubr.f32.gmra.mrb[0].mxu0 %v2849
      %v2851 = vpop.f32.mrb[0].mxu0
      %v2852 = vadd.f32 %v2743, %v2851
      %v2853 = vpop.f32.mrb[0].mxu0
      %v2854 = vadd.f32 %v2745, %v2853
      %2855 = vmatprep.mubr.f32.mxu0 0.0
      %v2856 = vand.u32 %v367, 4294901760
      %2857 = vmatmul.mubr.f32.gmra.mrb[0].mxu0 %v2856
      %v2858 = vpop.f32.mrb[0].mxu0
      %v2859 = vadd.f32 %v2750, %v2858
      %v2860 = vpop.f32.mrb[0].mxu0
      %v2861 = vadd.f32 %v2752, %v2860
      %2862 = vmatprep.mubr.f32.mxu0 0.0
      %v2863 = vand.u32 %v370, 4294901760
      %2864 = vmatmul.mubr.f32.gmra.mrb[0].mxu0 %v2863
      %v2865 = vpop.f32.mrb[0].mxu0
      %v2866 = vadd.f32 %v2757, %v2865
      %v2867 = vpop.f32.mrb[0].mxu0
      %v2868 = vadd.f32 %v2759, %v2867
      %2869 = vmatprep.mubr.f32.mxu0 0.0
      %v2870 = vand.u32 %v373, 4294901760
      %2871 = vmatmul.mubr.f32.gmra.mrb[0].mxu0 %v2870
      %v2872 = vpop.f32.mrb[0].mxu0
      %v2873 = vadd.f32 %v2764, %v2872
      %v2874 = vpop.f32.mrb[0].mxu0
      %v2875 = vadd.f32 %v2766, %v2874
      %2876 = vdwg.mxu0
      %v2877 = vmul.f32 %v2019, %v2852
      %v2878 = vmul.f32 %v2020, %v2854
      %v2879 = vmul.f32 %v2021, %v2859
      %v2880 = vmul.f32 %v2022, %v2861
      %v2881 = vmul.f32 %v2023, %v2866
      %v2882 = vmul.f32 %v2024, %v2868
      %v2883 = vmul.f32 %v2025, %v2873
      %v2884 = vmul.f32 %v2026, %v2875
      %v2885 = vlaneseq
      %v2886 = vshrl.u32 %v2885, 7
      %v2887 = vsub.s32 3, %v2886
      %v2888 = vrot.slane %v295, %v2887
      %v2889 = vlaneseq
      %v2890 = vshrl.u32 %v2889, 7
      %v2891 = vsub.s32 3, %v2890
      %v2892 = vrot.slane %v296, %v2891
      %vm2893 = vcmp.eq.s32.totalorder %v2888, %v298
      %vm2894 = vcmp.eq.s32.totalorder %v2892, %v298
      %vm2895 = vcmp.eq.s32.totalorder %v2888, %v299
      %vm2896 = vcmp.eq.s32.totalorder %v2892, %v299
      %vm2897 = vcmp.eq.s32.totalorder %v2888, %v300
      %vm2898 = vcmp.eq.s32.totalorder %v2892, %v300
      %vm2899 = vcmp.eq.s32.totalorder %v2888, %v301
      %vm2900 = vcmp.eq.s32.totalorder %v2892, %v301
      %vm2901 = vcmp.eq.s32.totalorder %v2888, %v302
      %vm2902 = vcmp.eq.s32.totalorder %v2892, %v302
      %vm2903 = vcmp.eq.s32.totalorder %v2888, %v303
      %vm2904 = vcmp.eq.s32.totalorder %v2892, %v303
      %vm2905 = vcmp.eq.s32.totalorder %v2888, %v304
      %vm2906 = vcmp.eq.s32.totalorder %v2892, %v304
      %vm2907 = vcmp.eq.s32.totalorder %v2888, %v305
      %vm2908 = vcmp.eq.s32.totalorder %v2892, %v305
      %v2909 = vsel %vm2893, 1, 0
      %v2910 = vsel %vm2894, 1, 0
      %v2911 = vsel %vm2895, 1, 0
      %v2912 = vsel %vm2896, 1, 0
      %v2913 = vsel %vm2897, 1, 0
      %v2914 = vsel %vm2898, 1, 0
      %v2915 = vsel %vm2899, 1, 0
      %v2916 = vsel %vm2900, 1, 0
      %v2917 = vsel %vm2901, 1, 0
      %v2918 = vsel %vm2902, 1, 0
      %v2919 = vsel %vm2903, 1, 0
      %v2920 = vsel %vm2904, 1, 0
      %v2921 = vsel %vm2905, 1, 0
      %v2922 = vsel %vm2906, 1, 0
      %v2923 = vsel %vm2907, 1, 0
      %v2924 = vsel %vm2908, 1, 0
      %v2925 = vcvt.s32.f32 %v2909
      %v2926 = vcvt.s32.f32 %v2910
      %v2927 = vcvt.s32.f32 %v2911
      %v2928 = vcvt.s32.f32 %v2912
      %v2929 = vcvt.s32.f32 %v2913
      %v2930 = vcvt.s32.f32 %v2914
      %v2931 = vcvt.s32.f32 %v2915
      %v2932 = vcvt.s32.f32 %v2916
      %v2933 = vcvt.s32.f32 %v2917
      %v2934 = vcvt.s32.f32 %v2918
      %v2935 = vcvt.s32.f32 %v2919
      %v2936 = vcvt.s32.f32 %v2920
      %v2937 = vcvt.s32.f32 %v2921
      %v2938 = vcvt.s32.f32 %v2922
      %v2939 = vcvt.s32.f32 %v2923
      %v2940 = vcvt.s32.f32 %v2924
      %v2941 = vand.u32 %v2926, 4294901760
      %2942 = vmatprep.subr.mxu0 %v2941
      %v2943 = vand.u32 %v2925, 4294901760
      %2944 = vmatpush1.msra.mxu0 %v2943
      %v2945 = vand.u32 %v2928, 4294901760
      %2946 = vmatprep.subr.mxu0 %v2945
      %v2947 = vand.u32 %v2927, 4294901760
      %2948 = vmatpush1.msra.mxu0 %v2947
      %v2949 = vand.u32 %v2930, 4294901760
      %2950 = vmatprep.subr.mxu0 %v2949
      %v2951 = vand.u32 %v2929, 4294901760
      %2952 = vmatpush1.msra.mxu0 %v2951
      %v2953 = vand.u32 %v2932, 4294901760
      %2954 = vmatprep.subr.mxu0 %v2953
      %v2955 = vand.u32 %v2931, 4294901760
      %2956 = vmatpush1.msra.mxu0 %v2955
      %v2957 = vand.u32 %v2934, 4294901760
      %2958 = vmatprep.subr.mxu0 %v2957
      %v2959 = vand.u32 %v2933, 4294901760
      %2960 = vmatpush1.msra.mxu0 %v2959
      %v2961 = vand.u32 %v2936, 4294901760
      %2962 = vmatprep.subr.mxu0 %v2961
      %v2963 = vand.u32 %v2935, 4294901760
      %2964 = vmatpush1.msra.mxu0 %v2963
      %v2965 = vand.u32 %v2938, 4294901760
      %2966 = vmatprep.subr.mxu0 %v2965
      %v2967 = vand.u32 %v2937, 4294901760
      %2968 = vmatpush1.msra.mxu0 %v2967
      %v2969 = vand.u32 %v2940, 4294901760
      %2970 = vmatprep.subr.mxu0 %v2969
      %v2971 = vand.u32 %v2939, 4294901760
      %2972 = vmatpush1.msra.mxu0 %v2971
      %2973 = vmatprep.subr.mxu0 0.0
      %2974 = vmatpush1.msra.mxu0 0.0
      %2975 = vmatprep.subr.mxu0 0.0
      %2976 = vmatpush1.msra.mxu0 0.0
      %2977 = vmatprep.subr.mxu0 0.0
      %2978 = vmatpush1.msra.mxu0 0.0
      %2979 = vmatprep.subr.mxu0 0.0
      %2980 = vmatpush1.msra.mxu0 0.0
      %2981 = vmatprep.subr.mxu0 0.0
      %2982 = vmatpush1.msra.mxu0 0.0
      %2983 = vmatprep.subr.mxu0 0.0
      %2984 = vmatpush1.msra.mxu0 0.0
      %2985 = vmatprep.subr.mxu0 0.0
      %2986 = vmatpush1.msra.mxu0 0.0
      %2987 = vmatprep.subr.mxu0 0.0
      %2988 = vmatpush1.msra.mxu0 0.0
      %2989 = vmatprep.subr.mxu0 0.0
      %2990 = vmatpush1.msra.mxu0 0.0
      %2991 = vmatprep.subr.mxu0 0.0
      %2992 = vmatpush1.msra.mxu0 0.0
      %2993 = vmatprep.subr.mxu0 0.0
      %2994 = vmatpush1.msra.mxu0 0.0
      %2995 = vmatprep.subr.mxu0 0.0
      %2996 = vmatpush1.msra.mxu0 0.0
      %2997 = vmatprep.subr.mxu0 0.0
      %2998 = vmatpush1.msra.mxu0 0.0
      %2999 = vmatprep.subr.mxu0 0.0
      %3000 = vmatpush1.msra.mxu0 0.0
      %3001 = vmatprep.subr.mxu0 0.0
      %3002 = vmatpush1.msra.mxu0 0.0
      %3003 = vmatprep.subr.mxu0 0.0
      %3004 = vmatpush1.msra.mxu0 0.0
      %3005 = vmatprep.subr.mxu0 0.0
      %3006 = vmatpush1.msra.mxu0 0.0
      %3007 = vmatprep.subr.mxu0 0.0
      %3008 = vmatpush1.msra.mxu0 0.0
      %3009 = vmatprep.subr.mxu0 0.0
      %3010 = vmatpush1.msra.mxu0 0.0
      %3011 = vmatprep.subr.mxu0 0.0
      %3012 = vmatpush1.msra.mxu0 0.0
      %3013 = vmatprep.subr.mxu0 0.0
      %3014 = vmatpush1.msra.mxu0 0.0
      %3015 = vmatprep.subr.mxu0 0.0
      %3016 = vmatpush1.msra.mxu0 0.0
      %3017 = vmatprep.subr.mxu0 0.0
      %3018 = vmatpush1.msra.mxu0 0.0
      %3019 = vmatprep.subr.mxu0 0.0
      %3020 = vmatpush1.msra.mxu0 0.0
      %3021 = vmatprep.mubr.f32.mxu0 0.0
      %v3022 = vand.u32 %v364, 4294901760
      %v3023 = vsub.f32 %v364, %v3022
      %v3024 = vand.u32 %v3023, 4294901760
      %v3025 = vsub.f32 %v3023, %v3024
      %v3026 = vand.u32 %v3025, 4294901760
      %3027 = vmatmul.mubr.f32.gmra.mrb[0].mxu0 %v3026
      %v3028 = vpop.f32.mrb[0].mxu0
      %v3029 = vadd.f32 0.0, %v3028
      %v3030 = vpop.f32.mrb[0].mxu0
      %v3031 = vadd.f32 0.0, %v3030
      %3032 = vmatprep.mubr.f32.mxu0 0.0
      %v3033 = vand.u32 %v367, 4294901760
      %v3034 = vsub.f32 %v367, %v3033
      %v3035 = vand.u32 %v3034, 4294901760
      %v3036 = vsub.f32 %v3034, %v3035
      %v3037 = vand.u32 %v3036, 4294901760
      %3038 = vmatmul.mubr.f32.gmra.mrb[0].mxu0 %v3037
      %v3039 = vpop.f32.mrb[0].mxu0
      %v3040 = vadd.f32 0.0, %v3039
      %v3041 = vpop.f32.mrb[0].mxu0
      %v3042 = vadd.f32 0.0, %v3041
      %3043 = vmatprep.mubr.f32.mxu0 0.0
      %v3044 = vand.u32 %v370, 4294901760
      %v3045 = vsub.f32 %v370, %v3044
      %v3046 = vand.u32 %v3045, 4294901760
      %v3047 = vsub.f32 %v3045, %v3046
      %v3048 = vand.u32 %v3047, 4294901760
      %3049 = vmatmul.mubr.f32.gmra.mrb[0].mxu0 %v3048
      %v3050 = vpop.f32.mrb[0].mxu0
      %v3051 = vadd.f32 0.0, %v3050
      %v3052 = vpop.f32.mrb[0].mxu0
      %v3053 = vadd.f32 0.0, %v3052
      %3054 = vmatprep.mubr.f32.mxu0 0.0
      %v3055 = vand.u32 %v373, 4294901760
      %v3056 = vsub.f32 %v373, %v3055
      %v3057 = vand.u32 %v3056, 4294901760
      %v3058 = vsub.f32 %v3056, %v3057
      %v3059 = vand.u32 %v3058, 4294901760
      %3060 = vmatmul.mubr.f32.gmra.mrb[0].mxu0 %v3059
      %v3061 = vpop.f32.mrb[0].mxu0
      %v3062 = vadd.f32 0.0, %v3061
      %v3063 = vpop.f32.mrb[0].mxu0
      %v3064 = vadd.f32 0.0, %v3063
      %3065 = vdwg.mxu0
      %v3066 = vand.u32 %v2926, 4294901760
      %v3067 = vsub.f32 %v2926, %v3066
      %v3068 = vand.u32 %v3067, 4294901760
      %v3069 = vsub.f32 %v3067, %v3068
      %v3070 = vand.u32 %v3069, 4294901760
      %3071 = vmatprep.subr.mxu0 %v3070
      %v3072 = vand.u32 %v2925, 4294901760
      %v3073 = vsub.f32 %v2925, %v3072
      %v3074 = vand.u32 %v3073, 4294901760
      %v3075 = vsub.f32 %v3073, %v3074
      %v3076 = vand.u32 %v3075, 4294901760
      %3077 = vmatpush1.msra.mxu0 %v3076
      %v3078 = vand.u32 %v2928, 4294901760
      %v3079 = vsub.f32 %v2928, %v3078
      %v3080 = vand.u32 %v3079, 4294901760
      %v3081 = vsub.f32 %v3079, %v3080
      %v3082 = vand.u32 %v3081, 4294901760
      %3083 = vmatprep.subr.mxu0 %v3082
      %v3084 = vand.u32 %v2927, 4294901760
      %v3085 = vsub.f32 %v2927, %v3084
      %v3086 = vand.u32 %v3085, 4294901760
      %v3087 = vsub.f32 %v3085, %v3086
      %v3088 = vand.u32 %v3087, 4294901760
      %3089 = vmatpush1.msra.mxu0 %v3088
      %v3090 = vand.u32 %v2930, 4294901760
      %v3091 = vsub.f32 %v2930, %v3090
      %v3092 = vand.u32 %v3091, 4294901760
      %v3093 = vsub.f32 %v3091, %v3092
      %v3094 = vand.u32 %v3093, 4294901760
      %3095 = vmatprep.subr.mxu0 %v3094
      %v3096 = vand.u32 %v2929, 4294901760
      %v3097 = vsub.f32 %v2929, %v3096
      %v3098 = vand.u32 %v3097, 4294901760
      %v3099 = vsub.f32 %v3097, %v3098
      %v3100 = vand.u32 %v3099, 4294901760
      %3101 = vmatpush1.msra.mxu0 %v3100
      %v3102 = vand.u32 %v2932, 4294901760
      %v3103 = vsub.f32 %v2932, %v3102
      %v3104 = vand.u32 %v3103, 4294901760
      %v3105 = vsub.f32 %v3103, %v3104
      %v3106 = vand.u32 %v3105, 4294901760
      %3107 = vmatprep.subr.mxu0 %v3106
      %v3108 = vand.u32 %v2931, 4294901760
      %v3109 = vsub.f32 %v2931, %v3108
      %v3110 = vand.u32 %v3109, 4294901760
      %v3111 = vsub.f32 %v3109, %v3110
      %v3112 = vand.u32 %v3111, 4294901760
      %3113 = vmatpush1.msra.mxu0 %v3112
      %v3114 = vand.u32 %v2934, 4294901760
      %v3115 = vsub.f32 %v2934, %v3114
      %v3116 = vand.u32 %v3115, 4294901760
      %v3117 = vsub.f32 %v3115, %v3116
      %v3118 = vand.u32 %v3117, 4294901760
      %3119 = vmatprep.subr.mxu0 %v3118
      %v3120 = vand.u32 %v2933, 4294901760
      %v3121 = vsub.f32 %v2933, %v3120
      %v3122 = vand.u32 %v3121, 4294901760
      %v3123 = vsub.f32 %v3121, %v3122
      %v3124 = vand.u32 %v3123, 4294901760
      %3125 = vmatpush1.msra.mxu0 %v3124
      %v3126 = vand.u32 %v2936, 4294901760
      %v3127 = vsub.f32 %v2936, %v3126
      %v3128 = vand.u32 %v3127, 4294901760
      %v3129 = vsub.f32 %v3127, %v3128
      %v3130 = vand.u32 %v3129, 4294901760
      %3131 = vmatprep.subr.mxu0 %v3130
      %v3132 = vand.u32 %v2935, 4294901760
      %v3133 = vsub.f32 %v2935, %v3132
      %v3134 = vand.u32 %v3133, 4294901760
      %v3135 = vsub.f32 %v3133, %v3134
      %v3136 = vand.u32 %v3135, 4294901760
      %3137 = vmatpush1.msra.mxu0 %v3136
      %v3138 = vand.u32 %v2938, 4294901760
      %v3139 = vsub.f32 %v2938, %v3138
      %v3140 = vand.u32 %v3139, 4294901760
      %v3141 = vsub.f32 %v3139, %v3140
      %v3142 = vand.u32 %v3141, 4294901760
      %3143 = vmatprep.subr.mxu0 %v3142
      %v3144 = vand.u32 %v2937, 4294901760
      %v3145 = vsub.f32 %v2937, %v3144
      %v3146 = vand.u32 %v3145, 4294901760
      %v3147 = vsub.f32 %v3145, %v3146
      %v3148 = vand.u32 %v3147, 4294901760
      %3149 = vmatpush1.msra.mxu0 %v3148
      %v3150 = vand.u32 %v2940, 4294901760
      %v3151 = vsub.f32 %v2940, %v3150
      %v3152 = vand.u32 %v3151, 4294901760
      %v3153 = vsub.f32 %v3151, %v3152
      %v3154 = vand.u32 %v3153, 4294901760
      %3155 = vmatprep.subr.mxu0 %v3154
      %v3156 = vand.u32 %v2939, 4294901760
      %v3157 = vsub.f32 %v2939, %v3156
      %v3158 = vand.u32 %v3157, 4294901760
      %v3159 = vsub.f32 %v3157, %v3158
      %v3160 = vand.u32 %v3159, 4294901760
      %3161 = vmatpush1.msra.mxu0 %v3160
      %3162 = vmatprep.subr.mxu0 0.0
      %3163 = vmatpush1.msra.mxu0 0.0
      %3164 = vmatprep.subr.mxu0 0.0
      %3165 = vmatpush1.msra.mxu0 0.0
      %3166 = vmatprep.subr.mxu0 0.0
      %3167 = vmatpush1.msra.mxu0 0.0
      %3168 = vmatprep.subr.mxu0 0.0
      %3169 = vmatpush1.msra.mxu0 0.0
      %3170 = vmatprep.subr.mxu0 0.0
      %3171 = vmatpush1.msra.mxu0 0.0
      %3172 = vmatprep.subr.mxu0 0.0
      %3173 = vmatpush1.msra.mxu0 0.0
      %3174 = vmatprep.subr.mxu0 0.0
      %3175 = vmatpush1.msra.mxu0 0.0
      %3176 = vmatprep.subr.mxu0 0.0
      %3177 = vmatpush1.msra.mxu0 0.0
      %3178 = vmatprep.subr.mxu0 0.0
      %3179 = vmatpush1.msra.mxu0 0.0
      %3180 = vmatprep.subr.mxu0 0.0
      %3181 = vmatpush1.msra.mxu0 0.0
      %3182 = vmatprep.subr.mxu0 0.0
      %3183 = vmatpush1.msra.mxu0 0.0
      %3184 = vmatprep.subr.mxu0 0.0
      %3185 = vmatpush1.msra.mxu0 0.0
      %3186 = vmatprep.subr.mxu0 0.0
      %3187 = vmatpush1.msra.mxu0 0.0
      %3188 = vmatprep.subr.mxu0 0.0
      %3189 = vmatpush1.msra.mxu0 0.0
      %3190 = vmatprep.subr.mxu0 0.0
      %3191 = vmatpush1.msra.mxu0 0.0
      %3192 = vmatprep.subr.mxu0 0.0
      %3193 = vmatpush1.msra.mxu0 0.0
      %3194 = vmatprep.subr.mxu0 0.0
      %3195 = vmatpush1.msra.mxu0 0.0
      %3196 = vmatprep.subr.mxu0 0.0
      %3197 = vmatpush1.msra.mxu0 0.0
      %3198 = vmatprep.subr.mxu0 0.0
      %3199 = vmatpush1.msra.mxu0 0.0
      %3200 = vmatprep.subr.mxu0 0.0
      %3201 = vmatpush1.msra.mxu0 0.0
      %3202 = vmatprep.subr.mxu0 0.0
      %3203 = vmatpush1.msra.mxu0 0.0
      %3204 = vmatprep.subr.mxu0 0.0
      %3205 = vmatpush1.msra.mxu0 0.0
      %3206 = vmatprep.subr.mxu0 0.0
      %3207 = vmatpush1.msra.mxu0 0.0
      %3208 = vmatprep.subr.mxu0 0.0
      %3209 = vmatpush1.msra.mxu0 0.0
      %3210 = vmatprep.mubr.f32.mxu0 0.0
      %v3211 = vand.u32 %v364, 4294901760
      %3212 = vmatmul.mubr.f32.gmra.mrb[0].mxu0 %v3211
      %v3213 = vpop.f32.mrb[0].mxu0
      %v3214 = vadd.f32 %v3029, %v3213
      %v3215 = vpop.f32.mrb[0].mxu0
      %v3216 = vadd.f32 %v3031, %v3215
      %3217 = vmatprep.mubr.f32.mxu0 0.0
      %v3218 = vand.u32 %v367, 4294901760
      %3219 = vmatmul.mubr.f32.gmra.mrb[0].mxu0 %v3218
      %v3220 = vpop.f32.mrb[0].mxu0
      %v3221 = vadd.f32 %v3040, %v3220
      %v3222 = vpop.f32.mrb[0].mxu0
      %v3223 = vadd.f32 %v3042, %v3222
      %3224 = vmatprep.mubr.f32.mxu0 0.0
      %v3225 = vand.u32 %v370, 4294901760
      %3226 = vmatmul.mubr.f32.gmra.mrb[0].mxu0 %v3225
      %v3227 = vpop.f32.mrb[0].mxu0
      %v3228 = vadd.f32 %v3051, %v3227
      %v3229 = vpop.f32.mrb[0].mxu0
      %v3230 = vadd.f32 %v3053, %v3229
      %3231 = vmatprep.mubr.f32.mxu0 0.0
      %v3232 = vand.u32 %v373, 4294901760
      %3233 = vmatmul.mubr.f32.gmra.mrb[0].mxu0 %v3232
      %v3234 = vpop.f32.mrb[0].mxu0
      %v3235 = vadd.f32 %v3062, %v3234
      %v3236 = vpop.f32.mrb[0].mxu0
      %v3237 = vadd.f32 %v3064, %v3236
      %3238 = vdwg.mxu0
      %v3239 = vand.u32 %v2926, 4294901760
      %v3240 = vsub.f32 %v2926, %v3239
      %3241 = vmatprep.subr.mxu0 %v3240
      %v3242 = vand.u32 %v2925, 4294901760
      %v3243 = vsub.f32 %v2925, %v3242
      %3244 = vmatpush1.msra.mxu0 %v3243
      %v3245 = vand.u32 %v2928, 4294901760
      %v3246 = vsub.f32 %v2928, %v3245
      %3247 = vmatprep.subr.mxu0 %v3246
      %v3248 = vand.u32 %v2927, 4294901760
      %v3249 = vsub.f32 %v2927, %v3248
      %3250 = vmatpush1.msra.mxu0 %v3249
      %v3251 = vand.u32 %v2930, 4294901760
      %v3252 = vsub.f32 %v2930, %v3251
      %3253 = vmatprep.subr.mxu0 %v3252
      %v3254 = vand.u32 %v2929, 4294901760
      %v3255 = vsub.f32 %v2929, %v3254
      %3256 = vmatpush1.msra.mxu0 %v3255
      %v3257 = vand.u32 %v2932, 4294901760
      %v3258 = vsub.f32 %v2932, %v3257
      %3259 = vmatprep.subr.mxu0 %v3258
      %v3260 = vand.u32 %v2931, 4294901760
      %v3261 = vsub.f32 %v2931, %v3260
      %3262 = vmatpush1.msra.mxu0 %v3261
      %v3263 = vand.u32 %v2934, 4294901760
      %v3264 = vsub.f32 %v2934, %v3263
      %3265 = vmatprep.subr.mxu0 %v3264
      %v3266 = vand.u32 %v2933, 4294901760
      %v3267 = vsub.f32 %v2933, %v3266
      %3268 = vmatpush1.msra.mxu0 %v3267
      %v3269 = vand.u32 %v2936, 4294901760
      %v3270 = vsub.f32 %v2936, %v3269
      %3271 = vmatprep.subr.mxu0 %v3270
      %v3272 = vand.u32 %v2935, 4294901760
      %v3273 = vsub.f32 %v2935, %v3272
      %3274 = vmatpush1.msra.mxu0 %v3273
      %v3275 = vand.u32 %v2938, 4294901760
      %v3276 = vsub.f32 %v2938, %v3275
      %3277 = vmatprep.subr.mxu0 %v3276
      %v3278 = vand.u32 %v2937, 4294901760
      %v3279 = vsub.f32 %v2937, %v3278
      %3280 = vmatpush1.msra.mxu0 %v3279
      %v3281 = vand.u32 %v2940, 4294901760
      %v3282 = vsub.f32 %v2940, %v3281
      %3283 = vmatprep.subr.mxu0 %v3282
      %v3284 = vand.u32 %v2939, 4294901760
      %v3285 = vsub.f32 %v2939, %v3284
      %3286 = vmatpush1.msra.mxu0 %v3285
      %3287 = vmatprep.subr.mxu0 0.0
      %3288 = vmatpush1.msra.mxu0 0.0
      %3289 = vmatprep.subr.mxu0 0.0
      %3290 = vmatpush1.msra.mxu0 0.0
      %3291 = vmatprep.subr.mxu0 0.0
      %3292 = vmatpush1.msra.mxu0 0.0
      %3293 = vmatprep.subr.mxu0 0.0
      %3294 = vmatpush1.msra.mxu0 0.0
      %3295 = vmatprep.subr.mxu0 0.0
      %3296 = vmatpush1.msra.mxu0 0.0
      %3297 = vmatprep.subr.mxu0 0.0
      %3298 = vmatpush1.msra.mxu0 0.0
      %3299 = vmatprep.subr.mxu0 0.0
      %3300 = vmatpush1.msra.mxu0 0.0
      %3301 = vmatprep.subr.mxu0 0.0
      %3302 = vmatpush1.msra.mxu0 0.0
      %3303 = vmatprep.subr.mxu0 0.0
      %3304 = vmatpush1.msra.mxu0 0.0
      %3305 = vmatprep.subr.mxu0 0.0
      %3306 = vmatpush1.msra.mxu0 0.0
      %3307 = vmatprep.subr.mxu0 0.0
      %3308 = vmatpush1.msra.mxu0 0.0
      %3309 = vmatprep.subr.mxu0 0.0
      %3310 = vmatpush1.msra.mxu0 0.0
      %3311 = vmatprep.subr.mxu0 0.0
      %3312 = vmatpush1.msra.mxu0 0.0
      %3313 = vmatprep.subr.mxu0 0.0
      %3314 = vmatpush1.msra.mxu0 0.0
      %3315 = vmatprep.subr.mxu0 0.0
      %3316 = vmatpush1.msra.mxu0 0.0
      %3317 = vmatprep.subr.mxu0 0.0
      %3318 = vmatpush1.msra.mxu0 0.0
      %3319 = vmatprep.subr.mxu0 0.0
      %3320 = vmatpush1.msra.mxu0 0.0
      %3321 = vmatprep.subr.mxu0 0.0
      %3322 = vmatpush1.msra.mxu0 0.0
      %3323 = vmatprep.subr.mxu0 0.0
      %3324 = vmatpush1.msra.mxu0 0.0
      %3325 = vmatprep.subr.mxu0 0.0
      %3326 = vmatpush1.msra.mxu0 0.0
      %3327 = vmatprep.subr.mxu0 0.0
      %3328 = vmatpush1.msra.mxu0 0.0
      %3329 = vmatprep.subr.mxu0 0.0
      %3330 = vmatpush1.msra.mxu0 0.0
      %3331 = vmatprep.subr.mxu0 0.0
      %3332 = vmatpush1.msra.mxu0 0.0
      %3333 = vmatprep.subr.mxu0 0.0
      %3334 = vmatpush1.msra.mxu0 0.0
      %3335 = vmatprep.mubr.f32.mxu0 0.0
      %v3336 = vand.u32 %v364, 4294901760
      %v3337 = vsub.f32 %v364, %v3336
      %3338 = vmatmul.mubr.f32.gmra.mrb[0].mxu0 %v3337
      %v3339 = vpop.f32.mrb[0].mxu0
      %v3340 = vadd.f32 %v3214, %v3339
      %v3341 = vpop.f32.mrb[0].mxu0
      %v3342 = vadd.f32 %v3216, %v3341
      %3343 = vmatprep.mubr.f32.mxu0 0.0
      %v3344 = vand.u32 %v367, 4294901760
      %v3345 = vsub.f32 %v367, %v3344
      %3346 = vmatmul.mubr.f32.gmra.mrb[0].mxu0 %v3345
      %v3347 = vpop.f32.mrb[0].mxu0
      %v3348 = vadd.f32 %v3221, %v3347
      %v3349 = vpop.f32.mrb[0].mxu0
      %v3350 = vadd.f32 %v3223, %v3349
      %3351 = vmatprep.mubr.f32.mxu0 0.0
      %v3352 = vand.u32 %v370, 4294901760
      %v3353 = vsub.f32 %v370, %v3352
      %3354 = vmatmul.mubr.f32.gmra.mrb[0].mxu0 %v3353
      %v3355 = vpop.f32.mrb[0].mxu0
      %v3356 = vadd.f32 %v3228, %v3355
      %v3357 = vpop.f32.mrb[0].mxu0
      %v3358 = vadd.f32 %v3230, %v3357
      %3359 = vmatprep.mubr.f32.mxu0 0.0
      %v3360 = vand.u32 %v373, 4294901760
      %v3361 = vsub.f32 %v373, %v3360
      %3362 = vmatmul.mubr.f32.gmra.mrb[0].mxu0 %v3361
      %v3363 = vpop.f32.mrb[0].mxu0
      %v3364 = vadd.f32 %v3235, %v3363
      %v3365 = vpop.f32.mrb[0].mxu0
      %v3366 = vadd.f32 %v3237, %v3365
      %3367 = vdwg.mxu0
      %v3368 = vand.u32 %v2926, 4294901760
      %3369 = vmatprep.subr.mxu0 %v3368
      %v3370 = vand.u32 %v2925, 4294901760
      %3371 = vmatpush1.msra.mxu0 %v3370
      %v3372 = vand.u32 %v2928, 4294901760
      %3373 = vmatprep.subr.mxu0 %v3372
      %v3374 = vand.u32 %v2927, 4294901760
      %3375 = vmatpush1.msra.mxu0 %v3374
      %v3376 = vand.u32 %v2930, 4294901760
      %3377 = vmatprep.subr.mxu0 %v3376
      %v3378 = vand.u32 %v2929, 4294901760
      %3379 = vmatpush1.msra.mxu0 %v3378
      %v3380 = vand.u32 %v2932, 4294901760
      %3381 = vmatprep.subr.mxu0 %v3380
      %v3382 = vand.u32 %v2931, 4294901760
      %3383 = vmatpush1.msra.mxu0 %v3382
      %v3384 = vand.u32 %v2934, 4294901760
      %3385 = vmatprep.subr.mxu0 %v3384
      %v3386 = vand.u32 %v2933, 4294901760
      %3387 = vmatpush1.msra.mxu0 %v3386
      %v3388 = vand.u32 %v2936, 4294901760
      %3389 = vmatprep.subr.mxu0 %v3388
      %v3390 = vand.u32 %v2935, 4294901760
      %3391 = vmatpush1.msra.mxu0 %v3390
      %v3392 = vand.u32 %v2938, 4294901760
      %3393 = vmatprep.subr.mxu0 %v3392
      %v3394 = vand.u32 %v2937, 4294901760
      %3395 = vmatpush1.msra.mxu0 %v3394
      %v3396 = vand.u32 %v2940, 4294901760
      %3397 = vmatprep.subr.mxu0 %v3396
      %v3398 = vand.u32 %v2939, 4294901760
      %3399 = vmatpush1.msra.mxu0 %v3398
      %3400 = vmatprep.subr.mxu0 0.0
      %3401 = vmatpush1.msra.mxu0 0.0
      %3402 = vmatprep.subr.mxu0 0.0
      %3403 = vmatpush1.msra.mxu0 0.0
      %3404 = vmatprep.subr.mxu0 0.0
      %3405 = vmatpush1.msra.mxu0 0.0
      %3406 = vmatprep.subr.mxu0 0.0
      %3407 = vmatpush1.msra.mxu0 0.0
      %3408 = vmatprep.subr.mxu0 0.0
      %3409 = vmatpush1.msra.mxu0 0.0
      %3410 = vmatprep.subr.mxu0 0.0
      %3411 = vmatpush1.msra.mxu0 0.0
      %3412 = vmatprep.subr.mxu0 0.0
      %3413 = vmatpush1.msra.mxu0 0.0
      %3414 = vmatprep.subr.mxu0 0.0
      %3415 = vmatpush1.msra.mxu0 0.0
      %3416 = vmatprep.subr.mxu0 0.0
      %3417 = vmatpush1.msra.mxu0 0.0
      %3418 = vmatprep.subr.mxu0 0.0
      %3419 = vmatpush1.msra.mxu0 0.0
      %3420 = vmatprep.subr.mxu0 0.0
      %3421 = vmatpush1.msra.mxu0 0.0
      %3422 = vmatprep.subr.mxu0 0.0
      %3423 = vmatpush1.msra.mxu0 0.0
      %3424 = vmatprep.subr.mxu0 0.0
      %3425 = vmatpush1.msra.mxu0 0.0
      %3426 = vmatprep.subr.mxu0 0.0
      %3427 = vmatpush1.msra.mxu0 0.0
      %3428 = vmatprep.subr.mxu0 0.0
      %3429 = vmatpush1.msra.mxu0 0.0
      %3430 = vmatprep.subr.mxu0 0.0
      %3431 = vmatpush1.msra.mxu0 0.0
      %3432 = vmatprep.subr.mxu0 0.0
      %3433 = vmatpush1.msra.mxu0 0.0
      %3434 = vmatprep.subr.mxu0 0.0
      %3435 = vmatpush1.msra.mxu0 0.0
      %3436 = vmatprep.subr.mxu0 0.0
      %3437 = vmatpush1.msra.mxu0 0.0
      %3438 = vmatprep.subr.mxu0 0.0
      %3439 = vmatpush1.msra.mxu0 0.0
      %3440 = vmatprep.subr.mxu0 0.0
      %3441 = vmatpush1.msra.mxu0 0.0
      %3442 = vmatprep.subr.mxu0 0.0
      %3443 = vmatpush1.msra.mxu0 0.0
      %3444 = vmatprep.subr.mxu0 0.0
      %3445 = vmatpush1.msra.mxu0 0.0
      %3446 = vmatprep.subr.mxu0 0.0
      %3447 = vmatpush1.msra.mxu0 0.0
      %3448 = vmatprep.mubr.f32.mxu0 0.0
      %v3449 = vand.u32 %v364, 4294901760
      %v3450 = vsub.f32 %v364, %v3449
      %v3451 = vand.u32 %v3450, 4294901760
      %3452 = vmatmul.mubr.f32.gmra.mrb[0].mxu0 %v3451
      %v3453 = vpop.f32.mrb[0].mxu0
      %v3454 = vadd.f32 %v3340, %v3453
      %v3455 = vpop.f32.mrb[0].mxu0
      %v3456 = vadd.f32 %v3342, %v3455
      %3457 = vmatprep.mubr.f32.mxu0 0.0
      %v3458 = vand.u32 %v367, 4294901760
      %v3459 = vsub.f32 %v367, %v3458
      %v3460 = vand.u32 %v3459, 4294901760
      %3461 = vmatmul.mubr.f32.gmra.mrb[0].mxu0 %v3460
      %v3462 = vpop.f32.mrb[0].mxu0
      %v3463 = vadd.f32 %v3348, %v3462
      %v3464 = vpop.f32.mrb[0].mxu0
      %v3465 = vadd.f32 %v3350, %v3464
      %3466 = vmatprep.mubr.f32.mxu0 0.0
      %v3467 = vand.u32 %v370, 4294901760
      %v3468 = vsub.f32 %v370, %v3467
      %v3469 = vand.u32 %v3468, 4294901760
      %3470 = vmatmul.mubr.f32.gmra.mrb[0].mxu0 %v3469
      %v3471 = vpop.f32.mrb[0].mxu0
      %v3472 = vadd.f32 %v3356, %v3471
      %v3473 = vpop.f32.mrb[0].mxu0
      %v3474 = vadd.f32 %v3358, %v3473
      %3475 = vmatprep.mubr.f32.mxu0 0.0
      %v3476 = vand.u32 %v373, 4294901760
      %v3477 = vsub.f32 %v373, %v3476
      %v3478 = vand.u32 %v3477, 4294901760
      %3479 = vmatmul.mubr.f32.gmra.mrb[0].mxu0 %v3478
      %v3480 = vpop.f32.mrb[0].mxu0
      %v3481 = vadd.f32 %v3364, %v3480
      %v3482 = vpop.f32.mrb[0].mxu0
      %v3483 = vadd.f32 %v3366, %v3482
      %3484 = vdwg.mxu0
      %v3485 = vand.u32 %v2926, 4294901760
      %v3486 = vsub.f32 %v2926, %v3485
      %v3487 = vand.u32 %v3486, 4294901760
      %3488 = vmatprep.subr.mxu0 %v3487
      %v3489 = vand.u32 %v2925, 4294901760
      %v3490 = vsub.f32 %v2925, %v3489
      %v3491 = vand.u32 %v3490, 4294901760
      %3492 = vmatpush1.msra.mxu0 %v3491
      %v3493 = vand.u32 %v2928, 4294901760
      %v3494 = vsub.f32 %v2928, %v3493
      %v3495 = vand.u32 %v3494, 4294901760
      %3496 = vmatprep.subr.mxu0 %v3495
      %v3497 = vand.u32 %v2927, 4294901760
      %v3498 = vsub.f32 %v2927, %v3497
      %v3499 = vand.u32 %v3498, 4294901760
      %3500 = vmatpush1.msra.mxu0 %v3499
      %v3501 = vand.u32 %v2930, 4294901760
      %v3502 = vsub.f32 %v2930, %v3501
      %v3503 = vand.u32 %v3502, 4294901760
      %3504 = vmatprep.subr.mxu0 %v3503
      %v3505 = vand.u32 %v2929, 4294901760
      %v3506 = vsub.f32 %v2929, %v3505
      %v3507 = vand.u32 %v3506, 4294901760
      %3508 = vmatpush1.msra.mxu0 %v3507
      %v3509 = vand.u32 %v2932, 4294901760
      %v3510 = vsub.f32 %v2932, %v3509
      %v3511 = vand.u32 %v3510, 4294901760
      %3512 = vmatprep.subr.mxu0 %v3511
      %v3513 = vand.u32 %v2931, 4294901760
      %v3514 = vsub.f32 %v2931, %v3513
      %v3515 = vand.u32 %v3514, 4294901760
      %3516 = vmatpush1.msra.mxu0 %v3515
      %v3517 = vand.u32 %v2934, 4294901760
      %v3518 = vsub.f32 %v2934, %v3517
      %v3519 = vand.u32 %v3518, 4294901760
      %3520 = vmatprep.subr.mxu0 %v3519
      %v3521 = vand.u32 %v2933, 4294901760
      %v3522 = vsub.f32 %v2933, %v3521
      %v3523 = vand.u32 %v3522, 4294901760
      %3524 = vmatpush1.msra.mxu0 %v3523
      %v3525 = vand.u32 %v2936, 4294901760
      %v3526 = vsub.f32 %v2936, %v3525
      %v3527 = vand.u32 %v3526, 4294901760
      %3528 = vmatprep.subr.mxu0 %v3527
      %v3529 = vand.u32 %v2935, 4294901760
      %v3530 = vsub.f32 %v2935, %v3529
      %v3531 = vand.u32 %v3530, 4294901760
      %3532 = vmatpush1.msra.mxu0 %v3531
      %v3533 = vand.u32 %v2938, 4294901760
      %v3534 = vsub.f32 %v2938, %v3533
      %v3535 = vand.u32 %v3534, 4294901760
      %3536 = vmatprep.subr.mxu0 %v3535
      %v3537 = vand.u32 %v2937, 4294901760
      %v3538 = vsub.f32 %v2937, %v3537
      %v3539 = vand.u32 %v3538, 4294901760
      %3540 = vmatpush1.msra.mxu0 %v3539
      %v3541 = vand.u32 %v2940, 4294901760
      %v3542 = vsub.f32 %v2940, %v3541
      %v3543 = vand.u32 %v3542, 4294901760
      %3544 = vmatprep.subr.mxu0 %v3543
      %v3545 = vand.u32 %v2939, 4294901760
      %v3546 = vsub.f32 %v2939, %v3545
      %v3547 = vand.u32 %v3546, 4294901760
      %3548 = vmatpush1.msra.mxu0 %v3547
      %3549 = vmatprep.subr.mxu0 0.0
      %3550 = vmatpush1.msra.mxu0 0.0
      %3551 = vmatprep.subr.mxu0 0.0
      %3552 = vmatpush1.msra.mxu0 0.0
      %3553 = vmatprep.subr.mxu0 0.0
      %3554 = vmatpush1.msra.mxu0 0.0
      %3555 = vmatprep.subr.mxu0 0.0
      %3556 = vmatpush1.msra.mxu0 0.0
      %3557 = vmatprep.subr.mxu0 0.0
      %3558 = vmatpush1.msra.mxu0 0.0
      %3559 = vmatprep.subr.mxu0 0.0
      %3560 = vmatpush1.msra.mxu0 0.0
      %3561 = vmatprep.subr.mxu0 0.0
      %3562 = vmatpush1.msra.mxu0 0.0
      %3563 = vmatprep.subr.mxu0 0.0
      %3564 = vmatpush1.msra.mxu0 0.0
      %3565 = vmatprep.subr.mxu0 0.0
      %3566 = vmatpush1.msra.mxu0 0.0
      %3567 = vmatprep.subr.mxu0 0.0
      %3568 = vmatpush1.msra.mxu0 0.0
      %3569 = vmatprep.subr.mxu0 0.0
      %3570 = vmatpush1.msra.mxu0 0.0
      %3571 = vmatprep.subr.mxu0 0.0
      %3572 = vmatpush1.msra.mxu0 0.0
      %3573 = vmatprep.subr.mxu0 0.0
      %3574 = vmatpush1.msra.mxu0 0.0
      %3575 = vmatprep.subr.mxu0 0.0
      %3576 = vmatpush1.msra.mxu0 0.0
      %3577 = vmatprep.subr.mxu0 0.0
      %3578 = vmatpush1.msra.mxu0 0.0
      %3579 = vmatprep.subr.mxu0 0.0
      %3580 = vmatpush1.msra.mxu0 0.0
      %3581 = vmatprep.subr.mxu0 0.0
      %3582 = vmatpush1.msra.mxu0 0.0
      %3583 = vmatprep.subr.mxu0 0.0
      %3584 = vmatpush1.msra.mxu0 0.0
      %3585 = vmatprep.subr.mxu0 0.0
      %3586 = vmatpush1.msra.mxu0 0.0
      %3587 = vmatprep.subr.mxu0 0.0
      %3588 = vmatpush1.msra.mxu0 0.0
      %3589 = vmatprep.subr.mxu0 0.0
      %3590 = vmatpush1.msra.mxu0 0.0
      %3591 = vmatprep.subr.mxu0 0.0
      %3592 = vmatpush1.msra.mxu0 0.0
      %3593 = vmatprep.subr.mxu0 0.0
      %3594 = vmatpush1.msra.mxu0 0.0
      %3595 = vmatprep.subr.mxu0 0.0
      %3596 = vmatpush1.msra.mxu0 0.0
      %3597 = vmatprep.mubr.f32.mxu0 0.0
      %v3598 = vand.u32 %v364, 4294901760
      %3599 = vmatmul.mubr.f32.gmra.mrb[0].mxu0 %v3598
      %v3600 = vpop.f32.mrb[0].mxu0
      %v3601 = vadd.f32 %v3454, %v3600
      %v3602 = vpop.f32.mrb[0].mxu0
      %v3603 = vadd.f32 %v3456, %v3602
      %3604 = vmatprep.mubr.f32.mxu0 0.0
      %v3605 = vand.u32 %v367, 4294901760
      %3606 = vmatmul.mubr.f32.gmra.mrb[0].mxu0 %v3605
      %v3607 = vpop.f32.mrb[0].mxu0
      %v3608 = vadd.f32 %v3463, %v3607
      %v3609 = vpop.f32.mrb[0].mxu0
      %v3610 = vadd.f32 %v3465, %v3609
      %3611 = vmatprep.mubr.f32.mxu0 0.0
      %v3612 = vand.u32 %v370, 4294901760
      %3613 = vmatmul.mubr.f32.gmra.mrb[0].mxu0 %v3612
      %v3614 = vpop.f32.mrb[0].mxu0
      %v3615 = vadd.f32 %v3472, %v3614
      %v3616 = vpop.f32.mrb[0].mxu0
      %v3617 = vadd.f32 %v3474, %v3616
      %3618 = vmatprep.mubr.f32.mxu0 0.0
      %v3619 = vand.u32 %v373, 4294901760
      %3620 = vmatmul.mubr.f32.gmra.mrb[0].mxu0 %v3619
      %v3621 = vpop.f32.mrb[0].mxu0
      %v3622 = vadd.f32 %v3481, %v3621
      %v3623 = vpop.f32.mrb[0].mxu0
      %v3624 = vadd.f32 %v3483, %v3623
      %3625 = vdwg.mxu0
      %v3626 = vand.u32 %v2926, 4294901760
      %3627 = vmatprep.subr.mxu0 %v3626
      %v3628 = vand.u32 %v2925, 4294901760
      %3629 = vmatpush1.msra.mxu0 %v3628
      %v3630 = vand.u32 %v2928, 4294901760
      %3631 = vmatprep.subr.mxu0 %v3630
      %v3632 = vand.u32 %v2927, 4294901760
      %3633 = vmatpush1.msra.mxu0 %v3632
      %v3634 = vand.u32 %v2930, 4294901760
      %3635 = vmatprep.subr.mxu0 %v3634
      %v3636 = vand.u32 %v2929, 4294901760
      %3637 = vmatpush1.msra.mxu0 %v3636
      %v3638 = vand.u32 %v2932, 4294901760
      %3639 = vmatprep.subr.mxu0 %v3638
      %v3640 = vand.u32 %v2931, 4294901760
      %3641 = vmatpush1.msra.mxu0 %v3640
      %v3642 = vand.u32 %v2934, 4294901760
      %3643 = vmatprep.subr.mxu0 %v3642
      %v3644 = vand.u32 %v2933, 4294901760
      %3645 = vmatpush1.msra.mxu0 %v3644
      %v3646 = vand.u32 %v2936, 4294901760
      %3647 = vmatprep.subr.mxu0 %v3646
      %v3648 = vand.u32 %v2935, 4294901760
      %3649 = vmatpush1.msra.mxu0 %v3648
      %v3650 = vand.u32 %v2938, 4294901760
      %3651 = vmatprep.subr.mxu0 %v3650
      %v3652 = vand.u32 %v2937, 4294901760
      %3653 = vmatpush1.msra.mxu0 %v3652
      %v3654 = vand.u32 %v2940, 4294901760
      %3655 = vmatprep.subr.mxu0 %v3654
      %v3656 = vand.u32 %v2939, 4294901760
      %3657 = vmatpush1.msra.mxu0 %v3656
      %3658 = vmatprep.subr.mxu0 0.0
      %3659 = vmatpush1.msra.mxu0 0.0
      %3660 = vmatprep.subr.mxu0 0.0
      %3661 = vmatpush1.msra.mxu0 0.0
      %3662 = vmatprep.subr.mxu0 0.0
      %3663 = vmatpush1.msra.mxu0 0.0
      %3664 = vmatprep.subr.mxu0 0.0
      %3665 = vmatpush1.msra.mxu0 0.0
      %3666 = vmatprep.subr.mxu0 0.0
      %3667 = vmatpush1.msra.mxu0 0.0
      %3668 = vmatprep.subr.mxu0 0.0
      %3669 = vmatpush1.msra.mxu0 0.0
      %3670 = vmatprep.subr.mxu0 0.0
      %3671 = vmatpush1.msra.mxu0 0.0
      %3672 = vmatprep.subr.mxu0 0.0
      %3673 = vmatpush1.msra.mxu0 0.0
      %3674 = vmatprep.subr.mxu0 0.0
      %3675 = vmatpush1.msra.mxu0 0.0
      %3676 = vmatprep.subr.mxu0 0.0
      %3677 = vmatpush1.msra.mxu0 0.0
      %3678 = vmatprep.subr.mxu0 0.0
      %3679 = vmatpush1.msra.mxu0 0.0
      %3680 = vmatprep.subr.mxu0 0.0
      %3681 = vmatpush1.msra.mxu0 0.0
      %3682 = vmatprep.subr.mxu0 0.0
      %3683 = vmatpush1.msra.mxu0 0.0
      %3684 = vmatprep.subr.mxu0 0.0
      %3685 = vmatpush1.msra.mxu0 0.0
      %3686 = vmatprep.subr.mxu0 0.0
      %3687 = vmatpush1.msra.mxu0 0.0
      %3688 = vmatprep.subr.mxu0 0.0
      %3689 = vmatpush1.msra.mxu0 0.0
      %3690 = vmatprep.subr.mxu0 0.0
      %3691 = vmatpush1.msra.mxu0 0.0
      %3692 = vmatprep.subr.mxu0 0.0
      %3693 = vmatpush1.msra.mxu0 0.0
      %3694 = vmatprep.subr.mxu0 0.0
      %3695 = vmatpush1.msra.mxu0 0.0
      %3696 = vmatprep.subr.mxu0 0.0
      %3697 = vmatpush1.msra.mxu0 0.0
      %3698 = vmatprep.subr.mxu0 0.0
      %3699 = vmatpush1.msra.mxu0 0.0
      %3700 = vmatprep.subr.mxu0 0.0
      %3701 = vmatpush1.msra.mxu0 0.0
      %3702 = vmatprep.subr.mxu0 0.0
      %3703 = vmatpush1.msra.mxu0 0.0
      %3704 = vmatprep.subr.mxu0 0.0
      %3705 = vmatpush1.msra.mxu0 0.0
      %3706 = vmatprep.mubr.f32.mxu0 0.0
      %v3707 = vand.u32 %v364, 4294901760
      %3708 = vmatmul.mubr.f32.gmra.mrb[0].mxu0 %v3707
      %v3709 = vpop.f32.mrb[0].mxu0
      %v3710 = vadd.f32 %v3601, %v3709
      %v3711 = vpop.f32.mrb[0].mxu0
      %v3712 = vadd.f32 %v3603, %v3711
      %3713 = vmatprep.mubr.f32.mxu0 0.0
      %v3714 = vand.u32 %v367, 4294901760
      %3715 = vmatmul.mubr.f32.gmra.mrb[0].mxu0 %v3714
      %v3716 = vpop.f32.mrb[0].mxu0
      %v3717 = vadd.f32 %v3608, %v3716
      %v3718 = vpop.f32.mrb[0].mxu0
      %v3719 = vadd.f32 %v3610, %v3718
      %3720 = vmatprep.mubr.f32.mxu0 0.0
      %v3721 = vand.u32 %v370, 4294901760
      %3722 = vmatmul.mubr.f32.gmra.mrb[0].mxu0 %v3721
      %v3723 = vpop.f32.mrb[0].mxu0
      %v3724 = vadd.f32 %v3615, %v3723
      %v3725 = vpop.f32.mrb[0].mxu0
      %v3726 = vadd.f32 %v3617, %v3725
      %3727 = vmatprep.mubr.f32.mxu0 0.0
      %v3728 = vand.u32 %v373, 4294901760
      %3729 = vmatmul.mubr.f32.gmra.mrb[0].mxu0 %v3728
      %v3730 = vpop.f32.mrb[0].mxu0
      %v3731 = vadd.f32 %v3622, %v3730
      %v3732 = vpop.f32.mrb[0].mxu0
      %v3733 = vadd.f32 %v3624, %v3732
      %3734 = vdwg.mxu0
      %v3735 = vmul.f32 %v2877, %v3710
      %v3736 = vmul.f32 %v2878, %v3712
      %v3737 = vmul.f32 %v2879, %v3717
      %v3738 = vmul.f32 %v2880, %v3719
      %v3739 = vmul.f32 %v2881, %v3724
      %v3740 = vmul.f32 %v2882, %v3726
      %v3741 = vmul.f32 %v2883, %v3731
      %v3742 = vmul.f32 %v2884, %v3733
      %v3743 = vlaneseq
      %v3744 = vshrl.u32 %v3743, 7
      %v3745 = vsub.s32 4, %v3744
      %v3746 = vrot.slane %v295, %v3745
      %v3747 = vlaneseq
      %v3748 = vshrl.u32 %v3747, 7
      %v3749 = vsub.s32 4, %v3748
      %v3750 = vrot.slane %v296, %v3749
      %vm3751 = vcmp.eq.s32.totalorder %v3746, %v298
      %vm3752 = vcmp.eq.s32.totalorder %v3750, %v298
      %vm3753 = vcmp.eq.s32.totalorder %v3746, %v299
      %vm3754 = vcmp.eq.s32.totalorder %v3750, %v299
      %vm3755 = vcmp.eq.s32.totalorder %v3746, %v300
      %vm3756 = vcmp.eq.s32.totalorder %v3750, %v300
      %vm3757 = vcmp.eq.s32.totalorder %v3746, %v301
      %vm3758 = vcmp.eq.s32.totalorder %v3750, %v301
      %vm3759 = vcmp.eq.s32.totalorder %v3746, %v302
      %vm3760 = vcmp.eq.s32.totalorder %v3750, %v302
      %vm3761 = vcmp.eq.s32.totalorder %v3746, %v303
      %vm3762 = vcmp.eq.s32.totalorder %v3750, %v303
      %vm3763 = vcmp.eq.s32.totalorder %v3746, %v304
      %vm3764 = vcmp.eq.s32.totalorder %v3750, %v304
      %vm3765 = vcmp.eq.s32.totalorder %v3746, %v305
      %vm3766 = vcmp.eq.s32.totalorder %v3750, %v305
      %v3767 = vsel %vm3751, 1, 0
      %v3768 = vsel %vm3752, 1, 0
      %v3769 = vsel %vm3753, 1, 0
      %v3770 = vsel %vm3754, 1, 0
      %v3771 = vsel %vm3755, 1, 0
      %v3772 = vsel %vm3756, 1, 0
      %v3773 = vsel %vm3757, 1, 0
      %v3774 = vsel %vm3758, 1, 0
      %v3775 = vsel %vm3759, 1, 0
      %v3776 = vsel %vm3760, 1, 0
      %v3777 = vsel %vm3761, 1, 0
      %v3778 = vsel %vm3762, 1, 0
      %v3779 = vsel %vm3763, 1, 0
      %v3780 = vsel %vm3764, 1, 0
      %v3781 = vsel %vm3765, 1, 0
      %v3782 = vsel %vm3766, 1, 0
      %v3783 = vcvt.s32.f32 %v3767
      %v3784 = vcvt.s32.f32 %v3768
      %v3785 = vcvt.s32.f32 %v3769
      %v3786 = vcvt.s32.f32 %v3770
      %v3787 = vcvt.s32.f32 %v3771
      %v3788 = vcvt.s32.f32 %v3772
      %v3789 = vcvt.s32.f32 %v3773
      %v3790 = vcvt.s32.f32 %v3774
      %v3791 = vcvt.s32.f32 %v3775
      %v3792 = vcvt.s32.f32 %v3776
      %v3793 = vcvt.s32.f32 %v3777
      %v3794 = vcvt.s32.f32 %v3778
      %v3795 = vcvt.s32.f32 %v3779
      %v3796 = vcvt.s32.f32 %v3780
      %v3797 = vcvt.s32.f32 %v3781
      %v3798 = vcvt.s32.f32 %v3782
      %v3799 = vand.u32 %v3784, 4294901760
      %3800 = vmatprep.subr.mxu0 %v3799
      %v3801 = vand.u32 %v3783, 4294901760
      %3802 = vmatpush1.msra.mxu0 %v3801
      %v3803 = vand.u32 %v3786, 4294901760
      %3804 = vmatprep.subr.mxu0 %v3803
      %v3805 = vand.u32 %v3785, 4294901760
      %3806 = vmatpush1.msra.mxu0 %v3805
      %v3807 = vand.u32 %v3788, 4294901760
      %3808 = vmatprep.subr.mxu0 %v3807
      %v3809 = vand.u32 %v3787, 4294901760
      %3810 = vmatpush1.msra.mxu0 %v3809
      %v3811 = vand.u32 %v3790, 4294901760
      %3812 = vmatprep.subr.mxu0 %v3811
      %v3813 = vand.u32 %v3789, 4294901760
      %3814 = vmatpush1.msra.mxu0 %v3813
      %v3815 = vand.u32 %v3792, 4294901760
      %3816 = vmatprep.subr.mxu0 %v3815
      %v3817 = vand.u32 %v3791, 4294901760
      %3818 = vmatpush1.msra.mxu0 %v3817
      %v3819 = vand.u32 %v3794, 4294901760
      %3820 = vmatprep.subr.mxu0 %v3819
      %v3821 = vand.u32 %v3793, 4294901760
      %3822 = vmatpush1.msra.mxu0 %v3821
      %v3823 = vand.u32 %v3796, 4294901760
      %3824 = vmatprep.subr.mxu0 %v3823
      %v3825 = vand.u32 %v3795, 4294901760
      %3826 = vmatpush1.msra.mxu0 %v3825
      %v3827 = vand.u32 %v3798, 4294901760
      %3828 = vmatprep.subr.mxu0 %v3827
      %v3829 = vand.u32 %v3797, 4294901760
      %3830 = vmatpush1.msra.mxu0 %v3829
      %3831 = vmatprep.subr.mxu0 0.0
      %3832 = vmatpush1.msra.mxu0 0.0
      %3833 = vmatprep.subr.mxu0 0.0
      %3834 = vmatpush1.msra.mxu0 0.0
      %3835 = vmatprep.subr.mxu0 0.0
      %3836 = vmatpush1.msra.mxu0 0.0
      %3837 = vmatprep.subr.mxu0 0.0
      %3838 = vmatpush1.msra.mxu0 0.0
      %3839 = vmatprep.subr.mxu0 0.0
      %3840 = vmatpush1.msra.mxu0 0.0
      %3841 = vmatprep.subr.mxu0 0.0
      %3842 = vmatpush1.msra.mxu0 0.0
      %3843 = vmatprep.subr.mxu0 0.0
      %3844 = vmatpush1.msra.mxu0 0.0
      %3845 = vmatprep.subr.mxu0 0.0
      %3846 = vmatpush1.msra.mxu0 0.0
      %3847 = vmatprep.subr.mxu0 0.0
      %3848 = vmatpush1.msra.mxu0 0.0
      %3849 = vmatprep.subr.mxu0 0.0
      %3850 = vmatpush1.msra.mxu0 0.0
      %3851 = vmatprep.subr.mxu0 0.0
      %3852 = vmatpush1.msra.mxu0 0.0
      %3853 = vmatprep.subr.mxu0 0.0
      %3854 = vmatpush1.msra.mxu0 0.0
      %3855 = vmatprep.subr.mxu0 0.0
      %3856 = vmatpush1.msra.mxu0 0.0
      %3857 = vmatprep.subr.mxu0 0.0
      %3858 = vmatpush1.msra.mxu0 0.0
      %3859 = vmatprep.subr.mxu0 0.0
      %3860 = vmatpush1.msra.mxu0 0.0
      %3861 = vmatprep.subr.mxu0 0.0
      %3862 = vmatpush1.msra.mxu0 0.0
      %3863 = vmatprep.subr.mxu0 0.0
      %3864 = vmatpush1.msra.mxu0 0.0
      %3865 = vmatprep.subr.mxu0 0.0
      %3866 = vmatpush1.msra.mxu0 0.0
      %3867 = vmatprep.subr.mxu0 0.0
      %3868 = vmatpush1.msra.mxu0 0.0
      %3869 = vmatprep.subr.mxu0 0.0
      %3870 = vmatpush1.msra.mxu0 0.0
      %3871 = vmatprep.subr.mxu0 0.0
      %3872 = vmatpush1.msra.mxu0 0.0
      %3873 = vmatprep.subr.mxu0 0.0
      %3874 = vmatpush1.msra.mxu0 0.0
      %3875 = vmatprep.subr.mxu0 0.0
      %3876 = vmatpush1.msra.mxu0 0.0
      %3877 = vmatprep.subr.mxu0 0.0
      %3878 = vmatpush1.msra.mxu0 0.0
      %3879 = vmatprep.mubr.f32.mxu0 0.0
      %v3880 = vand.u32 %v364, 4294901760
      %v3881 = vsub.f32 %v364, %v3880
      %v3882 = vand.u32 %v3881, 4294901760
      %v3883 = vsub.f32 %v3881, %v3882
      %v3884 = vand.u32 %v3883, 4294901760
      %3885 = vmatmul.mubr.f32.gmra.mrb[0].mxu0 %v3884
      %v3886 = vpop.f32.mrb[0].mxu0
      %v3887 = vadd.f32 0.0, %v3886
      %v3888 = vpop.f32.mrb[0].mxu0
      %v3889 = vadd.f32 0.0, %v3888
      %3890 = vmatprep.mubr.f32.mxu0 0.0
      %v3891 = vand.u32 %v367, 4294901760
      %v3892 = vsub.f32 %v367, %v3891
      %v3893 = vand.u32 %v3892, 4294901760
      %v3894 = vsub.f32 %v3892, %v3893
      %v3895 = vand.u32 %v3894, 4294901760
      %3896 = vmatmul.mubr.f32.gmra.mrb[0].mxu0 %v3895
      %v3897 = vpop.f32.mrb[0].mxu0
      %v3898 = vadd.f32 0.0, %v3897
      %v3899 = vpop.f32.mrb[0].mxu0
      %v3900 = vadd.f32 0.0, %v3899
      %3901 = vmatprep.mubr.f32.mxu0 0.0
      %v3902 = vand.u32 %v370, 4294901760
      %v3903 = vsub.f32 %v370, %v3902
      %v3904 = vand.u32 %v3903, 4294901760
      %v3905 = vsub.f32 %v3903, %v3904
      %v3906 = vand.u32 %v3905, 4294901760
      %3907 = vmatmul.mubr.f32.gmra.mrb[0].mxu0 %v3906
      %v3908 = vpop.f32.mrb[0].mxu0
      %v3909 = vadd.f32 0.0, %v3908
      %v3910 = vpop.f32.mrb[0].mxu0
      %v3911 = vadd.f32 0.0, %v3910
      %3912 = vmatprep.mubr.f32.mxu0 0.0
      %v3913 = vand.u32 %v373, 4294901760
      %v3914 = vsub.f32 %v373, %v3913
      %v3915 = vand.u32 %v3914, 4294901760
      %v3916 = vsub.f32 %v3914, %v3915
      %v3917 = vand.u32 %v3916, 4294901760
      %3918 = vmatmul.mubr.f32.gmra.mrb[0].mxu0 %v3917
      %v3919 = vpop.f32.mrb[0].mxu0
      %v3920 = vadd.f32 0.0, %v3919
      %v3921 = vpop.f32.mrb[0].mxu0
      %v3922 = vadd.f32 0.0, %v3921
      %3923 = vdwg.mxu0
      %v3924 = vand.u32 %v3784, 4294901760
      %v3925 = vsub.f32 %v3784, %v3924
      %v3926 = vand.u32 %v3925, 4294901760
      %v3927 = vsub.f32 %v3925, %v3926
      %v3928 = vand.u32 %v3927, 4294901760
      %3929 = vmatprep.subr.mxu0 %v3928
      %v3930 = vand.u32 %v3783, 4294901760
      %v3931 = vsub.f32 %v3783, %v3930
      %v3932 = vand.u32 %v3931, 4294901760
      %v3933 = vsub.f32 %v3931, %v3932
      %v3934 = vand.u32 %v3933, 4294901760
      %3935 = vmatpush1.msra.mxu0 %v3934
      %v3936 = vand.u32 %v3786, 4294901760
      %v3937 = vsub.f32 %v3786, %v3936
      %v3938 = vand.u32 %v3937, 4294901760
      %v3939 = vsub.f32 %v3937, %v3938
      %v3940 = vand.u32 %v3939, 4294901760
      %3941 = vmatprep.subr.mxu0 %v3940
      %v3942 = vand.u32 %v3785, 4294901760
      %v3943 = vsub.f32 %v3785, %v3942
      %v3944 = vand.u32 %v3943, 4294901760
      %v3945 = vsub.f32 %v3943, %v3944
      %v3946 = vand.u32 %v3945, 4294901760
      %3947 = vmatpush1.msra.mxu0 %v3946
      %v3948 = vand.u32 %v3788, 4294901760
      %v3949 = vsub.f32 %v3788, %v3948
      %v3950 = vand.u32 %v3949, 4294901760
      %v3951 = vsub.f32 %v3949, %v3950
      %v3952 = vand.u32 %v3951, 4294901760
      %3953 = vmatprep.subr.mxu0 %v3952
      %v3954 = vand.u32 %v3787, 4294901760
      %v3955 = vsub.f32 %v3787, %v3954
      %v3956 = vand.u32 %v3955, 4294901760
      %v3957 = vsub.f32 %v3955, %v3956
      %v3958 = vand.u32 %v3957, 4294901760
      %3959 = vmatpush1.msra.mxu0 %v3958
      %v3960 = vand.u32 %v3790, 4294901760
      %v3961 = vsub.f32 %v3790, %v3960
      %v3962 = vand.u32 %v3961, 4294901760
      %v3963 = vsub.f32 %v3961, %v3962
      %v3964 = vand.u32 %v3963, 4294901760
      %3965 = vmatprep.subr.mxu0 %v3964
      %v3966 = vand.u32 %v3789, 4294901760
      %v3967 = vsub.f32 %v3789, %v3966
      %v3968 = vand.u32 %v3967, 4294901760
      %v3969 = vsub.f32 %v3967, %v3968
      %v3970 = vand.u32 %v3969, 4294901760
      %3971 = vmatpush1.msra.mxu0 %v3970
      %v3972 = vand.u32 %v3792, 4294901760
      %v3973 = vsub.f32 %v3792, %v3972
      %v3974 = vand.u32 %v3973, 4294901760
      %v3975 = vsub.f32 %v3973, %v3974
      %v3976 = vand.u32 %v3975, 4294901760
      %3977 = vmatprep.subr.mxu0 %v3976
      %v3978 = vand.u32 %v3791, 4294901760
      %v3979 = vsub.f32 %v3791, %v3978
      %v3980 = vand.u32 %v3979, 4294901760
      %v3981 = vsub.f32 %v3979, %v3980
      %v3982 = vand.u32 %v3981, 4294901760
      %3983 = vmatpush1.msra.mxu0 %v3982
      %v3984 = vand.u32 %v3794, 4294901760
      %v3985 = vsub.f32 %v3794, %v3984
      %v3986 = vand.u32 %v3985, 4294901760
      %v3987 = vsub.f32 %v3985, %v3986
      %v3988 = vand.u32 %v3987, 4294901760
      %3989 = vmatprep.subr.mxu0 %v3988
      %v3990 = vand.u32 %v3793, 4294901760
      %v3991 = vsub.f32 %v3793, %v3990
      %v3992 = vand.u32 %v3991, 4294901760
      %v3993 = vsub.f32 %v3991, %v3992
      %v3994 = vand.u32 %v3993, 4294901760
      %3995 = vmatpush1.msra.mxu0 %v3994
      %v3996 = vand.u32 %v3796, 4294901760
      %v3997 = vsub.f32 %v3796, %v3996
      %v3998 = vand.u32 %v3997, 4294901760
      %v3999 = vsub.f32 %v3997, %v3998
      %v4000 = vand.u32 %v3999, 4294901760
      %4001 = vmatprep.subr.mxu0 %v4000
      %v4002 = vand.u32 %v3795, 4294901760
      %v4003 = vsub.f32 %v3795, %v4002
      %v4004 = vand.u32 %v4003, 4294901760
      %v4005 = vsub.f32 %v4003, %v4004
      %v4006 = vand.u32 %v4005, 4294901760
      %4007 = vmatpush1.msra.mxu0 %v4006
      %v4008 = vand.u32 %v3798, 4294901760
      %v4009 = vsub.f32 %v3798, %v4008
      %v4010 = vand.u32 %v4009, 4294901760
      %v4011 = vsub.f32 %v4009, %v4010
      %v4012 = vand.u32 %v4011, 4294901760
      %4013 = vmatprep.subr.mxu0 %v4012
      %v4014 = vand.u32 %v3797, 4294901760
      %v4015 = vsub.f32 %v3797, %v4014
      %v4016 = vand.u32 %v4015, 4294901760
      %v4017 = vsub.f32 %v4015, %v4016
      %v4018 = vand.u32 %v4017, 4294901760
      %4019 = vmatpush1.msra.mxu0 %v4018
      %4020 = vmatprep.subr.mxu0 0.0
      %4021 = vmatpush1.msra.mxu0 0.0
      %4022 = vmatprep.subr.mxu0 0.0
      %4023 = vmatpush1.msra.mxu0 0.0
      %4024 = vmatprep.subr.mxu0 0.0
      %4025 = vmatpush1.msra.mxu0 0.0
      %4026 = vmatprep.subr.mxu0 0.0
      %4027 = vmatpush1.msra.mxu0 0.0
      %4028 = vmatprep.subr.mxu0 0.0
      %4029 = vmatpush1.msra.mxu0 0.0
      %4030 = vmatprep.subr.mxu0 0.0
      %4031 = vmatpush1.msra.mxu0 0.0
      %4032 = vmatprep.subr.mxu0 0.0
      %4033 = vmatpush1.msra.mxu0 0.0
      %4034 = vmatprep.subr.mxu0 0.0
      %4035 = vmatpush1.msra.mxu0 0.0
      %4036 = vmatprep.subr.mxu0 0.0
      %4037 = vmatpush1.msra.mxu0 0.0
      %4038 = vmatprep.subr.mxu0 0.0
      %4039 = vmatpush1.msra.mxu0 0.0
      %4040 = vmatprep.subr.mxu0 0.0
      %4041 = vmatpush1.msra.mxu0 0.0
      %4042 = vmatprep.subr.mxu0 0.0
      %4043 = vmatpush1.msra.mxu0 0.0
      %4044 = vmatprep.subr.mxu0 0.0
      %4045 = vmatpush1.msra.mxu0 0.0
      %4046 = vmatprep.subr.mxu0 0.0
      %4047 = vmatpush1.msra.mxu0 0.0
      %4048 = vmatprep.subr.mxu0 0.0
      %4049 = vmatpush1.msra.mxu0 0.0
      %4050 = vmatprep.subr.mxu0 0.0
      %4051 = vmatpush1.msra.mxu0 0.0
      %4052 = vmatprep.subr.mxu0 0.0
      %4053 = vmatpush1.msra.mxu0 0.0
      %4054 = vmatprep.subr.mxu0 0.0
      %4055 = vmatpush1.msra.mxu0 0.0
      %4056 = vmatprep.subr.mxu0 0.0
      %4057 = vmatpush1.msra.mxu0 0.0
      %4058 = vmatprep.subr.mxu0 0.0
      %4059 = vmatpush1.msra.mxu0 0.0
      %4060 = vmatprep.subr.mxu0 0.0
      %4061 = vmatpush1.msra.mxu0 0.0
      %4062 = vmatprep.subr.mxu0 0.0
      %4063 = vmatpush1.msra.mxu0 0.0
      %4064 = vmatprep.subr.mxu0 0.0
      %4065 = vmatpush1.msra.mxu0 0.0
      %4066 = vmatprep.subr.mxu0 0.0
      %4067 = vmatpush1.msra.mxu0 0.0
      %4068 = vmatprep.mubr.f32.mxu0 0.0
      %v4069 = vand.u32 %v364, 4294901760
      %4070 = vmatmul.mubr.f32.gmra.mrb[0].mxu0 %v4069
      %v4071 = vpop.f32.mrb[0].mxu0
      %v4072 = vadd.f32 %v3887, %v4071
      %v4073 = vpop.f32.mrb[0].mxu0
      %v4074 = vadd.f32 %v3889, %v4073
      %4075 = vmatprep.mubr.f32.mxu0 0.0
      %v4076 = vand.u32 %v367, 4294901760
      %4077 = vmatmul.mubr.f32.gmra.mrb[0].mxu0 %v4076
      %v4078 = vpop.f32.mrb[0].mxu0
      %v4079 = vadd.f32 %v3898, %v4078
      %v4080 = vpop.f32.mrb[0].mxu0
      %v4081 = vadd.f32 %v3900, %v4080
      %4082 = vmatprep.mubr.f32.mxu0 0.0
      %v4083 = vand.u32 %v370, 4294901760
      %4084 = vmatmul.mubr.f32.gmra.mrb[0].mxu0 %v4083
      %v4085 = vpop.f32.mrb[0].mxu0
      %v4086 = vadd.f32 %v3909, %v4085
      %v4087 = vpop.f32.mrb[0].mxu0
      %v4088 = vadd.f32 %v3911, %v4087
      %4089 = vmatprep.mubr.f32.mxu0 0.0
      %v4090 = vand.u32 %v373, 4294901760
      %4091 = vmatmul.mubr.f32.gmra.mrb[0].mxu0 %v4090
      %v4092 = vpop.f32.mrb[0].mxu0
      %v4093 = vadd.f32 %v3920, %v4092
      %v4094 = vpop.f32.mrb[0].mxu0
      %v4095 = vadd.f32 %v3922, %v4094
      %4096 = vdwg.mxu0
      %v4097 = vand.u32 %v3784, 4294901760
      %v4098 = vsub.f32 %v3784, %v4097
      %4099 = vmatprep.subr.mxu0 %v4098
      %v4100 = vand.u32 %v3783, 4294901760
      %v4101 = vsub.f32 %v3783, %v4100
      %4102 = vmatpush1.msra.mxu0 %v4101
      %v4103 = vand.u32 %v3786, 4294901760
      %v4104 = vsub.f32 %v3786, %v4103
      %4105 = vmatprep.subr.mxu0 %v4104
      %v4106 = vand.u32 %v3785, 4294901760
      %v4107 = vsub.f32 %v3785, %v4106
      %4108 = vmatpush1.msra.mxu0 %v4107
      %v4109 = vand.u32 %v3788, 4294901760
      %v4110 = vsub.f32 %v3788, %v4109
      %4111 = vmatprep.subr.mxu0 %v4110
      %v4112 = vand.u32 %v3787, 4294901760
      %v4113 = vsub.f32 %v3787, %v4112
      %4114 = vmatpush1.msra.mxu0 %v4113
      %v4115 = vand.u32 %v3790, 4294901760
      %v4116 = vsub.f32 %v3790, %v4115
      %4117 = vmatprep.subr.mxu0 %v4116
      %v4118 = vand.u32 %v3789, 4294901760
      %v4119 = vsub.f32 %v3789, %v4118
      %4120 = vmatpush1.msra.mxu0 %v4119
      %v4121 = vand.u32 %v3792, 4294901760
      %v4122 = vsub.f32 %v3792, %v4121
      %4123 = vmatprep.subr.mxu0 %v4122
      %v4124 = vand.u32 %v3791, 4294901760
      %v4125 = vsub.f32 %v3791, %v4124
      %4126 = vmatpush1.msra.mxu0 %v4125
      %v4127 = vand.u32 %v3794, 4294901760
      %v4128 = vsub.f32 %v3794, %v4127
      %4129 = vmatprep.subr.mxu0 %v4128
      %v4130 = vand.u32 %v3793, 4294901760
      %v4131 = vsub.f32 %v3793, %v4130
      %4132 = vmatpush1.msra.mxu0 %v4131
      %v4133 = vand.u32 %v3796, 4294901760
      %v4134 = vsub.f32 %v3796, %v4133
      %4135 = vmatprep.subr.mxu0 %v4134
      %v4136 = vand.u32 %v3795, 4294901760
      %v4137 = vsub.f32 %v3795, %v4136
      %4138 = vmatpush1.msra.mxu0 %v4137
      %v4139 = vand.u32 %v3798, 4294901760
      %v4140 = vsub.f32 %v3798, %v4139
      %4141 = vmatprep.subr.mxu0 %v4140
      %v4142 = vand.u32 %v3797, 4294901760
      %v4143 = vsub.f32 %v3797, %v4142
      %4144 = vmatpush1.msra.mxu0 %v4143
      %4145 = vmatprep.subr.mxu0 0.0
      %4146 = vmatpush1.msra.mxu0 0.0
      %4147 = vmatprep.subr.mxu0 0.0
      %4148 = vmatpush1.msra.mxu0 0.0
      %4149 = vmatprep.subr.mxu0 0.0
      %4150 = vmatpush1.msra.mxu0 0.0
      %4151 = vmatprep.subr.mxu0 0.0
      %4152 = vmatpush1.msra.mxu0 0.0
      %4153 = vmatprep.subr.mxu0 0.0
      %4154 = vmatpush1.msra.mxu0 0.0
      %4155 = vmatprep.subr.mxu0 0.0
      %4156 = vmatpush1.msra.mxu0 0.0
      %4157 = vmatprep.subr.mxu0 0.0
      %4158 = vmatpush1.msra.mxu0 0.0
      %4159 = vmatprep.subr.mxu0 0.0
      %4160 = vmatpush1.msra.mxu0 0.0
      %4161 = vmatprep.subr.mxu0 0.0
      %4162 = vmatpush1.msra.mxu0 0.0
      %4163 = vmatprep.subr.mxu0 0.0
      %4164 = vmatpush1.msra.mxu0 0.0
      %4165 = vmatprep.subr.mxu0 0.0
      %4166 = vmatpush1.msra.mxu0 0.0
      %4167 = vmatprep.subr.mxu0 0.0
      %4168 = vmatpush1.msra.mxu0 0.0
      %4169 = vmatprep.subr.mxu0 0.0
      %4170 = vmatpush1.msra.mxu0 0.0
      %4171 = vmatprep.subr.mxu0 0.0
      %4172 = vmatpush1.msra.mxu0 0.0
      %4173 = vmatprep.subr.mxu0 0.0
      %4174 = vmatpush1.msra.mxu0 0.0
      %4175 = vmatprep.subr.mxu0 0.0
      %4176 = vmatpush1.msra.mxu0 0.0
      %4177 = vmatprep.subr.mxu0 0.0
      %4178 = vmatpush1.msra.mxu0 0.0
      %4179 = vmatprep.subr.mxu0 0.0
      %4180 = vmatpush1.msra.mxu0 0.0
      %4181 = vmatprep.subr.mxu0 0.0
      %4182 = vmatpush1.msra.mxu0 0.0
      %4183 = vmatprep.subr.mxu0 0.0
      %4184 = vmatpush1.msra.mxu0 0.0
      %4185 = vmatprep.subr.mxu0 0.0
      %4186 = vmatpush1.msra.mxu0 0.0
      %4187 = vmatprep.subr.mxu0 0.0
      %4188 = vmatpush1.msra.mxu0 0.0
      %4189 = vmatprep.subr.mxu0 0.0
      %4190 = vmatpush1.msra.mxu0 0.0
      %4191 = vmatprep.subr.mxu0 0.0
      %4192 = vmatpush1.msra.mxu0 0.0
      %4193 = vmatprep.mubr.f32.mxu0 0.0
      %v4194 = vand.u32 %v364, 4294901760
      %v4195 = vsub.f32 %v364, %v4194
      %4196 = vmatmul.mubr.f32.gmra.mrb[0].mxu0 %v4195
      %v4197 = vpop.f32.mrb[0].mxu0
      %v4198 = vadd.f32 %v4072, %v4197
      %v4199 = vpop.f32.mrb[0].mxu0
      %v4200 = vadd.f32 %v4074, %v4199
      %4201 = vmatprep.mubr.f32.mxu0 0.0
      %v4202 = vand.u32 %v367, 4294901760
      %v4203 = vsub.f32 %v367, %v4202
      %4204 = vmatmul.mubr.f32.gmra.mrb[0].mxu0 %v4203
      %v4205 = vpop.f32.mrb[0].mxu0
      %v4206 = vadd.f32 %v4079, %v4205
      %v4207 = vpop.f32.mrb[0].mxu0
      %v4208 = vadd.f32 %v4081, %v4207
      %4209 = vmatprep.mubr.f32.mxu0 0.0
      %v4210 = vand.u32 %v370, 4294901760
      %v4211 = vsub.f32 %v370, %v4210
      %4212 = vmatmul.mubr.f32.gmra.mrb[0].mxu0 %v4211
      %v4213 = vpop.f32.mrb[0].mxu0
      %v4214 = vadd.f32 %v4086, %v4213
      %v4215 = vpop.f32.mrb[0].mxu0
      %v4216 = vadd.f32 %v4088, %v4215
      %4217 = vmatprep.mubr.f32.mxu0 0.0
      %v4218 = vand.u32 %v373, 4294901760
      %v4219 = vsub.f32 %v373, %v4218
      %4220 = vmatmul.mubr.f32.gmra.mrb[0].mxu0 %v4219
      %v4221 = vpop.f32.mrb[0].mxu0
      %v4222 = vadd.f32 %v4093, %v4221
      %v4223 = vpop.f32.mrb[0].mxu0
      %v4224 = vadd.f32 %v4095, %v4223
      %4225 = vdwg.mxu0
      %v4226 = vand.u32 %v3784, 4294901760
      %4227 = vmatprep.subr.mxu0 %v4226
      %v4228 = vand.u32 %v3783, 4294901760
      %4229 = vmatpush1.msra.mxu0 %v4228
      %v4230 = vand.u32 %v3786, 4294901760
      %4231 = vmatprep.subr.mxu0 %v4230
      %v4232 = vand.u32 %v3785, 4294901760
      %4233 = vmatpush1.msra.mxu0 %v4232
      %v4234 = vand.u32 %v3788, 4294901760
      %4235 = vmatprep.subr.mxu0 %v4234
      %v4236 = vand.u32 %v3787, 4294901760
      %4237 = vmatpush1.msra.mxu0 %v4236
      %v4238 = vand.u32 %v3790, 4294901760
      %4239 = vmatprep.subr.mxu0 %v4238
      %v4240 = vand.u32 %v3789, 4294901760
      %4241 = vmatpush1.msra.mxu0 %v4240
      %v4242 = vand.u32 %v3792, 4294901760
      %4243 = vmatprep.subr.mxu0 %v4242
      %v4244 = vand.u32 %v3791, 4294901760
      %4245 = vmatpush1.msra.mxu0 %v4244
      %v4246 = vand.u32 %v3794, 4294901760
      %4247 = vmatprep.subr.mxu0 %v4246
      %v4248 = vand.u32 %v3793, 4294901760
      %4249 = vmatpush1.msra.mxu0 %v4248
      %v4250 = vand.u32 %v3796, 4294901760
      %4251 = vmatprep.subr.mxu0 %v4250
      %v4252 = vand.u32 %v3795, 4294901760
      %4253 = vmatpush1.msra.mxu0 %v4252
      %v4254 = vand.u32 %v3798, 4294901760
      %4255 = vmatprep.subr.mxu0 %v4254
      %v4256 = vand.u32 %v3797, 4294901760
      %4257 = vmatpush1.msra.mxu0 %v4256
      %4258 = vmatprep.subr.mxu0 0.0
      %4259 = vmatpush1.msra.mxu0 0.0
      %4260 = vmatprep.subr.mxu0 0.0
      %4261 = vmatpush1.msra.mxu0 0.0
      %4262 = vmatprep.subr.mxu0 0.0
      %4263 = vmatpush1.msra.mxu0 0.0
      %4264 = vmatprep.subr.mxu0 0.0
      %4265 = vmatpush1.msra.mxu0 0.0
      %4266 = vmatprep.subr.mxu0 0.0
      %4267 = vmatpush1.msra.mxu0 0.0
      %4268 = vmatprep.subr.mxu0 0.0
      %4269 = vmatpush1.msra.mxu0 0.0
      %4270 = vmatprep.subr.mxu0 0.0
      %4271 = vmatpush1.msra.mxu0 0.0
      %4272 = vmatprep.subr.mxu0 0.0
      %4273 = vmatpush1.msra.mxu0 0.0
      %4274 = vmatprep.subr.mxu0 0.0
      %4275 = vmatpush1.msra.mxu0 0.0
      %4276 = vmatprep.subr.mxu0 0.0
      %4277 = vmatpush1.msra.mxu0 0.0
      %4278 = vmatprep.subr.mxu0 0.0
      %4279 = vmatpush1.msra.mxu0 0.0
      %4280 = vmatprep.subr.mxu0 0.0
      %4281 = vmatpush1.msra.mxu0 0.0
      %4282 = vmatprep.subr.mxu0 0.0
      %4283 = vmatpush1.msra.mxu0 0.0
      %4284 = vmatprep.subr.mxu0 0.0
      %4285 = vmatpush1.msra.mxu0 0.0
      %4286 = vmatprep.subr.mxu0 0.0
      %4287 = vmatpush1.msra.mxu0 0.0
      %4288 = vmatprep.subr.mxu0 0.0
      %4289 = vmatpush1.msra.mxu0 0.0
      %4290 = vmatprep.subr.mxu0 0.0
      %4291 = vmatpush1.msra.mxu0 0.0
      %4292 = vmatprep.subr.mxu0 0.0
      %4293 = vmatpush1.msra.mxu0 0.0
      %4294 = vmatprep.subr.mxu0 0.0
      %4295 = vmatpush1.msra.mxu0 0.0
      %4296 = vmatprep.subr.mxu0 0.0
      %4297 = vmatpush1.msra.mxu0 0.0
      %4298 = vmatprep.subr.mxu0 0.0
      %4299 = vmatpush1.msra.mxu0 0.0
      %4300 = vmatprep.subr.mxu0 0.0
      %4301 = vmatpush1.msra.mxu0 0.0
      %4302 = vmatprep.subr.mxu0 0.0
      %4303 = vmatpush1.msra.mxu0 0.0
      %4304 = vmatprep.subr.mxu0 0.0
      %4305 = vmatpush1.msra.mxu0 0.0
      %4306 = vmatprep.mubr.f32.mxu0 0.0
      %v4307 = vand.u32 %v364, 4294901760
      %v4308 = vsub.f32 %v364, %v4307
      %v4309 = vand.u32 %v4308, 4294901760
      %4310 = vmatmul.mubr.f32.gmra.mrb[0].mxu0 %v4309
      %v4311 = vpop.f32.mrb[0].mxu0
      %v4312 = vadd.f32 %v4198, %v4311
      %v4313 = vpop.f32.mrb[0].mxu0
      %v4314 = vadd.f32 %v4200, %v4313
      %4315 = vmatprep.mubr.f32.mxu0 0.0
      %v4316 = vand.u32 %v367, 4294901760
      %v4317 = vsub.f32 %v367, %v4316
      %v4318 = vand.u32 %v4317, 4294901760
      %4319 = vmatmul.mubr.f32.gmra.mrb[0].mxu0 %v4318
      %v4320 = vpop.f32.mrb[0].mxu0
      %v4321 = vadd.f32 %v4206, %v4320
      %v4322 = vpop.f32.mrb[0].mxu0
      %v4323 = vadd.f32 %v4208, %v4322
      %4324 = vmatprep.mubr.f32.mxu0 0.0
      %v4325 = vand.u32 %v370, 4294901760
      %v4326 = vsub.f32 %v370, %v4325
      %v4327 = vand.u32 %v4326, 4294901760
      %4328 = vmatmul.mubr.f32.gmra.mrb[0].mxu0 %v4327
      %v4329 = vpop.f32.mrb[0].mxu0
      %v4330 = vadd.f32 %v4214, %v4329
      %v4331 = vpop.f32.mrb[0].mxu0
      %v4332 = vadd.f32 %v4216, %v4331
      %4333 = vmatprep.mubr.f32.mxu0 0.0
      %v4334 = vand.u32 %v373, 4294901760
      %v4335 = vsub.f32 %v373, %v4334
      %v4336 = vand.u32 %v4335, 4294901760
      %4337 = vmatmul.mubr.f32.gmra.mrb[0].mxu0 %v4336
      %v4338 = vpop.f32.mrb[0].mxu0
      %v4339 = vadd.f32 %v4222, %v4338
      %v4340 = vpop.f32.mrb[0].mxu0
      %v4341 = vadd.f32 %v4224, %v4340
      %4342 = vdwg.mxu0
      %v4343 = vand.u32 %v3784, 4294901760
      %v4344 = vsub.f32 %v3784, %v4343
      %v4345 = vand.u32 %v4344, 4294901760
      %4346 = vmatprep.subr.mxu0 %v4345
      %v4347 = vand.u32 %v3783, 4294901760
      %v4348 = vsub.f32 %v3783, %v4347
      %v4349 = vand.u32 %v4348, 4294901760
      %4350 = vmatpush1.msra.mxu0 %v4349
      %v4351 = vand.u32 %v3786, 4294901760
      %v4352 = vsub.f32 %v3786, %v4351
      %v4353 = vand.u32 %v4352, 4294901760
      %4354 = vmatprep.subr.mxu0 %v4353
      %v4355 = vand.u32 %v3785, 4294901760
      %v4356 = vsub.f32 %v3785, %v4355
      %v4357 = vand.u32 %v4356, 4294901760
      %4358 = vmatpush1.msra.mxu0 %v4357
      %v4359 = vand.u32 %v3788, 4294901760
      %v4360 = vsub.f32 %v3788, %v4359
      %v4361 = vand.u32 %v4360, 4294901760
      %4362 = vmatprep.subr.mxu0 %v4361
      %v4363 = vand.u32 %v3787, 4294901760
      %v4364 = vsub.f32 %v3787, %v4363
      %v4365 = vand.u32 %v4364, 4294901760
      %4366 = vmatpush1.msra.mxu0 %v4365
      %v4367 = vand.u32 %v3790, 4294901760
      %v4368 = vsub.f32 %v3790, %v4367
      %v4369 = vand.u32 %v4368, 4294901760
      %4370 = vmatprep.subr.mxu0 %v4369
      %v4371 = vand.u32 %v3789, 4294901760
      %v4372 = vsub.f32 %v3789, %v4371
      %v4373 = vand.u32 %v4372, 4294901760
      %4374 = vmatpush1.msra.mxu0 %v4373
      %v4375 = vand.u32 %v3792, 4294901760
      %v4376 = vsub.f32 %v3792, %v4375
      %v4377 = vand.u32 %v4376, 4294901760
      %4378 = vmatprep.subr.mxu0 %v4377
      %v4379 = vand.u32 %v3791, 4294901760
      %v4380 = vsub.f32 %v3791, %v4379
      %v4381 = vand.u32 %v4380, 4294901760
      %4382 = vmatpush1.msra.mxu0 %v4381
      %v4383 = vand.u32 %v3794, 4294901760
      %v4384 = vsub.f32 %v3794, %v4383
      %v4385 = vand.u32 %v4384, 4294901760
      %4386 = vmatprep.subr.mxu0 %v4385
      %v4387 = vand.u32 %v3793, 4294901760
      %v4388 = vsub.f32 %v3793, %v4387
      %v4389 = vand.u32 %v4388, 4294901760
      %4390 = vmatpush1.msra.mxu0 %v4389
      %v4391 = vand.u32 %v3796, 4294901760
      %v4392 = vsub.f32 %v3796, %v4391
      %v4393 = vand.u32 %v4392, 4294901760
      %4394 = vmatprep.subr.mxu0 %v4393
      %v4395 = vand.u32 %v3795, 4294901760
      %v4396 = vsub.f32 %v3795, %v4395
      %v4397 = vand.u32 %v4396, 4294901760
      %4398 = vmatpush1.msra.mxu0 %v4397
      %v4399 = vand.u32 %v3798, 4294901760
      %v4400 = vsub.f32 %v3798, %v4399
      %v4401 = vand.u32 %v4400, 4294901760
      %4402 = vmatprep.subr.mxu0 %v4401
      %v4403 = vand.u32 %v3797, 4294901760
      %v4404 = vsub.f32 %v3797, %v4403
      %v4405 = vand.u32 %v4404, 4294901760
      %4406 = vmatpush1.msra.mxu0 %v4405
      %4407 = vmatprep.subr.mxu0 0.0
      %4408 = vmatpush1.msra.mxu0 0.0
      %4409 = vmatprep.subr.mxu0 0.0
      %4410 = vmatpush1.msra.mxu0 0.0
      %4411 = vmatprep.subr.mxu0 0.0
      %4412 = vmatpush1.msra.mxu0 0.0
      %4413 = vmatprep.subr.mxu0 0.0
      %4414 = vmatpush1.msra.mxu0 0.0
      %4415 = vmatprep.subr.mxu0 0.0
      %4416 = vmatpush1.msra.mxu0 0.0
      %4417 = vmatprep.subr.mxu0 0.0
      %4418 = vmatpush1.msra.mxu0 0.0
      %4419 = vmatprep.subr.mxu0 0.0
      %4420 = vmatpush1.msra.mxu0 0.0
      %4421 = vmatprep.subr.mxu0 0.0
      %4422 = vmatpush1.msra.mxu0 0.0
      %4423 = vmatprep.subr.mxu0 0.0
      %4424 = vmatpush1.msra.mxu0 0.0
      %4425 = vmatprep.subr.mxu0 0.0
      %4426 = vmatpush1.msra.mxu0 0.0
      %4427 = vmatprep.subr.mxu0 0.0
      %4428 = vmatpush1.msra.mxu0 0.0
      %4429 = vmatprep.subr.mxu0 0.0
      %4430 = vmatpush1.msra.mxu0 0.0
      %4431 = vmatprep.subr.mxu0 0.0
      %4432 = vmatpush1.msra.mxu0 0.0
      %4433 = vmatprep.subr.mxu0 0.0
      %4434 = vmatpush1.msra.mxu0 0.0
      %4435 = vmatprep.subr.mxu0 0.0
      %4436 = vmatpush1.msra.mxu0 0.0
      %4437 = vmatprep.subr.mxu0 0.0
      %4438 = vmatpush1.msra.mxu0 0.0
      %4439 = vmatprep.subr.mxu0 0.0
      %4440 = vmatpush1.msra.mxu0 0.0
      %4441 = vmatprep.subr.mxu0 0.0
      %4442 = vmatpush1.msra.mxu0 0.0
      %4443 = vmatprep.subr.mxu0 0.0
      %4444 = vmatpush1.msra.mxu0 0.0
      %4445 = vmatprep.subr.mxu0 0.0
      %4446 = vmatpush1.msra.mxu0 0.0
      %4447 = vmatprep.subr.mxu0 0.0
      %4448 = vmatpush1.msra.mxu0 0.0
      %4449 = vmatprep.subr.mxu0 0.0
      %4450 = vmatpush1.msra.mxu0 0.0
      %4451 = vmatprep.subr.mxu0 0.0
      %4452 = vmatpush1.msra.mxu0 0.0
      %4453 = vmatprep.subr.mxu0 0.0
      %4454 = vmatpush1.msra.mxu0 0.0
      %4455 = vmatprep.mubr.f32.mxu0 0.0
      %v4456 = vand.u32 %v364, 4294901760
      %4457 = vmatmul.mubr.f32.gmra.mrb[0].mxu0 %v4456
      %v4458 = vpop.f32.mrb[0].mxu0
      %v4459 = vadd.f32 %v4312, %v4458
      %v4460 = vpop.f32.mrb[0].mxu0
      %v4461 = vadd.f32 %v4314, %v4460
      %4462 = vmatprep.mubr.f32.mxu0 0.0
      %v4463 = vand.u32 %v367, 4294901760
      %4464 = vmatmul.mubr.f32.gmra.mrb[0].mxu0 %v4463
      %v4465 = vpop.f32.mrb[0].mxu0
      %v4466 = vadd.f32 %v4321, %v4465
      %v4467 = vpop.f32.mrb[0].mxu0
      %v4468 = vadd.f32 %v4323, %v4467
      %4469 = vmatprep.mubr.f32.mxu0 0.0
      %v4470 = vand.u32 %v370, 4294901760
      %4471 = vmatmul.mubr.f32.gmra.mrb[0].mxu0 %v4470
      %v4472 = vpop.f32.mrb[0].mxu0
      %v4473 = vadd.f32 %v4330, %v4472
      %v4474 = vpop.f32.mrb[0].mxu0
      %v4475 = vadd.f32 %v4332, %v4474
      %4476 = vmatprep.mubr.f32.mxu0 0.0
      %v4477 = vand.u32 %v373, 4294901760
      %4478 = vmatmul.mubr.f32.gmra.mrb[0].mxu0 %v4477
      %v4479 = vpop.f32.mrb[0].mxu0
      %v4480 = vadd.f32 %v4339, %v4479
      %v4481 = vpop.f32.mrb[0].mxu0
      %v4482 = vadd.f32 %v4341, %v4481
      %4483 = vdwg.mxu0
      %v4484 = vand.u32 %v3784, 4294901760
      %4485 = vmatprep.subr.mxu0 %v4484
      %v4486 = vand.u32 %v3783, 4294901760
      %4487 = vmatpush1.msra.mxu0 %v4486
      %v4488 = vand.u32 %v3786, 4294901760
      %4489 = vmatprep.subr.mxu0 %v4488
      %v4490 = vand.u32 %v3785, 4294901760
      %4491 = vmatpush1.msra.mxu0 %v4490
      %v4492 = vand.u32 %v3788, 4294901760
      %4493 = vmatprep.subr.mxu0 %v4492
      %v4494 = vand.u32 %v3787, 4294901760
      %4495 = vmatpush1.msra.mxu0 %v4494
      %v4496 = vand.u32 %v3790, 4294901760
      %4497 = vmatprep.subr.mxu0 %v4496
      %v4498 = vand.u32 %v3789, 4294901760
      %4499 = vmatpush1.msra.mxu0 %v4498
      %v4500 = vand.u32 %v3792, 4294901760
      %4501 = vmatprep.subr.mxu0 %v4500
      %v4502 = vand.u32 %v3791, 4294901760
      %4503 = vmatpush1.msra.mxu0 %v4502
      %v4504 = vand.u32 %v3794, 4294901760
      %4505 = vmatprep.subr.mxu0 %v4504
      %v4506 = vand.u32 %v3793, 4294901760
      %4507 = vmatpush1.msra.mxu0 %v4506
      %v4508 = vand.u32 %v3796, 4294901760
      %4509 = vmatprep.subr.mxu0 %v4508
      %v4510 = vand.u32 %v3795, 4294901760
      %4511 = vmatpush1.msra.mxu0 %v4510
      %v4512 = vand.u32 %v3798, 4294901760
      %4513 = vmatprep.subr.mxu0 %v4512
      %v4514 = vand.u32 %v3797, 4294901760
      %4515 = vmatpush1.msra.mxu0 %v4514
      %4516 = vmatprep.subr.mxu0 0.0
      %4517 = vmatpush1.msra.mxu0 0.0
      %4518 = vmatprep.subr.mxu0 0.0
      %4519 = vmatpush1.msra.mxu0 0.0
      %4520 = vmatprep.subr.mxu0 0.0
      %4521 = vmatpush1.msra.mxu0 0.0
      %4522 = vmatprep.subr.mxu0 0.0
      %4523 = vmatpush1.msra.mxu0 0.0
      %4524 = vmatprep.subr.mxu0 0.0
      %4525 = vmatpush1.msra.mxu0 0.0
      %4526 = vmatprep.subr.mxu0 0.0
      %4527 = vmatpush1.msra.mxu0 0.0
      %4528 = vmatprep.subr.mxu0 0.0
      %4529 = vmatpush1.msra.mxu0 0.0
      %4530 = vmatprep.subr.mxu0 0.0
      %4531 = vmatpush1.msra.mxu0 0.0
      %4532 = vmatprep.subr.mxu0 0.0
      %4533 = vmatpush1.msra.mxu0 0.0
      %4534 = vmatprep.subr.mxu0 0.0
      %4535 = vmatpush1.msra.mxu0 0.0
      %4536 = vmatprep.subr.mxu0 0.0
      %4537 = vmatpush1.msra.mxu0 0.0
      %4538 = vmatprep.subr.mxu0 0.0
      %4539 = vmatpush1.msra.mxu0 0.0
      %4540 = vmatprep.subr.mxu0 0.0
      %4541 = vmatpush1.msra.mxu0 0.0
      %4542 = vmatprep.subr.mxu0 0.0
      %4543 = vmatpush1.msra.mxu0 0.0
      %4544 = vmatprep.subr.mxu0 0.0
      %4545 = vmatpush1.msra.mxu0 0.0
      %4546 = vmatprep.subr.mxu0 0.0
      %4547 = vmatpush1.msra.mxu0 0.0
      %4548 = vmatprep.subr.mxu0 0.0
      %4549 = vmatpush1.msra.mxu0 0.0
      %4550 = vmatprep.subr.mxu0 0.0
      %4551 = vmatpush1.msra.mxu0 0.0
      %4552 = vmatprep.subr.mxu0 0.0
      %4553 = vmatpush1.msra.mxu0 0.0
      %4554 = vmatprep.subr.mxu0 0.0
      %4555 = vmatpush1.msra.mxu0 0.0
      %4556 = vmatprep.subr.mxu0 0.0
      %4557 = vmatpush1.msra.mxu0 0.0
      %4558 = vmatprep.subr.mxu0 0.0
      %4559 = vmatpush1.msra.mxu0 0.0
      %4560 = vmatprep.subr.mxu0 0.0
      %4561 = vmatpush1.msra.mxu0 0.0
      %4562 = vmatprep.subr.mxu0 0.0
      %4563 = vmatpush1.msra.mxu0 0.0
      %4564 = vmatprep.mubr.f32.mxu0 0.0
      %v4565 = vand.u32 %v364, 4294901760
      %4566 = vmatmul.mubr.f32.gmra.mrb[0].mxu0 %v4565
      %v4567 = vpop.f32.mrb[0].mxu0
      %v4568 = vadd.f32 %v4459, %v4567
      %v4569 = vpop.f32.mrb[0].mxu0
      %v4570 = vadd.f32 %v4461, %v4569
      %4571 = vmatprep.mubr.f32.mxu0 0.0
      %v4572 = vand.u32 %v367, 4294901760
      %4573 = vmatmul.mubr.f32.gmra.mrb[0].mxu0 %v4572
      %v4574 = vpop.f32.mrb[0].mxu0
      %v4575 = vadd.f32 %v4466, %v4574
      %v4576 = vpop.f32.mrb[0].mxu0
      %v4577 = vadd.f32 %v4468, %v4576
      %4578 = vmatprep.mubr.f32.mxu0 0.0
      %v4579 = vand.u32 %v370, 4294901760
      %4580 = vmatmul.mubr.f32.gmra.mrb[0].mxu0 %v4579
      %v4581 = vpop.f32.mrb[0].mxu0
      %v4582 = vadd.f32 %v4473, %v4581
      %v4583 = vpop.f32.mrb[0].mxu0
      %v4584 = vadd.f32 %v4475, %v4583
      %4585 = vmatprep.mubr.f32.mxu0 0.0
      %v4586 = vand.u32 %v373, 4294901760
      %4587 = vmatmul.mubr.f32.gmra.mrb[0].mxu0 %v4586
      %v4588 = vpop.f32.mrb[0].mxu0
      %v4589 = vadd.f32 %v4480, %v4588
      %v4590 = vpop.f32.mrb[0].mxu0
      %v4591 = vadd.f32 %v4482, %v4590
      %4592 = vdwg.mxu0
      %v4593 = vmul.f32 %v3735, %v4568
      %v4594 = vmul.f32 %v3736, %v4570
      %v4595 = vmul.f32 %v3737, %v4575
      %v4596 = vmul.f32 %v3738, %v4577
      %v4597 = vmul.f32 %v3739, %v4582
      %v4598 = vmul.f32 %v3740, %v4584
      %v4599 = vmul.f32 %v3741, %v4589
      %v4600 = vmul.f32 %v3742, %v4591
      %v4601 = vlaneseq
      %v4602 = vshrl.u32 %v4601, 7
      %v4603 = vsub.s32 5, %v4602
      %v4604 = vrot.slane %v295, %v4603
      %v4605 = vlaneseq
      %v4606 = vshrl.u32 %v4605, 7
      %v4607 = vsub.s32 5, %v4606
      %v4608 = vrot.slane %v296, %v4607
      %vm4609 = vcmp.eq.s32.totalorder %v4604, %v298
      %vm4610 = vcmp.eq.s32.totalorder %v4608, %v298
      %vm4611 = vcmp.eq.s32.totalorder %v4604, %v299
      %vm4612 = vcmp.eq.s32.totalorder %v4608, %v299
      %vm4613 = vcmp.eq.s32.totalorder %v4604, %v300
      %vm4614 = vcmp.eq.s32.totalorder %v4608, %v300
      %vm4615 = vcmp.eq.s32.totalorder %v4604, %v301
      %vm4616 = vcmp.eq.s32.totalorder %v4608, %v301
      %vm4617 = vcmp.eq.s32.totalorder %v4604, %v302
      %vm4618 = vcmp.eq.s32.totalorder %v4608, %v302
      %vm4619 = vcmp.eq.s32.totalorder %v4604, %v303
      %vm4620 = vcmp.eq.s32.totalorder %v4608, %v303
      %vm4621 = vcmp.eq.s32.totalorder %v4604, %v304
      %vm4622 = vcmp.eq.s32.totalorder %v4608, %v304
      %vm4623 = vcmp.eq.s32.totalorder %v4604, %v305
      %vm4624 = vcmp.eq.s32.totalorder %v4608, %v305
      %v4625 = vsel %vm4609, 1, 0
      %v4626 = vsel %vm4610, 1, 0
      %v4627 = vsel %vm4611, 1, 0
      %v4628 = vsel %vm4612, 1, 0
      %v4629 = vsel %vm4613, 1, 0
      %v4630 = vsel %vm4614, 1, 0
      %v4631 = vsel %vm4615, 1, 0
      %v4632 = vsel %vm4616, 1, 0
      %v4633 = vsel %vm4617, 1, 0
      %v4634 = vsel %vm4618, 1, 0
      %v4635 = vsel %vm4619, 1, 0
      %v4636 = vsel %vm4620, 1, 0
      %v4637 = vsel %vm4621, 1, 0
      %v4638 = vsel %vm4622, 1, 0
      %v4639 = vsel %vm4623, 1, 0
      %v4640 = vsel %vm4624, 1, 0
      %v4641 = vcvt.s32.f32 %v4625
      %v4642 = vcvt.s32.f32 %v4626
      %v4643 = vcvt.s32.f32 %v4627
      %v4644 = vcvt.s32.f32 %v4628
      %v4645 = vcvt.s32.f32 %v4629
      %v4646 = vcvt.s32.f32 %v4630
      %v4647 = vcvt.s32.f32 %v4631
      %v4648 = vcvt.s32.f32 %v4632
      %v4649 = vcvt.s32.f32 %v4633
      %v4650 = vcvt.s32.f32 %v4634
      %v4651 = vcvt.s32.f32 %v4635
      %v4652 = vcvt.s32.f32 %v4636
      %v4653 = vcvt.s32.f32 %v4637
      %v4654 = vcvt.s32.f32 %v4638
      %v4655 = vcvt.s32.f32 %v4639
      %v4656 = vcvt.s32.f32 %v4640
      %v4657 = vand.u32 %v4642, 4294901760
      %4658 = vmatprep.subr.mxu0 %v4657
      %v4659 = vand.u32 %v4641, 4294901760
      %4660 = vmatpush1.msra.mxu0 %v4659
      %v4661 = vand.u32 %v4644, 4294901760
      %4662 = vmatprep.subr.mxu0 %v4661
      %v4663 = vand.u32 %v4643, 4294901760
      %4664 = vmatpush1.msra.mxu0 %v4663
      %v4665 = vand.u32 %v4646, 4294901760
      %4666 = vmatprep.subr.mxu0 %v4665
      %v4667 = vand.u32 %v4645, 4294901760
      %4668 = vmatpush1.msra.mxu0 %v4667
      %v4669 = vand.u32 %v4648, 4294901760
      %4670 = vmatprep.subr.mxu0 %v4669
      %v4671 = vand.u32 %v4647, 4294901760
      %4672 = vmatpush1.msra.mxu0 %v4671
      %v4673 = vand.u32 %v4650, 4294901760
      %4674 = vmatprep.subr.mxu0 %v4673
      %v4675 = vand.u32 %v4649, 4294901760
      %4676 = vmatpush1.msra.mxu0 %v4675
      %v4677 = vand.u32 %v4652, 4294901760
      %4678 = vmatprep.subr.mxu0 %v4677
      %v4679 = vand.u32 %v4651, 4294901760
      %4680 = vmatpush1.msra.mxu0 %v4679
      %v4681 = vand.u32 %v4654, 4294901760
      %4682 = vmatprep.subr.mxu0 %v4681
      %v4683 = vand.u32 %v4653, 4294901760
      %4684 = vmatpush1.msra.mxu0 %v4683
      %v4685 = vand.u32 %v4656, 4294901760
      %4686 = vmatprep.subr.mxu0 %v4685
      %v4687 = vand.u32 %v4655, 4294901760
      %4688 = vmatpush1.msra.mxu0 %v4687
      %4689 = vmatprep.subr.mxu0 0.0
      %4690 = vmatpush1.msra.mxu0 0.0
      %4691 = vmatprep.subr.mxu0 0.0
      %4692 = vmatpush1.msra.mxu0 0.0
      %4693 = vmatprep.subr.mxu0 0.0
      %4694 = vmatpush1.msra.mxu0 0.0
      %4695 = vmatprep.subr.mxu0 0.0
      %4696 = vmatpush1.msra.mxu0 0.0
      %4697 = vmatprep.subr.mxu0 0.0
      %4698 = vmatpush1.msra.mxu0 0.0
      %4699 = vmatprep.subr.mxu0 0.0
      %4700 = vmatpush1.msra.mxu0 0.0
      %4701 = vmatprep.subr.mxu0 0.0
      %4702 = vmatpush1.msra.mxu0 0.0
      %4703 = vmatprep.subr.mxu0 0.0
      %4704 = vmatpush1.msra.mxu0 0.0
      %4705 = vmatprep.subr.mxu0 0.0
      %4706 = vmatpush1.msra.mxu0 0.0
      %4707 = vmatprep.subr.mxu0 0.0
      %4708 = vmatpush1.msra.mxu0 0.0
      %4709 = vmatprep.subr.mxu0 0.0
      %4710 = vmatpush1.msra.mxu0 0.0
      %4711 = vmatprep.subr.mxu0 0.0
      %4712 = vmatpush1.msra.mxu0 0.0
      %4713 = vmatprep.subr.mxu0 0.0
      %4714 = vmatpush1.msra.mxu0 0.0
      %4715 = vmatprep.subr.mxu0 0.0
      %4716 = vmatpush1.msra.mxu0 0.0
      %4717 = vmatprep.subr.mxu0 0.0
      %4718 = vmatpush1.msra.mxu0 0.0
      %4719 = vmatprep.subr.mxu0 0.0
      %4720 = vmatpush1.msra.mxu0 0.0
      %4721 = vmatprep.subr.mxu0 0.0
      %4722 = vmatpush1.msra.mxu0 0.0
      %4723 = vmatprep.subr.mxu0 0.0
      %4724 = vmatpush1.msra.mxu0 0.0
      %4725 = vmatprep.subr.mxu0 0.0
      %4726 = vmatpush1.msra.mxu0 0.0
      %4727 = vmatprep.subr.mxu0 0.0
      %4728 = vmatpush1.msra.mxu0 0.0
      %4729 = vmatprep.subr.mxu0 0.0
      %4730 = vmatpush1.msra.mxu0 0.0
      %4731 = vmatprep.subr.mxu0 0.0
      %4732 = vmatpush1.msra.mxu0 0.0
      %4733 = vmatprep.subr.mxu0 0.0
      %4734 = vmatpush1.msra.mxu0 0.0
      %4735 = vmatprep.subr.mxu0 0.0
      %4736 = vmatpush1.msra.mxu0 0.0
      %4737 = vmatprep.mubr.f32.mxu0 0.0
      %v4738 = vand.u32 %v364, 4294901760
      %v4739 = vsub.f32 %v364, %v4738
      %v4740 = vand.u32 %v4739, 4294901760
      %v4741 = vsub.f32 %v4739, %v4740
      %v4742 = vand.u32 %v4741, 4294901760
      %4743 = vmatmul.mubr.f32.gmra.mrb[0].mxu0 %v4742
      %v4744 = vpop.f32.mrb[0].mxu0
      %v4745 = vadd.f32 0.0, %v4744
      %v4746 = vpop.f32.mrb[0].mxu0
      %v4747 = vadd.f32 0.0, %v4746
      %4748 = vmatprep.mubr.f32.mxu0 0.0
      %v4749 = vand.u32 %v367, 4294901760
      %v4750 = vsub.f32 %v367, %v4749
      %v4751 = vand.u32 %v4750, 4294901760
      %v4752 = vsub.f32 %v4750, %v4751
      %v4753 = vand.u32 %v4752, 4294901760
      %4754 = vmatmul.mubr.f32.gmra.mrb[0].mxu0 %v4753
      %v4755 = vpop.f32.mrb[0].mxu0
      %v4756 = vadd.f32 0.0, %v4755
      %v4757 = vpop.f32.mrb[0].mxu0
      %v4758 = vadd.f32 0.0, %v4757
      %4759 = vmatprep.mubr.f32.mxu0 0.0
      %v4760 = vand.u32 %v370, 4294901760
      %v4761 = vsub.f32 %v370, %v4760
      %v4762 = vand.u32 %v4761, 4294901760
      %v4763 = vsub.f32 %v4761, %v4762
      %v4764 = vand.u32 %v4763, 4294901760
      %4765 = vmatmul.mubr.f32.gmra.mrb[0].mxu0 %v4764
      %v4766 = vpop.f32.mrb[0].mxu0
      %v4767 = vadd.f32 0.0, %v4766
      %v4768 = vpop.f32.mrb[0].mxu0
      %v4769 = vadd.f32 0.0, %v4768
      %4770 = vmatprep.mubr.f32.mxu0 0.0
      %v4771 = vand.u32 %v373, 4294901760
      %v4772 = vsub.f32 %v373, %v4771
      %v4773 = vand.u32 %v4772, 4294901760
      %v4774 = vsub.f32 %v4772, %v4773
      %v4775 = vand.u32 %v4774, 4294901760
      %4776 = vmatmul.mubr.f32.gmra.mrb[0].mxu0 %v4775
      %v4777 = vpop.f32.mrb[0].mxu0
      %v4778 = vadd.f32 0.0, %v4777
      %v4779 = vpop.f32.mrb[0].mxu0
      %v4780 = vadd.f32 0.0, %v4779
      %4781 = vdwg.mxu0
      %v4782 = vand.u32 %v4642, 4294901760
      %v4783 = vsub.f32 %v4642, %v4782
      %v4784 = vand.u32 %v4783, 4294901760
      %v4785 = vsub.f32 %v4783, %v4784
      %v4786 = vand.u32 %v4785, 4294901760
      %4787 = vmatprep.subr.mxu0 %v4786
      %v4788 = vand.u32 %v4641, 4294901760
      %v4789 = vsub.f32 %v4641, %v4788
      %v4790 = vand.u32 %v4789, 4294901760
      %v4791 = vsub.f32 %v4789, %v4790
      %v4792 = vand.u32 %v4791, 4294901760
      %4793 = vmatpush1.msra.mxu0 %v4792
      %v4794 = vand.u32 %v4644, 4294901760
      %v4795 = vsub.f32 %v4644, %v4794
      %v4796 = vand.u32 %v4795, 4294901760
      %v4797 = vsub.f32 %v4795, %v4796
      %v4798 = vand.u32 %v4797, 4294901760
      %4799 = vmatprep.subr.mxu0 %v4798
      %v4800 = vand.u32 %v4643, 4294901760
      %v4801 = vsub.f32 %v4643, %v4800
      %v4802 = vand.u32 %v4801, 4294901760
      %v4803 = vsub.f32 %v4801, %v4802
      %v4804 = vand.u32 %v4803, 4294901760
      %4805 = vmatpush1.msra.mxu0 %v4804
      %v4806 = vand.u32 %v4646, 4294901760
      %v4807 = vsub.f32 %v4646, %v4806
      %v4808 = vand.u32 %v4807, 4294901760
      %v4809 = vsub.f32 %v4807, %v4808
      %v4810 = vand.u32 %v4809, 4294901760
      %4811 = vmatprep.subr.mxu0 %v4810
      %v4812 = vand.u32 %v4645, 4294901760
      %v4813 = vsub.f32 %v4645, %v4812
      %v4814 = vand.u32 %v4813, 4294901760
      %v4815 = vsub.f32 %v4813, %v4814
      %v4816 = vand.u32 %v4815, 4294901760
      %4817 = vmatpush1.msra.mxu0 %v4816
      %v4818 = vand.u32 %v4648, 4294901760
      %v4819 = vsub.f32 %v4648, %v4818
      %v4820 = vand.u32 %v4819, 4294901760
      %v4821 = vsub.f32 %v4819, %v4820
      %v4822 = vand.u32 %v4821, 4294901760
      %4823 = vmatprep.subr.mxu0 %v4822
      %v4824 = vand.u32 %v4647, 4294901760
      %v4825 = vsub.f32 %v4647, %v4824
      %v4826 = vand.u32 %v4825, 4294901760
      %v4827 = vsub.f32 %v4825, %v4826
      %v4828 = vand.u32 %v4827, 4294901760
      %4829 = vmatpush1.msra.mxu0 %v4828
      %v4830 = vand.u32 %v4650, 4294901760
      %v4831 = vsub.f32 %v4650, %v4830
      %v4832 = vand.u32 %v4831, 4294901760
      %v4833 = vsub.f32 %v4831, %v4832
      %v4834 = vand.u32 %v4833, 4294901760
      %4835 = vmatprep.subr.mxu0 %v4834
      %v4836 = vand.u32 %v4649, 4294901760
      %v4837 = vsub.f32 %v4649, %v4836
      %v4838 = vand.u32 %v4837, 4294901760
      %v4839 = vsub.f32 %v4837, %v4838
      %v4840 = vand.u32 %v4839, 4294901760
      %4841 = vmatpush1.msra.mxu0 %v4840
      %v4842 = vand.u32 %v4652, 4294901760
      %v4843 = vsub.f32 %v4652, %v4842
      %v4844 = vand.u32 %v4843, 4294901760
      %v4845 = vsub.f32 %v4843, %v4844
      %v4846 = vand.u32 %v4845, 4294901760
      %4847 = vmatprep.subr.mxu0 %v4846
      %v4848 = vand.u32 %v4651, 4294901760
      %v4849 = vsub.f32 %v4651, %v4848
      %v4850 = vand.u32 %v4849, 4294901760
      %v4851 = vsub.f32 %v4849, %v4850
      %v4852 = vand.u32 %v4851, 4294901760
      %4853 = vmatpush1.msra.mxu0 %v4852
      %v4854 = vand.u32 %v4654, 4294901760
      %v4855 = vsub.f32 %v4654, %v4854
      %v4856 = vand.u32 %v4855, 4294901760
      %v4857 = vsub.f32 %v4855, %v4856
      %v4858 = vand.u32 %v4857, 4294901760
      %4859 = vmatprep.subr.mxu0 %v4858
      %v4860 = vand.u32 %v4653, 4294901760
      %v4861 = vsub.f32 %v4653, %v4860
      %v4862 = vand.u32 %v4861, 4294901760
      %v4863 = vsub.f32 %v4861, %v4862
      %v4864 = vand.u32 %v4863, 4294901760
      %4865 = vmatpush1.msra.mxu0 %v4864
      %v4866 = vand.u32 %v4656, 4294901760
      %v4867 = vsub.f32 %v4656, %v4866
      %v4868 = vand.u32 %v4867, 4294901760
      %v4869 = vsub.f32 %v4867, %v4868
      %v4870 = vand.u32 %v4869, 4294901760
      %4871 = vmatprep.subr.mxu0 %v4870
      %v4872 = vand.u32 %v4655, 4294901760
      %v4873 = vsub.f32 %v4655, %v4872
      %v4874 = vand.u32 %v4873, 4294901760
      %v4875 = vsub.f32 %v4873, %v4874
      %v4876 = vand.u32 %v4875, 4294901760
      %4877 = vmatpush1.msra.mxu0 %v4876
      %4878 = vmatprep.subr.mxu0 0.0
      %4879 = vmatpush1.msra.mxu0 0.0
      %4880 = vmatprep.subr.mxu0 0.0
      %4881 = vmatpush1.msra.mxu0 0.0
      %4882 = vmatprep.subr.mxu0 0.0
      %4883 = vmatpush1.msra.mxu0 0.0
      %4884 = vmatprep.subr.mxu0 0.0
      %4885 = vmatpush1.msra.mxu0 0.0
      %4886 = vmatprep.subr.mxu0 0.0
      %4887 = vmatpush1.msra.mxu0 0.0
      %4888 = vmatprep.subr.mxu0 0.0
      %4889 = vmatpush1.msra.mxu0 0.0
      %4890 = vmatprep.subr.mxu0 0.0
      %4891 = vmatpush1.msra.mxu0 0.0
      %4892 = vmatprep.subr.mxu0 0.0
      %4893 = vmatpush1.msra.mxu0 0.0
      %4894 = vmatprep.subr.mxu0 0.0
      %4895 = vmatpush1.msra.mxu0 0.0
      %4896 = vmatprep.subr.mxu0 0.0
      %4897 = vmatpush1.msra.mxu0 0.0
      %4898 = vmatprep.subr.mxu0 0.0
      %4899 = vmatpush1.msra.mxu0 0.0
      %4900 = vmatprep.subr.mxu0 0.0
      %4901 = vmatpush1.msra.mxu0 0.0
      %4902 = vmatprep.subr.mxu0 0.0
      %4903 = vmatpush1.msra.mxu0 0.0
      %4904 = vmatprep.subr.mxu0 0.0
      %4905 = vmatpush1.msra.mxu0 0.0
      %4906 = vmatprep.subr.mxu0 0.0
      %4907 = vmatpush1.msra.mxu0 0.0
      %4908 = vmatprep.subr.mxu0 0.0
      %4909 = vmatpush1.msra.mxu0 0.0
      %4910 = vmatprep.subr.mxu0 0.0
      %4911 = vmatpush1.msra.mxu0 0.0
      %4912 = vmatprep.subr.mxu0 0.0
      %4913 = vmatpush1.msra.mxu0 0.0
      %4914 = vmatprep.subr.mxu0 0.0
      %4915 = vmatpush1.msra.mxu0 0.0
      %4916 = vmatprep.subr.mxu0 0.0
      %4917 = vmatpush1.msra.mxu0 0.0
      %4918 = vmatprep.subr.mxu0 0.0
      %4919 = vmatpush1.msra.mxu0 0.0
      %4920 = vmatprep.subr.mxu0 0.0
      %4921 = vmatpush1.msra.mxu0 0.0
      %4922 = vmatprep.subr.mxu0 0.0
      %4923 = vmatpush1.msra.mxu0 0.0
      %4924 = vmatprep.subr.mxu0 0.0
      %4925 = vmatpush1.msra.mxu0 0.0
      %4926 = vmatprep.mubr.f32.mxu0 0.0
      %v4927 = vand.u32 %v364, 4294901760
      %4928 = vmatmul.mubr.f32.gmra.mrb[0].mxu0 %v4927
      %v4929 = vpop.f32.mrb[0].mxu0
      %v4930 = vadd.f32 %v4745, %v4929
      %v4931 = vpop.f32.mrb[0].mxu0
      %v4932 = vadd.f32 %v4747, %v4931
      %4933 = vmatprep.mubr.f32.mxu0 0.0
      %v4934 = vand.u32 %v367, 4294901760
      %4935 = vmatmul.mubr.f32.gmra.mrb[0].mxu0 %v4934
      %v4936 = vpop.f32.mrb[0].mxu0
      %v4937 = vadd.f32 %v4756, %v4936
      %v4938 = vpop.f32.mrb[0].mxu0
      %v4939 = vadd.f32 %v4758, %v4938
      %4940 = vmatprep.mubr.f32.mxu0 0.0
      %v4941 = vand.u32 %v370, 4294901760
      %4942 = vmatmul.mubr.f32.gmra.mrb[0].mxu0 %v4941
      %v4943 = vpop.f32.mrb[0].mxu0
      %v4944 = vadd.f32 %v4767, %v4943
      %v4945 = vpop.f32.mrb[0].mxu0
      %v4946 = vadd.f32 %v4769, %v4945
      %4947 = vmatprep.mubr.f32.mxu0 0.0
      %v4948 = vand.u32 %v373, 4294901760
      %4949 = vmatmul.mubr.f32.gmra.mrb[0].mxu0 %v4948
      %v4950 = vpop.f32.mrb[0].mxu0
      %v4951 = vadd.f32 %v4778, %v4950
      %v4952 = vpop.f32.mrb[0].mxu0
      %v4953 = vadd.f32 %v4780, %v4952
      %4954 = vdwg.mxu0
      %v4955 = vand.u32 %v4642, 4294901760
      %v4956 = vsub.f32 %v4642, %v4955
      %4957 = vmatprep.subr.mxu0 %v4956
      %v4958 = vand.u32 %v4641, 4294901760
      %v4959 = vsub.f32 %v4641, %v4958
      %4960 = vmatpush1.msra.mxu0 %v4959
      %v4961 = vand.u32 %v4644, 4294901760
      %v4962 = vsub.f32 %v4644, %v4961
      %4963 = vmatprep.subr.mxu0 %v4962
      %v4964 = vand.u32 %v4643, 4294901760
      %v4965 = vsub.f32 %v4643, %v4964
      %4966 = vmatpush1.msra.mxu0 %v4965
      %v4967 = vand.u32 %v4646, 4294901760
      %v4968 = vsub.f32 %v4646, %v4967
      %4969 = vmatprep.subr.mxu0 %v4968
      %v4970 = vand.u32 %v4645, 4294901760
      %v4971 = vsub.f32 %v4645, %v4970
      %4972 = vmatpush1.msra.mxu0 %v4971
      %v4973 = vand.u32 %v4648, 4294901760
      %v4974 = vsub.f32 %v4648, %v4973
      %4975 = vmatprep.subr.mxu0 %v4974
      %v4976 = vand.u32 %v4647, 4294901760
      %v4977 = vsub.f32 %v4647, %v4976
      %4978 = vmatpush1.msra.mxu0 %v4977
      %v4979 = vand.u32 %v4650, 4294901760
      %v4980 = vsub.f32 %v4650, %v4979
      %4981 = vmatprep.subr.mxu0 %v4980
      %v4982 = vand.u32 %v4649, 4294901760
      %v4983 = vsub.f32 %v4649, %v4982
      %4984 = vmatpush1.msra.mxu0 %v4983
      %v4985 = vand.u32 %v4652, 4294901760
      %v4986 = vsub.f32 %v4652, %v4985
      %4987 = vmatprep.subr.mxu0 %v4986
      %v4988 = vand.u32 %v4651, 4294901760
      %v4989 = vsub.f32 %v4651, %v4988
      %4990 = vmatpush1.msra.mxu0 %v4989
      %v4991 = vand.u32 %v4654, 4294901760
      %v4992 = vsub.f32 %v4654, %v4991
      %4993 = vmatprep.subr.mxu0 %v4992
      %v4994 = vand.u32 %v4653, 4294901760
      %v4995 = vsub.f32 %v4653, %v4994
      %4996 = vmatpush1.msra.mxu0 %v4995
      %v4997 = vand.u32 %v4656, 4294901760
      %v4998 = vsub.f32 %v4656, %v4997
      %4999 = vmatprep.subr.mxu0 %v4998
      %v5000 = vand.u32 %v4655, 4294901760
      %v5001 = vsub.f32 %v4655, %v5000
      %5002 = vmatpush1.msra.mxu0 %v5001
      %5003 = vmatprep.subr.mxu0 0.0
      %5004 = vmatpush1.msra.mxu0 0.0
      %5005 = vmatprep.subr.mxu0 0.0
      %5006 = vmatpush1.msra.mxu0 0.0
      %5007 = vmatprep.subr.mxu0 0.0
      %5008 = vmatpush1.msra.mxu0 0.0
      %5009 = vmatprep.subr.mxu0 0.0
      %5010 = vmatpush1.msra.mxu0 0.0
      %5011 = vmatprep.subr.mxu0 0.0
      %5012 = vmatpush1.msra.mxu0 0.0
      %5013 = vmatprep.subr.mxu0 0.0
      %5014 = vmatpush1.msra.mxu0 0.0
      %5015 = vmatprep.subr.mxu0 0.0
      %5016 = vmatpush1.msra.mxu0 0.0
      %5017 = vmatprep.subr.mxu0 0.0
      %5018 = vmatpush1.msra.mxu0 0.0
      %5019 = vmatprep.subr.mxu0 0.0
      %5020 = vmatpush1.msra.mxu0 0.0
      %5021 = vmatprep.subr.mxu0 0.0
      %5022 = vmatpush1.msra.mxu0 0.0
      %5023 = vmatprep.subr.mxu0 0.0
      %5024 = vmatpush1.msra.mxu0 0.0
      %5025 = vmatprep.subr.mxu0 0.0
      %5026 = vmatpush1.msra.mxu0 0.0
      %5027 = vmatprep.subr.mxu0 0.0
      %5028 = vmatpush1.msra.mxu0 0.0
      %5029 = vmatprep.subr.mxu0 0.0
      %5030 = vmatpush1.msra.mxu0 0.0
      %5031 = vmatprep.subr.mxu0 0.0
      %5032 = vmatpush1.msra.mxu0 0.0
      %5033 = vmatprep.subr.mxu0 0.0
      %5034 = vmatpush1.msra.mxu0 0.0
      %5035 = vmatprep.subr.mxu0 0.0
      %5036 = vmatpush1.msra.mxu0 0.0
      %5037 = vmatprep.subr.mxu0 0.0
      %5038 = vmatpush1.msra.mxu0 0.0
      %5039 = vmatprep.subr.mxu0 0.0
      %5040 = vmatpush1.msra.mxu0 0.0
      %5041 = vmatprep.subr.mxu0 0.0
      %5042 = vmatpush1.msra.mxu0 0.0
      %5043 = vmatprep.subr.mxu0 0.0
      %5044 = vmatpush1.msra.mxu0 0.0
      %5045 = vmatprep.subr.mxu0 0.0
      %5046 = vmatpush1.msra.mxu0 0.0
      %5047 = vmatprep.subr.mxu0 0.0
      %5048 = vmatpush1.msra.mxu0 0.0
      %5049 = vmatprep.subr.mxu0 0.0
      %5050 = vmatpush1.msra.mxu0 0.0
      %5051 = vmatprep.mubr.f32.mxu0 0.0
      %v5052 = vand.u32 %v364, 4294901760
      %v5053 = vsub.f32 %v364, %v5052
      %5054 = vmatmul.mubr.f32.gmra.mrb[0].mxu0 %v5053
      %v5055 = vpop.f32.mrb[0].mxu0
      %v5056 = vadd.f32 %v4930, %v5055
      %v5057 = vpop.f32.mrb[0].mxu0
      %v5058 = vadd.f32 %v4932, %v5057
      %5059 = vmatprep.mubr.f32.mxu0 0.0
      %v5060 = vand.u32 %v367, 4294901760
      %v5061 = vsub.f32 %v367, %v5060
      %5062 = vmatmul.mubr.f32.gmra.mrb[0].mxu0 %v5061
      %v5063 = vpop.f32.mrb[0].mxu0
      %v5064 = vadd.f32 %v4937, %v5063
      %v5065 = vpop.f32.mrb[0].mxu0
      %v5066 = vadd.f32 %v4939, %v5065
      %5067 = vmatprep.mubr.f32.mxu0 0.0
      %v5068 = vand.u32 %v370, 4294901760
      %v5069 = vsub.f32 %v370, %v5068
      %5070 = vmatmul.mubr.f32.gmra.mrb[0].mxu0 %v5069
      %v5071 = vpop.f32.mrb[0].mxu0
      %v5072 = vadd.f32 %v4944, %v5071
      %v5073 = vpop.f32.mrb[0].mxu0
      %v5074 = vadd.f32 %v4946, %v5073
      %5075 = vmatprep.mubr.f32.mxu0 0.0
      %v5076 = vand.u32 %v373, 4294901760
      %v5077 = vsub.f32 %v373, %v5076
      %5078 = vmatmul.mubr.f32.gmra.mrb[0].mxu0 %v5077
      %v5079 = vpop.f32.mrb[0].mxu0
      %v5080 = vadd.f32 %v4951, %v5079
      %v5081 = vpop.f32.mrb[0].mxu0
      %v5082 = vadd.f32 %v4953, %v5081
      %5083 = vdwg.mxu0
      %v5084 = vand.u32 %v4642, 4294901760
      %5085 = vmatprep.subr.mxu0 %v5084
      %v5086 = vand.u32 %v4641, 4294901760
      %5087 = vmatpush1.msra.mxu0 %v5086
      %v5088 = vand.u32 %v4644, 4294901760
      %5089 = vmatprep.subr.mxu0 %v5088
      %v5090 = vand.u32 %v4643, 4294901760
      %5091 = vmatpush1.msra.mxu0 %v5090
      %v5092 = vand.u32 %v4646, 4294901760
      %5093 = vmatprep.subr.mxu0 %v5092
      %v5094 = vand.u32 %v4645, 4294901760
      %5095 = vmatpush1.msra.mxu0 %v5094
      %v5096 = vand.u32 %v4648, 4294901760
      %5097 = vmatprep.subr.mxu0 %v5096
      %v5098 = vand.u32 %v4647, 4294901760
      %5099 = vmatpush1.msra.mxu0 %v5098
      %v5100 = vand.u32 %v4650, 4294901760
      %5101 = vmatprep.subr.mxu0 %v5100
      %v5102 = vand.u32 %v4649, 4294901760
      %5103 = vmatpush1.msra.mxu0 %v5102
      %v5104 = vand.u32 %v4652, 4294901760
      %5105 = vmatprep.subr.mxu0 %v5104
      %v5106 = vand.u32 %v4651, 4294901760
      %5107 = vmatpush1.msra.mxu0 %v5106
      %v5108 = vand.u32 %v4654, 4294901760
      %5109 = vmatprep.subr.mxu0 %v5108
      %v5110 = vand.u32 %v4653, 4294901760
      %5111 = vmatpush1.msra.mxu0 %v5110
      %v5112 = vand.u32 %v4656, 4294901760
      %5113 = vmatprep.subr.mxu0 %v5112
      %v5114 = vand.u32 %v4655, 4294901760
      %5115 = vmatpush1.msra.mxu0 %v5114
      %5116 = vmatprep.subr.mxu0 0.0
      %5117 = vmatpush1.msra.mxu0 0.0
      %5118 = vmatprep.subr.mxu0 0.0
      %5119 = vmatpush1.msra.mxu0 0.0
      %5120 = vmatprep.subr.mxu0 0.0
      %5121 = vmatpush1.msra.mxu0 0.0
      %5122 = vmatprep.subr.mxu0 0.0
      %5123 = vmatpush1.msra.mxu0 0.0
      %5124 = vmatprep.subr.mxu0 0.0
      %5125 = vmatpush1.msra.mxu0 0.0
      %5126 = vmatprep.subr.mxu0 0.0
      %5127 = vmatpush1.msra.mxu0 0.0
      %5128 = vmatprep.subr.mxu0 0.0
      %5129 = vmatpush1.msra.mxu0 0.0
      %5130 = vmatprep.subr.mxu0 0.0
      %5131 = vmatpush1.msra.mxu0 0.0
      %5132 = vmatprep.subr.mxu0 0.0
      %5133 = vmatpush1.msra.mxu0 0.0
      %5134 = vmatprep.subr.mxu0 0.0
      %5135 = vmatpush1.msra.mxu0 0.0
      %5136 = vmatprep.subr.mxu0 0.0
      %5137 = vmatpush1.msra.mxu0 0.0
      %5138 = vmatprep.subr.mxu0 0.0
      %5139 = vmatpush1.msra.mxu0 0.0
      %5140 = vmatprep.subr.mxu0 0.0
      %5141 = vmatpush1.msra.mxu0 0.0
      %5142 = vmatprep.subr.mxu0 0.0
      %5143 = vmatpush1.msra.mxu0 0.0
      %5144 = vmatprep.subr.mxu0 0.0
      %5145 = vmatpush1.msra.mxu0 0.0
      %5146 = vmatprep.subr.mxu0 0.0
      %5147 = vmatpush1.msra.mxu0 0.0
      %5148 = vmatprep.subr.mxu0 0.0
      %5149 = vmatpush1.msra.mxu0 0.0
      %5150 = vmatprep.subr.mxu0 0.0
      %5151 = vmatpush1.msra.mxu0 0.0
      %5152 = vmatprep.subr.mxu0 0.0
      %5153 = vmatpush1.msra.mxu0 0.0
      %5154 = vmatprep.subr.mxu0 0.0
      %5155 = vmatpush1.msra.mxu0 0.0
      %5156 = vmatprep.subr.mxu0 0.0
      %5157 = vmatpush1.msra.mxu0 0.0
      %5158 = vmatprep.subr.mxu0 0.0
      %5159 = vmatpush1.msra.mxu0 0.0
      %5160 = vmatprep.subr.mxu0 0.0
      %5161 = vmatpush1.msra.mxu0 0.0
      %5162 = vmatprep.subr.mxu0 0.0
      %5163 = vmatpush1.msra.mxu0 0.0
      %5164 = vmatprep.mubr.f32.mxu0 0.0
      %v5165 = vand.u32 %v364, 4294901760
      %v5166 = vsub.f32 %v364, %v5165
      %v5167 = vand.u32 %v5166, 4294901760
      %5168 = vmatmul.mubr.f32.gmra.mrb[0].mxu0 %v5167
      %v5169 = vpop.f32.mrb[0].mxu0
      %v5170 = vadd.f32 %v5056, %v5169
      %v5171 = vpop.f32.mrb[0].mxu0
      %v5172 = vadd.f32 %v5058, %v5171
      %5173 = vmatprep.mubr.f32.mxu0 0.0
      %v5174 = vand.u32 %v367, 4294901760
      %v5175 = vsub.f32 %v367, %v5174
      %v5176 = vand.u32 %v5175, 4294901760
      %5177 = vmatmul.mubr.f32.gmra.mrb[0].mxu0 %v5176
      %v5178 = vpop.f32.mrb[0].mxu0
      %v5179 = vadd.f32 %v5064, %v5178
      %v5180 = vpop.f32.mrb[0].mxu0
      %v5181 = vadd.f32 %v5066, %v5180
      %5182 = vmatprep.mubr.f32.mxu0 0.0
      %v5183 = vand.u32 %v370, 4294901760
      %v5184 = vsub.f32 %v370, %v5183
      %v5185 = vand.u32 %v5184, 4294901760
      %5186 = vmatmul.mubr.f32.gmra.mrb[0].mxu0 %v5185
      %v5187 = vpop.f32.mrb[0].mxu0
      %v5188 = vadd.f32 %v5072, %v5187
      %v5189 = vpop.f32.mrb[0].mxu0
      %v5190 = vadd.f32 %v5074, %v5189
      %5191 = vmatprep.mubr.f32.mxu0 0.0
      %v5192 = vand.u32 %v373, 4294901760
      %v5193 = vsub.f32 %v373, %v5192
      %v5194 = vand.u32 %v5193, 4294901760
      %5195 = vmatmul.mubr.f32.gmra.mrb[0].mxu0 %v5194
      %v5196 = vpop.f32.mrb[0].mxu0
      %v5197 = vadd.f32 %v5080, %v5196
      %v5198 = vpop.f32.mrb[0].mxu0
      %v5199 = vadd.f32 %v5082, %v5198
      %5200 = vdwg.mxu0
      %v5201 = vand.u32 %v4642, 4294901760
      %v5202 = vsub.f32 %v4642, %v5201
      %v5203 = vand.u32 %v5202, 4294901760
      %5204 = vmatprep.subr.mxu0 %v5203
      %v5205 = vand.u32 %v4641, 4294901760
      %v5206 = vsub.f32 %v4641, %v5205
      %v5207 = vand.u32 %v5206, 4294901760
      %5208 = vmatpush1.msra.mxu0 %v5207
      %v5209 = vand.u32 %v4644, 4294901760
      %v5210 = vsub.f32 %v4644, %v5209
      %v5211 = vand.u32 %v5210, 4294901760
      %5212 = vmatprep.subr.mxu0 %v5211
      %v5213 = vand.u32 %v4643, 4294901760
      %v5214 = vsub.f32 %v4643, %v5213
      %v5215 = vand.u32 %v5214, 4294901760
      %5216 = vmatpush1.msra.mxu0 %v5215
      %v5217 = vand.u32 %v4646, 4294901760
      %v5218 = vsub.f32 %v4646, %v5217
      %v5219 = vand.u32 %v5218, 4294901760
      %5220 = vmatprep.subr.mxu0 %v5219
      %v5221 = vand.u32 %v4645, 4294901760
      %v5222 = vsub.f32 %v4645, %v5221
      %v5223 = vand.u32 %v5222, 4294901760
      %5224 = vmatpush1.msra.mxu0 %v5223
      %v5225 = vand.u32 %v4648, 4294901760
      %v5226 = vsub.f32 %v4648, %v5225
      %v5227 = vand.u32 %v5226, 4294901760
      %5228 = vmatprep.subr.mxu0 %v5227
      %v5229 = vand.u32 %v4647, 4294901760
      %v5230 = vsub.f32 %v4647, %v5229
      %v5231 = vand.u32 %v5230, 4294901760
      %5232 = vmatpush1.msra.mxu0 %v5231
      %v5233 = vand.u32 %v4650, 4294901760
      %v5234 = vsub.f32 %v4650, %v5233
      %v5235 = vand.u32 %v5234, 4294901760
      %5236 = vmatprep.subr.mxu0 %v5235
      %v5237 = vand.u32 %v4649, 4294901760
      %v5238 = vsub.f32 %v4649, %v5237
      %v5239 = vand.u32 %v5238, 4294901760
      %5240 = vmatpush1.msra.mxu0 %v5239
      %v5241 = vand.u32 %v4652, 4294901760
      %v5242 = vsub.f32 %v4652, %v5241
      %v5243 = vand.u32 %v5242, 4294901760
      %5244 = vmatprep.subr.mxu0 %v5243
      %v5245 = vand.u32 %v4651, 4294901760
      %v5246 = vsub.f32 %v4651, %v5245
      %v5247 = vand.u32 %v5246, 4294901760
      %5248 = vmatpush1.msra.mxu0 %v5247
      %v5249 = vand.u32 %v4654, 4294901760
      %v5250 = vsub.f32 %v4654, %v5249
      %v5251 = vand.u32 %v5250, 4294901760
      %5252 = vmatprep.subr.mxu0 %v5251
      %v5253 = vand.u32 %v4653, 4294901760
      %v5254 = vsub.f32 %v4653, %v5253
      %v5255 = vand.u32 %v5254, 4294901760
      %5256 = vmatpush1.msra.mxu0 %v5255
      %v5257 = vand.u32 %v4656, 4294901760
      %v5258 = vsub.f32 %v4656, %v5257
      %v5259 = vand.u32 %v5258, 4294901760
      %5260 = vmatprep.subr.mxu0 %v5259
      %v5261 = vand.u32 %v4655, 4294901760
      %v5262 = vsub.f32 %v4655, %v5261
      %v5263 = vand.u32 %v5262, 4294901760
      %5264 = vmatpush1.msra.mxu0 %v5263
      %5265 = vmatprep.subr.mxu0 0.0
      %5266 = vmatpush1.msra.mxu0 0.0
      %5267 = vmatprep.subr.mxu0 0.0
      %5268 = vmatpush1.msra.mxu0 0.0
      %5269 = vmatprep.subr.mxu0 0.0
      %5270 = vmatpush1.msra.mxu0 0.0
      %5271 = vmatprep.subr.mxu0 0.0
      %5272 = vmatpush1.msra.mxu0 0.0
      %5273 = vmatprep.subr.mxu0 0.0
      %5274 = vmatpush1.msra.mxu0 0.0
      %5275 = vmatprep.subr.mxu0 0.0
      %5276 = vmatpush1.msra.mxu0 0.0
      %5277 = vmatprep.subr.mxu0 0.0
      %5278 = vmatpush1.msra.mxu0 0.0
      %5279 = vmatprep.subr.mxu0 0.0
      %5280 = vmatpush1.msra.mxu0 0.0
      %5281 = vmatprep.subr.mxu0 0.0
      %5282 = vmatpush1.msra.mxu0 0.0
      %5283 = vmatprep.subr.mxu0 0.0
      %5284 = vmatpush1.msra.mxu0 0.0
      %5285 = vmatprep.subr.mxu0 0.0
      %5286 = vmatpush1.msra.mxu0 0.0
      %5287 = vmatprep.subr.mxu0 0.0
      %5288 = vmatpush1.msra.mxu0 0.0
      %5289 = vmatprep.subr.mxu0 0.0
      %5290 = vmatpush1.msra.mxu0 0.0
      %5291 = vmatprep.subr.mxu0 0.0
      %5292 = vmatpush1.msra.mxu0 0.0
      %5293 = vmatprep.subr.mxu0 0.0
      %5294 = vmatpush1.msra.mxu0 0.0
      %5295 = vmatprep.subr.mxu0 0.0
      %5296 = vmatpush1.msra.mxu0 0.0
      %5297 = vmatprep.subr.mxu0 0.0
      %5298 = vmatpush1.msra.mxu0 0.0
      %5299 = vmatprep.subr.mxu0 0.0
      %5300 = vmatpush1.msra.mxu0 0.0
      %5301 = vmatprep.subr.mxu0 0.0
      %5302 = vmatpush1.msra.mxu0 0.0
      %5303 = vmatprep.subr.mxu0 0.0
      %5304 = vmatpush1.msra.mxu0 0.0
      %5305 = vmatprep.subr.mxu0 0.0
      %5306 = vmatpush1.msra.mxu0 0.0
      %5307 = vmatprep.subr.mxu0 0.0
      %5308 = vmatpush1.msra.mxu0 0.0
      %5309 = vmatprep.subr.mxu0 0.0
      %5310 = vmatpush1.msra.mxu0 0.0
      %5311 = vmatprep.subr.mxu0 0.0
      %5312 = vmatpush1.msra.mxu0 0.0
      %5313 = vmatprep.mubr.f32.mxu0 0.0
      %v5314 = vand.u32 %v364, 4294901760
      %5315 = vmatmul.mubr.f32.gmra.mrb[0].mxu0 %v5314
      %v5316 = vpop.f32.mrb[0].mxu0
      %v5317 = vadd.f32 %v5170, %v5316
      %v5318 = vpop.f32.mrb[0].mxu0
      %v5319 = vadd.f32 %v5172, %v5318
      %5320 = vmatprep.mubr.f32.mxu0 0.0
      %v5321 = vand.u32 %v367, 4294901760
      %5322 = vmatmul.mubr.f32.gmra.mrb[0].mxu0 %v5321
      %v5323 = vpop.f32.mrb[0].mxu0
      %v5324 = vadd.f32 %v5179, %v5323
      %v5325 = vpop.f32.mrb[0].mxu0
      %v5326 = vadd.f32 %v5181, %v5325
      %5327 = vmatprep.mubr.f32.mxu0 0.0
      %v5328 = vand.u32 %v370, 4294901760
      %5329 = vmatmul.mubr.f32.gmra.mrb[0].mxu0 %v5328
      %v5330 = vpop.f32.mrb[0].mxu0
      %v5331 = vadd.f32 %v5188, %v5330
      %v5332 = vpop.f32.mrb[0].mxu0
      %v5333 = vadd.f32 %v5190, %v5332
      %5334 = vmatprep.mubr.f32.mxu0 0.0
      %v5335 = vand.u32 %v373, 4294901760
      %5336 = vmatmul.mubr.f32.gmra.mrb[0].mxu0 %v5335
      %v5337 = vpop.f32.mrb[0].mxu0
      %v5338 = vadd.f32 %v5197, %v5337
      %v5339 = vpop.f32.mrb[0].mxu0
      %v5340 = vadd.f32 %v5199, %v5339
      %5341 = vdwg.mxu0
      %v5342 = vand.u32 %v4642, 4294901760
      %5343 = vmatprep.subr.mxu0 %v5342
      %v5344 = vand.u32 %v4641, 4294901760
      %5345 = vmatpush1.msra.mxu0 %v5344
      %v5346 = vand.u32 %v4644, 4294901760
      %5347 = vmatprep.subr.mxu0 %v5346
      %v5348 = vand.u32 %v4643, 4294901760
      %5349 = vmatpush1.msra.mxu0 %v5348
      %v5350 = vand.u32 %v4646, 4294901760
      %5351 = vmatprep.subr.mxu0 %v5350
      %v5352 = vand.u32 %v4645, 4294901760
      %5353 = vmatpush1.msra.mxu0 %v5352
      %v5354 = vand.u32 %v4648, 4294901760
      %5355 = vmatprep.subr.mxu0 %v5354
      %v5356 = vand.u32 %v4647, 4294901760
      %5357 = vmatpush1.msra.mxu0 %v5356
      %v5358 = vand.u32 %v4650, 4294901760
      %5359 = vmatprep.subr.mxu0 %v5358
      %v5360 = vand.u32 %v4649, 4294901760
      %5361 = vmatpush1.msra.mxu0 %v5360
      %v5362 = vand.u32 %v4652, 4294901760
      %5363 = vmatprep.subr.mxu0 %v5362
      %v5364 = vand.u32 %v4651, 4294901760
      %5365 = vmatpush1.msra.mxu0 %v5364
      %v5366 = vand.u32 %v4654, 4294901760
      %5367 = vmatprep.subr.mxu0 %v5366
      %v5368 = vand.u32 %v4653, 4294901760
      %5369 = vmatpush1.msra.mxu0 %v5368
      %v5370 = vand.u32 %v4656, 4294901760
      %5371 = vmatprep.subr.mxu0 %v5370
      %v5372 = vand.u32 %v4655, 4294901760
      %5373 = vmatpush1.msra.mxu0 %v5372
      %5374 = vmatprep.subr.mxu0 0.0
      %5375 = vmatpush1.msra.mxu0 0.0
      %5376 = vmatprep.subr.mxu0 0.0
      %5377 = vmatpush1.msra.mxu0 0.0
      %5378 = vmatprep.subr.mxu0 0.0
      %5379 = vmatpush1.msra.mxu0 0.0
      %5380 = vmatprep.subr.mxu0 0.0
      %5381 = vmatpush1.msra.mxu0 0.0
      %5382 = vmatprep.subr.mxu0 0.0
      %5383 = vmatpush1.msra.mxu0 0.0
      %5384 = vmatprep.subr.mxu0 0.0
      %5385 = vmatpush1.msra.mxu0 0.0
      %5386 = vmatprep.subr.mxu0 0.0
      %5387 = vmatpush1.msra.mxu0 0.0
      %5388 = vmatprep.subr.mxu0 0.0
      %5389 = vmatpush1.msra.mxu0 0.0
      %5390 = vmatprep.subr.mxu0 0.0
      %5391 = vmatpush1.msra.mxu0 0.0
      %5392 = vmatprep.subr.mxu0 0.0
      %5393 = vmatpush1.msra.mxu0 0.0
      %5394 = vmatprep.subr.mxu0 0.0
      %5395 = vmatpush1.msra.mxu0 0.0
      %5396 = vmatprep.subr.mxu0 0.0
      %5397 = vmatpush1.msra.mxu0 0.0
      %5398 = vmatprep.subr.mxu0 0.0
      %5399 = vmatpush1.msra.mxu0 0.0
      %5400 = vmatprep.subr.mxu0 0.0
      %5401 = vmatpush1.msra.mxu0 0.0
      %5402 = vmatprep.subr.mxu0 0.0
      %5403 = vmatpush1.msra.mxu0 0.0
      %5404 = vmatprep.subr.mxu0 0.0
      %5405 = vmatpush1.msra.mxu0 0.0
      %5406 = vmatprep.subr.mxu0 0.0
      %5407 = vmatpush1.msra.mxu0 0.0
      %5408 = vmatprep.subr.mxu0 0.0
      %5409 = vmatpush1.msra.mxu0 0.0
      %5410 = vmatprep.subr.mxu0 0.0
      %5411 = vmatpush1.msra.mxu0 0.0
      %5412 = vmatprep.subr.mxu0 0.0
      %5413 = vmatpush1.msra.mxu0 0.0
      %5414 = vmatprep.subr.mxu0 0.0
      %5415 = vmatpush1.msra.mxu0 0.0
      %5416 = vmatprep.subr.mxu0 0.0
      %5417 = vmatpush1.msra.mxu0 0.0
      %5418 = vmatprep.subr.mxu0 0.0
      %5419 = vmatpush1.msra.mxu0 0.0
      %5420 = vmatprep.subr.mxu0 0.0
      %5421 = vmatpush1.msra.mxu0 0.0
      %5422 = vmatprep.mubr.f32.mxu0 0.0
      %v5423 = vand.u32 %v364, 4294901760
      %5424 = vmatmul.mubr.f32.gmra.mrb[0].mxu0 %v5423
      %v5425 = vpop.f32.mrb[0].mxu0
      %v5426 = vadd.f32 %v5317, %v5425
      %v5427 = vpop.f32.mrb[0].mxu0
      %v5428 = vadd.f32 %v5319, %v5427
      %5429 = vmatprep.mubr.f32.mxu0 0.0
      %v5430 = vand.u32 %v367, 4294901760
      %5431 = vmatmul.mubr.f32.gmra.mrb[0].mxu0 %v5430
      %v5432 = vpop.f32.mrb[0].mxu0
      %v5433 = vadd.f32 %v5324, %v5432
      %v5434 = vpop.f32.mrb[0].mxu0
      %v5435 = vadd.f32 %v5326, %v5434
      %5436 = vmatprep.mubr.f32.mxu0 0.0
      %v5437 = vand.u32 %v370, 4294901760
      %5438 = vmatmul.mubr.f32.gmra.mrb[0].mxu0 %v5437
      %v5439 = vpop.f32.mrb[0].mxu0
      %v5440 = vadd.f32 %v5331, %v5439
      %v5441 = vpop.f32.mrb[0].mxu0
      %v5442 = vadd.f32 %v5333, %v5441
      %5443 = vmatprep.mubr.f32.mxu0 0.0
      %v5444 = vand.u32 %v373, 4294901760
      %5445 = vmatmul.mubr.f32.gmra.mrb[0].mxu0 %v5444
      %v5446 = vpop.f32.mrb[0].mxu0
      %v5447 = vadd.f32 %v5338, %v5446
      %v5448 = vpop.f32.mrb[0].mxu0
      %v5449 = vadd.f32 %v5340, %v5448
      %5450 = vdwg.mxu0
      %v5451 = vmul.f32 %v4593, %v5426
      %v5452 = vmul.f32 %v4594, %v5428
      %v5453 = vmul.f32 %v4595, %v5433
      %v5454 = vmul.f32 %v4596, %v5435
      %v5455 = vmul.f32 %v4597, %v5440
      %v5456 = vmul.f32 %v4598, %v5442
      %v5457 = vmul.f32 %v4599, %v5447
      %v5458 = vmul.f32 %v4600, %v5449
      %v5459 = vlaneseq
      %v5460 = vshrl.u32 %v5459, 7
      %v5461 = vsub.s32 6, %v5460
      %v5462 = vrot.slane %v295, %v5461
      %v5463 = vlaneseq
      %v5464 = vshrl.u32 %v5463, 7
      %v5465 = vsub.s32 6, %v5464
      %v5466 = vrot.slane %v296, %v5465
      %vm5467 = vcmp.eq.s32.totalorder %v5462, %v298
      %vm5468 = vcmp.eq.s32.totalorder %v5466, %v298
      %vm5469 = vcmp.eq.s32.totalorder %v5462, %v299
      %vm5470 = vcmp.eq.s32.totalorder %v5466, %v299
      %vm5471 = vcmp.eq.s32.totalorder %v5462, %v300
      %vm5472 = vcmp.eq.s32.totalorder %v5466, %v300
      %vm5473 = vcmp.eq.s32.totalorder %v5462, %v301
      %vm5474 = vcmp.eq.s32.totalorder %v5466, %v301
      %vm5475 = vcmp.eq.s32.totalorder %v5462, %v302
      %vm5476 = vcmp.eq.s32.totalorder %v5466, %v302
      %vm5477 = vcmp.eq.s32.totalorder %v5462, %v303
      %vm5478 = vcmp.eq.s32.totalorder %v5466, %v303
      %vm5479 = vcmp.eq.s32.totalorder %v5462, %v304
      %vm5480 = vcmp.eq.s32.totalorder %v5466, %v304
      %vm5481 = vcmp.eq.s32.totalorder %v5462, %v305
      %vm5482 = vcmp.eq.s32.totalorder %v5466, %v305
      %v5483 = vsel %vm5467, 1, 0
      %v5484 = vsel %vm5468, 1, 0
      %v5485 = vsel %vm5469, 1, 0
      %v5486 = vsel %vm5470, 1, 0
      %v5487 = vsel %vm5471, 1, 0
      %v5488 = vsel %vm5472, 1, 0
      %v5489 = vsel %vm5473, 1, 0
      %v5490 = vsel %vm5474, 1, 0
      %v5491 = vsel %vm5475, 1, 0
      %v5492 = vsel %vm5476, 1, 0
      %v5493 = vsel %vm5477, 1, 0
      %v5494 = vsel %vm5478, 1, 0
      %v5495 = vsel %vm5479, 1, 0
      %v5496 = vsel %vm5480, 1, 0
      %v5497 = vsel %vm5481, 1, 0
      %v5498 = vsel %vm5482, 1, 0
      %v5499 = vcvt.s32.f32 %v5483
      %v5500 = vcvt.s32.f32 %v5484
      %v5501 = vcvt.s32.f32 %v5485
      %v5502 = vcvt.s32.f32 %v5486
      %v5503 = vcvt.s32.f32 %v5487
      %v5504 = vcvt.s32.f32 %v5488
      %v5505 = vcvt.s32.f32 %v5489
      %v5506 = vcvt.s32.f32 %v5490
      %v5507 = vcvt.s32.f32 %v5491
      %v5508 = vcvt.s32.f32 %v5492
      %v5509 = vcvt.s32.f32 %v5493
      %v5510 = vcvt.s32.f32 %v5494
      %v5511 = vcvt.s32.f32 %v5495
      %v5512 = vcvt.s32.f32 %v5496
      %v5513 = vcvt.s32.f32 %v5497
      %v5514 = vcvt.s32.f32 %v5498
      %v5515 = vand.u32 %v5500, 4294901760
      %5516 = vmatprep.subr.mxu0 %v5515
      %v5517 = vand.u32 %v5499, 4294901760
      %5518 = vmatpush1.msra.mxu0 %v5517
      %v5519 = vand.u32 %v5502, 4294901760
      %5520 = vmatprep.subr.mxu0 %v5519
      %v5521 = vand.u32 %v5501, 4294901760
      %5522 = vmatpush1.msra.mxu0 %v5521
      %v5523 = vand.u32 %v5504, 4294901760
      %5524 = vmatprep.subr.mxu0 %v5523
      %v5525 = vand.u32 %v5503, 4294901760
      %5526 = vmatpush1.msra.mxu0 %v5525
      %v5527 = vand.u32 %v5506, 4294901760
      %5528 = vmatprep.subr.mxu0 %v5527
      %v5529 = vand.u32 %v5505, 4294901760
      %5530 = vmatpush1.msra.mxu0 %v5529
      %v5531 = vand.u32 %v5508, 4294901760
      %5532 = vmatprep.subr.mxu0 %v5531
      %v5533 = vand.u32 %v5507, 4294901760
      %5534 = vmatpush1.msra.mxu0 %v5533
      %v5535 = vand.u32 %v5510, 4294901760
      %5536 = vmatprep.subr.mxu0 %v5535
      %v5537 = vand.u32 %v5509, 4294901760
      %5538 = vmatpush1.msra.mxu0 %v5537
      %v5539 = vand.u32 %v5512, 4294901760
      %5540 = vmatprep.subr.mxu0 %v5539
      %v5541 = vand.u32 %v5511, 4294901760
      %5542 = vmatpush1.msra.mxu0 %v5541
      %v5543 = vand.u32 %v5514, 4294901760
      %5544 = vmatprep.subr.mxu0 %v5543
      %v5545 = vand.u32 %v5513, 4294901760
      %5546 = vmatpush1.msra.mxu0 %v5545
      %5547 = vmatprep.subr.mxu0 0.0
      %5548 = vmatpush1.msra.mxu0 0.0
      %5549 = vmatprep.subr.mxu0 0.0
      %5550 = vmatpush1.msra.mxu0 0.0
      %5551 = vmatprep.subr.mxu0 0.0
      %5552 = vmatpush1.msra.mxu0 0.0
      %5553 = vmatprep.subr.mxu0 0.0
      %5554 = vmatpush1.msra.mxu0 0.0
      %5555 = vmatprep.subr.mxu0 0.0
      %5556 = vmatpush1.msra.mxu0 0.0
      %5557 = vmatprep.subr.mxu0 0.0
      %5558 = vmatpush1.msra.mxu0 0.0
      %5559 = vmatprep.subr.mxu0 0.0
      %5560 = vmatpush1.msra.mxu0 0.0
      %5561 = vmatprep.subr.mxu0 0.0
      %5562 = vmatpush1.msra.mxu0 0.0
      %5563 = vmatprep.subr.mxu0 0.0
      %5564 = vmatpush1.msra.mxu0 0.0
      %5565 = vmatprep.subr.mxu0 0.0
      %5566 = vmatpush1.msra.mxu0 0.0
      %5567 = vmatprep.subr.mxu0 0.0
      %5568 = vmatpush1.msra.mxu0 0.0
      %5569 = vmatprep.subr.mxu0 0.0
      %5570 = vmatpush1.msra.mxu0 0.0
      %5571 = vmatprep.subr.mxu0 0.0
      %5572 = vmatpush1.msra.mxu0 0.0
      %5573 = vmatprep.subr.mxu0 0.0
      %5574 = vmatpush1.msra.mxu0 0.0
      %5575 = vmatprep.subr.mxu0 0.0
      %5576 = vmatpush1.msra.mxu0 0.0
      %5577 = vmatprep.subr.mxu0 0.0
      %5578 = vmatpush1.msra.mxu0 0.0
      %5579 = vmatprep.subr.mxu0 0.0
      %5580 = vmatpush1.msra.mxu0 0.0
      %5581 = vmatprep.subr.mxu0 0.0
      %5582 = vmatpush1.msra.mxu0 0.0
      %5583 = vmatprep.subr.mxu0 0.0
      %5584 = vmatpush1.msra.mxu0 0.0
      %5585 = vmatprep.subr.mxu0 0.0
      %5586 = vmatpush1.msra.mxu0 0.0
      %5587 = vmatprep.subr.mxu0 0.0
      %5588 = vmatpush1.msra.mxu0 0.0
      %5589 = vmatprep.subr.mxu0 0.0
      %5590 = vmatpush1.msra.mxu0 0.0
      %5591 = vmatprep.subr.mxu0 0.0
      %5592 = vmatpush1.msra.mxu0 0.0
      %5593 = vmatprep.subr.mxu0 0.0
      %5594 = vmatpush1.msra.mxu0 0.0
      %5595 = vmatprep.mubr.f32.mxu0 0.0
      %v5596 = vand.u32 %v364, 4294901760
      %v5597 = vsub.f32 %v364, %v5596
      %v5598 = vand.u32 %v5597, 4294901760
      %v5599 = vsub.f32 %v5597, %v5598
      %v5600 = vand.u32 %v5599, 4294901760
      %5601 = vmatmul.mubr.f32.gmra.mrb[0].mxu0 %v5600
      %v5602 = vpop.f32.mrb[0].mxu0
      %v5603 = vadd.f32 0.0, %v5602
      %v5604 = vpop.f32.mrb[0].mxu0
      %v5605 = vadd.f32 0.0, %v5604
      %5606 = vmatprep.mubr.f32.mxu0 0.0
      %v5607 = vand.u32 %v367, 4294901760
      %v5608 = vsub.f32 %v367, %v5607
      %v5609 = vand.u32 %v5608, 4294901760
      %v5610 = vsub.f32 %v5608, %v5609
      %v5611 = vand.u32 %v5610, 4294901760
      %5612 = vmatmul.mubr.f32.gmra.mrb[0].mxu0 %v5611
      %v5613 = vpop.f32.mrb[0].mxu0
      %v5614 = vadd.f32 0.0, %v5613
      %v5615 = vpop.f32.mrb[0].mxu0
      %v5616 = vadd.f32 0.0, %v5615
      %5617 = vmatprep.mubr.f32.mxu0 0.0
      %v5618 = vand.u32 %v370, 4294901760
      %v5619 = vsub.f32 %v370, %v5618
      %v5620 = vand.u32 %v5619, 4294901760
      %v5621 = vsub.f32 %v5619, %v5620
      %v5622 = vand.u32 %v5621, 4294901760
      %5623 = vmatmul.mubr.f32.gmra.mrb[0].mxu0 %v5622
      %v5624 = vpop.f32.mrb[0].mxu0
      %v5625 = vadd.f32 0.0, %v5624
      %v5626 = vpop.f32.mrb[0].mxu0
      %v5627 = vadd.f32 0.0, %v5626
      %5628 = vmatprep.mubr.f32.mxu0 0.0
      %v5629 = vand.u32 %v373, 4294901760
      %v5630 = vsub.f32 %v373, %v5629
      %v5631 = vand.u32 %v5630, 4294901760
      %v5632 = vsub.f32 %v5630, %v5631
      %v5633 = vand.u32 %v5632, 4294901760
      %5634 = vmatmul.mubr.f32.gmra.mrb[0].mxu0 %v5633
      %v5635 = vpop.f32.mrb[0].mxu0
      %v5636 = vadd.f32 0.0, %v5635
      %v5637 = vpop.f32.mrb[0].mxu0
      %v5638 = vadd.f32 0.0, %v5637
      %5639 = vdwg.mxu0
      %v5640 = vand.u32 %v5500, 4294901760
      %v5641 = vsub.f32 %v5500, %v5640
      %v5642 = vand.u32 %v5641, 4294901760
      %v5643 = vsub.f32 %v5641, %v5642
      %v5644 = vand.u32 %v5643, 4294901760
      %5645 = vmatprep.subr.mxu0 %v5644
      %v5646 = vand.u32 %v5499, 4294901760
      %v5647 = vsub.f32 %v5499, %v5646
      %v5648 = vand.u32 %v5647, 4294901760
      %v5649 = vsub.f32 %v5647, %v5648
      %v5650 = vand.u32 %v5649, 4294901760
      %5651 = vmatpush1.msra.mxu0 %v5650
      %v5652 = vand.u32 %v5502, 4294901760
      %v5653 = vsub.f32 %v5502, %v5652
      %v5654 = vand.u32 %v5653, 4294901760
      %v5655 = vsub.f32 %v5653, %v5654
      %v5656 = vand.u32 %v5655, 4294901760
      %5657 = vmatprep.subr.mxu0 %v5656
      %v5658 = vand.u32 %v5501, 4294901760
      %v5659 = vsub.f32 %v5501, %v5658
      %v5660 = vand.u32 %v5659, 4294901760
      %v5661 = vsub.f32 %v5659, %v5660
      %v5662 = vand.u32 %v5661, 4294901760
      %5663 = vmatpush1.msra.mxu0 %v5662
      %v5664 = vand.u32 %v5504, 4294901760
      %v5665 = vsub.f32 %v5504, %v5664
      %v5666 = vand.u32 %v5665, 4294901760
      %v5667 = vsub.f32 %v5665, %v5666
      %v5668 = vand.u32 %v5667, 4294901760
      %5669 = vmatprep.subr.mxu0 %v5668
      %v5670 = vand.u32 %v5503, 4294901760
      %v5671 = vsub.f32 %v5503, %v5670
      %v5672 = vand.u32 %v5671, 4294901760
      %v5673 = vsub.f32 %v5671, %v5672
      %v5674 = vand.u32 %v5673, 4294901760
      %5675 = vmatpush1.msra.mxu0 %v5674
      %v5676 = vand.u32 %v5506, 4294901760
      %v5677 = vsub.f32 %v5506, %v5676
      %v5678 = vand.u32 %v5677, 4294901760
      %v5679 = vsub.f32 %v5677, %v5678
      %v5680 = vand.u32 %v5679, 4294901760
      %5681 = vmatprep.subr.mxu0 %v5680
      %v5682 = vand.u32 %v5505, 4294901760
      %v5683 = vsub.f32 %v5505, %v5682
      %v5684 = vand.u32 %v5683, 4294901760
      %v5685 = vsub.f32 %v5683, %v5684
      %v5686 = vand.u32 %v5685, 4294901760
      %5687 = vmatpush1.msra.mxu0 %v5686
      %v5688 = vand.u32 %v5508, 4294901760
      %v5689 = vsub.f32 %v5508, %v5688
      %v5690 = vand.u32 %v5689, 4294901760
      %v5691 = vsub.f32 %v5689, %v5690
      %v5692 = vand.u32 %v5691, 4294901760
      %5693 = vmatprep.subr.mxu0 %v5692
      %v5694 = vand.u32 %v5507, 4294901760
      %v5695 = vsub.f32 %v5507, %v5694
      %v5696 = vand.u32 %v5695, 4294901760
      %v5697 = vsub.f32 %v5695, %v5696
      %v5698 = vand.u32 %v5697, 4294901760
      %5699 = vmatpush1.msra.mxu0 %v5698
      %v5700 = vand.u32 %v5510, 4294901760
      %v5701 = vsub.f32 %v5510, %v5700
      %v5702 = vand.u32 %v5701, 4294901760
      %v5703 = vsub.f32 %v5701, %v5702
      %v5704 = vand.u32 %v5703, 4294901760
      %5705 = vmatprep.subr.mxu0 %v5704
      %v5706 = vand.u32 %v5509, 4294901760
      %v5707 = vsub.f32 %v5509, %v5706
      %v5708 = vand.u32 %v5707, 4294901760
      %v5709 = vsub.f32 %v5707, %v5708
      %v5710 = vand.u32 %v5709, 4294901760
      %5711 = vmatpush1.msra.mxu0 %v5710
      %v5712 = vand.u32 %v5512, 4294901760
      %v5713 = vsub.f32 %v5512, %v5712
      %v5714 = vand.u32 %v5713, 4294901760
      %v5715 = vsub.f32 %v5713, %v5714
      %v5716 = vand.u32 %v5715, 4294901760
      %5717 = vmatprep.subr.mxu0 %v5716
      %v5718 = vand.u32 %v5511, 4294901760
      %v5719 = vsub.f32 %v5511, %v5718
      %v5720 = vand.u32 %v5719, 4294901760
      %v5721 = vsub.f32 %v5719, %v5720
      %v5722 = vand.u32 %v5721, 4294901760
      %5723 = vmatpush1.msra.mxu0 %v5722
      %v5724 = vand.u32 %v5514, 4294901760
      %v5725 = vsub.f32 %v5514, %v5724
      %v5726 = vand.u32 %v5725, 4294901760
      %v5727 = vsub.f32 %v5725, %v5726
      %v5728 = vand.u32 %v5727, 4294901760
      %5729 = vmatprep.subr.mxu0 %v5728
      %v5730 = vand.u32 %v5513, 4294901760
      %v5731 = vsub.f32 %v5513, %v5730
      %v5732 = vand.u32 %v5731, 4294901760
      %v5733 = vsub.f32 %v5731, %v5732
      %v5734 = vand.u32 %v5733, 4294901760
      %5735 = vmatpush1.msra.mxu0 %v5734
      %5736 = vmatprep.subr.mxu0 0.0
      %5737 = vmatpush1.msra.mxu0 0.0
      %5738 = vmatprep.subr.mxu0 0.0
      %5739 = vmatpush1.msra.mxu0 0.0
      %5740 = vmatprep.subr.mxu0 0.0
      %5741 = vmatpush1.msra.mxu0 0.0
      %5742 = vmatprep.subr.mxu0 0.0
      %5743 = vmatpush1.msra.mxu0 0.0
      %5744 = vmatprep.subr.mxu0 0.0
      %5745 = vmatpush1.msra.mxu0 0.0
      %5746 = vmatprep.subr.mxu0 0.0
      %5747 = vmatpush1.msra.mxu0 0.0
      %5748 = vmatprep.subr.mxu0 0.0
      %5749 = vmatpush1.msra.mxu0 0.0
      %5750 = vmatprep.subr.mxu0 0.0
      %5751 = vmatpush1.msra.mxu0 0.0
      %5752 = vmatprep.subr.mxu0 0.0
      %5753 = vmatpush1.msra.mxu0 0.0
      %5754 = vmatprep.subr.mxu0 0.0
      %5755 = vmatpush1.msra.mxu0 0.0
      %5756 = vmatprep.subr.mxu0 0.0
      %5757 = vmatpush1.msra.mxu0 0.0
      %5758 = vmatprep.subr.mxu0 0.0
      %5759 = vmatpush1.msra.mxu0 0.0
      %5760 = vmatprep.subr.mxu0 0.0
      %5761 = vmatpush1.msra.mxu0 0.0
      %5762 = vmatprep.subr.mxu0 0.0
      %5763 = vmatpush1.msra.mxu0 0.0
      %5764 = vmatprep.subr.mxu0 0.0
      %5765 = vmatpush1.msra.mxu0 0.0
      %5766 = vmatprep.subr.mxu0 0.0
      %5767 = vmatpush1.msra.mxu0 0.0
      %5768 = vmatprep.subr.mxu0 0.0
      %5769 = vmatpush1.msra.mxu0 0.0
      %5770 = vmatprep.subr.mxu0 0.0
      %5771 = vmatpush1.msra.mxu0 0.0
      %5772 = vmatprep.subr.mxu0 0.0
      %5773 = vmatpush1.msra.mxu0 0.0
      %5774 = vmatprep.subr.mxu0 0.0
      %5775 = vmatpush1.msra.mxu0 0.0
      %5776 = vmatprep.subr.mxu0 0.0
      %5777 = vmatpush1.msra.mxu0 0.0
      %5778 = vmatprep.subr.mxu0 0.0
      %5779 = vmatpush1.msra.mxu0 0.0
      %5780 = vmatprep.subr.mxu0 0.0
      %5781 = vmatpush1.msra.mxu0 0.0
      %5782 = vmatprep.subr.mxu0 0.0
      %5783 = vmatpush1.msra.mxu0 0.0
      %5784 = vmatprep.mubr.f32.mxu0 0.0
      %v5785 = vand.u32 %v364, 4294901760
      %5786 = vmatmul.mubr.f32.gmra.mrb[0].mxu0 %v5785
      %v5787 = vpop.f32.mrb[0].mxu0
      %v5788 = vadd.f32 %v5603, %v5787
      %v5789 = vpop.f32.mrb[0].mxu0
      %v5790 = vadd.f32 %v5605, %v5789
      %5791 = vmatprep.mubr.f32.mxu0 0.0
      %v5792 = vand.u32 %v367, 4294901760
      %5793 = vmatmul.mubr.f32.gmra.mrb[0].mxu0 %v5792
      %v5794 = vpop.f32.mrb[0].mxu0
      %v5795 = vadd.f32 %v5614, %v5794
      %v5796 = vpop.f32.mrb[0].mxu0
      %v5797 = vadd.f32 %v5616, %v5796
      %5798 = vmatprep.mubr.f32.mxu0 0.0
      %v5799 = vand.u32 %v370, 4294901760
      %5800 = vmatmul.mubr.f32.gmra.mrb[0].mxu0 %v5799
      %v5801 = vpop.f32.mrb[0].mxu0
      %v5802 = vadd.f32 %v5625, %v5801
      %v5803 = vpop.f32.mrb[0].mxu0
      %v5804 = vadd.f32 %v5627, %v5803
      %5805 = vmatprep.mubr.f32.mxu0 0.0
      %v5806 = vand.u32 %v373, 4294901760
      %5807 = vmatmul.mubr.f32.gmra.mrb[0].mxu0 %v5806
      %v5808 = vpop.f32.mrb[0].mxu0
      %v5809 = vadd.f32 %v5636, %v5808
      %v5810 = vpop.f32.mrb[0].mxu0
      %v5811 = vadd.f32 %v5638, %v5810
      %5812 = vdwg.mxu0
      %v5813 = vand.u32 %v5500, 4294901760
      %v5814 = vsub.f32 %v5500, %v5813
      %5815 = vmatprep.subr.mxu0 %v5814
      %v5816 = vand.u32 %v5499, 4294901760
      %v5817 = vsub.f32 %v5499, %v5816
      %5818 = vmatpush1.msra.mxu0 %v5817
      %v5819 = vand.u32 %v5502, 4294901760
      %v5820 = vsub.f32 %v5502, %v5819
      %5821 = vmatprep.subr.mxu0 %v5820
      %v5822 = vand.u32 %v5501, 4294901760
      %v5823 = vsub.f32 %v5501, %v5822
      %5824 = vmatpush1.msra.mxu0 %v5823
      %v5825 = vand.u32 %v5504, 4294901760
      %v5826 = vsub.f32 %v5504, %v5825
      %5827 = vmatprep.subr.mxu0 %v5826
      %v5828 = vand.u32 %v5503, 4294901760
      %v5829 = vsub.f32 %v5503, %v5828
      %5830 = vmatpush1.msra.mxu0 %v5829
      %v5831 = vand.u32 %v5506, 4294901760
      %v5832 = vsub.f32 %v5506, %v5831
      %5833 = vmatprep.subr.mxu0 %v5832
      %v5834 = vand.u32 %v5505, 4294901760
      %v5835 = vsub.f32 %v5505, %v5834
      %5836 = vmatpush1.msra.mxu0 %v5835
      %v5837 = vand.u32 %v5508, 4294901760
      %v5838 = vsub.f32 %v5508, %v5837
      %5839 = vmatprep.subr.mxu0 %v5838
      %v5840 = vand.u32 %v5507, 4294901760
      %v5841 = vsub.f32 %v5507, %v5840
      %5842 = vmatpush1.msra.mxu0 %v5841
      %v5843 = vand.u32 %v5510, 4294901760
      %v5844 = vsub.f32 %v5510, %v5843
      %5845 = vmatprep.subr.mxu0 %v5844
      %v5846 = vand.u32 %v5509, 4294901760
      %v5847 = vsub.f32 %v5509, %v5846
      %5848 = vmatpush1.msra.mxu0 %v5847
      %v5849 = vand.u32 %v5512, 4294901760
      %v5850 = vsub.f32 %v5512, %v5849
      %5851 = vmatprep.subr.mxu0 %v5850
      %v5852 = vand.u32 %v5511, 4294901760
      %v5853 = vsub.f32 %v5511, %v5852
      %5854 = vmatpush1.msra.mxu0 %v5853
      %v5855 = vand.u32 %v5514, 4294901760
      %v5856 = vsub.f32 %v5514, %v5855
      %5857 = vmatprep.subr.mxu0 %v5856
      %v5858 = vand.u32 %v5513, 4294901760
      %v5859 = vsub.f32 %v5513, %v5858
      %5860 = vmatpush1.msra.mxu0 %v5859
      %5861 = vmatprep.subr.mxu0 0.0
      %5862 = vmatpush1.msra.mxu0 0.0
      %5863 = vmatprep.subr.mxu0 0.0
      %5864 = vmatpush1.msra.mxu0 0.0
      %5865 = vmatprep.subr.mxu0 0.0
      %5866 = vmatpush1.msra.mxu0 0.0
      %5867 = vmatprep.subr.mxu0 0.0
      %5868 = vmatpush1.msra.mxu0 0.0
      %5869 = vmatprep.subr.mxu0 0.0
      %5870 = vmatpush1.msra.mxu0 0.0
      %5871 = vmatprep.subr.mxu0 0.0
      %5872 = vmatpush1.msra.mxu0 0.0
      %5873 = vmatprep.subr.mxu0 0.0
      %5874 = vmatpush1.msra.mxu0 0.0
      %5875 = vmatprep.subr.mxu0 0.0
      %5876 = vmatpush1.msra.mxu0 0.0
      %5877 = vmatprep.subr.mxu0 0.0
      %5878 = vmatpush1.msra.mxu0 0.0
      %5879 = vmatprep.subr.mxu0 0.0
      %5880 = vmatpush1.msra.mxu0 0.0
      %5881 = vmatprep.subr.mxu0 0.0
      %5882 = vmatpush1.msra.mxu0 0.0
      %5883 = vmatprep.subr.mxu0 0.0
      %5884 = vmatpush1.msra.mxu0 0.0
      %5885 = vmatprep.subr.mxu0 0.0
      %5886 = vmatpush1.msra.mxu0 0.0
      %5887 = vmatprep.subr.mxu0 0.0
      %5888 = vmatpush1.msra.mxu0 0.0
      %5889 = vmatprep.subr.mxu0 0.0
      %5890 = vmatpush1.msra.mxu0 0.0
      %5891 = vmatprep.subr.mxu0 0.0
      %5892 = vmatpush1.msra.mxu0 0.0
      %5893 = vmatprep.subr.mxu0 0.0
      %5894 = vmatpush1.msra.mxu0 0.0
      %5895 = vmatprep.subr.mxu0 0.0
      %5896 = vmatpush1.msra.mxu0 0.0
      %5897 = vmatprep.subr.mxu0 0.0
      %5898 = vmatpush1.msra.mxu0 0.0
      %5899 = vmatprep.subr.mxu0 0.0
      %5900 = vmatpush1.msra.mxu0 0.0
      %5901 = vmatprep.subr.mxu0 0.0
      %5902 = vmatpush1.msra.mxu0 0.0
      %5903 = vmatprep.subr.mxu0 0.0
      %5904 = vmatpush1.msra.mxu0 0.0
      %5905 = vmatprep.subr.mxu0 0.0
      %5906 = vmatpush1.msra.mxu0 0.0
      %5907 = vmatprep.subr.mxu0 0.0
      %5908 = vmatpush1.msra.mxu0 0.0
      %5909 = vmatprep.mubr.f32.mxu0 0.0
      %v5910 = vand.u32 %v364, 4294901760
      %v5911 = vsub.f32 %v364, %v5910
      %5912 = vmatmul.mubr.f32.gmra.mrb[0].mxu0 %v5911
      %v5913 = vpop.f32.mrb[0].mxu0
      %v5914 = vadd.f32 %v5788, %v5913
      %v5915 = vpop.f32.mrb[0].mxu0
      %v5916 = vadd.f32 %v5790, %v5915
      %5917 = vmatprep.mubr.f32.mxu0 0.0
      %v5918 = vand.u32 %v367, 4294901760
      %v5919 = vsub.f32 %v367, %v5918
      %5920 = vmatmul.mubr.f32.gmra.mrb[0].mxu0 %v5919
      %v5921 = vpop.f32.mrb[0].mxu0
      %v5922 = vadd.f32 %v5795, %v5921
      %v5923 = vpop.f32.mrb[0].mxu0
      %v5924 = vadd.f32 %v5797, %v5923
      %5925 = vmatprep.mubr.f32.mxu0 0.0
      %v5926 = vand.u32 %v370, 4294901760
      %v5927 = vsub.f32 %v370, %v5926
      %5928 = vmatmul.mubr.f32.gmra.mrb[0].mxu0 %v5927
      %v5929 = vpop.f32.mrb[0].mxu0
      %v5930 = vadd.f32 %v5802, %v5929
      %v5931 = vpop.f32.mrb[0].mxu0
      %v5932 = vadd.f32 %v5804, %v5931
      %5933 = vmatprep.mubr.f32.mxu0 0.0
      %v5934 = vand.u32 %v373, 4294901760
      %v5935 = vsub.f32 %v373, %v5934
      %5936 = vmatmul.mubr.f32.gmra.mrb[0].mxu0 %v5935
      %v5937 = vpop.f32.mrb[0].mxu0
      %v5938 = vadd.f32 %v5809, %v5937
      %v5939 = vpop.f32.mrb[0].mxu0
      %v5940 = vadd.f32 %v5811, %v5939
      %5941 = vdwg.mxu0
      %v5942 = vand.u32 %v5500, 4294901760
      %5943 = vmatprep.subr.mxu0 %v5942
      %v5944 = vand.u32 %v5499, 4294901760
      %5945 = vmatpush1.msra.mxu0 %v5944
      %v5946 = vand.u32 %v5502, 4294901760
      %5947 = vmatprep.subr.mxu0 %v5946
      %v5948 = vand.u32 %v5501, 4294901760
      %5949 = vmatpush1.msra.mxu0 %v5948
      %v5950 = vand.u32 %v5504, 4294901760
      %5951 = vmatprep.subr.mxu0 %v5950
      %v5952 = vand.u32 %v5503, 4294901760
      %5953 = vmatpush1.msra.mxu0 %v5952
      %v5954 = vand.u32 %v5506, 4294901760
      %5955 = vmatprep.subr.mxu0 %v5954
      %v5956 = vand.u32 %v5505, 4294901760
      %5957 = vmatpush1.msra.mxu0 %v5956
      %v5958 = vand.u32 %v5508, 4294901760
      %5959 = vmatprep.subr.mxu0 %v5958
      %v5960 = vand.u32 %v5507, 4294901760
      %5961 = vmatpush1.msra.mxu0 %v5960
      %v5962 = vand.u32 %v5510, 4294901760
      %5963 = vmatprep.subr.mxu0 %v5962
      %v5964 = vand.u32 %v5509, 4294901760
      %5965 = vmatpush1.msra.mxu0 %v5964
      %v5966 = vand.u32 %v5512, 4294901760
      %5967 = vmatprep.subr.mxu0 %v5966
      %v5968 = vand.u32 %v5511, 4294901760
      %5969 = vmatpush1.msra.mxu0 %v5968
      %v5970 = vand.u32 %v5514, 4294901760
      %5971 = vmatprep.subr.mxu0 %v5970
      %v5972 = vand.u32 %v5513, 4294901760
      %5973 = vmatpush1.msra.mxu0 %v5972
      %5974 = vmatprep.subr.mxu0 0.0
      %5975 = vmatpush1.msra.mxu0 0.0
      %5976 = vmatprep.subr.mxu0 0.0
      %5977 = vmatpush1.msra.mxu0 0.0
      %5978 = vmatprep.subr.mxu0 0.0
      %5979 = vmatpush1.msra.mxu0 0.0
      %5980 = vmatprep.subr.mxu0 0.0
      %5981 = vmatpush1.msra.mxu0 0.0
      %5982 = vmatprep.subr.mxu0 0.0
      %5983 = vmatpush1.msra.mxu0 0.0
      %5984 = vmatprep.subr.mxu0 0.0
      %5985 = vmatpush1.msra.mxu0 0.0
      %5986 = vmatprep.subr.mxu0 0.0
      %5987 = vmatpush1.msra.mxu0 0.0
      %5988 = vmatprep.subr.mxu0 0.0
      %5989 = vmatpush1.msra.mxu0 0.0
      %5990 = vmatprep.subr.mxu0 0.0
      %5991 = vmatpush1.msra.mxu0 0.0
      %5992 = vmatprep.subr.mxu0 0.0
      %5993 = vmatpush1.msra.mxu0 0.0
      %5994 = vmatprep.subr.mxu0 0.0
      %5995 = vmatpush1.msra.mxu0 0.0
      %5996 = vmatprep.subr.mxu0 0.0
      %5997 = vmatpush1.msra.mxu0 0.0
      %5998 = vmatprep.subr.mxu0 0.0
      %5999 = vmatpush1.msra.mxu0 0.0
      %6000 = vmatprep.subr.mxu0 0.0
      %6001 = vmatpush1.msra.mxu0 0.0
      %6002 = vmatprep.subr.mxu0 0.0
      %6003 = vmatpush1.msra.mxu0 0.0
      %6004 = vmatprep.subr.mxu0 0.0
      %6005 = vmatpush1.msra.mxu0 0.0
      %6006 = vmatprep.subr.mxu0 0.0
      %6007 = vmatpush1.msra.mxu0 0.0
      %6008 = vmatprep.subr.mxu0 0.0
      %6009 = vmatpush1.msra.mxu0 0.0
      %6010 = vmatprep.subr.mxu0 0.0
      %6011 = vmatpush1.msra.mxu0 0.0
      %6012 = vmatprep.subr.mxu0 0.0
      %6013 = vmatpush1.msra.mxu0 0.0
      %6014 = vmatprep.subr.mxu0 0.0
      %6015 = vmatpush1.msra.mxu0 0.0
      %6016 = vmatprep.subr.mxu0 0.0
      %6017 = vmatpush1.msra.mxu0 0.0
      %6018 = vmatprep.subr.mxu0 0.0
      %6019 = vmatpush1.msra.mxu0 0.0
      %6020 = vmatprep.subr.mxu0 0.0
      %6021 = vmatpush1.msra.mxu0 0.0
      %6022 = vmatprep.mubr.f32.mxu0 0.0
      %v6023 = vand.u32 %v364, 4294901760
      %v6024 = vsub.f32 %v364, %v6023
      %v6025 = vand.u32 %v6024, 4294901760
      %6026 = vmatmul.mubr.f32.gmra.mrb[0].mxu0 %v6025
      %v6027 = vpop.f32.mrb[0].mxu0
      %v6028 = vadd.f32 %v5914, %v6027
      %v6029 = vpop.f32.mrb[0].mxu0
      %v6030 = vadd.f32 %v5916, %v6029
      %6031 = vmatprep.mubr.f32.mxu0 0.0
      %v6032 = vand.u32 %v367, 4294901760
      %v6033 = vsub.f32 %v367, %v6032
      %v6034 = vand.u32 %v6033, 4294901760
      %6035 = vmatmul.mubr.f32.gmra.mrb[0].mxu0 %v6034
      %v6036 = vpop.f32.mrb[0].mxu0
      %v6037 = vadd.f32 %v5922, %v6036
      %v6038 = vpop.f32.mrb[0].mxu0
      %v6039 = vadd.f32 %v5924, %v6038
      %6040 = vmatprep.mubr.f32.mxu0 0.0
      %v6041 = vand.u32 %v370, 4294901760
      %v6042 = vsub.f32 %v370, %v6041
      %v6043 = vand.u32 %v6042, 4294901760
      %6044 = vmatmul.mubr.f32.gmra.mrb[0].mxu0 %v6043
      %v6045 = vpop.f32.mrb[0].mxu0
      %v6046 = vadd.f32 %v5930, %v6045
      %v6047 = vpop.f32.mrb[0].mxu0
      %v6048 = vadd.f32 %v5932, %v6047
      %6049 = vmatprep.mubr.f32.mxu0 0.0
      %v6050 = vand.u32 %v373, 4294901760
      %v6051 = vsub.f32 %v373, %v6050
      %v6052 = vand.u32 %v6051, 4294901760
      %6053 = vmatmul.mubr.f32.gmra.mrb[0].mxu0 %v6052
      %v6054 = vpop.f32.mrb[0].mxu0
      %v6055 = vadd.f32 %v5938, %v6054
      %v6056 = vpop.f32.mrb[0].mxu0
      %v6057 = vadd.f32 %v5940, %v6056
      %6058 = vdwg.mxu0
      %v6059 = vand.u32 %v5500, 4294901760
      %v6060 = vsub.f32 %v5500, %v6059
      %v6061 = vand.u32 %v6060, 4294901760
      %6062 = vmatprep.subr.mxu0 %v6061
      %v6063 = vand.u32 %v5499, 4294901760
      %v6064 = vsub.f32 %v5499, %v6063
      %v6065 = vand.u32 %v6064, 4294901760
      %6066 = vmatpush1.msra.mxu0 %v6065
      %v6067 = vand.u32 %v5502, 4294901760
      %v6068 = vsub.f32 %v5502, %v6067
      %v6069 = vand.u32 %v6068, 4294901760
      %6070 = vmatprep.subr.mxu0 %v6069
      %v6071 = vand.u32 %v5501, 4294901760
      %v6072 = vsub.f32 %v5501, %v6071
      %v6073 = vand.u32 %v6072, 4294901760
      %6074 = vmatpush1.msra.mxu0 %v6073
      %v6075 = vand.u32 %v5504, 4294901760
      %v6076 = vsub.f32 %v5504, %v6075
      %v6077 = vand.u32 %v6076, 4294901760
      %6078 = vmatprep.subr.mxu0 %v6077
      %v6079 = vand.u32 %v5503, 4294901760
      %v6080 = vsub.f32 %v5503, %v6079
      %v6081 = vand.u32 %v6080, 4294901760
      %6082 = vmatpush1.msra.mxu0 %v6081
      %v6083 = vand.u32 %v5506, 4294901760
      %v6084 = vsub.f32 %v5506, %v6083
      %v6085 = vand.u32 %v6084, 4294901760
      %6086 = vmatprep.subr.mxu0 %v6085
      %v6087 = vand.u32 %v5505, 4294901760
      %v6088 = vsub.f32 %v5505, %v6087
      %v6089 = vand.u32 %v6088, 4294901760
      %6090 = vmatpush1.msra.mxu0 %v6089
      %v6091 = vand.u32 %v5508, 4294901760
      %v6092 = vsub.f32 %v5508, %v6091
      %v6093 = vand.u32 %v6092, 4294901760
      %6094 = vmatprep.subr.mxu0 %v6093
      %v6095 = vand.u32 %v5507, 4294901760
      %v6096 = vsub.f32 %v5507, %v6095
      %v6097 = vand.u32 %v6096, 4294901760
      %6098 = vmatpush1.msra.mxu0 %v6097
      %v6099 = vand.u32 %v5510, 4294901760
      %v6100 = vsub.f32 %v5510, %v6099
      %v6101 = vand.u32 %v6100, 4294901760
      %6102 = vmatprep.subr.mxu0 %v6101
      %v6103 = vand.u32 %v5509, 4294901760
      %v6104 = vsub.f32 %v5509, %v6103
      %v6105 = vand.u32 %v6104, 4294901760
      %6106 = vmatpush1.msra.mxu0 %v6105
      %v6107 = vand.u32 %v5512, 4294901760
      %v6108 = vsub.f32 %v5512, %v6107
      %v6109 = vand.u32 %v6108, 4294901760
      %6110 = vmatprep.subr.mxu0 %v6109
      %v6111 = vand.u32 %v5511, 4294901760
      %v6112 = vsub.f32 %v5511, %v6111
      %v6113 = vand.u32 %v6112, 4294901760
      %6114 = vmatpush1.msra.mxu0 %v6113
      %v6115 = vand.u32 %v5514, 4294901760
      %v6116 = vsub.f32 %v5514, %v6115
      %v6117 = vand.u32 %v6116, 4294901760
      %6118 = vmatprep.subr.mxu0 %v6117
      %v6119 = vand.u32 %v5513, 4294901760
      %v6120 = vsub.f32 %v5513, %v6119
      %v6121 = vand.u32 %v6120, 4294901760
      %6122 = vmatpush1.msra.mxu0 %v6121
      %6123 = vmatprep.subr.mxu0 0.0
      %6124 = vmatpush1.msra.mxu0 0.0
      %6125 = vmatprep.subr.mxu0 0.0
      %6126 = vmatpush1.msra.mxu0 0.0
      %6127 = vmatprep.subr.mxu0 0.0
      %6128 = vmatpush1.msra.mxu0 0.0
      %6129 = vmatprep.subr.mxu0 0.0
      %6130 = vmatpush1.msra.mxu0 0.0
      %6131 = vmatprep.subr.mxu0 0.0
      %6132 = vmatpush1.msra.mxu0 0.0
      %6133 = vmatprep.subr.mxu0 0.0
      %6134 = vmatpush1.msra.mxu0 0.0
      %6135 = vmatprep.subr.mxu0 0.0
      %6136 = vmatpush1.msra.mxu0 0.0
      %6137 = vmatprep.subr.mxu0 0.0
      %6138 = vmatpush1.msra.mxu0 0.0
      %6139 = vmatprep.subr.mxu0 0.0
      %6140 = vmatpush1.msra.mxu0 0.0
      %6141 = vmatprep.subr.mxu0 0.0
      %6142 = vmatpush1.msra.mxu0 0.0
      %6143 = vmatprep.subr.mxu0 0.0
      %6144 = vmatpush1.msra.mxu0 0.0
      %6145 = vmatprep.subr.mxu0 0.0
      %6146 = vmatpush1.msra.mxu0 0.0
      %6147 = vmatprep.subr.mxu0 0.0
      %6148 = vmatpush1.msra.mxu0 0.0
      %6149 = vmatprep.subr.mxu0 0.0
      %6150 = vmatpush1.msra.mxu0 0.0
      %6151 = vmatprep.subr.mxu0 0.0
      %6152 = vmatpush1.msra.mxu0 0.0
      %6153 = vmatprep.subr.mxu0 0.0
      %6154 = vmatpush1.msra.mxu0 0.0
      %6155 = vmatprep.subr.mxu0 0.0
      %6156 = vmatpush1.msra.mxu0 0.0
      %6157 = vmatprep.subr.mxu0 0.0
      %6158 = vmatpush1.msra.mxu0 0.0
      %6159 = vmatprep.subr.mxu0 0.0
      %6160 = vmatpush1.msra.mxu0 0.0
      %6161 = vmatprep.subr.mxu0 0.0
      %6162 = vmatpush1.msra.mxu0 0.0
      %6163 = vmatprep.subr.mxu0 0.0
      %6164 = vmatpush1.msra.mxu0 0.0
      %6165 = vmatprep.subr.mxu0 0.0
      %6166 = vmatpush1.msra.mxu0 0.0
      %6167 = vmatprep.subr.mxu0 0.0
      %6168 = vmatpush1.msra.mxu0 0.0
      %6169 = vmatprep.subr.mxu0 0.0
      %6170 = vmatpush1.msra.mxu0 0.0
      %6171 = vmatprep.mubr.f32.mxu0 0.0
      %v6172 = vand.u32 %v364, 4294901760
      %6173 = vmatmul.mubr.f32.gmra.mrb[0].mxu0 %v6172
      %v6174 = vpop.f32.mrb[0].mxu0
      %v6175 = vadd.f32 %v6028, %v6174
      %v6176 = vpop.f32.mrb[0].mxu0
      %v6177 = vadd.f32 %v6030, %v6176
      %6178 = vmatprep.mubr.f32.mxu0 0.0
      %v6179 = vand.u32 %v367, 4294901760
      %6180 = vmatmul.mubr.f32.gmra.mrb[0].mxu0 %v6179
      %v6181 = vpop.f32.mrb[0].mxu0
      %v6182 = vadd.f32 %v6037, %v6181
      %v6183 = vpop.f32.mrb[0].mxu0
      %v6184 = vadd.f32 %v6039, %v6183
      %6185 = vmatprep.mubr.f32.mxu0 0.0
      %v6186 = vand.u32 %v370, 4294901760
      %6187 = vmatmul.mubr.f32.gmra.mrb[0].mxu0 %v6186
      %v6188 = vpop.f32.mrb[0].mxu0
      %v6189 = vadd.f32 %v6046, %v6188
      %v6190 = vpop.f32.mrb[0].mxu0
      %v6191 = vadd.f32 %v6048, %v6190
      %6192 = vmatprep.mubr.f32.mxu0 0.0
      %v6193 = vand.u32 %v373, 4294901760
      %6194 = vmatmul.mubr.f32.gmra.mrb[0].mxu0 %v6193
      %v6195 = vpop.f32.mrb[0].mxu0
      %v6196 = vadd.f32 %v6055, %v6195
      %v6197 = vpop.f32.mrb[0].mxu0
      %v6198 = vadd.f32 %v6057, %v6197
      %6199 = vdwg.mxu0
      %v6200 = vand.u32 %v5500, 4294901760
      %6201 = vmatprep.subr.mxu0 %v6200
      %v6202 = vand.u32 %v5499, 4294901760
      %6203 = vmatpush1.msra.mxu0 %v6202
      %v6204 = vand.u32 %v5502, 4294901760
      %6205 = vmatprep.subr.mxu0 %v6204
      %v6206 = vand.u32 %v5501, 4294901760
      %6207 = vmatpush1.msra.mxu0 %v6206
      %v6208 = vand.u32 %v5504, 4294901760
      %6209 = vmatprep.subr.mxu0 %v6208
      %v6210 = vand.u32 %v5503, 4294901760
      %6211 = vmatpush1.msra.mxu0 %v6210
      %v6212 = vand.u32 %v5506, 4294901760
      %6213 = vmatprep.subr.mxu0 %v6212
      %v6214 = vand.u32 %v5505, 4294901760
      %6215 = vmatpush1.msra.mxu0 %v6214
      %v6216 = vand.u32 %v5508, 4294901760
      %6217 = vmatprep.subr.mxu0 %v6216
      %v6218 = vand.u32 %v5507, 4294901760
      %6219 = vmatpush1.msra.mxu0 %v6218
      %v6220 = vand.u32 %v5510, 4294901760
      %6221 = vmatprep.subr.mxu0 %v6220
      %v6222 = vand.u32 %v5509, 4294901760
      %6223 = vmatpush1.msra.mxu0 %v6222
      %v6224 = vand.u32 %v5512, 4294901760
      %6225 = vmatprep.subr.mxu0 %v6224
      %v6226 = vand.u32 %v5511, 4294901760
      %6227 = vmatpush1.msra.mxu0 %v6226
      %v6228 = vand.u32 %v5514, 4294901760
      %6229 = vmatprep.subr.mxu0 %v6228
      %v6230 = vand.u32 %v5513, 4294901760
      %6231 = vmatpush1.msra.mxu0 %v6230
      %6232 = vmatprep.subr.mxu0 0.0
      %6233 = vmatpush1.msra.mxu0 0.0
      %6234 = vmatprep.subr.mxu0 0.0
      %6235 = vmatpush1.msra.mxu0 0.0
      %6236 = vmatprep.subr.mxu0 0.0
      %6237 = vmatpush1.msra.mxu0 0.0
      %6238 = vmatprep.subr.mxu0 0.0
      %6239 = vmatpush1.msra.mxu0 0.0
      %6240 = vmatprep.subr.mxu0 0.0
      %6241 = vmatpush1.msra.mxu0 0.0
      %6242 = vmatprep.subr.mxu0 0.0
      %6243 = vmatpush1.msra.mxu0 0.0
      %6244 = vmatprep.subr.mxu0 0.0
      %6245 = vmatpush1.msra.mxu0 0.0
      %6246 = vmatprep.subr.mxu0 0.0
      %6247 = vmatpush1.msra.mxu0 0.0
      %6248 = vmatprep.subr.mxu0 0.0
      %6249 = vmatpush1.msra.mxu0 0.0
      %6250 = vmatprep.subr.mxu0 0.0
      %6251 = vmatpush1.msra.mxu0 0.0
      %6252 = vmatprep.subr.mxu0 0.0
      %6253 = vmatpush1.msra.mxu0 0.0
      %6254 = vmatprep.subr.mxu0 0.0
      %6255 = vmatpush1.msra.mxu0 0.0
      %6256 = vmatprep.subr.mxu0 0.0
      %6257 = vmatpush1.msra.mxu0 0.0
      %6258 = vmatprep.subr.mxu0 0.0
      %6259 = vmatpush1.msra.mxu0 0.0
      %6260 = vmatprep.subr.mxu0 0.0
      %6261 = vmatpush1.msra.mxu0 0.0
      %6262 = vmatprep.subr.mxu0 0.0
      %6263 = vmatpush1.msra.mxu0 0.0
      %6264 = vmatprep.subr.mxu0 0.0
      %6265 = vmatpush1.msra.mxu0 0.0
      %6266 = vmatprep.subr.mxu0 0.0
      %6267 = vmatpush1.msra.mxu0 0.0
      %6268 = vmatprep.subr.mxu0 0.0
      %6269 = vmatpush1.msra.mxu0 0.0
      %6270 = vmatprep.subr.mxu0 0.0
      %6271 = vmatpush1.msra.mxu0 0.0
      %6272 = vmatprep.subr.mxu0 0.0
      %6273 = vmatpush1.msra.mxu0 0.0
      %6274 = vmatprep.subr.mxu0 0.0
      %6275 = vmatpush1.msra.mxu0 0.0
      %6276 = vmatprep.subr.mxu0 0.0
      %6277 = vmatpush1.msra.mxu0 0.0
      %6278 = vmatprep.subr.mxu0 0.0
      %6279 = vmatpush1.msra.mxu0 0.0
      %6280 = vmatprep.mubr.f32.mxu0 0.0
      %v6281 = vand.u32 %v364, 4294901760
      %6282 = vmatmul.mubr.f32.gmra.mrb[0].mxu0 %v6281
      %v6283 = vpop.f32.mrb[0].mxu0
      %v6284 = vadd.f32 %v6175, %v6283
      %v6285 = vpop.f32.mrb[0].mxu0
      %v6286 = vadd.f32 %v6177, %v6285
      %6287 = vmatprep.mubr.f32.mxu0 0.0
      %v6288 = vand.u32 %v367, 4294901760
      %6289 = vmatmul.mubr.f32.gmra.mrb[0].mxu0 %v6288
      %v6290 = vpop.f32.mrb[0].mxu0
      %v6291 = vadd.f32 %v6182, %v6290
      %v6292 = vpop.f32.mrb[0].mxu0
      %v6293 = vadd.f32 %v6184, %v6292
      %6294 = vmatprep.mubr.f32.mxu0 0.0
      %v6295 = vand.u32 %v370, 4294901760
      %6296 = vmatmul.mubr.f32.gmra.mrb[0].mxu0 %v6295
      %v6297 = vpop.f32.mrb[0].mxu0
      %v6298 = vadd.f32 %v6189, %v6297
      %v6299 = vpop.f32.mrb[0].mxu0
      %v6300 = vadd.f32 %v6191, %v6299
      %6301 = vmatprep.mubr.f32.mxu0 0.0
      %v6302 = vand.u32 %v373, 4294901760
      %6303 = vmatmul.mubr.f32.gmra.mrb[0].mxu0 %v6302
      %v6304 = vpop.f32.mrb[0].mxu0
      %v6305 = vadd.f32 %v6196, %v6304
      %v6306 = vpop.f32.mrb[0].mxu0
      %v6307 = vadd.f32 %v6198, %v6306
      %6308 = vdwg.mxu0
      %v6309 = vmul.f32 %v5451, %v6284
      %v6310 = vmul.f32 %v5452, %v6286
      %v6311 = vmul.f32 %v5453, %v6291
      %v6312 = vmul.f32 %v5454, %v6293
      %v6313 = vmul.f32 %v5455, %v6298
      %v6314 = vmul.f32 %v5456, %v6300
      %v6315 = vmul.f32 %v5457, %v6305
      %v6316 = vmul.f32 %v5458, %v6307
      %v6317 = vlaneseq
      %v6318 = vshrl.u32 %v6317, 7
      %v6319 = vsub.s32 7, %v6318
      %v6320 = vrot.slane %v295, %v6319
      %v6321 = vlaneseq
      %v6322 = vshrl.u32 %v6321, 7
      %v6323 = vsub.s32 7, %v6322
      %v6324 = vrot.slane %v296, %v6323
      %vm6325 = vcmp.eq.s32.totalorder %v6320, %v298
      %vm6326 = vcmp.eq.s32.totalorder %v6324, %v298
      %vm6327 = vcmp.eq.s32.totalorder %v6320, %v299
      %vm6328 = vcmp.eq.s32.totalorder %v6324, %v299
      %vm6329 = vcmp.eq.s32.totalorder %v6320, %v300
      %vm6330 = vcmp.eq.s32.totalorder %v6324, %v300
      %vm6331 = vcmp.eq.s32.totalorder %v6320, %v301
      %vm6332 = vcmp.eq.s32.totalorder %v6324, %v301
      %vm6333 = vcmp.eq.s32.totalorder %v6320, %v302
      %vm6334 = vcmp.eq.s32.totalorder %v6324, %v302
      %vm6335 = vcmp.eq.s32.totalorder %v6320, %v303
      %vm6336 = vcmp.eq.s32.totalorder %v6324, %v303
      %vm6337 = vcmp.eq.s32.totalorder %v6320, %v304
      %vm6338 = vcmp.eq.s32.totalorder %v6324, %v304
      %vm6339 = vcmp.eq.s32.totalorder %v6320, %v305
      %vm6340 = vcmp.eq.s32.totalorder %v6324, %v305
      %v6341 = vsel %vm6325, 1, 0
      %v6342 = vsel %vm6326, 1, 0
      %v6343 = vsel %vm6327, 1, 0
      %v6344 = vsel %vm6328, 1, 0
      %v6345 = vsel %vm6329, 1, 0
      %v6346 = vsel %vm6330, 1, 0
      %v6347 = vsel %vm6331, 1, 0
      %v6348 = vsel %vm6332, 1, 0
      %v6349 = vsel %vm6333, 1, 0
      %v6350 = vsel %vm6334, 1, 0
      %v6351 = vsel %vm6335, 1, 0
      %v6352 = vsel %vm6336, 1, 0
      %v6353 = vsel %vm6337, 1, 0
      %v6354 = vsel %vm6338, 1, 0
      %v6355 = vsel %vm6339, 1, 0
      %v6356 = vsel %vm6340, 1, 0
      %v6357 = vcvt.s32.f32 %v6341
      %v6358 = vcvt.s32.f32 %v6342
      %v6359 = vcvt.s32.f32 %v6343
      %v6360 = vcvt.s32.f32 %v6344
      %v6361 = vcvt.s32.f32 %v6345
      %v6362 = vcvt.s32.f32 %v6346
      %v6363 = vcvt.s32.f32 %v6347
      %v6364 = vcvt.s32.f32 %v6348
      %v6365 = vcvt.s32.f32 %v6349
      %v6366 = vcvt.s32.f32 %v6350
      %v6367 = vcvt.s32.f32 %v6351
      %v6368 = vcvt.s32.f32 %v6352
      %v6369 = vcvt.s32.f32 %v6353
      %v6370 = vcvt.s32.f32 %v6354
      %v6371 = vcvt.s32.f32 %v6355
      %v6372 = vcvt.s32.f32 %v6356
      %v6373 = vand.u32 %v6358, 4294901760
      %6374 = vmatprep.subr.mxu0 %v6373
      %v6375 = vand.u32 %v6357, 4294901760
      %6376 = vmatpush1.msra.mxu0 %v6375
      %v6377 = vand.u32 %v6360, 4294901760
      %6378 = vmatprep.subr.mxu0 %v6377
      %v6379 = vand.u32 %v6359, 4294901760
      %6380 = vmatpush1.msra.mxu0 %v6379
      %v6381 = vand.u32 %v6362, 4294901760
      %6382 = vmatprep.subr.mxu0 %v6381
      %v6383 = vand.u32 %v6361, 4294901760
      %6384 = vmatpush1.msra.mxu0 %v6383
      %v6385 = vand.u32 %v6364, 4294901760
      %6386 = vmatprep.subr.mxu0 %v6385
      %v6387 = vand.u32 %v6363, 4294901760
      %6388 = vmatpush1.msra.mxu0 %v6387
      %v6389 = vand.u32 %v6366, 4294901760
      %6390 = vmatprep.subr.mxu0 %v6389
      %v6391 = vand.u32 %v6365, 4294901760
      %6392 = vmatpush1.msra.mxu0 %v6391
      %v6393 = vand.u32 %v6368, 4294901760
      %6394 = vmatprep.subr.mxu0 %v6393
      %v6395 = vand.u32 %v6367, 4294901760
      %6396 = vmatpush1.msra.mxu0 %v6395
      %v6397 = vand.u32 %v6370, 4294901760
      %6398 = vmatprep.subr.mxu0 %v6397
      %v6399 = vand.u32 %v6369, 4294901760
      %6400 = vmatpush1.msra.mxu0 %v6399
      %v6401 = vand.u32 %v6372, 4294901760
      %6402 = vmatprep.subr.mxu0 %v6401
      %v6403 = vand.u32 %v6371, 4294901760
      %6404 = vmatpush1.msra.mxu0 %v6403
      %6405 = vmatprep.subr.mxu0 0.0
      %6406 = vmatpush1.msra.mxu0 0.0
      %6407 = vmatprep.subr.mxu0 0.0
      %6408 = vmatpush1.msra.mxu0 0.0
      %6409 = vmatprep.subr.mxu0 0.0
      %6410 = vmatpush1.msra.mxu0 0.0
      %6411 = vmatprep.subr.mxu0 0.0
      %6412 = vmatpush1.msra.mxu0 0.0
      %6413 = vmatprep.subr.mxu0 0.0
      %6414 = vmatpush1.msra.mxu0 0.0
      %6415 = vmatprep.subr.mxu0 0.0
      %6416 = vmatpush1.msra.mxu0 0.0
      %6417 = vmatprep.subr.mxu0 0.0
      %6418 = vmatpush1.msra.mxu0 0.0
      %6419 = vmatprep.subr.mxu0 0.0
      %6420 = vmatpush1.msra.mxu0 0.0
      %6421 = vmatprep.subr.mxu0 0.0
      %6422 = vmatpush1.msra.mxu0 0.0
      %6423 = vmatprep.subr.mxu0 0.0
      %6424 = vmatpush1.msra.mxu0 0.0
      %6425 = vmatprep.subr.mxu0 0.0
      %6426 = vmatpush1.msra.mxu0 0.0
      %6427 = vmatprep.subr.mxu0 0.0
      %6428 = vmatpush1.msra.mxu0 0.0
      %6429 = vmatprep.subr.mxu0 0.0
      %6430 = vmatpush1.msra.mxu0 0.0
      %6431 = vmatprep.subr.mxu0 0.0
      %6432 = vmatpush1.msra.mxu0 0.0
      %6433 = vmatprep.subr.mxu0 0.0
      %6434 = vmatpush1.msra.mxu0 0.0
      %6435 = vmatprep.subr.mxu0 0.0
      %6436 = vmatpush1.msra.mxu0 0.0
      %6437 = vmatprep.subr.mxu0 0.0
      %6438 = vmatpush1.msra.mxu0 0.0
      %6439 = vmatprep.subr.mxu0 0.0
      %6440 = vmatpush1.msra.mxu0 0.0
      %6441 = vmatprep.subr.mxu0 0.0
      %6442 = vmatpush1.msra.mxu0 0.0
      %6443 = vmatprep.subr.mxu0 0.0
      %6444 = vmatpush1.msra.mxu0 0.0
      %6445 = vmatprep.subr.mxu0 0.0
      %6446 = vmatpush1.msra.mxu0 0.0
      %6447 = vmatprep.subr.mxu0 0.0
      %6448 = vmatpush1.msra.mxu0 0.0
      %6449 = vmatprep.subr.mxu0 0.0
      %6450 = vmatpush1.msra.mxu0 0.0
      %6451 = vmatprep.subr.mxu0 0.0
      %6452 = vmatpush1.msra.mxu0 0.0
      %6453 = vmatprep.mubr.f32.mxu0 0.0
      %v6454 = vand.u32 %v364, 4294901760
      %v6455 = vsub.f32 %v364, %v6454
      %v6456 = vand.u32 %v6455, 4294901760
      %v6457 = vsub.f32 %v6455, %v6456
      %v6458 = vand.u32 %v6457, 4294901760
      %6459 = vmatmul.mubr.f32.gmra.mrb[0].mxu0 %v6458
      %v6460 = vpop.f32.mrb[0].mxu0
      %v6461 = vadd.f32 0.0, %v6460
      %v6462 = vpop.f32.mrb[0].mxu0
      %v6463 = vadd.f32 0.0, %v6462
      %6464 = vmatprep.mubr.f32.mxu0 0.0
      %v6465 = vand.u32 %v367, 4294901760
      %v6466 = vsub.f32 %v367, %v6465
      %v6467 = vand.u32 %v6466, 4294901760
      %v6468 = vsub.f32 %v6466, %v6467
      %v6469 = vand.u32 %v6468, 4294901760
      %6470 = vmatmul.mubr.f32.gmra.mrb[0].mxu0 %v6469
      %v6471 = vpop.f32.mrb[0].mxu0
      %v6472 = vadd.f32 0.0, %v6471
      %v6473 = vpop.f32.mrb[0].mxu0
      %v6474 = vadd.f32 0.0, %v6473
      %6475 = vmatprep.mubr.f32.mxu0 0.0
      %v6476 = vand.u32 %v370, 4294901760
      %v6477 = vsub.f32 %v370, %v6476
      %v6478 = vand.u32 %v6477, 4294901760
      %v6479 = vsub.f32 %v6477, %v6478
      %v6480 = vand.u32 %v6479, 4294901760
      %6481 = vmatmul.mubr.f32.gmra.mrb[0].mxu0 %v6480
      %v6482 = vpop.f32.mrb[0].mxu0
      %v6483 = vadd.f32 0.0, %v6482
      %v6484 = vpop.f32.mrb[0].mxu0
      %v6485 = vadd.f32 0.0, %v6484
      %6486 = vmatprep.mubr.f32.mxu0 0.0
      %v6487 = vand.u32 %v373, 4294901760
      %v6488 = vsub.f32 %v373, %v6487
      %v6489 = vand.u32 %v6488, 4294901760
      %v6490 = vsub.f32 %v6488, %v6489
      %v6491 = vand.u32 %v6490, 4294901760
      %6492 = vmatmul.mubr.f32.gmra.mrb[0].mxu0 %v6491
      %v6493 = vpop.f32.mrb[0].mxu0
      %v6494 = vadd.f32 0.0, %v6493
      %v6495 = vpop.f32.mrb[0].mxu0
      %v6496 = vadd.f32 0.0, %v6495
      %6497 = vdwg.mxu0
      %v6498 = vand.u32 %v6358, 4294901760
      %v6499 = vsub.f32 %v6358, %v6498
      %v6500 = vand.u32 %v6499, 4294901760
      %v6501 = vsub.f32 %v6499, %v6500
      %v6502 = vand.u32 %v6501, 4294901760
      %6503 = vmatprep.subr.mxu0 %v6502
      %v6504 = vand.u32 %v6357, 4294901760
      %v6505 = vsub.f32 %v6357, %v6504
      %v6506 = vand.u32 %v6505, 4294901760
      %v6507 = vsub.f32 %v6505, %v6506
      %v6508 = vand.u32 %v6507, 4294901760
      %6509 = vmatpush1.msra.mxu0 %v6508
      %v6510 = vand.u32 %v6360, 4294901760
      %v6511 = vsub.f32 %v6360, %v6510
      %v6512 = vand.u32 %v6511, 4294901760
      %v6513 = vsub.f32 %v6511, %v6512
      %v6514 = vand.u32 %v6513, 4294901760
      %6515 = vmatprep.subr.mxu0 %v6514
      %v6516 = vand.u32 %v6359, 4294901760
      %v6517 = vsub.f32 %v6359, %v6516
      %v6518 = vand.u32 %v6517, 4294901760
      %v6519 = vsub.f32 %v6517, %v6518
      %v6520 = vand.u32 %v6519, 4294901760
      %6521 = vmatpush1.msra.mxu0 %v6520
      %v6522 = vand.u32 %v6362, 4294901760
      %v6523 = vsub.f32 %v6362, %v6522
      %v6524 = vand.u32 %v6523, 4294901760
      %v6525 = vsub.f32 %v6523, %v6524
      %v6526 = vand.u32 %v6525, 4294901760
      %6527 = vmatprep.subr.mxu0 %v6526
      %v6528 = vand.u32 %v6361, 4294901760
      %v6529 = vsub.f32 %v6361, %v6528
      %v6530 = vand.u32 %v6529, 4294901760
      %v6531 = vsub.f32 %v6529, %v6530
      %v6532 = vand.u32 %v6531, 4294901760
      %6533 = vmatpush1.msra.mxu0 %v6532
      %v6534 = vand.u32 %v6364, 4294901760
      %v6535 = vsub.f32 %v6364, %v6534
      %v6536 = vand.u32 %v6535, 4294901760
      %v6537 = vsub.f32 %v6535, %v6536
      %v6538 = vand.u32 %v6537, 4294901760
      %6539 = vmatprep.subr.mxu0 %v6538
      %v6540 = vand.u32 %v6363, 4294901760
      %v6541 = vsub.f32 %v6363, %v6540
      %v6542 = vand.u32 %v6541, 4294901760
      %v6543 = vsub.f32 %v6541, %v6542
      %v6544 = vand.u32 %v6543, 4294901760
      %6545 = vmatpush1.msra.mxu0 %v6544
      %v6546 = vand.u32 %v6366, 4294901760
      %v6547 = vsub.f32 %v6366, %v6546
      %v6548 = vand.u32 %v6547, 4294901760
      %v6549 = vsub.f32 %v6547, %v6548
      %v6550 = vand.u32 %v6549, 4294901760
      %6551 = vmatprep.subr.mxu0 %v6550
      %v6552 = vand.u32 %v6365, 4294901760
      %v6553 = vsub.f32 %v6365, %v6552
      %v6554 = vand.u32 %v6553, 4294901760
      %v6555 = vsub.f32 %v6553, %v6554
      %v6556 = vand.u32 %v6555, 4294901760
      %6557 = vmatpush1.msra.mxu0 %v6556
      %v6558 = vand.u32 %v6368, 4294901760
      %v6559 = vsub.f32 %v6368, %v6558
      %v6560 = vand.u32 %v6559, 4294901760
      %v6561 = vsub.f32 %v6559, %v6560
      %v6562 = vand.u32 %v6561, 4294901760
      %6563 = vmatprep.subr.mxu0 %v6562
      %v6564 = vand.u32 %v6367, 4294901760
      %v6565 = vsub.f32 %v6367, %v6564
      %v6566 = vand.u32 %v6565, 4294901760
      %v6567 = vsub.f32 %v6565, %v6566
      %v6568 = vand.u32 %v6567, 4294901760
      %6569 = vmatpush1.msra.mxu0 %v6568
      %v6570 = vand.u32 %v6370, 4294901760
      %v6571 = vsub.f32 %v6370, %v6570
      %v6572 = vand.u32 %v6571, 4294901760
      %v6573 = vsub.f32 %v6571, %v6572
      %v6574 = vand.u32 %v6573, 4294901760
      %6575 = vmatprep.subr.mxu0 %v6574
      %v6576 = vand.u32 %v6369, 4294901760
      %v6577 = vsub.f32 %v6369, %v6576
      %v6578 = vand.u32 %v6577, 4294901760
      %v6579 = vsub.f32 %v6577, %v6578
      %v6580 = vand.u32 %v6579, 4294901760
      %6581 = vmatpush1.msra.mxu0 %v6580
      %v6582 = vand.u32 %v6372, 4294901760
      %v6583 = vsub.f32 %v6372, %v6582
      %v6584 = vand.u32 %v6583, 4294901760
      %v6585 = vsub.f32 %v6583, %v6584
      %v6586 = vand.u32 %v6585, 4294901760
      %6587 = vmatprep.subr.mxu0 %v6586
      %v6588 = vand.u32 %v6371, 4294901760
      %v6589 = vsub.f32 %v6371, %v6588
      %v6590 = vand.u32 %v6589, 4294901760
      %v6591 = vsub.f32 %v6589, %v6590
      %v6592 = vand.u32 %v6591, 4294901760
      %6593 = vmatpush1.msra.mxu0 %v6592
      %6594 = vmatprep.subr.mxu0 0.0
      %6595 = vmatpush1.msra.mxu0 0.0
      %6596 = vmatprep.subr.mxu0 0.0
      %6597 = vmatpush1.msra.mxu0 0.0
      %6598 = vmatprep.subr.mxu0 0.0
      %6599 = vmatpush1.msra.mxu0 0.0
      %6600 = vmatprep.subr.mxu0 0.0
      %6601 = vmatpush1.msra.mxu0 0.0
      %6602 = vmatprep.subr.mxu0 0.0
      %6603 = vmatpush1.msra.mxu0 0.0
      %6604 = vmatprep.subr.mxu0 0.0
      %6605 = vmatpush1.msra.mxu0 0.0
      %6606 = vmatprep.subr.mxu0 0.0
      %6607 = vmatpush1.msra.mxu0 0.0
      %6608 = vmatprep.subr.mxu0 0.0
      %6609 = vmatpush1.msra.mxu0 0.0
      %6610 = vmatprep.subr.mxu0 0.0
      %6611 = vmatpush1.msra.mxu0 0.0
      %6612 = vmatprep.subr.mxu0 0.0
      %6613 = vmatpush1.msra.mxu0 0.0
      %6614 = vmatprep.subr.mxu0 0.0
      %6615 = vmatpush1.msra.mxu0 0.0
      %6616 = vmatprep.subr.mxu0 0.0
      %6617 = vmatpush1.msra.mxu0 0.0
      %6618 = vmatprep.subr.mxu0 0.0
      %6619 = vmatpush1.msra.mxu0 0.0
      %6620 = vmatprep.subr.mxu0 0.0
      %6621 = vmatpush1.msra.mxu0 0.0
      %6622 = vmatprep.subr.mxu0 0.0
      %6623 = vmatpush1.msra.mxu0 0.0
      %6624 = vmatprep.subr.mxu0 0.0
      %6625 = vmatpush1.msra.mxu0 0.0
      %6626 = vmatprep.subr.mxu0 0.0
      %6627 = vmatpush1.msra.mxu0 0.0
      %6628 = vmatprep.subr.mxu0 0.0
      %6629 = vmatpush1.msra.mxu0 0.0
      %6630 = vmatprep.subr.mxu0 0.0
      %6631 = vmatpush1.msra.mxu0 0.0
      %6632 = vmatprep.subr.mxu0 0.0
      %6633 = vmatpush1.msra.mxu0 0.0
      %6634 = vmatprep.subr.mxu0 0.0
      %6635 = vmatpush1.msra.mxu0 0.0
      %6636 = vmatprep.subr.mxu0 0.0
      %6637 = vmatpush1.msra.mxu0 0.0
      %6638 = vmatprep.subr.mxu0 0.0
      %6639 = vmatpush1.msra.mxu0 0.0
      %6640 = vmatprep.subr.mxu0 0.0
      %6641 = vmatpush1.msra.mxu0 0.0
      %6642 = vmatprep.mubr.f32.mxu0 0.0
      %v6643 = vand.u32 %v364, 4294901760
      %6644 = vmatmul.mubr.f32.gmra.mrb[0].mxu0 %v6643
      %v6645 = vpop.f32.mrb[0].mxu0
      %v6646 = vadd.f32 %v6461, %v6645
      %v6647 = vpop.f32.mrb[0].mxu0
      %v6648 = vadd.f32 %v6463, %v6647
      %6649 = vmatprep.mubr.f32.mxu0 0.0
      %v6650 = vand.u32 %v367, 4294901760
      %6651 = vmatmul.mubr.f32.gmra.mrb[0].mxu0 %v6650
      %v6652 = vpop.f32.mrb[0].mxu0
      %v6653 = vadd.f32 %v6472, %v6652
      %v6654 = vpop.f32.mrb[0].mxu0
      %v6655 = vadd.f32 %v6474, %v6654
      %6656 = vmatprep.mubr.f32.mxu0 0.0
      %v6657 = vand.u32 %v370, 4294901760
      %6658 = vmatmul.mubr.f32.gmra.mrb[0].mxu0 %v6657
      %v6659 = vpop.f32.mrb[0].mxu0
      %v6660 = vadd.f32 %v6483, %v6659
      %v6661 = vpop.f32.mrb[0].mxu0
      %v6662 = vadd.f32 %v6485, %v6661
      %6663 = vmatprep.mubr.f32.mxu0 0.0
      %v6664 = vand.u32 %v373, 4294901760
      %6665 = vmatmul.mubr.f32.gmra.mrb[0].mxu0 %v6664
      %v6666 = vpop.f32.mrb[0].mxu0
      %v6667 = vadd.f32 %v6494, %v6666
      %v6668 = vpop.f32.mrb[0].mxu0
      %v6669 = vadd.f32 %v6496, %v6668
      %6670 = vdwg.mxu0
      %v6671 = vand.u32 %v6358, 4294901760
      %v6672 = vsub.f32 %v6358, %v6671
      %6673 = vmatprep.subr.mxu0 %v6672
      %v6674 = vand.u32 %v6357, 4294901760
      %v6675 = vsub.f32 %v6357, %v6674
      %6676 = vmatpush1.msra.mxu0 %v6675
      %v6677 = vand.u32 %v6360, 4294901760
      %v6678 = vsub.f32 %v6360, %v6677
      %6679 = vmatprep.subr.mxu0 %v6678
      %v6680 = vand.u32 %v6359, 4294901760
      %v6681 = vsub.f32 %v6359, %v6680
      %6682 = vmatpush1.msra.mxu0 %v6681
      %v6683 = vand.u32 %v6362, 4294901760
      %v6684 = vsub.f32 %v6362, %v6683
      %6685 = vmatprep.subr.mxu0 %v6684
      %v6686 = vand.u32 %v6361, 4294901760
      %v6687 = vsub.f32 %v6361, %v6686
      %6688 = vmatpush1.msra.mxu0 %v6687
      %v6689 = vand.u32 %v6364, 4294901760
      %v6690 = vsub.f32 %v6364, %v6689
      %6691 = vmatprep.subr.mxu0 %v6690
      %v6692 = vand.u32 %v6363, 4294901760
      %v6693 = vsub.f32 %v6363, %v6692
      %6694 = vmatpush1.msra.mxu0 %v6693
      %v6695 = vand.u32 %v6366, 4294901760
      %v6696 = vsub.f32 %v6366, %v6695
      %6697 = vmatprep.subr.mxu0 %v6696
      %v6698 = vand.u32 %v6365, 4294901760
      %v6699 = vsub.f32 %v6365, %v6698
      %6700 = vmatpush1.msra.mxu0 %v6699
      %v6701 = vand.u32 %v6368, 4294901760
      %v6702 = vsub.f32 %v6368, %v6701
      %6703 = vmatprep.subr.mxu0 %v6702
      %v6704 = vand.u32 %v6367, 4294901760
      %v6705 = vsub.f32 %v6367, %v6704
      %6706 = vmatpush1.msra.mxu0 %v6705
      %v6707 = vand.u32 %v6370, 4294901760
      %v6708 = vsub.f32 %v6370, %v6707
      %6709 = vmatprep.subr.mxu0 %v6708
      %v6710 = vand.u32 %v6369, 4294901760
      %v6711 = vsub.f32 %v6369, %v6710
      %6712 = vmatpush1.msra.mxu0 %v6711
      %v6713 = vand.u32 %v6372, 4294901760
      %v6714 = vsub.f32 %v6372, %v6713
      %6715 = vmatprep.subr.mxu0 %v6714
      %v6716 = vand.u32 %v6371, 4294901760
      %v6717 = vsub.f32 %v6371, %v6716
      %6718 = vmatpush1.msra.mxu0 %v6717
      %6719 = vmatprep.subr.mxu0 0.0
      %6720 = vmatpush1.msra.mxu0 0.0
      %6721 = vmatprep.subr.mxu0 0.0
      %6722 = vmatpush1.msra.mxu0 0.0
      %6723 = vmatprep.subr.mxu0 0.0
      %6724 = vmatpush1.msra.mxu0 0.0
      %6725 = vmatprep.subr.mxu0 0.0
      %6726 = vmatpush1.msra.mxu0 0.0
      %6727 = vmatprep.subr.mxu0 0.0
      %6728 = vmatpush1.msra.mxu0 0.0
      %6729 = vmatprep.subr.mxu0 0.0
      %6730 = vmatpush1.msra.mxu0 0.0
      %6731 = vmatprep.subr.mxu0 0.0
      %6732 = vmatpush1.msra.mxu0 0.0
      %6733 = vmatprep.subr.mxu0 0.0
      %6734 = vmatpush1.msra.mxu0 0.0
      %6735 = vmatprep.subr.mxu0 0.0
      %6736 = vmatpush1.msra.mxu0 0.0
      %6737 = vmatprep.subr.mxu0 0.0
      %6738 = vmatpush1.msra.mxu0 0.0
      %6739 = vmatprep.subr.mxu0 0.0
      %6740 = vmatpush1.msra.mxu0 0.0
      %6741 = vmatprep.subr.mxu0 0.0
      %6742 = vmatpush1.msra.mxu0 0.0
      %6743 = vmatprep.subr.mxu0 0.0
      %6744 = vmatpush1.msra.mxu0 0.0
      %6745 = vmatprep.subr.mxu0 0.0
      %6746 = vmatpush1.msra.mxu0 0.0
      %6747 = vmatprep.subr.mxu0 0.0
      %6748 = vmatpush1.msra.mxu0 0.0
      %6749 = vmatprep.subr.mxu0 0.0
      %6750 = vmatpush1.msra.mxu0 0.0
      %6751 = vmatprep.subr.mxu0 0.0
      %6752 = vmatpush1.msra.mxu0 0.0
      %6753 = vmatprep.subr.mxu0 0.0
      %6754 = vmatpush1.msra.mxu0 0.0
      %6755 = vmatprep.subr.mxu0 0.0
      %6756 = vmatpush1.msra.mxu0 0.0
      %6757 = vmatprep.subr.mxu0 0.0
      %6758 = vmatpush1.msra.mxu0 0.0
      %6759 = vmatprep.subr.mxu0 0.0
      %6760 = vmatpush1.msra.mxu0 0.0
      %6761 = vmatprep.subr.mxu0 0.0
      %6762 = vmatpush1.msra.mxu0 0.0
      %6763 = vmatprep.subr.mxu0 0.0
      %6764 = vmatpush1.msra.mxu0 0.0
      %6765 = vmatprep.subr.mxu0 0.0
      %6766 = vmatpush1.msra.mxu0 0.0
      %6767 = vmatprep.mubr.f32.mxu0 0.0
      %v6768 = vand.u32 %v364, 4294901760
      %v6769 = vsub.f32 %v364, %v6768
      %6770 = vmatmul.mubr.f32.gmra.mrb[0].mxu0 %v6769
      %v6771 = vpop.f32.mrb[0].mxu0
      %v6772 = vadd.f32 %v6646, %v6771
      %v6773 = vpop.f32.mrb[0].mxu0
      %v6774 = vadd.f32 %v6648, %v6773
      %6775 = vmatprep.mubr.f32.mxu0 0.0
      %v6776 = vand.u32 %v367, 4294901760
      %v6777 = vsub.f32 %v367, %v6776
      %6778 = vmatmul.mubr.f32.gmra.mrb[0].mxu0 %v6777
      %v6779 = vpop.f32.mrb[0].mxu0
      %v6780 = vadd.f32 %v6653, %v6779
      %v6781 = vpop.f32.mrb[0].mxu0
      %v6782 = vadd.f32 %v6655, %v6781
      %6783 = vmatprep.mubr.f32.mxu0 0.0
      %v6784 = vand.u32 %v370, 4294901760
      %v6785 = vsub.f32 %v370, %v6784
      %6786 = vmatmul.mubr.f32.gmra.mrb[0].mxu0 %v6785
      %v6787 = vpop.f32.mrb[0].mxu0
      %v6788 = vadd.f32 %v6660, %v6787
      %v6789 = vpop.f32.mrb[0].mxu0
      %v6790 = vadd.f32 %v6662, %v6789
      %6791 = vmatprep.mubr.f32.mxu0 0.0
      %v6792 = vand.u32 %v373, 4294901760
      %v6793 = vsub.f32 %v373, %v6792
      %6794 = vmatmul.mubr.f32.gmra.mrb[0].mxu0 %v6793
      %v6795 = vpop.f32.mrb[0].mxu0
      %v6796 = vadd.f32 %v6667, %v6795
      %v6797 = vpop.f32.mrb[0].mxu0
      %v6798 = vadd.f32 %v6669, %v6797
      %6799 = vdwg.mxu0
      %v6800 = vand.u32 %v6358, 4294901760
      %6801 = vmatprep.subr.mxu0 %v6800
      %v6802 = vand.u32 %v6357, 4294901760
      %6803 = vmatpush1.msra.mxu0 %v6802
      %v6804 = vand.u32 %v6360, 4294901760
      %6805 = vmatprep.subr.mxu0 %v6804
      %v6806 = vand.u32 %v6359, 4294901760
      %6807 = vmatpush1.msra.mxu0 %v6806
      %v6808 = vand.u32 %v6362, 4294901760
      %6809 = vmatprep.subr.mxu0 %v6808
      %v6810 = vand.u32 %v6361, 4294901760
      %6811 = vmatpush1.msra.mxu0 %v6810
      %v6812 = vand.u32 %v6364, 4294901760
      %6813 = vmatprep.subr.mxu0 %v6812
      %v6814 = vand.u32 %v6363, 4294901760
      %6815 = vmatpush1.msra.mxu0 %v6814
      %v6816 = vand.u32 %v6366, 4294901760
      %6817 = vmatprep.subr.mxu0 %v6816
      %v6818 = vand.u32 %v6365, 4294901760
      %6819 = vmatpush1.msra.mxu0 %v6818
      %v6820 = vand.u32 %v6368, 4294901760
      %6821 = vmatprep.subr.mxu0 %v6820
      %v6822 = vand.u32 %v6367, 4294901760
      %6823 = vmatpush1.msra.mxu0 %v6822
      %v6824 = vand.u32 %v6370, 4294901760
      %6825 = vmatprep.subr.mxu0 %v6824
      %v6826 = vand.u32 %v6369, 4294901760
      %6827 = vmatpush1.msra.mxu0 %v6826
      %v6828 = vand.u32 %v6372, 4294901760
      %6829 = vmatprep.subr.mxu0 %v6828
      %v6830 = vand.u32 %v6371, 4294901760
      %6831 = vmatpush1.msra.mxu0 %v6830
      %6832 = vmatprep.subr.mxu0 0.0
      %6833 = vmatpush1.msra.mxu0 0.0
      %6834 = vmatprep.subr.mxu0 0.0
      %6835 = vmatpush1.msra.mxu0 0.0
      %6836 = vmatprep.subr.mxu0 0.0
      %6837 = vmatpush1.msra.mxu0 0.0
      %6838 = vmatprep.subr.mxu0 0.0
      %6839 = vmatpush1.msra.mxu0 0.0
      %6840 = vmatprep.subr.mxu0 0.0
      %6841 = vmatpush1.msra.mxu0 0.0
      %6842 = vmatprep.subr.mxu0 0.0
      %6843 = vmatpush1.msra.mxu0 0.0
      %6844 = vmatprep.subr.mxu0 0.0
      %6845 = vmatpush1.msra.mxu0 0.0
      %6846 = vmatprep.subr.mxu0 0.0
      %6847 = vmatpush1.msra.mxu0 0.0
      %6848 = vmatprep.subr.mxu0 0.0
      %6849 = vmatpush1.msra.mxu0 0.0
      %6850 = vmatprep.subr.mxu0 0.0
      %6851 = vmatpush1.msra.mxu0 0.0
      %6852 = vmatprep.subr.mxu0 0.0
      %6853 = vmatpush1.msra.mxu0 0.0
      %6854 = vmatprep.subr.mxu0 0.0
      %6855 = vmatpush1.msra.mxu0 0.0
      %6856 = vmatprep.subr.mxu0 0.0
      %6857 = vmatpush1.msra.mxu0 0.0
      %6858 = vmatprep.subr.mxu0 0.0
      %6859 = vmatpush1.msra.mxu0 0.0
      %6860 = vmatprep.subr.mxu0 0.0
      %6861 = vmatpush1.msra.mxu0 0.0
      %6862 = vmatprep.subr.mxu0 0.0
      %6863 = vmatpush1.msra.mxu0 0.0
      %6864 = vmatprep.subr.mxu0 0.0
      %6865 = vmatpush1.msra.mxu0 0.0
      %6866 = vmatprep.subr.mxu0 0.0
      %6867 = vmatpush1.msra.mxu0 0.0
      %6868 = vmatprep.subr.mxu0 0.0
      %6869 = vmatpush1.msra.mxu0 0.0
      %6870 = vmatprep.subr.mxu0 0.0
      %6871 = vmatpush1.msra.mxu0 0.0
      %6872 = vmatprep.subr.mxu0 0.0
      %6873 = vmatpush1.msra.mxu0 0.0
      %6874 = vmatprep.subr.mxu0 0.0
      %6875 = vmatpush1.msra.mxu0 0.0
      %6876 = vmatprep.subr.mxu0 0.0
      %6877 = vmatpush1.msra.mxu0 0.0
      %6878 = vmatprep.subr.mxu0 0.0
      %6879 = vmatpush1.msra.mxu0 0.0
      %6880 = vmatprep.mubr.f32.mxu0 0.0
      %v6881 = vand.u32 %v364, 4294901760
      %v6882 = vsub.f32 %v364, %v6881
      %v6883 = vand.u32 %v6882, 4294901760
      %6884 = vmatmul.mubr.f32.gmra.mrb[0].mxu0 %v6883
      %v6885 = vpop.f32.mrb[0].mxu0
      %v6886 = vadd.f32 %v6772, %v6885
      %v6887 = vpop.f32.mrb[0].mxu0
      %v6888 = vadd.f32 %v6774, %v6887
      %6889 = vmatprep.mubr.f32.mxu0 0.0
      %v6890 = vand.u32 %v367, 4294901760
      %v6891 = vsub.f32 %v367, %v6890
      %v6892 = vand.u32 %v6891, 4294901760
      %6893 = vmatmul.mubr.f32.gmra.mrb[0].mxu0 %v6892
      %v6894 = vpop.f32.mrb[0].mxu0
      %v6895 = vadd.f32 %v6780, %v6894
      %v6896 = vpop.f32.mrb[0].mxu0
      %v6897 = vadd.f32 %v6782, %v6896
      %6898 = vmatprep.mubr.f32.mxu0 0.0
      %v6899 = vand.u32 %v370, 4294901760
      %v6900 = vsub.f32 %v370, %v6899
      %v6901 = vand.u32 %v6900, 4294901760
      %6902 = vmatmul.mubr.f32.gmra.mrb[0].mxu0 %v6901
      %v6903 = vpop.f32.mrb[0].mxu0
      %v6904 = vadd.f32 %v6788, %v6903
      %v6905 = vpop.f32.mrb[0].mxu0
      %v6906 = vadd.f32 %v6790, %v6905
      %6907 = vmatprep.mubr.f32.mxu0 0.0
      %v6908 = vand.u32 %v373, 4294901760
      %v6909 = vsub.f32 %v373, %v6908
      %v6910 = vand.u32 %v6909, 4294901760
      %6911 = vmatmul.mubr.f32.gmra.mrb[0].mxu0 %v6910
      %v6912 = vpop.f32.mrb[0].mxu0
      %v6913 = vadd.f32 %v6796, %v6912
      %v6914 = vpop.f32.mrb[0].mxu0
      %v6915 = vadd.f32 %v6798, %v6914
      %6916 = vdwg.mxu0
      %v6917 = vand.u32 %v6358, 4294901760
      %v6918 = vsub.f32 %v6358, %v6917
      %v6919 = vand.u32 %v6918, 4294901760
      %6920 = vmatprep.subr.mxu0 %v6919
      %v6921 = vand.u32 %v6357, 4294901760
      %v6922 = vsub.f32 %v6357, %v6921
      %v6923 = vand.u32 %v6922, 4294901760
      %6924 = vmatpush1.msra.mxu0 %v6923
      %v6925 = vand.u32 %v6360, 4294901760
      %v6926 = vsub.f32 %v6360, %v6925
      %v6927 = vand.u32 %v6926, 4294901760
      %6928 = vmatprep.subr.mxu0 %v6927
      %v6929 = vand.u32 %v6359, 4294901760
      %v6930 = vsub.f32 %v6359, %v6929
      %v6931 = vand.u32 %v6930, 4294901760
      %6932 = vmatpush1.msra.mxu0 %v6931
      %v6933 = vand.u32 %v6362, 4294901760
      %v6934 = vsub.f32 %v6362, %v6933
      %v6935 = vand.u32 %v6934, 4294901760
      %6936 = vmatprep.subr.mxu0 %v6935
      %v6937 = vand.u32 %v6361, 4294901760
      %v6938 = vsub.f32 %v6361, %v6937
      %v6939 = vand.u32 %v6938, 4294901760
      %6940 = vmatpush1.msra.mxu0 %v6939
      %v6941 = vand.u32 %v6364, 4294901760
      %v6942 = vsub.f32 %v6364, %v6941
      %v6943 = vand.u32 %v6942, 4294901760
      %6944 = vmatprep.subr.mxu0 %v6943
      %v6945 = vand.u32 %v6363, 4294901760
      %v6946 = vsub.f32 %v6363, %v6945
      %v6947 = vand.u32 %v6946, 4294901760
      %6948 = vmatpush1.msra.mxu0 %v6947
      %v6949 = vand.u32 %v6366, 4294901760
      %v6950 = vsub.f32 %v6366, %v6949
      %v6951 = vand.u32 %v6950, 4294901760
      %6952 = vmatprep.subr.mxu0 %v6951
      %v6953 = vand.u32 %v6365, 4294901760
      %v6954 = vsub.f32 %v6365, %v6953
      %v6955 = vand.u32 %v6954, 4294901760
      %6956 = vmatpush1.msra.mxu0 %v6955
      %v6957 = vand.u32 %v6368, 4294901760
      %v6958 = vsub.f32 %v6368, %v6957
      %v6959 = vand.u32 %v6958, 4294901760
      %6960 = vmatprep.subr.mxu0 %v6959
      %v6961 = vand.u32 %v6367, 4294901760
      %v6962 = vsub.f32 %v6367, %v6961
      %v6963 = vand.u32 %v6962, 4294901760
      %6964 = vmatpush1.msra.mxu0 %v6963
      %v6965 = vand.u32 %v6370, 4294901760
      %v6966 = vsub.f32 %v6370, %v6965
      %v6967 = vand.u32 %v6966, 4294901760
      %6968 = vmatprep.subr.mxu0 %v6967
      %v6969 = vand.u32 %v6369, 4294901760
      %v6970 = vsub.f32 %v6369, %v6969
      %v6971 = vand.u32 %v6970, 4294901760
      %6972 = vmatpush1.msra.mxu0 %v6971
      %v6973 = vand.u32 %v6372, 4294901760
      %v6974 = vsub.f32 %v6372, %v6973
      %v6975 = vand.u32 %v6974, 4294901760
      %6976 = vmatprep.subr.mxu0 %v6975
      %v6977 = vand.u32 %v6371, 4294901760
      %v6978 = vsub.f32 %v6371, %v6977
      %v6979 = vand.u32 %v6978, 4294901760
      %6980 = vmatpush1.msra.mxu0 %v6979
      %6981 = vmatprep.subr.mxu0 0.0
      %6982 = vmatpush1.msra.mxu0 0.0
      %6983 = vmatprep.subr.mxu0 0.0
      %6984 = vmatpush1.msra.mxu0 0.0
      %6985 = vmatprep.subr.mxu0 0.0
      %6986 = vmatpush1.msra.mxu0 0.0
      %6987 = vmatprep.subr.mxu0 0.0
      %6988 = vmatpush1.msra.mxu0 0.0
      %6989 = vmatprep.subr.mxu0 0.0
      %6990 = vmatpush1.msra.mxu0 0.0
      %6991 = vmatprep.subr.mxu0 0.0
      %6992 = vmatpush1.msra.mxu0 0.0
      %6993 = vmatprep.subr.mxu0 0.0
      %6994 = vmatpush1.msra.mxu0 0.0
      %6995 = vmatprep.subr.mxu0 0.0
      %6996 = vmatpush1.msra.mxu0 0.0
      %6997 = vmatprep.subr.mxu0 0.0
      %6998 = vmatpush1.msra.mxu0 0.0
      %6999 = vmatprep.subr.mxu0 0.0
      %7000 = vmatpush1.msra.mxu0 0.0
      %7001 = vmatprep.subr.mxu0 0.0
      %7002 = vmatpush1.msra.mxu0 0.0
      %7003 = vmatprep.subr.mxu0 0.0
      %7004 = vmatpush1.msra.mxu0 0.0
      %7005 = vmatprep.subr.mxu0 0.0
      %7006 = vmatpush1.msra.mxu0 0.0
      %7007 = vmatprep.subr.mxu0 0.0
      %7008 = vmatpush1.msra.mxu0 0.0
      %7009 = vmatprep.subr.mxu0 0.0
      %7010 = vmatpush1.msra.mxu0 0.0
      %7011 = vmatprep.subr.mxu0 0.0
      %7012 = vmatpush1.msra.mxu0 0.0
      %7013 = vmatprep.subr.mxu0 0.0
      %7014 = vmatpush1.msra.mxu0 0.0
      %7015 = vmatprep.subr.mxu0 0.0
      %7016 = vmatpush1.msra.mxu0 0.0
      %7017 = vmatprep.subr.mxu0 0.0
      %7018 = vmatpush1.msra.mxu0 0.0
      %7019 = vmatprep.subr.mxu0 0.0
      %7020 = vmatpush1.msra.mxu0 0.0
      %7021 = vmatprep.subr.mxu0 0.0
      %7022 = vmatpush1.msra.mxu0 0.0
      %7023 = vmatprep.subr.mxu0 0.0
      %7024 = vmatpush1.msra.mxu0 0.0
      %7025 = vmatprep.subr.mxu0 0.0
      %7026 = vmatpush1.msra.mxu0 0.0
      %7027 = vmatprep.subr.mxu0 0.0
      %7028 = vmatpush1.msra.mxu0 0.0
      %7029 = vmatprep.mubr.f32.mxu0 0.0
      %v7030 = vand.u32 %v364, 4294901760
      %7031 = vmatmul.mubr.f32.gmra.mrb[0].mxu0 %v7030
      %v7032 = vpop.f32.mrb[0].mxu0
      %v7033 = vadd.f32 %v6886, %v7032
      %v7034 = vpop.f32.mrb[0].mxu0
      %v7035 = vadd.f32 %v6888, %v7034
      %7036 = vmatprep.mubr.f32.mxu0 0.0
      %v7037 = vand.u32 %v367, 4294901760
      %7038 = vmatmul.mubr.f32.gmra.mrb[0].mxu0 %v7037
      %v7039 = vpop.f32.mrb[0].mxu0
      %v7040 = vadd.f32 %v6895, %v7039
      %v7041 = vpop.f32.mrb[0].mxu0
      %v7042 = vadd.f32 %v6897, %v7041
      %7043 = vmatprep.mubr.f32.mxu0 0.0
      %v7044 = vand.u32 %v370, 4294901760
      %7045 = vmatmul.mubr.f32.gmra.mrb[0].mxu0 %v7044
      %v7046 = vpop.f32.mrb[0].mxu0
      %v7047 = vadd.f32 %v6904, %v7046
      %v7048 = vpop.f32.mrb[0].mxu0
      %v7049 = vadd.f32 %v6906, %v7048
      %7050 = vmatprep.mubr.f32.mxu0 0.0
      %v7051 = vand.u32 %v373, 4294901760
      %7052 = vmatmul.mubr.f32.gmra.mrb[0].mxu0 %v7051
      %v7053 = vpop.f32.mrb[0].mxu0
      %v7054 = vadd.f32 %v6913, %v7053
      %v7055 = vpop.f32.mrb[0].mxu0
      %v7056 = vadd.f32 %v6915, %v7055
      %7057 = vdwg.mxu0
      %v7058 = vand.u32 %v6358, 4294901760
      %7059 = vmatprep.subr.mxu0 %v7058
      %v7060 = vand.u32 %v6357, 4294901760
      %7061 = vmatpush1.msra.mxu0 %v7060
      %v7062 = vand.u32 %v6360, 4294901760
      %7063 = vmatprep.subr.mxu0 %v7062
      %v7064 = vand.u32 %v6359, 4294901760
      %7065 = vmatpush1.msra.mxu0 %v7064
      %v7066 = vand.u32 %v6362, 4294901760
      %7067 = vmatprep.subr.mxu0 %v7066
      %v7068 = vand.u32 %v6361, 4294901760
      %7069 = vmatpush1.msra.mxu0 %v7068
      %v7070 = vand.u32 %v6364, 4294901760
      %7071 = vmatprep.subr.mxu0 %v7070
      %v7072 = vand.u32 %v6363, 4294901760
      %7073 = vmatpush1.msra.mxu0 %v7072
      %v7074 = vand.u32 %v6366, 4294901760
      %7075 = vmatprep.subr.mxu0 %v7074
      %v7076 = vand.u32 %v6365, 4294901760
      %7077 = vmatpush1.msra.mxu0 %v7076
      %v7078 = vand.u32 %v6368, 4294901760
      %7079 = vmatprep.subr.mxu0 %v7078
      %v7080 = vand.u32 %v6367, 4294901760
      %7081 = vmatpush1.msra.mxu0 %v7080
      %v7082 = vand.u32 %v6370, 4294901760
      %7083 = vmatprep.subr.mxu0 %v7082
      %v7084 = vand.u32 %v6369, 4294901760
      %7085 = vmatpush1.msra.mxu0 %v7084
      %v7086 = vand.u32 %v6372, 4294901760
      %7087 = vmatprep.subr.mxu0 %v7086
      %v7088 = vand.u32 %v6371, 4294901760
      %7089 = vmatpush1.msra.mxu0 %v7088
      %7090 = vmatprep.subr.mxu0 0.0
      %7091 = vmatpush1.msra.mxu0 0.0
      %7092 = vmatprep.subr.mxu0 0.0
      %7093 = vmatpush1.msra.mxu0 0.0
      %7094 = vmatprep.subr.mxu0 0.0
      %7095 = vmatpush1.msra.mxu0 0.0
      %7096 = vmatprep.subr.mxu0 0.0
      %7097 = vmatpush1.msra.mxu0 0.0
      %7098 = vmatprep.subr.mxu0 0.0
      %7099 = vmatpush1.msra.mxu0 0.0
      %7100 = vmatprep.subr.mxu0 0.0
      %7101 = vmatpush1.msra.mxu0 0.0
      %7102 = vmatprep.subr.mxu0 0.0
      %7103 = vmatpush1.msra.mxu0 0.0
      %7104 = vmatprep.subr.mxu0 0.0
      %7105 = vmatpush1.msra.mxu0 0.0
      %7106 = vmatprep.subr.mxu0 0.0
      %7107 = vmatpush1.msra.mxu0 0.0
      %7108 = vmatprep.subr.mxu0 0.0
      %7109 = vmatpush1.msra.mxu0 0.0
      %7110 = vmatprep.subr.mxu0 0.0
      %7111 = vmatpush1.msra.mxu0 0.0
      %7112 = vmatprep.subr.mxu0 0.0
      %7113 = vmatpush1.msra.mxu0 0.0
      %7114 = vmatprep.subr.mxu0 0.0
      %7115 = vmatpush1.msra.mxu0 0.0
      %7116 = vmatprep.subr.mxu0 0.0
      %7117 = vmatpush1.msra.mxu0 0.0
      %7118 = vmatprep.subr.mxu0 0.0
      %7119 = vmatpush1.msra.mxu0 0.0
      %7120 = vmatprep.subr.mxu0 0.0
      %7121 = vmatpush1.msra.mxu0 0.0
      %7122 = vmatprep.subr.mxu0 0.0
      %7123 = vmatpush1.msra.mxu0 0.0
      %7124 = vmatprep.subr.mxu0 0.0
      %7125 = vmatpush1.msra.mxu0 0.0
      %7126 = vmatprep.subr.mxu0 0.0
      %7127 = vmatpush1.msra.mxu0 0.0
      %7128 = vmatprep.subr.mxu0 0.0
      %7129 = vmatpush1.msra.mxu0 0.0
      %7130 = vmatprep.subr.mxu0 0.0
      %7131 = vmatpush1.msra.mxu0 0.0
      %7132 = vmatprep.subr.mxu0 0.0
      %7133 = vmatpush1.msra.mxu0 0.0
      %7134 = vmatprep.subr.mxu0 0.0
      %7135 = vmatpush1.msra.mxu0 0.0
      %7136 = vmatprep.subr.mxu0 0.0
      %7137 = vmatpush1.msra.mxu0 0.0
      %7138 = vmatprep.mubr.f32.mxu0 0.0
      %v7139 = vand.u32 %v364, 4294901760
      %7140 = vmatmul.mubr.f32.gmra.mrb[0].mxu0 %v7139
      %v7141 = vpop.f32.mrb[0].mxu0
      %v7142 = vadd.f32 %v7033, %v7141
      %v7143 = vpop.f32.mrb[0].mxu0
      %v7144 = vadd.f32 %v7035, %v7143
      %7145 = vmatprep.mubr.f32.mxu0 0.0
      %v7146 = vand.u32 %v367, 4294901760
      %7147 = vmatmul.mubr.f32.gmra.mrb[0].mxu0 %v7146
      %v7148 = vpop.f32.mrb[0].mxu0
      %v7149 = vadd.f32 %v7040, %v7148
      %v7150 = vpop.f32.mrb[0].mxu0
      %v7151 = vadd.f32 %v7042, %v7150
      %7152 = vmatprep.mubr.f32.mxu0 0.0
      %v7153 = vand.u32 %v370, 4294901760
      %7154 = vmatmul.mubr.f32.gmra.mrb[0].mxu0 %v7153
      %v7155 = vpop.f32.mrb[0].mxu0
      %v7156 = vadd.f32 %v7047, %v7155
      %v7157 = vpop.f32.mrb[0].mxu0
      %v7158 = vadd.f32 %v7049, %v7157
      %7159 = vmatprep.mubr.f32.mxu0 0.0
      %v7160 = vand.u32 %v373, 4294901760
      %7161 = vmatmul.mubr.f32.gmra.mrb[0].mxu0 %v7160
      %v7162 = vpop.f32.mrb[0].mxu0
      %v7163 = vadd.f32 %v7054, %v7162
      %v7164 = vpop.f32.mrb[0].mxu0
      %v7165 = vadd.f32 %v7056, %v7164
      %7166 = vdwg.mxu0
      %v7167 = vmul.f32 %v6309, %v7142
      %v7168 = vmul.f32 %v6310, %v7144
      %v7169 = vmul.f32 %v6311, %v7149
      %v7170 = vmul.f32 %v6312, %v7151
      %v7171 = vmul.f32 %v6313, %v7156
      %v7172 = vmul.f32 %v6314, %v7158
      %v7173 = vmul.f32 %v6315, %v7163
      %v7174 = vmul.f32 %v6316, %v7165
      %v7175 = vmul.f32 %v7167, %v7168
      %v7176 = vmul.f32 %v7169, %v7170
      %v7177 = vmul.f32 %v7171, %v7172
      %v7178 = vmul.f32 %v7173, %v7174
      %v7179 = vsub.f32 %v7167, %v7168
      %v7180 = vsub.f32 %v7169, %v7170
      %v7181 = vsub.f32 %v7171, %v7172
      %v7182 = vsub.f32 %v7173, %v7174
      %v7183 = vand.u32 2147483647, %v7179
      %v7184 = vand.u32 2147483647, %v7180
      %v7185 = vand.u32 2147483647, %v7181
      %v7186 = vand.u32 2147483647, %v7182
      %v7187 = vld [vmem:[%s3] sm:$0xff]
      %v7188 = vld [vmem:[%s3 + $0x8] sm:$0xff]
      %v7189 = vld [vmem:[%s3 + $0x10] sm:$0xff]
      %v7190 = vld [vmem:[%s3 + $0x18] sm:$0xff]
      %v7191 = vld [vmem:[%s4] sm:$0xff]
      %v7192 = vld [vmem:[%s4 + $0x8] sm:$0xff]
      %v7193 = vld [vmem:[%s4 + $0x10] sm:$0xff]
      %v7194 = vld [vmem:[%s4 + $0x18] sm:$0xff]
      %7196 = vset.pattern.permute.xlu0 0
      %7197 = vperm.xlu0 %7196, %v7191
      %v7198 = vpop.permute.xlu0 %7197
      %7201 = vset.pattern.permute.xlu0 0
      %7202 = vperm.xlu0 %7201, %v7192
      %v7203 = vpop.permute.xlu0 %7202
      %7206 = vset.pattern.permute.xlu0 0
      %7207 = vperm.xlu0 %7206, %v7193
      %v7208 = vpop.permute.xlu0 %7207
      %7211 = vset.pattern.permute.xlu0 0
      %7212 = vperm.xlu0 %7211, %v7194
      %v7213 = vpop.permute.xlu0 %7212
      %7215 = vmatprep.subr.mxu0 0.0
      %v7216 = vand.u32 %v7167, 4294901760
      %7217 = vmatpush1.msra.mxu0 %v7216
      %7218 = vmatprep.subr.mxu0 0.0
      %v7219 = vand.u32 %v7169, 4294901760
      %7220 = vmatpush1.msra.mxu0 %v7219
      %7221 = vmatprep.subr.mxu0 0.0
      %v7222 = vand.u32 %v7171, 4294901760
      %7223 = vmatpush1.msra.mxu0 %v7222
      %7224 = vmatprep.subr.mxu0 0.0
      %v7225 = vand.u32 %v7173, 4294901760
      %7226 = vmatpush1.msra.mxu0 %v7225
      %7227 = vmatprep.subr.mxu0 0.0
      %v7228 = vand.u32 %v7168, 4294901760
      %7229 = vmatpush1.msra.mxu0 %v7228
      %7230 = vmatprep.subr.mxu0 0.0
      %v7231 = vand.u32 %v7170, 4294901760
      %7232 = vmatpush1.msra.mxu0 %v7231
      %7233 = vmatprep.subr.mxu0 0.0
      %v7234 = vand.u32 %v7172, 4294901760
      %7235 = vmatpush1.msra.mxu0 %v7234
      %7236 = vmatprep.subr.mxu0 0.0
      %v7237 = vand.u32 %v7174, 4294901760
      %7238 = vmatpush1.msra.mxu0 %v7237
      %7239 = vmatprep.subr.mxu0 0.0
      %v7240 = vand.u32 %v7175, 4294901760
      %7241 = vmatpush1.msra.mxu0 %v7240
      %7242 = vmatprep.subr.mxu0 0.0
      %v7243 = vand.u32 %v7176, 4294901760
      %7244 = vmatpush1.msra.mxu0 %v7243
      %7245 = vmatprep.subr.mxu0 0.0
      %v7246 = vand.u32 %v7177, 4294901760
      %7247 = vmatpush1.msra.mxu0 %v7246
      %7248 = vmatprep.subr.mxu0 0.0
      %v7249 = vand.u32 %v7178, 4294901760
      %7250 = vmatpush1.msra.mxu0 %v7249
      %7251 = vmatprep.subr.mxu0 0.0
      %v7252 = vand.u32 %v7183, 4294901760
      %7253 = vmatpush1.msra.mxu0 %v7252
      %7254 = vmatprep.subr.mxu0 0.0
      %v7255 = vand.u32 %v7184, 4294901760
      %7256 = vmatpush1.msra.mxu0 %v7255
      %7257 = vmatprep.subr.mxu0 0.0
      %v7258 = vand.u32 %v7185, 4294901760
      %7259 = vmatpush1.msra.mxu0 %v7258
      %7260 = vmatprep.subr.mxu0 0.0
      %v7261 = vand.u32 %v7186, 4294901760
      %7262 = vmatpush1.msra.mxu0 %v7261
      %7263 = vmatprep.subr.mxu0 0.0
      %7264 = vmatpush1.msra.mxu0 0.0
      %7265 = vmatprep.subr.mxu0 0.0
      %7266 = vmatpush1.msra.mxu0 0.0
      %7267 = vmatprep.subr.mxu0 0.0
      %7268 = vmatpush1.msra.mxu0 0.0
      %7269 = vmatprep.subr.mxu0 0.0
      %7270 = vmatpush1.msra.mxu0 0.0
      %7271 = vmatprep.subr.mxu0 0.0
      %7272 = vmatpush1.msra.mxu0 0.0
      %7273 = vmatprep.subr.mxu0 0.0
      %7274 = vmatpush1.msra.mxu0 0.0
      %7275 = vmatprep.subr.mxu0 0.0
      %7276 = vmatpush1.msra.mxu0 0.0
      %7277 = vmatprep.subr.mxu0 0.0
      %7278 = vmatpush1.msra.mxu0 0.0
      %7279 = vmatprep.subr.mxu0 0.0
      %7280 = vmatpush1.msra.mxu0 0.0
      %7281 = vmatprep.subr.mxu0 0.0
      %7282 = vmatpush1.msra.mxu0 0.0
      %7283 = vmatprep.subr.mxu0 0.0
      %7284 = vmatpush1.msra.mxu0 0.0
      %7285 = vmatprep.subr.mxu0 0.0
      %7286 = vmatpush1.msra.mxu0 0.0
      %7287 = vmatprep.subr.mxu0 0.0
      %7288 = vmatpush1.msra.mxu0 0.0
      %7289 = vmatprep.subr.mxu0 0.0
      %7290 = vmatpush1.msra.mxu0 0.0
      %7291 = vmatprep.subr.mxu0 0.0
      %7292 = vmatpush1.msra.mxu0 0.0
      %7293 = vmatprep.subr.mxu0 0.0
      %7294 = vmatpush1.msra.mxu0 0.0
      %7295 = vmatprep.mubr.f32.mxu0 0.0
      %v7296 = vand.u32 %v7187, 4294901760
      %v7297 = vsub.f32 %v7187, %v7296
      %v7298 = vand.u32 %v7297, 4294901760
      %v7299 = vsub.f32 %v7297, %v7298
      %v7300 = vand.u32 %v7299, 4294901760
      %7301 = vmatmul.mubr.f32.gmra.mrb[0].mxu0 %v7300
      %v7302 = vpop.f32.mrb[0].mxu0
      %v7303 = vadd.f32 %v7198, %v7302
      %v7304 = vpop.f32.mrb[0].mxu0
      %7305 = vmatprep.mubr.f32.mxu0 0.0
      %v7306 = vand.u32 %v7188, 4294901760
      %v7307 = vsub.f32 %v7188, %v7306
      %v7308 = vand.u32 %v7307, 4294901760
      %v7309 = vsub.f32 %v7307, %v7308
      %v7310 = vand.u32 %v7309, 4294901760
      %7311 = vmatmul.mubr.f32.gmra.mrb[0].mxu0 %v7310
      %v7312 = vpop.f32.mrb[0].mxu0
      %v7313 = vadd.f32 %v7203, %v7312
      %v7314 = vpop.f32.mrb[0].mxu0
      %7315 = vmatprep.mubr.f32.mxu0 0.0
      %v7316 = vand.u32 %v7189, 4294901760
      %v7317 = vsub.f32 %v7189, %v7316
      %v7318 = vand.u32 %v7317, 4294901760
      %v7319 = vsub.f32 %v7317, %v7318
      %v7320 = vand.u32 %v7319, 4294901760
      %7321 = vmatmul.mubr.f32.gmra.mrb[0].mxu0 %v7320
      %v7322 = vpop.f32.mrb[0].mxu0
      %v7323 = vadd.f32 %v7208, %v7322
      %v7324 = vpop.f32.mrb[0].mxu0
      %7325 = vmatprep.mubr.f32.mxu0 0.0
      %v7326 = vand.u32 %v7190, 4294901760
      %v7327 = vsub.f32 %v7190, %v7326
      %v7328 = vand.u32 %v7327, 4294901760
      %v7329 = vsub.f32 %v7327, %v7328
      %v7330 = vand.u32 %v7329, 4294901760
      %7331 = vmatmul.mubr.f32.gmra.mrb[0].mxu0 %v7330
      %v7332 = vpop.f32.mrb[0].mxu0
      %v7333 = vadd.f32 %v7213, %v7332
      %v7334 = vpop.f32.mrb[0].mxu0
      %7335 = vdwg.mxu0
      %7336 = vmatprep.subr.mxu0 0.0
      %v7337 = vand.u32 %v7167, 4294901760
      %v7338 = vsub.f32 %v7167, %v7337
      %v7339 = vand.u32 %v7338, 4294901760
      %v7340 = vsub.f32 %v7338, %v7339
      %v7341 = vand.u32 %v7340, 4294901760
      %7342 = vmatpush1.msra.mxu0 %v7341
      %7343 = vmatprep.subr.mxu0 0.0
      %v7344 = vand.u32 %v7169, 4294901760
      %v7345 = vsub.f32 %v7169, %v7344
      %v7346 = vand.u32 %v7345, 4294901760
      %v7347 = vsub.f32 %v7345, %v7346
      %v7348 = vand.u32 %v7347, 4294901760
      %7349 = vmatpush1.msra.mxu0 %v7348
      %7350 = vmatprep.subr.mxu0 0.0
      %v7351 = vand.u32 %v7171, 4294901760
      %v7352 = vsub.f32 %v7171, %v7351
      %v7353 = vand.u32 %v7352, 4294901760
      %v7354 = vsub.f32 %v7352, %v7353
      %v7355 = vand.u32 %v7354, 4294901760
      %7356 = vmatpush1.msra.mxu0 %v7355
      %7357 = vmatprep.subr.mxu0 0.0
      %v7358 = vand.u32 %v7173, 4294901760
      %v7359 = vsub.f32 %v7173, %v7358
      %v7360 = vand.u32 %v7359, 4294901760
      %v7361 = vsub.f32 %v7359, %v7360
      %v7362 = vand.u32 %v7361, 4294901760
      %7363 = vmatpush1.msra.mxu0 %v7362
      %7364 = vmatprep.subr.mxu0 0.0
      %v7365 = vand.u32 %v7168, 4294901760
      %v7366 = vsub.f32 %v7168, %v7365
      %v7367 = vand.u32 %v7366, 4294901760
      %v7368 = vsub.f32 %v7366, %v7367
      %v7369 = vand.u32 %v7368, 4294901760
      %7370 = vmatpush1.msra.mxu0 %v7369
      %7371 = vmatprep.subr.mxu0 0.0
      %v7372 = vand.u32 %v7170, 4294901760
      %v7373 = vsub.f32 %v7170, %v7372
      %v7374 = vand.u32 %v7373, 4294901760
      %v7375 = vsub.f32 %v7373, %v7374
      %v7376 = vand.u32 %v7375, 4294901760
      %7377 = vmatpush1.msra.mxu0 %v7376
      %7378 = vmatprep.subr.mxu0 0.0
      %v7379 = vand.u32 %v7172, 4294901760
      %v7380 = vsub.f32 %v7172, %v7379
      %v7381 = vand.u32 %v7380, 4294901760
      %v7382 = vsub.f32 %v7380, %v7381
      %v7383 = vand.u32 %v7382, 4294901760
      %7384 = vmatpush1.msra.mxu0 %v7383
      %7385 = vmatprep.subr.mxu0 0.0
      %v7386 = vand.u32 %v7174, 4294901760
      %v7387 = vsub.f32 %v7174, %v7386
      %v7388 = vand.u32 %v7387, 4294901760
      %v7389 = vsub.f32 %v7387, %v7388
      %v7390 = vand.u32 %v7389, 4294901760
      %7391 = vmatpush1.msra.mxu0 %v7390
      %7392 = vmatprep.subr.mxu0 0.0
      %v7393 = vand.u32 %v7175, 4294901760
      %v7394 = vsub.f32 %v7175, %v7393
      %v7395 = vand.u32 %v7394, 4294901760
      %v7396 = vsub.f32 %v7394, %v7395
      %v7397 = vand.u32 %v7396, 4294901760
      %7398 = vmatpush1.msra.mxu0 %v7397
      %7399 = vmatprep.subr.mxu0 0.0
      %v7400 = vand.u32 %v7176, 4294901760
      %v7401 = vsub.f32 %v7176, %v7400
      %v7402 = vand.u32 %v7401, 4294901760
      %v7403 = vsub.f32 %v7401, %v7402
      %v7404 = vand.u32 %v7403, 4294901760
      %7405 = vmatpush1.msra.mxu0 %v7404
      %7406 = vmatprep.subr.mxu0 0.0
      %v7407 = vand.u32 %v7177, 4294901760
      %v7408 = vsub.f32 %v7177, %v7407
      %v7409 = vand.u32 %v7408, 4294901760
      %v7410 = vsub.f32 %v7408, %v7409
      %v7411 = vand.u32 %v7410, 4294901760
      %7412 = vmatpush1.msra.mxu0 %v7411
      %7413 = vmatprep.subr.mxu0 0.0
      %v7414 = vand.u32 %v7178, 4294901760
      %v7415 = vsub.f32 %v7178, %v7414
      %v7416 = vand.u32 %v7415, 4294901760
      %v7417 = vsub.f32 %v7415, %v7416
      %v7418 = vand.u32 %v7417, 4294901760
      %7419 = vmatpush1.msra.mxu0 %v7418
      %7420 = vmatprep.subr.mxu0 0.0
      %v7421 = vand.u32 %v7183, 4294901760
      %v7422 = vsub.f32 %v7183, %v7421
      %v7423 = vand.u32 %v7422, 4294901760
      %v7424 = vsub.f32 %v7422, %v7423
      %v7425 = vand.u32 %v7424, 4294901760
      %7426 = vmatpush1.msra.mxu0 %v7425
      %7427 = vmatprep.subr.mxu0 0.0
      %v7428 = vand.u32 %v7184, 4294901760
      %v7429 = vsub.f32 %v7184, %v7428
      %v7430 = vand.u32 %v7429, 4294901760
      %v7431 = vsub.f32 %v7429, %v7430
      %v7432 = vand.u32 %v7431, 4294901760
      %7433 = vmatpush1.msra.mxu0 %v7432
      %7434 = vmatprep.subr.mxu0 0.0
      %v7435 = vand.u32 %v7185, 4294901760
      %v7436 = vsub.f32 %v7185, %v7435
      %v7437 = vand.u32 %v7436, 4294901760
      %v7438 = vsub.f32 %v7436, %v7437
      %v7439 = vand.u32 %v7438, 4294901760
      %7440 = vmatpush1.msra.mxu0 %v7439
      %7441 = vmatprep.subr.mxu0 0.0
      %v7442 = vand.u32 %v7186, 4294901760
      %v7443 = vsub.f32 %v7186, %v7442
      %v7444 = vand.u32 %v7443, 4294901760
      %v7445 = vsub.f32 %v7443, %v7444
      %v7446 = vand.u32 %v7445, 4294901760
      %7447 = vmatpush1.msra.mxu0 %v7446
      %7448 = vmatprep.subr.mxu0 0.0
      %7449 = vmatpush1.msra.mxu0 0.0
      %7450 = vmatprep.subr.mxu0 0.0
      %7451 = vmatpush1.msra.mxu0 0.0
      %7452 = vmatprep.subr.mxu0 0.0
      %7453 = vmatpush1.msra.mxu0 0.0
      %7454 = vmatprep.subr.mxu0 0.0
      %7455 = vmatpush1.msra.mxu0 0.0
      %7456 = vmatprep.subr.mxu0 0.0
      %7457 = vmatpush1.msra.mxu0 0.0
      %7458 = vmatprep.subr.mxu0 0.0
      %7459 = vmatpush1.msra.mxu0 0.0
      %7460 = vmatprep.subr.mxu0 0.0
      %7461 = vmatpush1.msra.mxu0 0.0
      %7462 = vmatprep.subr.mxu0 0.0
      %7463 = vmatpush1.msra.mxu0 0.0
      %7464 = vmatprep.subr.mxu0 0.0
      %7465 = vmatpush1.msra.mxu0 0.0
      %7466 = vmatprep.subr.mxu0 0.0
      %7467 = vmatpush1.msra.mxu0 0.0
      %7468 = vmatprep.subr.mxu0 0.0
      %7469 = vmatpush1.msra.mxu0 0.0
      %7470 = vmatprep.subr.mxu0 0.0
      %7471 = vmatpush1.msra.mxu0 0.0
      %7472 = vmatprep.subr.mxu0 0.0
      %7473 = vmatpush1.msra.mxu0 0.0
      %7474 = vmatprep.subr.mxu0 0.0
      %7475 = vmatpush1.msra.mxu0 0.0
      %7476 = vmatprep.subr.mxu0 0.0
      %7477 = vmatpush1.msra.mxu0 0.0
      %7478 = vmatprep.subr.mxu0 0.0
      %7479 = vmatpush1.msra.mxu0 0.0
      %7480 = vmatprep.mubr.f32.mxu0 0.0
      %v7481 = vand.u32 %v7187, 4294901760
      %7482 = vmatmul.mubr.f32.gmra.mrb[0].mxu0 %v7481
      %v7483 = vpop.f32.mrb[0].mxu0
      %v7484 = vadd.f32 %v7303, %v7483
      %v7485 = vpop.f32.mrb[0].mxu0
      %7486 = vmatprep.mubr.f32.mxu0 0.0
      %v7487 = vand.u32 %v7188, 4294901760
      %7488 = vmatmul.mubr.f32.gmra.mrb[0].mxu0 %v7487
      %v7489 = vpop.f32.mrb[0].mxu0
      %v7490 = vadd.f32 %v7313, %v7489
      %v7491 = vpop.f32.mrb[0].mxu0
      %7492 = vmatprep.mubr.f32.mxu0 0.0
      %v7493 = vand.u32 %v7189, 4294901760
      %7494 = vmatmul.mubr.f32.gmra.mrb[0].mxu0 %v7493
      %v7495 = vpop.f32.mrb[0].mxu0
      %v7496 = vadd.f32 %v7323, %v7495
      %v7497 = vpop.f32.mrb[0].mxu0
      %7498 = vmatprep.mubr.f32.mxu0 0.0
      %v7499 = vand.u32 %v7190, 4294901760
      %7500 = vmatmul.mubr.f32.gmra.mrb[0].mxu0 %v7499
      %v7501 = vpop.f32.mrb[0].mxu0
      %v7502 = vadd.f32 %v7333, %v7501
      %v7503 = vpop.f32.mrb[0].mxu0
      %7504 = vdwg.mxu0
      %7505 = vmatprep.subr.mxu0 0.0
      %v7506 = vand.u32 %v7167, 4294901760
      %v7507 = vsub.f32 %v7167, %v7506
      %7508 = vmatpush1.msra.mxu0 %v7507
      %7509 = vmatprep.subr.mxu0 0.0
      %v7510 = vand.u32 %v7169, 4294901760
      %v7511 = vsub.f32 %v7169, %v7510
      %7512 = vmatpush1.msra.mxu0 %v7511
      %7513 = vmatprep.subr.mxu0 0.0
      %v7514 = vand.u32 %v7171, 4294901760
      %v7515 = vsub.f32 %v7171, %v7514
      %7516 = vmatpush1.msra.mxu0 %v7515
      %7517 = vmatprep.subr.mxu0 0.0
      %v7518 = vand.u32 %v7173, 4294901760
      %v7519 = vsub.f32 %v7173, %v7518
      %7520 = vmatpush1.msra.mxu0 %v7519
      %7521 = vmatprep.subr.mxu0 0.0
      %v7522 = vand.u32 %v7168, 4294901760
      %v7523 = vsub.f32 %v7168, %v7522
      %7524 = vmatpush1.msra.mxu0 %v7523
      %7525 = vmatprep.subr.mxu0 0.0
      %v7526 = vand.u32 %v7170, 4294901760
      %v7527 = vsub.f32 %v7170, %v7526
      %7528 = vmatpush1.msra.mxu0 %v7527
      %7529 = vmatprep.subr.mxu0 0.0
      %v7530 = vand.u32 %v7172, 4294901760
      %v7531 = vsub.f32 %v7172, %v7530
      %7532 = vmatpush1.msra.mxu0 %v7531
      %7533 = vmatprep.subr.mxu0 0.0
      %v7534 = vand.u32 %v7174, 4294901760
      %v7535 = vsub.f32 %v7174, %v7534
      %7536 = vmatpush1.msra.mxu0 %v7535
      %7537 = vmatprep.subr.mxu0 0.0
      %v7538 = vand.u32 %v7175, 4294901760
      %v7539 = vsub.f32 %v7175, %v7538
      %7540 = vmatpush1.msra.mxu0 %v7539
      %7541 = vmatprep.subr.mxu0 0.0
      %v7542 = vand.u32 %v7176, 4294901760
      %v7543 = vsub.f32 %v7176, %v7542
      %7544 = vmatpush1.msra.mxu0 %v7543
      %7545 = vmatprep.subr.mxu0 0.0
      %v7546 = vand.u32 %v7177, 4294901760
      %v7547 = vsub.f32 %v7177, %v7546
      %7548 = vmatpush1.msra.mxu0 %v7547
      %7549 = vmatprep.subr.mxu0 0.0
      %v7550 = vand.u32 %v7178, 4294901760
      %v7551 = vsub.f32 %v7178, %v7550
      %7552 = vmatpush1.msra.mxu0 %v7551
      %7553 = vmatprep.subr.mxu0 0.0
      %v7554 = vand.u32 %v7183, 4294901760
      %v7555 = vsub.f32 %v7183, %v7554
      %7556 = vmatpush1.msra.mxu0 %v7555
      %7557 = vmatprep.subr.mxu0 0.0
      %v7558 = vand.u32 %v7184, 4294901760
      %v7559 = vsub.f32 %v7184, %v7558
      %7560 = vmatpush1.msra.mxu0 %v7559
      %7561 = vmatprep.subr.mxu0 0.0
      %v7562 = vand.u32 %v7185, 4294901760
      %v7563 = vsub.f32 %v7185, %v7562
      %7564 = vmatpush1.msra.mxu0 %v7563
      %7565 = vmatprep.subr.mxu0 0.0
      %v7566 = vand.u32 %v7186, 4294901760
      %v7567 = vsub.f32 %v7186, %v7566
      %7568 = vmatpush1.msra.mxu0 %v7567
      %7569 = vmatprep.subr.mxu0 0.0
      %7570 = vmatpush1.msra.mxu0 0.0
      %7571 = vmatprep.subr.mxu0 0.0
      %7572 = vmatpush1.msra.mxu0 0.0
      %7573 = vmatprep.subr.mxu0 0.0
      %7574 = vmatpush1.msra.mxu0 0.0
      %7575 = vmatprep.subr.mxu0 0.0
      %7576 = vmatpush1.msra.mxu0 0.0
      %7577 = vmatprep.subr.mxu0 0.0
      %7578 = vmatpush1.msra.mxu0 0.0
      %7579 = vmatprep.subr.mxu0 0.0
      %7580 = vmatpush1.msra.mxu0 0.0
      %7581 = vmatprep.subr.mxu0 0.0
      %7582 = vmatpush1.msra.mxu0 0.0
      %7583 = vmatprep.subr.mxu0 0.0
      %7584 = vmatpush1.msra.mxu0 0.0
      %7585 = vmatprep.subr.mxu0 0.0
      %7586 = vmatpush1.msra.mxu0 0.0
      %7587 = vmatprep.subr.mxu0 0.0
      %7588 = vmatpush1.msra.mxu0 0.0
      %7589 = vmatprep.subr.mxu0 0.0
      %7590 = vmatpush1.msra.mxu0 0.0
      %7591 = vmatprep.subr.mxu0 0.0
      %7592 = vmatpush1.msra.mxu0 0.0
      %7593 = vmatprep.subr.mxu0 0.0
      %7594 = vmatpush1.msra.mxu0 0.0
      %7595 = vmatprep.subr.mxu0 0.0
      %7596 = vmatpush1.msra.mxu0 0.0
      %7597 = vmatprep.subr.mxu0 0.0
      %7598 = vmatpush1.msra.mxu0 0.0
      %7599 = vmatprep.subr.mxu0 0.0
      %7600 = vmatpush1.msra.mxu0 0.0
      %7601 = vmatprep.mubr.f32.mxu0 0.0
      %v7602 = vand.u32 %v7187, 4294901760
      %v7603 = vsub.f32 %v7187, %v7602
      %7604 = vmatmul.mubr.f32.gmra.mrb[0].mxu0 %v7603
      %v7605 = vpop.f32.mrb[0].mxu0
      %v7606 = vadd.f32 %v7484, %v7605
      %v7607 = vpop.f32.mrb[0].mxu0
      %7608 = vmatprep.mubr.f32.mxu0 0.0
      %v7609 = vand.u32 %v7188, 4294901760
      %v7610 = vsub.f32 %v7188, %v7609
      %7611 = vmatmul.mubr.f32.gmra.mrb[0].mxu0 %v7610
      %v7612 = vpop.f32.mrb[0].mxu0
      %v7613 = vadd.f32 %v7490, %v7612
      %v7614 = vpop.f32.mrb[0].mxu0
      %7615 = vmatprep.mubr.f32.mxu0 0.0
      %v7616 = vand.u32 %v7189, 4294901760
      %v7617 = vsub.f32 %v7189, %v7616
      %7618 = vmatmul.mubr.f32.gmra.mrb[0].mxu0 %v7617
      %v7619 = vpop.f32.mrb[0].mxu0
      %v7620 = vadd.f32 %v7496, %v7619
      %v7621 = vpop.f32.mrb[0].mxu0
      %7622 = vmatprep.mubr.f32.mxu0 0.0
      %v7623 = vand.u32 %v7190, 4294901760
      %v7624 = vsub.f32 %v7190, %v7623
      %7625 = vmatmul.mubr.f32.gmra.mrb[0].mxu0 %v7624
      %v7626 = vpop.f32.mrb[0].mxu0
      %v7627 = vadd.f32 %v7502, %v7626
      %v7628 = vpop.f32.mrb[0].mxu0
      %7629 = vdwg.mxu0
      %7630 = vmatprep.subr.mxu0 0.0
      %v7631 = vand.u32 %v7167, 4294901760
      %7632 = vmatpush1.msra.mxu0 %v7631
      %7633 = vmatprep.subr.mxu0 0.0
      %v7634 = vand.u32 %v7169, 4294901760
      %7635 = vmatpush1.msra.mxu0 %v7634
      %7636 = vmatprep.subr.mxu0 0.0
      %v7637 = vand.u32 %v7171, 4294901760
      %7638 = vmatpush1.msra.mxu0 %v7637
      %7639 = vmatprep.subr.mxu0 0.0
      %v7640 = vand.u32 %v7173, 4294901760
      %7641 = vmatpush1.msra.mxu0 %v7640
      %7642 = vmatprep.subr.mxu0 0.0
      %v7643 = vand.u32 %v7168, 4294901760
      %7644 = vmatpush1.msra.mxu0 %v7643
      %7645 = vmatprep.subr.mxu0 0.0
      %v7646 = vand.u32 %v7170, 4294901760
      %7647 = vmatpush1.msra.mxu0 %v7646
      %7648 = vmatprep.subr.mxu0 0.0
      %v7649 = vand.u32 %v7172, 4294901760
      %7650 = vmatpush1.msra.mxu0 %v7649
      %7651 = vmatprep.subr.mxu0 0.0
      %v7652 = vand.u32 %v7174, 4294901760
      %7653 = vmatpush1.msra.mxu0 %v7652
      %7654 = vmatprep.subr.mxu0 0.0
      %v7655 = vand.u32 %v7175, 4294901760
      %7656 = vmatpush1.msra.mxu0 %v7655
      %7657 = vmatprep.subr.mxu0 0.0
      %v7658 = vand.u32 %v7176, 4294901760
      %7659 = vmatpush1.msra.mxu0 %v7658
      %7660 = vmatprep.subr.mxu0 0.0
      %v7661 = vand.u32 %v7177, 4294901760
      %7662 = vmatpush1.msra.mxu0 %v7661
      %7663 = vmatprep.subr.mxu0 0.0
      %v7664 = vand.u32 %v7178, 4294901760
      %7665 = vmatpush1.msra.mxu0 %v7664
      %7666 = vmatprep.subr.mxu0 0.0
      %v7667 = vand.u32 %v7183, 4294901760
      %7668 = vmatpush1.msra.mxu0 %v7667
      %7669 = vmatprep.subr.mxu0 0.0
      %v7670 = vand.u32 %v7184, 4294901760
      %7671 = vmatpush1.msra.mxu0 %v7670
      %7672 = vmatprep.subr.mxu0 0.0
      %v7673 = vand.u32 %v7185, 4294901760
      %7674 = vmatpush1.msra.mxu0 %v7673
      %7675 = vmatprep.subr.mxu0 0.0
      %v7676 = vand.u32 %v7186, 4294901760
      %7677 = vmatpush1.msra.mxu0 %v7676
      %7678 = vmatprep.subr.mxu0 0.0
      %7679 = vmatpush1.msra.mxu0 0.0
      %7680 = vmatprep.subr.mxu0 0.0
      %7681 = vmatpush1.msra.mxu0 0.0
      %7682 = vmatprep.subr.mxu0 0.0
      %7683 = vmatpush1.msra.mxu0 0.0
      %7684 = vmatprep.subr.mxu0 0.0
      %7685 = vmatpush1.msra.mxu0 0.0
      %7686 = vmatprep.subr.mxu0 0.0
      %7687 = vmatpush1.msra.mxu0 0.0
      %7688 = vmatprep.subr.mxu0 0.0
      %7689 = vmatpush1.msra.mxu0 0.0
      %7690 = vmatprep.subr.mxu0 0.0
      %7691 = vmatpush1.msra.mxu0 0.0
      %7692 = vmatprep.subr.mxu0 0.0
      %7693 = vmatpush1.msra.mxu0 0.0
      %7694 = vmatprep.subr.mxu0 0.0
      %7695 = vmatpush1.msra.mxu0 0.0
      %7696 = vmatprep.subr.mxu0 0.0
      %7697 = vmatpush1.msra.mxu0 0.0
      %7698 = vmatprep.subr.mxu0 0.0
      %7699 = vmatpush1.msra.mxu0 0.0
      %7700 = vmatprep.subr.mxu0 0.0
      %7701 = vmatpush1.msra.mxu0 0.0
      %7702 = vmatprep.subr.mxu0 0.0
      %7703 = vmatpush1.msra.mxu0 0.0
      %7704 = vmatprep.subr.mxu0 0.0
      %7705 = vmatpush1.msra.mxu0 0.0
      %7706 = vmatprep.subr.mxu0 0.0
      %7707 = vmatpush1.msra.mxu0 0.0
      %7708 = vmatprep.subr.mxu0 0.0
      %7709 = vmatpush1.msra.mxu0 0.0
      %7710 = vmatprep.mubr.f32.mxu0 0.0
      %v7711 = vand.u32 %v7187, 4294901760
      %v7712 = vsub.f32 %v7187, %v7711
      %v7713 = vand.u32 %v7712, 4294901760
      %7714 = vmatmul.mubr.f32.gmra.mrb[0].mxu0 %v7713
      %v7715 = vpop.f32.mrb[0].mxu0
      %v7716 = vadd.f32 %v7606, %v7715
      %v7717 = vpop.f32.mrb[0].mxu0
      %7718 = vmatprep.mubr.f32.mxu0 0.0
      %v7719 = vand.u32 %v7188, 4294901760
      %v7720 = vsub.f32 %v7188, %v7719
      %v7721 = vand.u32 %v7720, 4294901760
      %7722 = vmatmul.mubr.f32.gmra.mrb[0].mxu0 %v7721
      %v7723 = vpop.f32.mrb[0].mxu0
      %v7724 = vadd.f32 %v7613, %v7723
      %v7725 = vpop.f32.mrb[0].mxu0
      %7726 = vmatprep.mubr.f32.mxu0 0.0
      %v7727 = vand.u32 %v7189, 4294901760
      %v7728 = vsub.f32 %v7189, %v7727
      %v7729 = vand.u32 %v7728, 4294901760
      %7730 = vmatmul.mubr.f32.gmra.mrb[0].mxu0 %v7729
      %v7731 = vpop.f32.mrb[0].mxu0
      %v7732 = vadd.f32 %v7620, %v7731
      %v7733 = vpop.f32.mrb[0].mxu0
      %7734 = vmatprep.mubr.f32.mxu0 0.0
      %v7735 = vand.u32 %v7190, 4294901760
      %v7736 = vsub.f32 %v7190, %v7735
      %v7737 = vand.u32 %v7736, 4294901760
      %7738 = vmatmul.mubr.f32.gmra.mrb[0].mxu0 %v7737
      %v7739 = vpop.f32.mrb[0].mxu0
      %v7740 = vadd.f32 %v7627, %v7739
      %v7741 = vpop.f32.mrb[0].mxu0
      %7742 = vdwg.mxu0
      %7743 = vmatprep.subr.mxu0 0.0
      %v7744 = vand.u32 %v7167, 4294901760
      %v7745 = vsub.f32 %v7167, %v7744
      %v7746 = vand.u32 %v7745, 4294901760
      %7747 = vmatpush1.msra.mxu0 %v7746
      %7748 = vmatprep.subr.mxu0 0.0
      %v7749 = vand.u32 %v7169, 4294901760
      %v7750 = vsub.f32 %v7169, %v7749
      %v7751 = vand.u32 %v7750, 4294901760
      %7752 = vmatpush1.msra.mxu0 %v7751
      %7753 = vmatprep.subr.mxu0 0.0
      %v7754 = vand.u32 %v7171, 4294901760
      %v7755 = vsub.f32 %v7171, %v7754
      %v7756 = vand.u32 %v7755, 4294901760
      %7757 = vmatpush1.msra.mxu0 %v7756
      %7758 = vmatprep.subr.mxu0 0.0
      %v7759 = vand.u32 %v7173, 4294901760
      %v7760 = vsub.f32 %v7173, %v7759
      %v7761 = vand.u32 %v7760, 4294901760
      %7762 = vmatpush1.msra.mxu0 %v7761
      %7763 = vmatprep.subr.mxu0 0.0
      %v7764 = vand.u32 %v7168, 4294901760
      %v7765 = vsub.f32 %v7168, %v7764
      %v7766 = vand.u32 %v7765, 4294901760
      %7767 = vmatpush1.msra.mxu0 %v7766
      %7768 = vmatprep.subr.mxu0 0.0
      %v7769 = vand.u32 %v7170, 4294901760
      %v7770 = vsub.f32 %v7170, %v7769
      %v7771 = vand.u32 %v7770, 4294901760
      %7772 = vmatpush1.msra.mxu0 %v7771
      %7773 = vmatprep.subr.mxu0 0.0
      %v7774 = vand.u32 %v7172, 4294901760
      %v7775 = vsub.f32 %v7172, %v7774
      %v7776 = vand.u32 %v7775, 4294901760
      %7777 = vmatpush1.msra.mxu0 %v7776
      %7778 = vmatprep.subr.mxu0 0.0
      %v7779 = vand.u32 %v7174, 4294901760
      %v7780 = vsub.f32 %v7174, %v7779
      %v7781 = vand.u32 %v7780, 4294901760
      %7782 = vmatpush1.msra.mxu0 %v7781
      %7783 = vmatprep.subr.mxu0 0.0
      %v7784 = vand.u32 %v7175, 4294901760
      %v7785 = vsub.f32 %v7175, %v7784
      %v7786 = vand.u32 %v7785, 4294901760
      %7787 = vmatpush1.msra.mxu0 %v7786
      %7788 = vmatprep.subr.mxu0 0.0
      %v7789 = vand.u32 %v7176, 4294901760
      %v7790 = vsub.f32 %v7176, %v7789
      %v7791 = vand.u32 %v7790, 4294901760
      %7792 = vmatpush1.msra.mxu0 %v7791
      %7793 = vmatprep.subr.mxu0 0.0
      %v7794 = vand.u32 %v7177, 4294901760
      %v7795 = vsub.f32 %v7177, %v7794
      %v7796 = vand.u32 %v7795, 4294901760
      %7797 = vmatpush1.msra.mxu0 %v7796
      %7798 = vmatprep.subr.mxu0 0.0
      %v7799 = vand.u32 %v7178, 4294901760
      %v7800 = vsub.f32 %v7178, %v7799
      %v7801 = vand.u32 %v7800, 4294901760
      %7802 = vmatpush1.msra.mxu0 %v7801
      %7803 = vmatprep.subr.mxu0 0.0
      %v7804 = vand.u32 %v7183, 4294901760
      %v7805 = vsub.f32 %v7183, %v7804
      %v7806 = vand.u32 %v7805, 4294901760
      %7807 = vmatpush1.msra.mxu0 %v7806
      %7808 = vmatprep.subr.mxu0 0.0
      %v7809 = vand.u32 %v7184, 4294901760
      %v7810 = vsub.f32 %v7184, %v7809
      %v7811 = vand.u32 %v7810, 4294901760
      %7812 = vmatpush1.msra.mxu0 %v7811
      %7813 = vmatprep.subr.mxu0 0.0
      %v7814 = vand.u32 %v7185, 4294901760
      %v7815 = vsub.f32 %v7185, %v7814
      %v7816 = vand.u32 %v7815, 4294901760
      %7817 = vmatpush1.msra.mxu0 %v7816
      %7818 = vmatprep.subr.mxu0 0.0
      %v7819 = vand.u32 %v7186, 4294901760
      %v7820 = vsub.f32 %v7186, %v7819
      %v7821 = vand.u32 %v7820, 4294901760
      %7822 = vmatpush1.msra.mxu0 %v7821
      %7823 = vmatprep.subr.mxu0 0.0
      %7824 = vmatpush1.msra.mxu0 0.0
      %7825 = vmatprep.subr.mxu0 0.0
      %7826 = vmatpush1.msra.mxu0 0.0
      %7827 = vmatprep.subr.mxu0 0.0
      %7828 = vmatpush1.msra.mxu0 0.0
      %7829 = vmatprep.subr.mxu0 0.0
      %7830 = vmatpush1.msra.mxu0 0.0
      %7831 = vmatprep.subr.mxu0 0.0
      %7832 = vmatpush1.msra.mxu0 0.0
      %7833 = vmatprep.subr.mxu0 0.0
      %7834 = vmatpush1.msra.mxu0 0.0
      %7835 = vmatprep.subr.mxu0 0.0
      %7836 = vmatpush1.msra.mxu0 0.0
      %7837 = vmatprep.subr.mxu0 0.0
      %7838 = vmatpush1.msra.mxu0 0.0
      %7839 = vmatprep.subr.mxu0 0.0
      %7840 = vmatpush1.msra.mxu0 0.0
      %7841 = vmatprep.subr.mxu0 0.0
      %7842 = vmatpush1.msra.mxu0 0.0
      %7843 = vmatprep.subr.mxu0 0.0
      %7844 = vmatpush1.msra.mxu0 0.0
      %7845 = vmatprep.subr.mxu0 0.0
      %7846 = vmatpush1.msra.mxu0 0.0
      %7847 = vmatprep.subr.mxu0 0.0
      %7848 = vmatpush1.msra.mxu0 0.0
      %7849 = vmatprep.subr.mxu0 0.0
      %7850 = vmatpush1.msra.mxu0 0.0
      %7851 = vmatprep.subr.mxu0 0.0
      %7852 = vmatpush1.msra.mxu0 0.0
      %7853 = vmatprep.subr.mxu0 0.0
      %7854 = vmatpush1.msra.mxu0 0.0
      %7855 = vmatprep.mubr.f32.mxu0 0.0
      %v7856 = vand.u32 %v7187, 4294901760
      %7857 = vmatmul.mubr.f32.gmra.mrb[0].mxu0 %v7856
      %v7858 = vpop.f32.mrb[0].mxu0
      %v7859 = vadd.f32 %v7716, %v7858
      %v7860 = vpop.f32.mrb[0].mxu0
      %7861 = vmatprep.mubr.f32.mxu0 0.0
      %v7862 = vand.u32 %v7188, 4294901760
      %7863 = vmatmul.mubr.f32.gmra.mrb[0].mxu0 %v7862
      %v7864 = vpop.f32.mrb[0].mxu0
      %v7865 = vadd.f32 %v7724, %v7864
      %v7866 = vpop.f32.mrb[0].mxu0
      %7867 = vmatprep.mubr.f32.mxu0 0.0
      %v7868 = vand.u32 %v7189, 4294901760
      %7869 = vmatmul.mubr.f32.gmra.mrb[0].mxu0 %v7868
      %v7870 = vpop.f32.mrb[0].mxu0
      %v7871 = vadd.f32 %v7732, %v7870
      %v7872 = vpop.f32.mrb[0].mxu0
      %7873 = vmatprep.mubr.f32.mxu0 0.0
      %v7874 = vand.u32 %v7190, 4294901760
      %7875 = vmatmul.mubr.f32.gmra.mrb[0].mxu0 %v7874
      %v7876 = vpop.f32.mrb[0].mxu0
      %v7877 = vadd.f32 %v7740, %v7876
      %v7878 = vpop.f32.mrb[0].mxu0
      %7879 = vdwg.mxu0
      %7880 = vmatprep.subr.mxu0 0.0
      %v7881 = vand.u32 %v7167, 4294901760
      %7882 = vmatpush1.msra.mxu0 %v7881
      %7883 = vmatprep.subr.mxu0 0.0
      %v7884 = vand.u32 %v7169, 4294901760
      %7885 = vmatpush1.msra.mxu0 %v7884
      %7886 = vmatprep.subr.mxu0 0.0
      %v7887 = vand.u32 %v7171, 4294901760
      %7888 = vmatpush1.msra.mxu0 %v7887
      %7889 = vmatprep.subr.mxu0 0.0
      %v7890 = vand.u32 %v7173, 4294901760
      %7891 = vmatpush1.msra.mxu0 %v7890
      %7892 = vmatprep.subr.mxu0 0.0
      %v7893 = vand.u32 %v7168, 4294901760
      %7894 = vmatpush1.msra.mxu0 %v7893
      %7895 = vmatprep.subr.mxu0 0.0
      %v7896 = vand.u32 %v7170, 4294901760
      %7897 = vmatpush1.msra.mxu0 %v7896
      %7898 = vmatprep.subr.mxu0 0.0
      %v7899 = vand.u32 %v7172, 4294901760
      %7900 = vmatpush1.msra.mxu0 %v7899
      %7901 = vmatprep.subr.mxu0 0.0
      %v7902 = vand.u32 %v7174, 4294901760
      %7903 = vmatpush1.msra.mxu0 %v7902
      %7904 = vmatprep.subr.mxu0 0.0
      %v7905 = vand.u32 %v7175, 4294901760
      %7906 = vmatpush1.msra.mxu0 %v7905
      %7907 = vmatprep.subr.mxu0 0.0
      %v7908 = vand.u32 %v7176, 4294901760
      %7909 = vmatpush1.msra.mxu0 %v7908
      %7910 = vmatprep.subr.mxu0 0.0
      %v7911 = vand.u32 %v7177, 4294901760
      %7912 = vmatpush1.msra.mxu0 %v7911
      %7913 = vmatprep.subr.mxu0 0.0
      %v7914 = vand.u32 %v7178, 4294901760
      %7915 = vmatpush1.msra.mxu0 %v7914
      %7916 = vmatprep.subr.mxu0 0.0
      %v7917 = vand.u32 %v7183, 4294901760
      %7918 = vmatpush1.msra.mxu0 %v7917
      %7919 = vmatprep.subr.mxu0 0.0
      %v7920 = vand.u32 %v7184, 4294901760
      %7921 = vmatpush1.msra.mxu0 %v7920
      %7922 = vmatprep.subr.mxu0 0.0
      %v7923 = vand.u32 %v7185, 4294901760
      %7924 = vmatpush1.msra.mxu0 %v7923
      %7925 = vmatprep.subr.mxu0 0.0
      %v7926 = vand.u32 %v7186, 4294901760
      %7927 = vmatpush1.msra.mxu0 %v7926
      %7928 = vmatprep.subr.mxu0 0.0
      %7929 = vmatpush1.msra.mxu0 0.0
      %7930 = vmatprep.subr.mxu0 0.0
      %7931 = vmatpush1.msra.mxu0 0.0
      %7932 = vmatprep.subr.mxu0 0.0
      %7933 = vmatpush1.msra.mxu0 0.0
      %7934 = vmatprep.subr.mxu0 0.0
      %7935 = vmatpush1.msra.mxu0 0.0
      %7936 = vmatprep.subr.mxu0 0.0
      %7937 = vmatpush1.msra.mxu0 0.0
      %7938 = vmatprep.subr.mxu0 0.0
      %7939 = vmatpush1.msra.mxu0 0.0
      %7940 = vmatprep.subr.mxu0 0.0
      %7941 = vmatpush1.msra.mxu0 0.0
      %7942 = vmatprep.subr.mxu0 0.0
      %7943 = vmatpush1.msra.mxu0 0.0
      %7944 = vmatprep.subr.mxu0 0.0
      %7945 = vmatpush1.msra.mxu0 0.0
      %7946 = vmatprep.subr.mxu0 0.0
      %7947 = vmatpush1.msra.mxu0 0.0
      %7948 = vmatprep.subr.mxu0 0.0
      %7949 = vmatpush1.msra.mxu0 0.0
      %7950 = vmatprep.subr.mxu0 0.0
      %7951 = vmatpush1.msra.mxu0 0.0
      %7952 = vmatprep.subr.mxu0 0.0
      %7953 = vmatpush1.msra.mxu0 0.0
      %7954 = vmatprep.subr.mxu0 0.0
      %7955 = vmatpush1.msra.mxu0 0.0
      %7956 = vmatprep.subr.mxu0 0.0
      %7957 = vmatpush1.msra.mxu0 0.0
      %7958 = vmatprep.subr.mxu0 0.0
      %7959 = vmatpush1.msra.mxu0 0.0
      %7960 = vmatprep.mubr.f32.mxu0 0.0
      %v7961 = vand.u32 %v7187, 4294901760
      %7962 = vmatmul.mubr.f32.gmra.mrb[0].mxu0 %v7961
      %v7963 = vpop.f32.mrb[0].mxu0
      %v7964 = vadd.f32 %v7859, %v7963
      %v7965 = vpop.f32.mrb[0].mxu0
      %7966 = vmatprep.mubr.f32.mxu0 0.0
      %v7967 = vand.u32 %v7188, 4294901760
      %7968 = vmatmul.mubr.f32.gmra.mrb[0].mxu0 %v7967
      %v7969 = vpop.f32.mrb[0].mxu0
      %v7970 = vadd.f32 %v7865, %v7969
      %v7971 = vpop.f32.mrb[0].mxu0
      %7972 = vmatprep.mubr.f32.mxu0 0.0
      %v7973 = vand.u32 %v7189, 4294901760
      %7974 = vmatmul.mubr.f32.gmra.mrb[0].mxu0 %v7973
      %v7975 = vpop.f32.mrb[0].mxu0
      %v7976 = vadd.f32 %v7871, %v7975
      %v7977 = vpop.f32.mrb[0].mxu0
      %7978 = vmatprep.mubr.f32.mxu0 0.0
      %v7979 = vand.u32 %v7190, 4294901760
      %7980 = vmatmul.mubr.f32.gmra.mrb[0].mxu0 %v7979
      %v7981 = vpop.f32.mrb[0].mxu0
      %v7982 = vadd.f32 %v7877, %v7981
      %v7983 = vpop.f32.mrb[0].mxu0
      %7984 = vdwg.mxu0
      %v7985 = vxor.u32 %v7964, 2147483648
      %v7986 = vxor.u32 %v7970, 2147483648
      %v7987 = vxor.u32 %v7976, 2147483648
      %v7988 = vxor.u32 %v7982, 2147483648
      %v7989 = vmul.f32 %v7985, 1.442695
      %v7990 = vpow.pop %v7989
      %v7991 = vmul.f32 %v7986, 1.442695
      %v7992 = vpow.pop %v7991
      %v7993 = vmul.f32 %v7987, 1.442695
      %v7994 = vpow.pop %v7993
      %v7995 = vmul.f32 %v7988, 1.442695
      %v7996 = vpow.pop %v7995
      %v7997 = vadd.f32 %v7990, 1.0
      %v7998 = vadd.f32 %v7992, 1.0
      %v7999 = vadd.f32 %v7994, 1.0
      %v8000 = vadd.f32 %v7996, 1.0
      %v8001 = vrcp.pop %v7997
      %v8002 = vmul.f32 1.0, %v8001
      %v8003 = vrcp.pop %v7998
      %v8004 = vmul.f32 1.0, %v8003
      %v8005 = vrcp.pop %v7999
      %v8006 = vmul.f32 1.0, %v8005
      %v8007 = vrcp.pop %v8000
      %v8008 = vmul.f32 1.0, %v8007
      %v8009 = vld [vmem:[%s5] sm:$0xff]
      %v8010 = vld [vmem:[%s6] sm:$0xff]
      %8012 = vset.pattern.permute.xlu0 0
      %8013 = vperm.xlu0 %8012, %v8010
      %v8014 = vpop.permute.xlu0 %8013
      %vm8016 = vcmask 261120
      %v8018 = vsel %vm8016, %v8009, 0
      %8020 = vmatprep.subr.mxu0 0.0
      %v8021 = vand.u32 %v8002, 4294901760
      %8022 = vmatpush1.msra.mxu0 %v8021
      %8023 = vmatprep.subr.mxu0 0.0
      %v8024 = vand.u32 %v8004, 4294901760
      %8025 = vmatpush1.msra.mxu0 %v8024
      %8026 = vmatprep.subr.mxu0 0.0
      %v8027 = vand.u32 %v8006, 4294901760
      %8028 = vmatpush1.msra.mxu0 %v8027
      %8029 = vmatprep.subr.mxu0 0.0
      %v8030 = vand.u32 %v8008, 4294901760
      %8031 = vmatpush1.msra.mxu0 %v8030
      %8032 = vmatprep.subr.mxu0 0.0
      %8033 = vmatpush1.msra.mxu0 0.0
      %8034 = vmatprep.subr.mxu0 0.0
      %8035 = vmatpush1.msra.mxu0 0.0
      %8036 = vmatprep.subr.mxu0 0.0
      %8037 = vmatpush1.msra.mxu0 0.0
      %8038 = vmatprep.subr.mxu0 0.0
      %8039 = vmatpush1.msra.mxu0 0.0
      %8040 = vmatprep.subr.mxu0 0.0
      %8041 = vmatpush1.msra.mxu0 0.0
      %8042 = vmatprep.subr.mxu0 0.0
      %8043 = vmatpush1.msra.mxu0 0.0
      %8044 = vmatprep.subr.mxu0 0.0
      %8045 = vmatpush1.msra.mxu0 0.0
      %8046 = vmatprep.subr.mxu0 0.0
      %8047 = vmatpush1.msra.mxu0 0.0
      %8048 = vmatprep.subr.mxu0 0.0
      %8049 = vmatpush1.msra.mxu0 0.0
      %8050 = vmatprep.subr.mxu0 0.0
      %8051 = vmatpush1.msra.mxu0 0.0
      %8052 = vmatprep.subr.mxu0 0.0
      %8053 = vmatpush1.msra.mxu0 0.0
      %8054 = vmatprep.subr.mxu0 0.0
      %8055 = vmatpush1.msra.mxu0 0.0
      %8056 = vmatprep.subr.mxu0 0.0
      %8057 = vmatpush1.msra.mxu0 0.0
      %8058 = vmatprep.subr.mxu0 0.0
      %8059 = vmatpush1.msra.mxu0 0.0
      %8060 = vmatprep.subr.mxu0 0.0
      %8061 = vmatpush1.msra.mxu0 0.0
      %8062 = vmatprep.subr.mxu0 0.0
      %8063 = vmatpush1.msra.mxu0 0.0
      %8064 = vmatprep.subr.mxu0 0.0
      %8065 = vmatpush1.msra.mxu0 0.0
      %8066 = vmatprep.subr.mxu0 0.0
      %8067 = vmatpush1.msra.mxu0 0.0
      %8068 = vmatprep.subr.mxu0 0.0
      %8069 = vmatpush1.msra.mxu0 0.0
      %8070 = vmatprep.subr.mxu0 0.0
      %8071 = vmatpush1.msra.mxu0 0.0
      %8072 = vmatprep.subr.mxu0 0.0
      %8073 = vmatpush1.msra.mxu0 0.0
      %8074 = vmatprep.subr.mxu0 0.0
      %8075 = vmatpush1.msra.mxu0 0.0
      %8076 = vmatprep.subr.mxu0 0.0
      %8077 = vmatpush1.msra.mxu0 0.0
      %8078 = vmatprep.subr.mxu0 0.0
      %8079 = vmatpush1.msra.mxu0 0.0
      %8080 = vmatprep.subr.mxu0 0.0
      %8081 = vmatpush1.msra.mxu0 0.0
      %8082 = vmatprep.subr.mxu0 0.0
      %8083 = vmatpush1.msra.mxu0 0.0
      %8084 = vmatprep.subr.mxu0 0.0
      %8085 = vmatpush1.msra.mxu0 0.0
      %8086 = vmatprep.subr.mxu0 0.0
      %8087 = vmatpush1.msra.mxu0 0.0
      %8088 = vmatprep.mubr.f32.mxu0 0.0
      %v8089 = vand.u32 %v8018, 4294901760
      %v8090 = vsub.f32 %v8018, %v8089
      %v8091 = vand.u32 %v8090, 4294901760
      %v8092 = vsub.f32 %v8090, %v8091
      %v8093 = vand.u32 %v8092, 4294901760
      %8094 = vmatmul.mubr.f32.gmra.mrb[0].mxu0 %v8093
      %v8095 = vpop.f32.mrb[0].mxu0
      %v8096 = vadd.f32 %v8014, %v8095
      %v8097 = vpop.f32.mrb[0].mxu0
      %8098 = vdwg.mxu0
      %8099 = vmatprep.subr.mxu0 0.0
      %v8100 = vand.u32 %v8002, 4294901760
      %v8101 = vsub.f32 %v8002, %v8100
      %v8102 = vand.u32 %v8101, 4294901760
      %v8103 = vsub.f32 %v8101, %v8102
      %v8104 = vand.u32 %v8103, 4294901760
      %8105 = vmatpush1.msra.mxu0 %v8104
      %8106 = vmatprep.subr.mxu0 0.0
      %v8107 = vand.u32 %v8004, 4294901760
      %v8108 = vsub.f32 %v8004, %v8107
      %v8109 = vand.u32 %v8108, 4294901760
      %v8110 = vsub.f32 %v8108, %v8109
      %v8111 = vand.u32 %v8110, 4294901760
      %8112 = vmatpush1.msra.mxu0 %v8111
      %8113 = vmatprep.subr.mxu0 0.0
      %v8114 = vand.u32 %v8006, 4294901760
      %v8115 = vsub.f32 %v8006, %v8114
      %v8116 = vand.u32 %v8115, 4294901760
      %v8117 = vsub.f32 %v8115, %v8116
      %v8118 = vand.u32 %v8117, 4294901760
      %8119 = vmatpush1.msra.mxu0 %v8118
      %8120 = vmatprep.subr.mxu0 0.0
      %v8121 = vand.u32 %v8008, 4294901760
      %v8122 = vsub.f32 %v8008, %v8121
      %v8123 = vand.u32 %v8122, 4294901760
      %v8124 = vsub.f32 %v8122, %v8123
      %v8125 = vand.u32 %v8124, 4294901760
      %8126 = vmatpush1.msra.mxu0 %v8125
      %8127 = vmatprep.subr.mxu0 0.0
      %8128 = vmatpush1.msra.mxu0 0.0
      %8129 = vmatprep.subr.mxu0 0.0
      %8130 = vmatpush1.msra.mxu0 0.0
      %8131 = vmatprep.subr.mxu0 0.0
      %8132 = vmatpush1.msra.mxu0 0.0
      %8133 = vmatprep.subr.mxu0 0.0
      %8134 = vmatpush1.msra.mxu0 0.0
      %8135 = vmatprep.subr.mxu0 0.0
      %8136 = vmatpush1.msra.mxu0 0.0
      %8137 = vmatprep.subr.mxu0 0.0
      %8138 = vmatpush1.msra.mxu0 0.0
      %8139 = vmatprep.subr.mxu0 0.0
      %8140 = vmatpush1.msra.mxu0 0.0
      %8141 = vmatprep.subr.mxu0 0.0
      %8142 = vmatpush1.msra.mxu0 0.0
      %8143 = vmatprep.subr.mxu0 0.0
      %8144 = vmatpush1.msra.mxu0 0.0
      %8145 = vmatprep.subr.mxu0 0.0
      %8146 = vmatpush1.msra.mxu0 0.0
      %8147 = vmatprep.subr.mxu0 0.0
      %8148 = vmatpush1.msra.mxu0 0.0
      %8149 = vmatprep.subr.mxu0 0.0
      %8150 = vmatpush1.msra.mxu0 0.0
      %8151 = vmatprep.subr.mxu0 0.0
      %8152 = vmatpush1.msra.mxu0 0.0
      %8153 = vmatprep.subr.mxu0 0.0
      %8154 = vmatpush1.msra.mxu0 0.0
      %8155 = vmatprep.subr.mxu0 0.0
      %8156 = vmatpush1.msra.mxu0 0.0
      %8157 = vmatprep.subr.mxu0 0.0
      %8158 = vmatpush1.msra.mxu0 0.0
      %8159 = vmatprep.subr.mxu0 0.0
      %8160 = vmatpush1.msra.mxu0 0.0
      %8161 = vmatprep.subr.mxu0 0.0
      %8162 = vmatpush1.msra.mxu0 0.0
      %8163 = vmatprep.subr.mxu0 0.0
      %8164 = vmatpush1.msra.mxu0 0.0
      %8165 = vmatprep.subr.mxu0 0.0
      %8166 = vmatpush1.msra.mxu0 0.0
      %8167 = vmatprep.subr.mxu0 0.0
      %8168 = vmatpush1.msra.mxu0 0.0
      %8169 = vmatprep.subr.mxu0 0.0
      %8170 = vmatpush1.msra.mxu0 0.0
      %8171 = vmatprep.subr.mxu0 0.0
      %8172 = vmatpush1.msra.mxu0 0.0
      %8173 = vmatprep.subr.mxu0 0.0
      %8174 = vmatpush1.msra.mxu0 0.0
      %8175 = vmatprep.subr.mxu0 0.0
      %8176 = vmatpush1.msra.mxu0 0.0
      %8177 = vmatprep.subr.mxu0 0.0
      %8178 = vmatpush1.msra.mxu0 0.0
      %8179 = vmatprep.subr.mxu0 0.0
      %8180 = vmatpush1.msra.mxu0 0.0
      %8181 = vmatprep.subr.mxu0 0.0
      %8182 = vmatpush1.msra.mxu0 0.0
      %8183 = vmatprep.mubr.f32.mxu0 0.0
      %v8184 = vand.u32 %v8018, 4294901760
      %8185 = vmatmul.mubr.f32.gmra.mrb[0].mxu0 %v8184
      %v8186 = vpop.f32.mrb[0].mxu0
      %v8187 = vadd.f32 %v8096, %v8186
      %v8188 = vpop.f32.mrb[0].mxu0
      %8189 = vdwg.mxu0
      %8190 = vmatprep.subr.mxu0 0.0
      %v8191 = vand.u32 %v8002, 4294901760
      %v8192 = vsub.f32 %v8002, %v8191
      %8193 = vmatpush1.msra.mxu0 %v8192
      %8194 = vmatprep.subr.mxu0 0.0
      %v8195 = vand.u32 %v8004, 4294901760
      %v8196 = vsub.f32 %v8004, %v8195
      %8197 = vmatpush1.msra.mxu0 %v8196
      %8198 = vmatprep.subr.mxu0 0.0
      %v8199 = vand.u32 %v8006, 4294901760
      %v8200 = vsub.f32 %v8006, %v8199
      %8201 = vmatpush1.msra.mxu0 %v8200
      %8202 = vmatprep.subr.mxu0 0.0
      %v8203 = vand.u32 %v8008, 4294901760
      %v8204 = vsub.f32 %v8008, %v8203
      %8205 = vmatpush1.msra.mxu0 %v8204
      %8206 = vmatprep.subr.mxu0 0.0
      %8207 = vmatpush1.msra.mxu0 0.0
      %8208 = vmatprep.subr.mxu0 0.0
      %8209 = vmatpush1.msra.mxu0 0.0
      %8210 = vmatprep.subr.mxu0 0.0
      %8211 = vmatpush1.msra.mxu0 0.0
      %8212 = vmatprep.subr.mxu0 0.0
      %8213 = vmatpush1.msra.mxu0 0.0
      %8214 = vmatprep.subr.mxu0 0.0
      %8215 = vmatpush1.msra.mxu0 0.0
      %8216 = vmatprep.subr.mxu0 0.0
      %8217 = vmatpush1.msra.mxu0 0.0
      %8218 = vmatprep.subr.mxu0 0.0
      %8219 = vmatpush1.msra.mxu0 0.0
      %8220 = vmatprep.subr.mxu0 0.0
      %8221 = vmatpush1.msra.mxu0 0.0
      %8222 = vmatprep.subr.mxu0 0.0
      %8223 = vmatpush1.msra.mxu0 0.0
      %8224 = vmatprep.subr.mxu0 0.0
      %8225 = vmatpush1.msra.mxu0 0.0
      %8226 = vmatprep.subr.mxu0 0.0
      %8227 = vmatpush1.msra.mxu0 0.0
      %8228 = vmatprep.subr.mxu0 0.0
      %8229 = vmatpush1.msra.mxu0 0.0
      %8230 = vmatprep.subr.mxu0 0.0
      %8231 = vmatpush1.msra.mxu0 0.0
      %8232 = vmatprep.subr.mxu0 0.0
      %8233 = vmatpush1.msra.mxu0 0.0
      %8234 = vmatprep.subr.mxu0 0.0
      %8235 = vmatpush1.msra.mxu0 0.0
      %8236 = vmatprep.subr.mxu0 0.0
      %8237 = vmatpush1.msra.mxu0 0.0
      %8238 = vmatprep.subr.mxu0 0.0
      %8239 = vmatpush1.msra.mxu0 0.0
      %8240 = vmatprep.subr.mxu0 0.0
      %8241 = vmatpush1.msra.mxu0 0.0
      %8242 = vmatprep.subr.mxu0 0.0
      %8243 = vmatpush1.msra.mxu0 0.0
      %8244 = vmatprep.subr.mxu0 0.0
      %8245 = vmatpush1.msra.mxu0 0.0
      %8246 = vmatprep.subr.mxu0 0.0
      %8247 = vmatpush1.msra.mxu0 0.0
      %8248 = vmatprep.subr.mxu0 0.0
      %8249 = vmatpush1.msra.mxu0 0.0
      %8250 = vmatprep.subr.mxu0 0.0
      %8251 = vmatpush1.msra.mxu0 0.0
      %8252 = vmatprep.subr.mxu0 0.0
      %8253 = vmatpush1.msra.mxu0 0.0
      %8254 = vmatprep.subr.mxu0 0.0
      %8255 = vmatpush1.msra.mxu0 0.0
      %8256 = vmatprep.subr.mxu0 0.0
      %8257 = vmatpush1.msra.mxu0 0.0
      %8258 = vmatprep.subr.mxu0 0.0
      %8259 = vmatpush1.msra.mxu0 0.0
      %8260 = vmatprep.subr.mxu0 0.0
      %8261 = vmatpush1.msra.mxu0 0.0
      %8262 = vmatprep.mubr.f32.mxu0 0.0
      %v8263 = vand.u32 %v8018, 4294901760
      %v8264 = vsub.f32 %v8018, %v8263
      %8265 = vmatmul.mubr.f32.gmra.mrb[0].mxu0 %v8264
      %v8266 = vpop.f32.mrb[0].mxu0
      %v8267 = vadd.f32 %v8187, %v8266
      %v8268 = vpop.f32.mrb[0].mxu0
      %8269 = vdwg.mxu0
      %8270 = vmatprep.subr.mxu0 0.0
      %v8271 = vand.u32 %v8002, 4294901760
      %8272 = vmatpush1.msra.mxu0 %v8271
      %8273 = vmatprep.subr.mxu0 0.0
      %v8274 = vand.u32 %v8004, 4294901760
      %8275 = vmatpush1.msra.mxu0 %v8274
      %8276 = vmatprep.subr.mxu0 0.0
      %v8277 = vand.u32 %v8006, 4294901760
      %8278 = vmatpush1.msra.mxu0 %v8277
      %8279 = vmatprep.subr.mxu0 0.0
      %v8280 = vand.u32 %v8008, 4294901760
      %8281 = vmatpush1.msra.mxu0 %v8280
      %8282 = vmatprep.subr.mxu0 0.0
      %8283 = vmatpush1.msra.mxu0 0.0
      %8284 = vmatprep.subr.mxu0 0.0
      %8285 = vmatpush1.msra.mxu0 0.0
      %8286 = vmatprep.subr.mxu0 0.0
      %8287 = vmatpush1.msra.mxu0 0.0
      %8288 = vmatprep.subr.mxu0 0.0
      %8289 = vmatpush1.msra.mxu0 0.0
      %8290 = vmatprep.subr.mxu0 0.0
      %8291 = vmatpush1.msra.mxu0 0.0
      %8292 = vmatprep.subr.mxu0 0.0
      %8293 = vmatpush1.msra.mxu0 0.0
      %8294 = vmatprep.subr.mxu0 0.0
      %8295 = vmatpush1.msra.mxu0 0.0
      %8296 = vmatprep.subr.mxu0 0.0
      %8297 = vmatpush1.msra.mxu0 0.0
      %8298 = vmatprep.subr.mxu0 0.0
      %8299 = vmatpush1.msra.mxu0 0.0
      %8300 = vmatprep.subr.mxu0 0.0
      %8301 = vmatpush1.msra.mxu0 0.0
      %8302 = vmatprep.subr.mxu0 0.0
      %8303 = vmatpush1.msra.mxu0 0.0
      %8304 = vmatprep.subr.mxu0 0.0
      %8305 = vmatpush1.msra.mxu0 0.0
      %8306 = vmatprep.subr.mxu0 0.0
      %8307 = vmatpush1.msra.mxu0 0.0
      %8308 = vmatprep.subr.mxu0 0.0
      %8309 = vmatpush1.msra.mxu0 0.0
      %8310 = vmatprep.subr.mxu0 0.0
      %8311 = vmatpush1.msra.mxu0 0.0
      %8312 = vmatprep.subr.mxu0 0.0
      %8313 = vmatpush1.msra.mxu0 0.0
      %8314 = vmatprep.subr.mxu0 0.0
      %8315 = vmatpush1.msra.mxu0 0.0
      %8316 = vmatprep.subr.mxu0 0.0
      %8317 = vmatpush1.msra.mxu0 0.0
      %8318 = vmatprep.subr.mxu0 0.0
      %8319 = vmatpush1.msra.mxu0 0.0
      %8320 = vmatprep.subr.mxu0 0.0
      %8321 = vmatpush1.msra.mxu0 0.0
      %8322 = vmatprep.subr.mxu0 0.0
      %8323 = vmatpush1.msra.mxu0 0.0
      %8324 = vmatprep.subr.mxu0 0.0
      %8325 = vmatpush1.msra.mxu0 0.0
      %8326 = vmatprep.subr.mxu0 0.0
      %8327 = vmatpush1.msra.mxu0 0.0
      %8328 = vmatprep.subr.mxu0 0.0
      %8329 = vmatpush1.msra.mxu0 0.0
      %8330 = vmatprep.subr.mxu0 0.0
      %8331 = vmatpush1.msra.mxu0 0.0
      %8332 = vmatprep.subr.mxu0 0.0
      %8333 = vmatpush1.msra.mxu0 0.0
      %8334 = vmatprep.subr.mxu0 0.0
      %8335 = vmatpush1.msra.mxu0 0.0
      %8336 = vmatprep.subr.mxu0 0.0
      %8337 = vmatpush1.msra.mxu0 0.0
      %8338 = vmatprep.mubr.f32.mxu0 0.0
      %v8339 = vand.u32 %v8018, 4294901760
      %v8340 = vsub.f32 %v8018, %v8339
      %v8341 = vand.u32 %v8340, 4294901760
      %8342 = vmatmul.mubr.f32.gmra.mrb[0].mxu0 %v8341
      %v8343 = vpop.f32.mrb[0].mxu0
      %v8344 = vadd.f32 %v8267, %v8343
      %v8345 = vpop.f32.mrb[0].mxu0
      %8346 = vdwg.mxu0
      %8347 = vmatprep.subr.mxu0 0.0
      %v8348 = vand.u32 %v8002, 4294901760
      %v8349 = vsub.f32 %v8002, %v8348
      %v8350 = vand.u32 %v8349, 4294901760
      %8351 = vmatpush1.msra.mxu0 %v8350
      %8352 = vmatprep.subr.mxu0 0.0
      %v8353 = vand.u32 %v8004, 4294901760
      %v8354 = vsub.f32 %v8004, %v8353
      %v8355 = vand.u32 %v8354, 4294901760
      %8356 = vmatpush1.msra.mxu0 %v8355
      %8357 = vmatprep.subr.mxu0 0.0
      %v8358 = vand.u32 %v8006, 4294901760
      %v8359 = vsub.f32 %v8006, %v8358
      %v8360 = vand.u32 %v8359, 4294901760
      %8361 = vmatpush1.msra.mxu0 %v8360
      %8362 = vmatprep.subr.mxu0 0.0
      %v8363 = vand.u32 %v8008, 4294901760
      %v8364 = vsub.f32 %v8008, %v8363
      %v8365 = vand.u32 %v8364, 4294901760
      %8366 = vmatpush1.msra.mxu0 %v8365
      %8367 = vmatprep.subr.mxu0 0.0
      %8368 = vmatpush1.msra.mxu0 0.0
      %8369 = vmatprep.subr.mxu0 0.0
      %8370 = vmatpush1.msra.mxu0 0.0
      %8371 = vmatprep.subr.mxu0 0.0
      %8372 = vmatpush1.msra.mxu0 0.0
      %8373 = vmatprep.subr.mxu0 0.0
      %8374 = vmatpush1.msra.mxu0 0.0
      %8375 = vmatprep.subr.mxu0 0.0
      %8376 = vmatpush1.msra.mxu0 0.0
      %8377 = vmatprep.subr.mxu0 0.0
      %8378 = vmatpush1.msra.mxu0 0.0
      %8379 = vmatprep.subr.mxu0 0.0
      %8380 = vmatpush1.msra.mxu0 0.0
      %8381 = vmatprep.subr.mxu0 0.0
      %8382 = vmatpush1.msra.mxu0 0.0
      %8383 = vmatprep.subr.mxu0 0.0
      %8384 = vmatpush1.msra.mxu0 0.0
      %8385 = vmatprep.subr.mxu0 0.0
      %8386 = vmatpush1.msra.mxu0 0.0
      %8387 = vmatprep.subr.mxu0 0.0
      %8388 = vmatpush1.msra.mxu0 0.0
      %8389 = vmatprep.subr.mxu0 0.0
      %8390 = vmatpush1.msra.mxu0 0.0
      %8391 = vmatprep.subr.mxu0 0.0
      %8392 = vmatpush1.msra.mxu0 0.0
      %8393 = vmatprep.subr.mxu0 0.0
      %8394 = vmatpush1.msra.mxu0 0.0
      %8395 = vmatprep.subr.mxu0 0.0
      %8396 = vmatpush1.msra.mxu0 0.0
      %8397 = vmatprep.subr.mxu0 0.0
      %8398 = vmatpush1.msra.mxu0 0.0
      %8399 = vmatprep.subr.mxu0 0.0
      %8400 = vmatpush1.msra.mxu0 0.0
      %8401 = vmatprep.subr.mxu0 0.0
      %8402 = vmatpush1.msra.mxu0 0.0
      %8403 = vmatprep.subr.mxu0 0.0
      %8404 = vmatpush1.msra.mxu0 0.0
      %8405 = vmatprep.subr.mxu0 0.0
      %8406 = vmatpush1.msra.mxu0 0.0
      %8407 = vmatprep.subr.mxu0 0.0
      %8408 = vmatpush1.msra.mxu0 0.0
      %8409 = vmatprep.subr.mxu0 0.0
      %8410 = vmatpush1.msra.mxu0 0.0
      %8411 = vmatprep.subr.mxu0 0.0
      %8412 = vmatpush1.msra.mxu0 0.0
      %8413 = vmatprep.subr.mxu0 0.0
      %8414 = vmatpush1.msra.mxu0 0.0
      %8415 = vmatprep.subr.mxu0 0.0
      %8416 = vmatpush1.msra.mxu0 0.0
      %8417 = vmatprep.subr.mxu0 0.0
      %8418 = vmatpush1.msra.mxu0 0.0
      %8419 = vmatprep.subr.mxu0 0.0
      %8420 = vmatpush1.msra.mxu0 0.0
      %8421 = vmatprep.subr.mxu0 0.0
      %8422 = vmatpush1.msra.mxu0 0.0
      %8423 = vmatprep.mubr.f32.mxu0 0.0
      %v8424 = vand.u32 %v8018, 4294901760
      %8425 = vmatmul.mubr.f32.gmra.mrb[0].mxu0 %v8424
      %v8426 = vpop.f32.mrb[0].mxu0
      %v8427 = vadd.f32 %v8344, %v8426
      %v8428 = vpop.f32.mrb[0].mxu0
      %8429 = vdwg.mxu0
      %8430 = vmatprep.subr.mxu0 0.0
      %v8431 = vand.u32 %v8002, 4294901760
      %8432 = vmatpush1.msra.mxu0 %v8431
      %8433 = vmatprep.subr.mxu0 0.0
      %v8434 = vand.u32 %v8004, 4294901760
      %8435 = vmatpush1.msra.mxu0 %v8434
      %8436 = vmatprep.subr.mxu0 0.0
      %v8437 = vand.u32 %v8006, 4294901760
      %8438 = vmatpush1.msra.mxu0 %v8437
      %8439 = vmatprep.subr.mxu0 0.0
      %v8440 = vand.u32 %v8008, 4294901760
      %8441 = vmatpush1.msra.mxu0 %v8440
      %8442 = vmatprep.subr.mxu0 0.0
      %8443 = vmatpush1.msra.mxu0 0.0
      %8444 = vmatprep.subr.mxu0 0.0
      %8445 = vmatpush1.msra.mxu0 0.0
      %8446 = vmatprep.subr.mxu0 0.0
      %8447 = vmatpush1.msra.mxu0 0.0
      %8448 = vmatprep.subr.mxu0 0.0
      %8449 = vmatpush1.msra.mxu0 0.0
      %8450 = vmatprep.subr.mxu0 0.0
      %8451 = vmatpush1.msra.mxu0 0.0
      %8452 = vmatprep.subr.mxu0 0.0
      %8453 = vmatpush1.msra.mxu0 0.0
      %8454 = vmatprep.subr.mxu0 0.0
      %8455 = vmatpush1.msra.mxu0 0.0
      %8456 = vmatprep.subr.mxu0 0.0
      %8457 = vmatpush1.msra.mxu0 0.0
      %8458 = vmatprep.subr.mxu0 0.0
      %8459 = vmatpush1.msra.mxu0 0.0
      %8460 = vmatprep.subr.mxu0 0.0
      %8461 = vmatpush1.msra.mxu0 0.0
      %8462 = vmatprep.subr.mxu0 0.0
      %8463 = vmatpush1.msra.mxu0 0.0
      %8464 = vmatprep.subr.mxu0 0.0
      %8465 = vmatpush1.msra.mxu0 0.0
      %8466 = vmatprep.subr.mxu0 0.0
      %8467 = vmatpush1.msra.mxu0 0.0
      %8468 = vmatprep.subr.mxu0 0.0
      %8469 = vmatpush1.msra.mxu0 0.0
      %8470 = vmatprep.subr.mxu0 0.0
      %8471 = vmatpush1.msra.mxu0 0.0
      %8472 = vmatprep.subr.mxu0 0.0
      %8473 = vmatpush1.msra.mxu0 0.0
      %8474 = vmatprep.subr.mxu0 0.0
      %8475 = vmatpush1.msra.mxu0 0.0
      %8476 = vmatprep.subr.mxu0 0.0
      %8477 = vmatpush1.msra.mxu0 0.0
      %8478 = vmatprep.subr.mxu0 0.0
      %8479 = vmatpush1.msra.mxu0 0.0
      %8480 = vmatprep.subr.mxu0 0.0
      %8481 = vmatpush1.msra.mxu0 0.0
      %8482 = vmatprep.subr.mxu0 0.0
      %8483 = vmatpush1.msra.mxu0 0.0
      %8484 = vmatprep.subr.mxu0 0.0
      %8485 = vmatpush1.msra.mxu0 0.0
      %8486 = vmatprep.subr.mxu0 0.0
      %8487 = vmatpush1.msra.mxu0 0.0
      %8488 = vmatprep.subr.mxu0 0.0
      %8489 = vmatpush1.msra.mxu0 0.0
      %8490 = vmatprep.subr.mxu0 0.0
      %8491 = vmatpush1.msra.mxu0 0.0
      %8492 = vmatprep.subr.mxu0 0.0
      %8493 = vmatpush1.msra.mxu0 0.0
      %8494 = vmatprep.subr.mxu0 0.0
      %8495 = vmatpush1.msra.mxu0 0.0
      %8496 = vmatprep.subr.mxu0 0.0
      %8497 = vmatpush1.msra.mxu0 0.0
      %8498 = vmatprep.mubr.f32.mxu0 0.0
      %v8499 = vand.u32 %v8018, 4294901760
      %8500 = vmatmul.mubr.f32.gmra.mrb[0].mxu0 %v8499
      %v8501 = vpop.f32.mrb[0].mxu0
      %v8502 = vadd.f32 %v8427, %v8501
      %v8503 = vpop.f32.mrb[0].mxu0
      %8504 = vdwg.mxu0
      %v8505 = vrot.slane %v8502, 4
      %v8506 = vmax.f32 %v8502, %v8505
      %v8507 = vrot.slane %v8506, 2
      %v8508 = vmax.f32 %v8506, %v8507
      %v8509 = vrot.slane %v8508, 1
      %v8510 = vmax.f32 %v8508, %v8509
      %v8511 = vsub.f32 %v8502, %v8510
      %v8512 = vmul.f32 %v8511, 1.442695
      %v8513 = vpow.pop %v8512
      %v8514 = vrot.slane %v8513, 4
      %v8515 = vadd.f32 %v8513, %v8514
      %v8516 = vrot.slane %v8515, 2
      %v8517 = vadd.f32 %v8515, %v8516
      %v8518 = vrot.slane %v8517, 1
      %v8519 = vadd.f32 %v8517, %v8518
      %v8520 = vlog2.pop %v8519
      %v8521 = vmul.f32 %v8520, 0.6931472
      %v8522 = vsub.f32 %v8511, %v8521
      %8523 = vst [vmem:[%s290] sm:$0xff] %v8522
      %p8524 = scmp.lt.s32.totalorder %s18, 1
      %s8525 = scalar_select %p8524, %s18, 1
      %s8526 = smul.addr %s8525, 8
      %s8527 = scalar_lea.vmem %s7, %s8526
      // Predicated region
      $region49: #{vecsim_linear_forward.1} parent=47 // pred_check
        %p8528 = pneg %p193
      $region50: #{vecsim_linear_forward.1} parent=47 // pred_check_branch
        %8530 = sbr.rel (%p8528) target = $region52
      $region51: #{vecsim_linear_forward.1} parent=47 // pred_region
        _
      $region52: #{vecsim_linear_forward.1} parent=47 // pred_fallthru
        _
    $region48: #{vecsim_linear_forward.1} parent=5 // pred_fallthru
      _
    %p8531 = scmp.le.s32.totalorder 2, %s13
    // Predicated region
    $region53: #{vecsim_linear_forward.1} parent=5 // pred_check
      %p8532 = pneg %p8531
    $region54: #{vecsim_linear_forward.1} parent=5 // pred_check_branch
      %8534 = sbr.rel (%p8532) target = $region56
    $region55: #{vecsim_linear_forward.1} parent=5 // pred_region
      %s8535 = ssub.s32 %s13, 2
      // Predicated region
      $region57: #{vecsim_linear_forward.1} parent=55 // pred_check
        %p8536 = pneg %p199
      $region58: #{vecsim_linear_forward.1} parent=55 // pred_check_branch
        %8538 = sbr.rel (%p8536) target = $region60
      $region59: #{vecsim_linear_forward.1} parent=55 // pred_region
        %p8539 = scmp.lt.s32.totalorder %s19, 1
        %s8540 = scalar_select %p8539, %s19, 1
        %s8541 = smul.addr %s8540, 8
        %s8542 = scalar_lea.vmem %s7, %s8541
      $region60: #{vecsim_linear_forward.1} parent=55 // pred_fallthru
        _
    $region56: #{vecsim_linear_forward.1} parent=5 // pred_fallthru
      _
  $region6: #{vecsim_linear_forward.1} parent=0 // loop_footer
    %s17 = sadd.s32 1, %s13
  $region7: #{vecsim_linear_forward.1} parent=0 // loop_footer_branch
    %12 = sbr.rel target = $region3
  $region8: #{vecsim_linear_forward.1} parent=0 // loop_exit
    _

</llo_original>
